<compile_context>
chip_gen: v5e
topology: v5e:2x2
jax: 0.10.0
libtpu: 0.0.40
codegen_flags: <defaults>
</compile_context>

<pallas_src>
import math
import functools

import jax
import jax.numpy as jnp
from jax.experimental import pallas as pl
from jax.experimental.pallas import tpu as pltpu

DRUG_DIM = 512           # len(load_drug_embedding().values()[0]) in the original
PROT_DIM = 2560
HID1 = 1024
HID2 = 512


def _closest_power_of_2(x: int) -> int:
    return 2 ** (math.ceil(math.log2(x)) - 1)


def _drug_fc_sizes(input_size: int):
    sizes = []
    cur = input_size
    while cur != 128:
        nxt = _closest_power_of_2(cur)
        sizes.append((cur, nxt))
        cur = nxt
    return sizes  # for 512: [(512, 256), (256, 128)]


# --------------------------------------------------------------------------
# Kernel
# --------------------------------------------------------------------------
def dti_kernel(drug_ref, prot_ref,
               wd0_ref, bd0_ref, wd1_ref, bd1_ref,
               w1d_ref, w1p_ref, b1_ref,
               w2_ref, b2_ref,
               wo_ref, bo_ref,
               out_ref):
    f32 = jnp.float32
    bf16 = jnp.bfloat16

    # Cast streamed activations to bf16 in-kernel (no wrapper-side copy).
    d = drug_ref[...].astype(bf16)
    p = prot_ref[...].astype(bf16)

    # Drug tower: two Linear + ReLU (+ Dropout == identity in eval mode).
    d = jnp.maximum(
        jnp.dot(d, wd0_ref[...], preferred_element_type=f32) + bd0_ref[...],
        0.0).astype(bf16)
    d = jnp.maximum(
        jnp.dot(d, wd1_ref[...], preferred_element_type=f32) + bd1_ref[...],
        0.0).astype(bf16)

    # fc1 on concat(drug128, protein): concat folded into two matmuls.
    # TODO(synk): int8 (v5e/v6e) / fp8 (v7x) quantization of w1p (~76% of the
    # FLOPs) for ~2x MXU rate; needs separate accuracy validation.
    x = (jnp.dot(d, w1d_ref[...], preferred_element_type=f32)
         + jnp.dot(p, w1p_ref[...], preferred_element_type=f32)
         + b1_ref[...])
    x = jnp.maximum(x, 0.0).astype(bf16)

    # fc2 + ReLU (keep f32 result for the final reduction).
    x = jnp.maximum(
        jnp.dot(x, w2_ref[...], preferred_element_type=f32) + b2_ref[...], 0.0)

    # out (512 -> 1): VPU multiply + cross-lane reduce instead of an N=1 MXU dot.
    out_ref[...] = jnp.sum(x * wo_ref[...], axis=-1, keepdims=True) + bo_ref[...]


# --------------------------------------------------------------------------
# Wrapper
# --------------------------------------------------------------------------
def _chip_defaults():
    """Pick (batch_tile, vmem_limit_bytes) from the core's VMEM capacity.

    v5e/v6e (128 MiB VMEM per core) -> tb=1024 with an 80 MiB scoped limit.
    v7x (64 MiB per core) or unknown -> tb=512 with a 48 MiB scoped limit.
    """
    try:
        vmem = pltpu.get_tpu_info().vmem_capacity_bytes
    except Exception:
        vmem = 0
    if vmem >= 100 * 1024 * 1024:
        return 1024, 80 * 1024 * 1024
    return 512, 48 * 1024 * 1024


def _probe_kernel(x_ref, o_ref):
    o_ref[...] = x_ref[...]


@functools.lru_cache(maxsize=None)
def _single_buffer_ok() -> bool:
    """Probe once whether pipeline_mode=pl.Buffered(1) (single-buffered
    VMEM-resident blocks) is supported by the installed JAX/Mosaic."""
    try:
        spec = pl.BlockSpec((8, 128), lambda i: (0, 0),
                            pipeline_mode=pl.Buffered(1))
        fn = pl.pallas_call(
            _probe_kernel,
            out_shape=jax.ShapeDtypeStruct((16, 128), jnp.float32),
            grid=(2,),
            in_specs=[spec],
            out_specs=pl.BlockSpec((8, 128), lambda i: (i, 0)),
        )
        jax.block_until_ready(fn(jnp.zeros((8, 128), jnp.float32)))
        return True
    except Exception:
        return False


@functools.partial(jax.jit, static_argnames=("tb", "single_buffer_weights"))
def _dti_forward_impl(drug, protein, params, *, tb, single_buffer_weights):
    (wd0, bd0, wd1, bd1, w1d, w1p, b1, w2, b2, wo_row, bo) = params
    B = drug.shape[0]

    if tb is None:
        tb, vmem_limit = _chip_defaults()
    else:
        vmem_limit = 48 * 1024 * 1024 if tb <= 512 else 64 * 1024 * 1024

    if B <= tb:
        # One full-batch block: no padding, no partial blocks at all.
        tb = B
    grid = (pl.cdiv(B, tb),)

    resident_kw = (dict(pipeline_mode=pl.Buffered(1))
                   if single_buffer_weights else {})

    def batch_spec(feat):
        return pl.BlockSpec((tb, feat), lambda i: (i, 0))

    def resident_spec(arr):
        # Full-array block + constant block index -> stays VMEM-resident
        # across grid steps (single-buffered when supported).
        return pl.BlockSpec(arr.shape, lambda i: (0, 0), **resident_kw)

    return pl.pallas_call(
        dti_kernel,
        out_shape=jax.ShapeDtypeStruct((B, 1), jnp.float32),
        grid=grid,
        in_specs=[
            batch_spec(DRUG_DIM), batch_spec(PROT_DIM),
            resident_spec(wd0), resident_spec(bd0),
            resident_spec(wd1), resident_spec(bd1),
            resident_spec(w1d), resident_spec(w1p), resident_spec(b1),
            resident_spec(w2), resident_spec(b2),
            resident_spec(wo_row), resident_spec(bo),
        ],
        out_specs=pl.BlockSpec((tb, 1), lambda i: (i, 0)),
        compiler_params=pltpu.CompilerParams(
            dimension_semantics=("parallel",),
            vmem_limit_bytes=vmem_limit,
        ),
    )(drug, protein, wd0, bd0, wd1, bd1, w1d, w1p, b1, w2, b2, wo_row, bo)


def dti_forward(drug, protein, params, *, tb=None):
    return _dti_forward_impl(drug, protein, params, tb=tb,
                             single_buffer_weights=_single_buffer_ok())


# --------------------------------------------------------------------------
# Parameters & reference
# --------------------------------------------------------------------------
def init_params(key):
    """Deterministic PyTorch-Linear-style init. Weights bf16, biases f32."""
    def linear(key, fan_in, fan_out):
        kw, kb = jax.random.split(key)
        bound = 1.0 / math.sqrt(fan_in)
        w = jax.random.uniform(kw, (fan_in, fan_out), jnp.float32, -bound, bound)
        b = jax.random.uniform(kb, (1, fan_out), jnp.float32, -bound, bound)
        return w, b

    keys = jax.random.split(key, 5)
    sizes = _drug_fc_sizes(DRUG_DIM)
    assert sizes == [(512, 256), (256, 128)]

    wd0, bd0 = linear(keys[0], *sizes[0])           # 512 -> 256
    wd1, bd1 = linear(keys[1], *sizes[1])           # 256 -> 128
    w1, b1 = linear(keys[2], 128 + PROT_DIM, HID1)  # 2688 -> 1024
    w1d, w1p = w1[:128, :], w1[128:, :]             # fold the concat
    w2, b2 = linear(keys[3], HID1, HID2)            # 1024 -> 512
    wo, bo = linear(keys[4], HID2, 1)               # 512 -> 1

    bf = jnp.bfloat16
    return (wd0.astype(bf), bd0,
            wd1.astype(bf), bd1,
            w1d.astype(bf), w1p.astype(bf), b1,
            w2.astype(bf), b2,
            wo.T.astype(jnp.float32),               # stored as (1, 512) row, f32
            bo)                                     # (1, 1) f32


def reference_forward(drug, protein, params):
    """Pure-JAX f32 reference using the same (bf16-quantized) weights."""
    (wd0, bd0, wd1, bd1, w1d, w1p, b1, w2, b2, wo_row, bo) = params
    f32 = jnp.float32
    d = jnp.maximum(drug @ wd0.astype(f32) + bd0, 0.0)
    d = jnp.maximum(d @ wd1.astype(f32) + bd1, 0.0)
    x = jnp.maximum(d @ w1d.astype(f32) + protein @ w1p.astype(f32) + b1, 0.0)
    x = jnp.maximum(x @ w2.astype(f32) + b2, 0.0)
    return x @ wo_row.T + bo


if __name__ == "__main__":
    key = jax.random.PRNGKey(0)
    kp, kd, kpr = jax.random.split(key, 3)

    B = 2
    drug = jax.random.normal(kd, (B, DRUG_DIM), jnp.float32)
    protein = jax.random.normal(kpr, (B, PROT_DIM), jnp.float32)
    params = init_params(kp)

    out = dti_forward(drug, protein, params)
    out = jax.block_until_ready(out)
    assert out.shape == (B, 1)

    ref = reference_forward(drug, protein, params)
    # bf16 activations/weights in-kernel vs f32 reference: modest tolerance.
    assert jnp.allclose(out, ref, rtol=5e-2, atol=5e-2), (out, ref)

    print("KERNEL_OK")
</pallas_src>

<mosaic_0001>
module attributes {stable_mosaic.version = 11 : i64} {
  func.func @_probe_kernel(%arg0: i32, %arg1: memref<8x128xf32, #tpu.memory_space<vmem>>, %arg2: memref<8x128xf32, #tpu.memory_space<vmem>>) attributes {dimension_semantics = [#tpu.dimension_semantics<arbitrary>], iteration_bounds = array<i64: 2>, scalar_prefetch = 0 : i64, scratch_operands = 0 : i64, tpu.core_type = #tpu.core_type<tc>, window_params = [{pipeline_mode = #tpu.pipeline_mode<synchronous>, transform_indices = @transform_0, window_bounds = array<i64: 8, 128>}, {transform_indices = @transform_1, window_bounds = array<i64: 8, 128>}]} {
    %c0 = arith.constant 0 : index
    %c0_0 = arith.constant 0 : index
    %0 = vector.load %arg1[%c0, %c0_0] : memref<8x128xf32, #tpu.memory_space<vmem>>, vector<8x128xf32>
    %c0_1 = arith.constant 0 : index
    %c0_2 = arith.constant 0 : index
    %1 = vector.load %arg2[%c0_1, %c0_2] : memref<8x128xf32, #tpu.memory_space<vmem>>, vector<8x128xf32>
    tpu.vector_store %arg2[%c0_1, %c0_2], %0 {strides = array<i32>} : memref<8x128xf32, #tpu.memory_space<vmem>>, vector<8x128xf32>,
    return
  }
  func.func @transform_0(%arg0: i32) -> (i32, i32) {
    %c0_i32 = arith.constant 0 : i32
    %c0_i32_0 = arith.constant 0 : i32
    %c0_i32_1 = arith.constant 0 : i32
    return %c0_i32, %c0_i32_0 : i32, i32
  }
  func.func @transform_1(%arg0: i32) -> (i32, i32) {
    %c0_i32 = arith.constant 0 : i32
    %c0_i32_0 = arith.constant 0 : i32
    return %arg0, %c0_i32 : i32, i32
  }
}

module attributes {stable_mosaic.version = 11 : i64} {
  func.func @dti_kernel(%arg0: i32, %arg1: memref<2x512xf32, #tpu.memory_space<vmem>>, %arg2: memref<2x2560xf32, #tpu.memory_space<vmem>>, %arg3: memref<512x256xbf16, #tpu.memory_space<vmem>>, %arg4: memref<1x256xf32, #tpu.memory_space<vmem>>, %arg5: memref<256x128xbf16, #tpu.memory_space<vmem>>, %arg6: memref<1x128xf32, #tpu.memory_space<vmem>>, %arg7: memref<128x1024xbf16, #tpu.memory_space<vmem>>, %arg8: memref<2560x1024xbf16, #tpu.memory_space<vmem>>, %arg9: memref<1x1024xf32, #tpu.memory_space<vmem>>, %arg10: memref<1024x512xbf16, #tpu.memory_space<vmem>>, %arg11: memref<1x512xf32, #tpu.memory_space<vmem>>, %arg12: memref<1x512xf32, #tpu.memory_space<vmem>>, %arg13: memref<1x1xf32, #tpu.memory_space<vmem>>, %arg14: memref<2x1xf32, #tpu.memory_space<vmem>>) attributes {dimension_semantics = [#tpu.dimension_semantics<parallel>], iteration_bounds = array<i64: 1>, scalar_prefetch = 0 : i64, scratch_operands = 0 : i64, tpu.core_type = #tpu.core_type<tc>, window_params = [{transform_indices = @transform_0, window_bounds = array<i64: 2, 512>}, {transform_indices = @transform_1, window_bounds = array<i64: 2, 2560>}, {pipeline_mode = #tpu.pipeline_mode<synchronous>, transform_indices = @transform_2, window_bounds = array<i64: 512, 256>}, {pipeline_mode = #tpu.pipeline_mode<synchronous>, transform_indices = @transform_3, window_bounds = array<i64: 1, 256>}, {pipeline_mode = #tpu.pipeline_mode<synchronous>, transform_indices = @transform_4, window_bounds = array<i64: 256, 128>}, {pipeline_mode = #tpu.pipeline_mode<synchronous>, transform_indices = @transform_5, window_bounds = array<i64: 1, 128>}, {pipeline_mode = #tpu.pipeline_mode<synchronous>, transform_indices = @transform_6, window_bounds = array<i64: 128, 1024>}, {pipeline_mode = #tpu.pipeline_mode<synchronous>, transform_indices = @transform_7, window_bounds = array<i64: 2560, 1024>}, {pipeline_mode = #tpu.pipeline_mode<synchronous>, transform_indices = @transform_8, window_bounds = array<i64: 1, 1024>}, {pipeline_mode = #tpu.pipeline_mode<synchronous>, transform_indices = @transform_9, window_bounds = array<i64: 1024, 512>}, {pipeline_mode = #tpu.pipeline_mode<synchronous>, transform_indices = @transform_10, window_bounds = array<i64: 1, 512>}, {pipeline_mode = #tpu.pipeline_mode<synchronous>, transform_indices = @transform_11, window_bounds = array<i64: 1, 512>}, {pipeline_mode = #tpu.pipeline_mode<synchronous>, transform_indices = @transform_12, window_bounds = array<i64: 1, 1>}, {transform_indices = @transform_13, window_bounds = array<i64: 2, 1>}]} {
    %c0 = arith.constant 0 : index
    %c0_0 = arith.constant 0 : index
    %0 = vector.load %arg1[%c0, %c0_0] : memref<2x512xf32, #tpu.memory_space<vmem>>, vector<2x512xf32>
    %1 = arith.truncf %0 : vector<2x512xf32> to vector<2x512xbf16>
    %c0_1 = arith.constant 0 : index
    %c0_2 = arith.constant 0 : index
    %2 = vector.load %arg2[%c0_1, %c0_2] : memref<2x2560xf32, #tpu.memory_space<vmem>>, vector<2x2560xf32>
    %3 = arith.truncf %2 : vector<2x2560xf32> to vector<2x2560xbf16>
    %c0_3 = arith.constant 0 : index
    %c0_4 = arith.constant 0 : index
    %4 = vector.load %arg3[%c0_3, %c0_4] : memref<512x256xbf16, #tpu.memory_space<vmem>>, vector<512x256xbf16>
    %cst = arith.constant dense<0.000000e+00> : vector<2x256xf32>
    %5 = tpu.matmul %1, %4, %cst {dimension_numbers = #tpu.dot_dimension_numbers<[1], [0], [0], [1], [0, 0, 1, 1], [], []>} : vector<2x512xbf16>, vector<512x256xbf16>, vector<2x256xf32> -> vector<2x256xf32>
    %c0_5 = arith.constant 0 : index
    %c0_6 = arith.constant 0 : index
    %6 = vector.load %arg4[%c0_5, %c0_6] : memref<1x256xf32, #tpu.memory_space<vmem>>, vector<1x256xf32>
    %7 = vector.broadcast %6 : vector<1x256xf32> to vector<2x256xf32>
    %8 = arith.addf %5, %7 : vector<2x256xf32>
    %cst_7 = arith.constant 0.000000e+00 : f32
    %9 = vector.broadcast %cst_7 : f32 to vector<2x256xf32>
    %10 = arith.maximumf %8, %9 : vector<2x256xf32>
    %11 = arith.truncf %10 : vector<2x256xf32> to vector<2x256xbf16>
    %c0_8 = arith.constant 0 : index
    %c0_9 = arith.constant 0 : index
    %12 = vector.load %arg5[%c0_8, %c0_9] : memref<256x128xbf16, #tpu.memory_space<vmem>>, vector<256x128xbf16>
    %cst_10 = arith.constant dense<0.000000e+00> : vector<2x128xf32>
    %13 = tpu.matmul %11, %12, %cst_10 {dimension_numbers = #tpu.dot_dimension_numbers<[1], [0], [0], [1], [0, 0, 1, 1], [], []>} : vector<2x256xbf16>, vector<256x128xbf16>, vector<2x128xf32> -> vector<2x128xf32>
    %c0_11 = arith.constant 0 : index
    %c0_12 = arith.constant 0 : index
    %14 = vector.load %arg6[%c0_11, %c0_12] : memref<1x128xf32, #tpu.memory_space<vmem>>, vector<1x128xf32>
    %15 = vector.broadcast %14 : vector<1x128xf32> to vector<2x128xf32>
    %16 = arith.addf %13, %15 : vector<2x128xf32>
    %cst_13 = arith.constant 0.000000e+00 : f32
    %17 = vector.broadcast %cst_13 : f32 to vector<2x128xf32>
    %18 = arith.maximumf %16, %17 : vector<2x128xf32>
    %19 = arith.truncf %18 : vector<2x128xf32> to vector<2x128xbf16>
    %c0_14 = arith.constant 0 : index
    %c0_15 = arith.constant 0 : index
    %20 = vector.load %arg7[%c0_14, %c0_15] : memref<128x1024xbf16, #tpu.memory_space<vmem>>, vector<128x1024xbf16>
    %cst_16 = arith.constant dense<0.000000e+00> : vector<2x1024xf32>
    %21 = tpu.matmul %19, %20, %cst_16 {dimension_numbers = #tpu.dot_dimension_numbers<[1], [0], [0], [1], [0, 0, 1, 1], [], []>} : vector<2x128xbf16>, vector<128x1024xbf16>, vector<2x1024xf32> -> vector<2x1024xf32>
    %c0_17 = arith.constant 0 : index
    %c0_18 = arith.constant 0 : index
    %22 = vector.load %arg8[%c0_17, %c0_18] : memref<2560x1024xbf16, #tpu.memory_space<vmem>>, vector<2560x1024xbf16>
    %cst_19 = arith.constant dense<0.000000e+00> : vector<2x1024xf32>
    %23 = tpu.matmul %3, %22, %cst_19 {dimension_numbers = #tpu.dot_dimension_numbers<[1], [0], [0], [1], [0, 0, 1, 1], [], []>} : vector<2x2560xbf16>, vector<2560x1024xbf16>, vector<2x1024xf32> -> vector<2x1024xf32>
    %24 = arith.addf %21, %23 : vector<2x1024xf32>
    %c0_20 = arith.constant 0 : index
    %c0_21 = arith.constant 0 : index
    %25 = vector.load %arg9[%c0_20, %c0_21] : memref<1x1024xf32, #tpu.memory_space<vmem>>, vector<1x1024xf32>
    %26 = vector.broadcast %25 : vector<1x1024xf32> to vector<2x1024xf32>
    %27 = arith.addf %24, %26 : vector<2x1024xf32>
    %cst_22 = arith.constant 0.000000e+00 : f32
    %28 = vector.broadcast %cst_22 : f32 to vector<2x1024xf32>
    %29 = arith.maximumf %27, %28 : vector<2x1024xf32>
    %30 = arith.truncf %29 : vector<2x1024xf32> to vector<2x1024xbf16>
    %c0_23 = arith.constant 0 : index
    %c0_24 = arith.constant 0 : index
    %31 = vector.load %arg10[%c0_23, %c0_24] : memref<1024x512xbf16, #tpu.memory_space<vmem>>, vector<1024x512xbf16>
    %cst_25 = arith.constant dense<0.000000e+00> : vector<2x512xf32>
    %32 = tpu.matmul %30, %31, %cst_25 {dimension_numbers = #tpu.dot_dimension_numbers<[1], [0], [0], [1], [0, 0, 1, 1], [], []>} : vector<2x1024xbf16>, vector<1024x512xbf16>, vector<2x512xf32> -> vector<2x512xf32>
    %c0_26 = arith.constant 0 : index
    %c0_27 = arith.constant 0 : index
    %33 = vector.load %arg11[%c0_26, %c0_27] : memref<1x512xf32, #tpu.memory_space<vmem>>, vector<1x512xf32>
    %34 = vector.broadcast %33 : vector<1x512xf32> to vector<2x512xf32>
    %35 = arith.addf %32, %34 : vector<2x512xf32>
    %cst_28 = arith.constant 0.000000e+00 : f32
    %36 = vector.broadcast %cst_28 : f32 to vector<2x512xf32>
    %37 = arith.maximumf %35, %36 : vector<2x512xf32>
    %c0_29 = arith.constant 0 : index
    %c0_30 = arith.constant 0 : index
    %38 = vector.load %arg12[%c0_29, %c0_30] : memref<1x512xf32, #tpu.memory_space<vmem>>, vector<1x512xf32>
    %39 = vector.broadcast %38 : vector<1x512xf32> to vector<2x512xf32>
    %40 = arith.mulf %37, %39 : vector<2x512xf32>
    %cst_31 = arith.constant dense<0.000000e+00> : vector<2xf32>
    %41 = vector.multi_reduction <add>, %40, %cst_31 [1] : vector<2x512xf32> to vector<2xf32>
    %42 = vector.shape_cast %41 : vector<2xf32> to vector<2x1xf32>
    %c0_32 = arith.constant 0 : index
    %c0_33 = arith.constant 0 : index
    %43 = vector.load %arg13[%c0_32, %c0_33] : memref<1x1xf32, #tpu.memory_space<vmem>>, vector<1x1xf32>
    %44 = vector.broadcast %43 : vector<1x1xf32> to vector<2x1xf32>
    %45 = arith.addf %42, %44 : vector<2x1xf32>
    %c0_34 = arith.constant 0 : index
    %c0_35 = arith.constant 0 : index
    %46 = vector.load %arg14[%c0_34, %c0_35] : memref<2x1xf32, #tpu.memory_space<vmem>>, vector<2x1xf32>
    tpu.vector_store %arg14[%c0_34, %c0_35], %45 {strides = array<i32>} : memref<2x1xf32, #tpu.memory_space<vmem>>, vector<2x1xf32>,
    return
  }
  func.func @transform_0(%arg0: i32) -> (i32, i32) {
    %c0_i32 = arith.constant 0 : i32
    %c0_i32_0 = arith.constant 0 : i32
    return %arg0, %c0_i32 : i32, i32
  }
  func.func @transform_1(%arg0: i32) -> (i32, i32) {
    %c0_i32 = arith.constant 0 : i32
    %c0_i32_0 = arith.constant 0 : i32
    return %arg0, %c0_i32 : i32, i32
  }
  func.func @transform_2(%arg0: i32) -> (i32, i32) {
    %c0_i32 = arith.constant 0 : i32
    %c0_i32_0 = arith.constant 0 : i32
    %c0_i32_1 = arith.constant 0 : i32
    return %c0_i32, %c0_i32_0 : i32, i32
  }
  func.func @transform_3(%arg0: i32) -> (i32, i32) {
    %c0_i32 = arith.constant 0 : i32
    %c0_i32_0 = arith.constant 0 : i32
    %c0_i32_1 = arith.constant 0 : i32
    return %c0_i32, %c0_i32_0 : i32, i32
  }
  func.func @transform_4(%arg0: i32) -> (i32, i32) {
    %c0_i32 = arith.constant 0 : i32
    %c0_i32_0 = arith.constant 0 : i32
    %c0_i32_1 = arith.constant 0 : i32
    return %c0_i32, %c0_i32_0 : i32, i32
  }
  func.func @transform_5(%arg0: i32) -> (i32, i32) {
    %c0_i32 = arith.constant 0 : i32
    %c0_i32_0 = arith.constant 0 : i32
    %c0_i32_1 = arith.constant 0 : i32
    return %c0_i32, %c0_i32_0 : i32, i32
  }
  func.func @transform_6(%arg0: i32) -> (i32, i32) {
    %c0_i32 = arith.constant 0 : i32
    %c0_i32_0 = arith.constant 0 : i32
    %c0_i32_1 = arith.constant 0 : i32
    return %c0_i32, %c0_i32_0 : i32, i32
  }
  func.func @transform_7(%arg0: i32) -> (i32, i32) {
    %c0_i32 = arith.constant 0 : i32
    %c0_i32_0 = arith.constant 0 : i32
    %c0_i32_1 = arith.constant 0 : i32
    return %c0_i32, %c0_i32_0 : i32, i32
  }
  func.func @transform_8(%arg0: i32) -> (i32, i32) {
    %c0_i32 = arith.constant 0 : i32
    %c0_i32_0 = arith.constant 0 : i32
    %c0_i32_1 = arith.constant 0 : i32
    return %c0_i32, %c0_i32_0 : i32, i32
  }
  func.func @transform_9(%arg0: i32) -> (i32, i32) {
    %c0_i32 = arith.constant 0 : i32
    %c0_i32_0 = arith.constant 0 : i32
    %c0_i32_1 = arith.constant 0 : i32
    return %c0_i32, %c0_i32_0 : i32, i32
  }
  func.func @transform_10(%arg0: i32) -> (i32, i32) {
    %c0_i32 = arith.constant 0 : i32
    %c0_i32_0 = arith.constant 0 : i32
    %c0_i32_1 = arith.constant 0 : i32
    return %c0_i32, %c0_i32_0 : i32, i32
  }
  func.func @transform_11(%arg0: i32) -> (i32, i32) {
    %c0_i32 = arith.constant 0 : i32
    %c0_i32_0 = arith.constant 0 : i32
    %c0_i32_1 = arith.constant 0 : i32
    return %c0_i32, %c0_i32_0 : i32, i32
  }
  func.func @transform_12(%arg0: i32) -> (i32, i32) {
    %c0_i32 = arith.constant 0 : i32
    %c0_i32_0 = arith.constant 0 : i32
    %c0_i32_1 = arith.constant 0 : i32
    return %c0_i32, %c0_i32_0 : i32, i32
  }
  func.func @transform_13(%arg0: i32) -> (i32, i32) {
    %c0_i32 = arith.constant 0 : i32
    %c0_i32_0 = arith.constant 0 : i32
    return %arg0, %c0_i32 : i32, i32
  }
}

</mosaic_0001>

<llo_original>
// kernel: tpu_custom_call.1
$region0: #{tpu_custom_call.1}
  #allocation0 [shape = 'u32[]', space=smem, size = 0x4, offset = 0x4, fixed_abs, tag = 'smem constant byte address 0x4 - core index']
  #allocation1 [shape = 'u32[72,128]{1,0:T(1,128)}', space=vmem, size = 0x9000, scoped, tag = 'internal scratch']
  %s0 = inlined_call_operand.hbm [shape: f32[8,128], index: 0, kind: input, shape index: {}]
  %s1 = inlined_call_operand.hbm [shape: f32[16,128], index: 1, kind: output, shape index: {}]
  %s2 = sld [smem:[#allocation0]]
  $region41: #{tpu_custom_call.1} parent=0
    _
  %s4 = ssub.s32 1, %s2
  %s5 = scalar_select 0, %s4, %s2
  $region1: #{tpu_custom_call.1} parent=0
    #allocation2 [shape = 'u8[4096]{0}', space=vmem, size = 0x1000, scoped, tag = 'input window, operand 0, single buffered']
    #allocation3 [shape = 's32[2]{0}', space=sflag, size = 0x8, scoped, tag = 'scoped memory for tpu_custom_call.1']
    #allocation4 [shape = 's32[2]{0}', space=sflag, size = 0x8, scoped, tag = 'scoped memory for tpu_custom_call.1']
    #allocation5 [shape = 'u8[8192]{0}', space=vmem, size = 0x2000, scoped, tag = 'output window, operand 0']
    %6 = vsyncpa [#allocation3], 0
    %7 = vsyncpa [#allocation4], 0
    %s8 = scalar_lea.sflag [#allocation4], 1
    %9 = vsyncpa %s8, 0
    loop: start=0, step=1, limit=4
    $region2: #{tpu_custom_call.1} parent=1 // loop_pre_header
      _
    $region3: #{tpu_custom_call.1} parent=1 // loop_header
      %s11 = sphi 0, %s15
      %p12 = scmp.ge.s32.totalorder %s11, 4
      %s19 = sphi 0, %s19
      %s21 = sphi 0, %s19
      %s22 = sphi 0, %s21
      %s36 = sphi 0, %s22
      %s42 = sphi 0, %s44
      %s45 = sphi 0, %s42
      %s46 = sphi 0, %s45
      %s62 = sphi 0, %s46
    $region4: #{tpu_custom_call.1} parent=1 // loop_header_branch
      %14 = sbr.rel (%p12) target = $region8
    $region5: #{tpu_custom_call.1} parent=1 // loop_body
      %s16 = ssub.s32 %s11, 1
      %s17 = ssub.s32 %s11, 2
      %s18 = sadd.s32 %s11, 1
      %s20 = sadd.s32 %s19, 1
      %p23 = scmp.eq.s32.totalorder %s11, 1
      %p24 = scmp.ne.s32.totalorder %s19, %s21
      %p25 = scmp.eq.s32.totalorder %s11, 0
      %p26 = por %p24, %p25
      %p27 = scmp.ne.s32.totalorder %s19, %s21
      %p28 = scmp.eq.s32.totalorder %s16, 1
      %p29 = por %p27, %p28
      %p30 = scmp.ne.s32.totalorder %s21, %s22
      %p31 = scmp.eq.s32.totalorder %s16, 0
      %p32 = por %p30, %p31
      %p33 = scmp.ne.s32.totalorder %s21, %s22
      %p34 = scmp.eq.s32.totalorder %s17, 1
      %p35 = por %p33, %p34
      %p37 = scmp.ne.s32.totalorder %s22, %s36
      %p38 = scmp.eq.s32.totalorder %s17, 0
      %p39 = por %p37, %p38
      %s40 = ssub.s32 %s11, %s18
      %p41 = scmp.eq.s32.totalorder %s40, 0
      %s43 = sadd.s32 %s42, 1
      %s44 = scalar_select %p41, %s42, %s43
      %p47 = pneg %p41
      %p48 = scmp.eq.s32.totalorder %s11, 1
      %p49 = por %p47, %p48
      %p50 = scmp.ne.s32.totalorder %s42, %s45
      %p51 = scmp.eq.s32.totalorder %s11, 0
      %p52 = por %p50, %p51
      %p53 = scmp.ne.s32.totalorder %s42, %s45
      %p54 = scmp.eq.s32.totalorder %s16, 1
      %p55 = por %p53, %p54
      %p56 = scmp.ne.s32.totalorder %s45, %s46
      %p57 = scmp.eq.s32.totalorder %s16, 0
      %p58 = por %p56, %p57
      %p59 = scmp.ne.s32.totalorder %s45, %s46
      %p60 = scmp.eq.s32.totalorder %s17, 1
      %p61 = por %p59, %p60
      %p63 = scmp.ne.s32.totalorder %s46, %s62
      %p64 = scmp.eq.s32.totalorder %s17, 0
      %p65 = por %p63, %p64
      %p66 = scmp.le.s32.totalorder 1, %s11
      %p67 = scmp.lt.s32.totalorder %s11, 3
      %p68 = pnand %p66, %p67
      %p69 = pneg %p68
      // Predicated region
      $region9: #{tpu_custom_call.1} parent=5 // pred_check
        _
      $region10: #{tpu_custom_call.1} parent=5 // pred_check_branch
        %71 = sbr.rel (%p68) target = $region12
      $region11: #{tpu_custom_call.1} parent=5 // pred_region
        %s72 = ssub.s32 %s11, 1
        // Predicated region
        $region13: #{tpu_custom_call.1} parent=11 // pred_check
          %p73 = pneg %p32
        $region14: #{tpu_custom_call.1} parent=11 // pred_check_branch
          %75 = sbr.rel (%p73) target = $region16
        $region15: #{tpu_custom_call.1} parent=11 // pred_region
          %77 = vsyncadd [#allocation3], 0
          %s79 = sshll.u32 %s0, 4
          %s80 = int_to_ptr.hbm [resolvable:$true] %s79
          %s81 = sshll.u32 [#allocation2], 4
          %s82 = int_to_ptr.vmem [resolvable:$true] %s81
          %84 = dma.hbm_to_vmem [thread:$0]  %s80, 128, %s82, [#allocation3]
        $region16: #{tpu_custom_call.1} parent=11 // pred_fallthru
          _
      $region12: #{tpu_custom_call.1} parent=5 // pred_fallthru
        _
      %p85 = scmp.lt.s32.totalorder %s11, 2
      // Predicated region
      $region17: #{tpu_custom_call.1} parent=5 // pred_check
        %p86 = pneg %p85
      $region18: #{tpu_custom_call.1} parent=5 // pred_check_branch
        %88 = sbr.rel (%p86) target = $region20
      $region19: #{tpu_custom_call.1} parent=5 // pred_region
        _
      $region20: #{tpu_custom_call.1} parent=5 // pred_fallthru
        _
      %p89 = scmp.le.s32.totalorder 1, %s11
      %p90 = scmp.lt.s32.totalorder %s11, 3
      %p91 = pnand %p89, %p90
      %p92 = pneg %p91
      // Predicated region
      $region21: #{tpu_custom_call.1} parent=5 // pred_check
        _
      $region22: #{tpu_custom_call.1} parent=5 // pred_check_branch
        %94 = sbr.rel (%p91) target = $region24
      $region23: #{tpu_custom_call.1} parent=5 // pred_region
        %s95 = ssub.s32 %s11, 1
        // Predicated region
        $region25: #{tpu_custom_call.1} parent=23 // pred_check
          %p96 = pneg %p32
        $region26: #{tpu_custom_call.1} parent=23 // pred_check_branch
          %98 = sbr.rel (%p96) target = $region28
        $region27: #{tpu_custom_call.1} parent=23 // pred_region
          %100 = dma.done [#allocation3], 128
        $region28: #{tpu_custom_call.1} parent=23 // pred_fallthru
          _
        %p101 = pneg %p32
        %p102 = pneg %p29
        %p103 = pneg %p58
        %p104 = pneg %p55
        %s105 = sand.u32 %s45, 1
        %s106 = scalar_lea.sflag [#allocation4], %s105
        %s107 = sand.u32 %s45, 1
        %s108 = smul.addr %s107, 8
        %s109 = scalar_lea.vmem [#allocation5], %s108
        %v110 = vld [vmem:[#allocation2] sm:$0xff]
        %111 = vst [vmem:[%s109] sm:$0xff] %v110
        %s112 = sand.u32 %s45, 1
        %s113 = scalar_lea.sflag [#allocation4], %s112
        %s114 = sand.u32 %s45, 1
        %s115 = smul.addr %s114, 8
        %s116 = scalar_lea.vmem [#allocation5], %s115
        // Predicated region
        $region29: #{tpu_custom_call.1} parent=23 // pred_check
          %p117 = pneg %p55
        $region30: #{tpu_custom_call.1} parent=23 // pred_check_branch
          %119 = sbr.rel (%p117) target = $region32
        $region31: #{tpu_custom_call.1} parent=23 // pred_region
          %121 = vsyncadd %s113, 0
          %s122 = smul.addr %s16, 8
          %s123 = scalar_lea.hbm %s1, %s122
          %s125 = sshll.u32 %s116, 4
          %s126 = int_to_ptr.vmem [resolvable:$true] %s125
          %s127 = sshll.u32 %s123, 4
          %s128 = int_to_ptr.hbm [resolvable:$true] %s127
          %130 = dma.vmem_to_hbm [thread:$0]  %s126, 128, %s128, %s113
        $region32: #{tpu_custom_call.1} parent=23 // pred_fallthru
          _
      $region24: #{tpu_custom_call.1} parent=5 // pred_fallthru
        _
      %p131 = scmp.le.s32.totalorder 2, %s11
      // Predicated region
      $region33: #{tpu_custom_call.1} parent=5 // pred_check
        %p132 = pneg %p131
      $region34: #{tpu_custom_call.1} parent=5 // pred_check_branch
        %134 = sbr.rel (%p132) target = $region36
      $region35: #{tpu_custom_call.1} parent=5 // pred_region
        %s135 = ssub.s32 %s11, 2
        // Predicated region
        $region37: #{tpu_custom_call.1} parent=35 // pred_check
          %p136 = pneg %p61
        $region38: #{tpu_custom_call.1} parent=35 // pred_check_branch
          %138 = sbr.rel (%p136) target = $region40
        $region39: #{tpu_custom_call.1} parent=35 // pred_region
          %s139 = sand.u32 %s46, 1
          %s140 = scalar_lea.sflag [#allocation4], %s139
          %s141 = sand.u32 %s46, 1
          %s142 = smul.addr %s141, 8
          %s143 = scalar_lea.vmem [#allocation5], %s142
          %145 = dma.done %s140, 128
        $region40: #{tpu_custom_call.1} parent=35 // pred_fallthru
          _
      $region36: #{tpu_custom_call.1} parent=5 // pred_fallthru
        _
    $region6: #{tpu_custom_call.1} parent=1 // loop_footer
      %s15 = sadd.s32 1, %s11
    $region7: #{tpu_custom_call.1} parent=1 // loop_footer_branch
      %10 = sbr.rel target = $region3
    $region8: #{tpu_custom_call.1} parent=1 // loop_exit
      _
    %146 = vsyncpa [#allocation3], 1
    %s147 = scalar_lea.sflag [#allocation3], 1
    %148 = vsyncpa %s147, 1
    %149 = vsyncpa [#allocation4], 1
    %s150 = scalar_lea.sflag [#allocation4], 1
    %151 = vsyncpa %s150, 1

// kernel: _dti_forward_impl.1
$region0: #{_dti_forward_impl.1}
  #allocation0 [shape = 'u32[]', space=smem, size = 0x4, offset = 0x4, fixed_abs, tag = 'smem constant byte address 0x4 - core index']
  #allocation1 [shape = 'u32[72,128]{1,0:T(1,128)}', space=vmem, size = 0x9000, scoped, tag = 'internal scratch']
  #allocation2 [shape = 'f32[1,1]{1,0:T(1,128)S(1)}', space=vmem, size = 0x200, scoped, tag = 'scoped memory for _dti_forward_impl.1']
  %s0 = inlined_call_operand.hbm [shape: f32[2,512], index: 0, kind: input, shape index: {}]
  %s1 = inlined_call_operand.hbm [shape: f32[2,2560], index: 1, kind: input, shape index: {}]
  %s2 = inlined_call_operand.hbm [shape: bf16[512,256], index: 2, kind: input, shape index: {}]
  %s3 = inlined_call_operand.hbm [shape: f32[1,256], index: 3, kind: input, shape index: {}]
  %s4 = inlined_call_operand.hbm [shape: bf16[256,128], index: 4, kind: input, shape index: {}]
  %s5 = inlined_call_operand.hbm [shape: f32[1,128], index: 5, kind: input, shape index: {}]
  %s6 = inlined_call_operand.hbm [shape: bf16[128,1024], index: 6, kind: input, shape index: {}]
  %s7 = inlined_call_operand.hbm [shape: bf16[2560,1024], index: 7, kind: input, shape index: {}]
  %s8 = inlined_call_operand.hbm [shape: f32[1,1024], index: 8, kind: input, shape index: {}]
  %s9 = inlined_call_operand.hbm [shape: bf16[1024,512], index: 9, kind: input, shape index: {}]
  %s10 = inlined_call_operand.hbm [shape: f32[1,512], index: 10, kind: input, shape index: {}]
  %s11 = inlined_call_operand.hbm [shape: f32[1,512], index: 11, kind: input, shape index: {}]
  %s12 = inlined_call_operand.<no memory space> [shape: f32[1,1], index: 12, kind: input, shape index: {}]
  %s13 = inlined_call_operand.vmem [shape: f32[2,1], index: 13, kind: output, shape index: {}]
  %s14 = sld [smem:[#allocation0]]
  $region110: #{_dti_forward_impl.1} parent=0
    _
  %s16 = ssub.s32 1, %s14
  %s17 = scalar_select 0, %s16, %s14
  %v18 = vstv %s12
  %19 = vst [vmem:[#allocation2] sm:$0x1] %v18
  $region1: #{_dti_forward_impl.1} parent=0
    #allocation3 [shape = 'u8[4096]{0}', space=vmem, size = 0x1000, scoped, tag = 'input window, operand 0, single buffered']
    #allocation4 [shape = 's32[1]{0}', space=sflag, size = 0x4, scoped, tag = 'scoped memory for _dti_forward_impl.1']
    #allocation5 [shape = 'u8[20480]{0}', space=vmem, size = 0x5000, scoped, tag = 'input window, operand 1, single buffered']
    #allocation6 [shape = 's32[1]{0}', space=sflag, size = 0x4, scoped, tag = 'scoped memory for _dti_forward_impl.1']
    #allocation7 [shape = 'u8[262144]{0}', space=vmem, size = 0x40000, scoped, tag = 'input window, operand 2, single buffered']
    #allocation8 [shape = 'u8[1024]{0}', space=vmem, size = 0x400, scoped, tag = 'input window, operand 3, single buffered']
    #allocation9 [shape = 's32[1]{0}', space=sflag, size = 0x4, scoped, tag = 'scoped memory for _dti_forward_impl.1']
    #allocation10 [shape = 'u8[65536]{0}', space=vmem, size = 0x10000, scoped, tag = 'input window, operand 4, single buffered']
    #allocation11 [shape = 'u8[512]{0}', space=vmem, size = 0x400, scoped, tag = 'input window, operand 5, single buffered']
    #allocation12 [shape = 's32[1]{0}', space=sflag, size = 0x4, scoped, tag = 'scoped memory for _dti_forward_impl.1']
    #allocation13 [shape = 'u8[262144]{0}', space=vmem, size = 0x40000, scoped, tag = 'input window, operand 6, single buffered']
    #allocation14 [shape = 'u8[5242880]{0}', space=vmem, size = 0x500000, scoped, tag = 'input window, operand 7, single buffered']
    #allocation15 [shape = 's32[1]{0}', space=sflag, size = 0x4, scoped, tag = 'scoped memory for _dti_forward_impl.1']
    #allocation16 [shape = 'u8[4096]{0}', space=vmem, size = 0x1000, scoped, tag = 'input window, operand 8, single buffered']
    #allocation17 [shape = 'u8[1048576]{0}', space=vmem, size = 0x100000, scoped, tag = 'input window, operand 9, single buffered']
    #allocation18 [shape = 's32[1]{0}', space=sflag, size = 0x4, scoped, tag = 'scoped memory for _dti_forward_impl.1']
    #allocation19 [shape = 'u8[2048]{0}', space=vmem, size = 0x800, scoped, tag = 'input window, operand 10, single buffered']
    #allocation20 [shape = 'u8[2048]{0}', space=vmem, size = 0x800, scoped, tag = 'input window, operand 11, single buffered']
    #allocation21 [shape = 's32[1]{0}', space=sflag, size = 0x4, scoped, tag = 'scoped memory for _dti_forward_impl.1']
    %20 = vsyncpa [#allocation4], 0
    %21 = vsyncpa [#allocation6], 0
    %22 = vsyncpa [#allocation9], 0
    %23 = vsyncpa [#allocation12], 0
    %24 = vsyncpa [#allocation15], 0
    %25 = vsyncpa [#allocation18], 0
    %26 = vsyncpa [#allocation21], 0
    // Predicated region
    $region2: #{_dti_forward_impl.1} parent=1 // pred_check
      _
    $region3: #{_dti_forward_impl.1} parent=1 // pred_check_branch
      %28 = sbr.rel (0) target = $region5
    $region4: #{_dti_forward_impl.1} parent=1 // pred_region
      %30 = vsyncadd [#allocation4], 0
      %s32 = sshll.u32 %s0, 4
      %s33 = int_to_ptr.hbm [resolvable:$true] %s32
      %s34 = sshll.u32 [#allocation3], 4
      %s35 = int_to_ptr.vmem [resolvable:$true] %s34
      %37 = dma.hbm_to_vmem [thread:$0]  %s33, 128, %s35, [#allocation4]
    $region5: #{_dti_forward_impl.1} parent=1 // pred_fallthru
      _
    // Predicated region
    $region6: #{_dti_forward_impl.1} parent=1 // pred_check
      _
    $region7: #{_dti_forward_impl.1} parent=1 // pred_check_branch
      %39 = sbr.rel (0) target = $region9
    $region8: #{_dti_forward_impl.1} parent=1 // pred_region
      %41 = vsyncadd [#allocation6], 0
      %s43 = sshll.u32 %s1, 4
      %s44 = int_to_ptr.hbm [resolvable:$true] %s43
      %s45 = sshll.u32 [#allocation5], 4
      %s46 = int_to_ptr.vmem [resolvable:$true] %s45
      %48 = dma.hbm_to_vmem [thread:$0]  %s44, 640, %s46, [#allocation6]
    $region9: #{_dti_forward_impl.1} parent=1 // pred_fallthru
      _
    // Predicated region
    $region10: #{_dti_forward_impl.1} parent=1 // pred_check
      _
    $region11: #{_dti_forward_impl.1} parent=1 // pred_check_branch
      %50 = sbr.rel (0) target = $region13
    $region12: #{_dti_forward_impl.1} parent=1 // pred_region
      %52 = vsyncadd [#allocation6], 0
      %s53 = sshll.u32 %s2, 4
      %s54 = int_to_ptr.hbm [resolvable:$true] %s53
      %s55 = sshll.u32 [#allocation7], 4
      %s56 = int_to_ptr.vmem [resolvable:$true] %s55
      %61 = dma.hbm_to_vmem [thread:$0]  %s54, 8192, %s56, [#allocation6], 128, 128, 8
    $region13: #{_dti_forward_impl.1} parent=1 // pred_fallthru
      _
    // Predicated region
    $region14: #{_dti_forward_impl.1} parent=1 // pred_check
      _
    $region15: #{_dti_forward_impl.1} parent=1 // pred_check_branch
      %63 = sbr.rel (0) target = $region17
    $region16: #{_dti_forward_impl.1} parent=1 // pred_region
      %65 = vsyncadd [#allocation9], 0
      %s67 = sshll.u32 %s3, 4
      %s68 = int_to_ptr.hbm [resolvable:$true] %s67
      %s69 = sshll.u32 [#allocation8], 4
      %s70 = int_to_ptr.vmem [resolvable:$true] %s69
      %72 = dma.hbm_to_vmem [thread:$0]  %s68, 32, %s70, [#allocation9]
    $region17: #{_dti_forward_impl.1} parent=1 // pred_fallthru
      _
    // Predicated region
    $region18: #{_dti_forward_impl.1} parent=1 // pred_check
      _
    $region19: #{_dti_forward_impl.1} parent=1 // pred_check_branch
      %74 = sbr.rel (0) target = $region21
    $region20: #{_dti_forward_impl.1} parent=1 // pred_region
      %76 = vsyncadd [#allocation9], 0
      %s77 = sshll.u32 %s4, 4
      %s78 = int_to_ptr.hbm [resolvable:$true] %s77
      %s79 = sshll.u32 [#allocation10], 4
      %s80 = int_to_ptr.vmem [resolvable:$true] %s79
      %85 = dma.hbm_to_vmem [thread:$0]  %s78, 2048, %s80, [#allocation9], 64, 64, 4
    $region21: #{_dti_forward_impl.1} parent=1 // pred_fallthru
      _
    // Predicated region
    $region22: #{_dti_forward_impl.1} parent=1 // pred_check
      _
    $region23: #{_dti_forward_impl.1} parent=1 // pred_check_branch
      %87 = sbr.rel (0) target = $region25
    $region24: #{_dti_forward_impl.1} parent=1 // pred_region
      %89 = vsyncadd [#allocation12], 0
      %s91 = sshll.u32 %s5, 4
      %s92 = int_to_ptr.hbm [resolvable:$true] %s91
      %s93 = sshll.u32 [#allocation11], 4
      %s94 = int_to_ptr.vmem [resolvable:$true] %s93
      %96 = dma.hbm_to_vmem [thread:$0]  %s92, 16, %s94, [#allocation12]
    $region25: #{_dti_forward_impl.1} parent=1 // pred_fallthru
      _
    // Predicated region
    $region26: #{_dti_forward_impl.1} parent=1 // pred_check
      _
    $region27: #{_dti_forward_impl.1} parent=1 // pred_check_branch
      %98 = sbr.rel (0) target = $region29
    $region28: #{_dti_forward_impl.1} parent=1 // pred_region
      %100 = vsyncadd [#allocation12], 0
      %s101 = sshll.u32 %s6, 4
      %s102 = int_to_ptr.hbm [resolvable:$true] %s101
      %s103 = sshll.u32 [#allocation13], 4
      %s104 = int_to_ptr.vmem [resolvable:$true] %s103
      %109 = dma.hbm_to_vmem [thread:$0]  %s102, 8192, %s104, [#allocation12], 512, 512, 32
    $region29: #{_dti_forward_impl.1} parent=1 // pred_fallthru
      _
    // Predicated region
    $region30: #{_dti_forward_impl.1} parent=1 // pred_check
      _
    $region31: #{_dti_forward_impl.1} parent=1 // pred_check_branch
      %111 = sbr.rel (0) target = $region33
    $region32: #{_dti_forward_impl.1} parent=1 // pred_region
      %113 = vsyncadd [#allocation15], 0
      %s114 = sshll.u32 %s7, 4
      %s115 = int_to_ptr.hbm [resolvable:$true] %s114
      %s116 = sshll.u32 [#allocation14], 4
      %s117 = int_to_ptr.vmem [resolvable:$true] %s116
      %122 = dma.hbm_to_vmem [thread:$0]  %s115, 163840, %s117, [#allocation15], 512, 512, 32
    $region33: #{_dti_forward_impl.1} parent=1 // pred_fallthru
      _
    // Predicated region
    $region34: #{_dti_forward_impl.1} parent=1 // pred_check
      _
    $region35: #{_dti_forward_impl.1} parent=1 // pred_check_branch
      %124 = sbr.rel (0) target = $region37
    $region36: #{_dti_forward_impl.1} parent=1 // pred_region
      %126 = vsyncadd [#allocation15], 0
      %s128 = sshll.u32 %s8, 4
      %s129 = int_to_ptr.hbm [resolvable:$true] %s128
      %s130 = sshll.u32 [#allocation16], 4
      %s131 = int_to_ptr.vmem [resolvable:$true] %s130
      %133 = dma.hbm_to_vmem [thread:$0]  %s129, 128, %s131, [#allocation15]
    $region37: #{_dti_forward_impl.1} parent=1 // pred_fallthru
      _
    // Predicated region
    $region38: #{_dti_forward_impl.1} parent=1 // pred_check
      _
    $region39: #{_dti_forward_impl.1} parent=1 // pred_check_branch
      %135 = sbr.rel (0) target = $region41
    $region40: #{_dti_forward_impl.1} parent=1 // pred_region
      %137 = vsyncadd [#allocation18], 0
      %s138 = sshll.u32 %s9, 4
      %s139 = int_to_ptr.hbm [resolvable:$true] %s138
      %s140 = sshll.u32 [#allocation17], 4
      %s141 = int_to_ptr.vmem [resolvable:$true] %s140
      %146 = dma.hbm_to_vmem [thread:$0]  %s139, 32768, %s141, [#allocation18], 256, 256, 16
    $region41: #{_dti_forward_impl.1} parent=1 // pred_fallthru
      _
    // Predicated region
    $region42: #{_dti_forward_impl.1} parent=1 // pred_check
      _
    $region43: #{_dti_forward_impl.1} parent=1 // pred_check_branch
      %148 = sbr.rel (0) target = $region45
    $region44: #{_dti_forward_impl.1} parent=1 // pred_region
      %150 = vsyncadd [#allocation18], 0
      %s152 = sshll.u32 %s10, 4
      %s153 = int_to_ptr.hbm [resolvable:$true] %s152
      %s154 = sshll.u32 [#allocation19], 4
      %s155 = int_to_ptr.vmem [resolvable:$true] %s154
      %157 = dma.hbm_to_vmem [thread:$0]  %s153, 64, %s155, [#allocation18]
    $region45: #{_dti_forward_impl.1} parent=1 // pred_fallthru
      _
    // Predicated region
    $region46: #{_dti_forward_impl.1} parent=1 // pred_check
      _
    $region47: #{_dti_forward_impl.1} parent=1 // pred_check_branch
      %159 = sbr.rel (0) target = $region49
    $region48: #{_dti_forward_impl.1} parent=1 // pred_region
      %161 = vsyncadd [#allocation21], 0
      %s163 = sshll.u32 %s11, 4
      %s164 = int_to_ptr.hbm [resolvable:$true] %s163
      %s165 = sshll.u32 [#allocation20], 4
      %s166 = int_to_ptr.vmem [resolvable:$true] %s165
      %168 = dma.hbm_to_vmem [thread:$0]  %s164, 64, %s166, [#allocation21]
    $region49: #{_dti_forward_impl.1} parent=1 // pred_fallthru
      _
    // Predicated region
    $region50: #{_dti_forward_impl.1} parent=1 // pred_check
      _
    $region51: #{_dti_forward_impl.1} parent=1 // pred_check_branch
      %170 = sbr.rel (0) target = $region53
    $region52: #{_dti_forward_impl.1} parent=1 // pred_region
      _
    $region53: #{_dti_forward_impl.1} parent=1 // pred_fallthru
      _
    // Predicated region
    $region54: #{_dti_forward_impl.1} parent=1 // pred_check
      _
    $region55: #{_dti_forward_impl.1} parent=1 // pred_check_branch
      %172 = sbr.rel (0) target = $region57
    $region56: #{_dti_forward_impl.1} parent=1 // pred_region
      %174 = dma.done [#allocation4], 128
    $region57: #{_dti_forward_impl.1} parent=1 // pred_fallthru
      _
    // Predicated region
    $region58: #{_dti_forward_impl.1} parent=1 // pred_check
      _
    $region59: #{_dti_forward_impl.1} parent=1 // pred_check_branch
      %176 = sbr.rel (0) target = $region61
    $region60: #{_dti_forward_impl.1} parent=1 // pred_region
      %178 = dma.done [#allocation6], 640
    $region61: #{_dti_forward_impl.1} parent=1 // pred_fallthru
      _
    // Predicated region
    $region62: #{_dti_forward_impl.1} parent=1 // pred_check
      _
    $region63: #{_dti_forward_impl.1} parent=1 // pred_check_branch
      %180 = sbr.rel (0) target = $region65
    $region64: #{_dti_forward_impl.1} parent=1 // pred_region
      %182 = dma.done [#allocation6], 8192
    $region65: #{_dti_forward_impl.1} parent=1 // pred_fallthru
      _
    // Predicated region
    $region66: #{_dti_forward_impl.1} parent=1 // pred_check
      _
    $region67: #{_dti_forward_impl.1} parent=1 // pred_check_branch
      %184 = sbr.rel (0) target = $region69
    $region68: #{_dti_forward_impl.1} parent=1 // pred_region
      %186 = dma.done [#allocation9], 32
    $region69: #{_dti_forward_impl.1} parent=1 // pred_fallthru
      _
    // Predicated region
    $region70: #{_dti_forward_impl.1} parent=1 // pred_check
      _
    $region71: #{_dti_forward_impl.1} parent=1 // pred_check_branch
      %188 = sbr.rel (0) target = $region73
    $region72: #{_dti_forward_impl.1} parent=1 // pred_region
      %190 = dma.done [#allocation9], 2048
    $region73: #{_dti_forward_impl.1} parent=1 // pred_fallthru
      _
    // Predicated region
    $region74: #{_dti_forward_impl.1} parent=1 // pred_check
      _
    $region75: #{_dti_forward_impl.1} parent=1 // pred_check_branch
      %192 = sbr.rel (0) target = $region77
    $region76: #{_dti_forward_impl.1} parent=1 // pred_region
      %194 = dma.done [#allocation12], 16
    $region77: #{_dti_forward_impl.1} parent=1 // pred_fallthru
      _
    // Predicated region
    $region78: #{_dti_forward_impl.1} parent=1 // pred_check
      _
    $region79: #{_dti_forward_impl.1} parent=1 // pred_check_branch
      %196 = sbr.rel (0) target = $region81
    $region80: #{_dti_forward_impl.1} parent=1 // pred_region
      %198 = dma.done [#allocation12], 8192
    $region81: #{_dti_forward_impl.1} parent=1 // pred_fallthru
      _
    // Predicated region
    $region82: #{_dti_forward_impl.1} parent=1 // pred_check
      _
    $region83: #{_dti_forward_impl.1} parent=1 // pred_check_branch
      %200 = sbr.rel (0) target = $region85
    $region84: #{_dti_forward_impl.1} parent=1 // pred_region
      %202 = dma.done [#allocation15], 163840
    $region85: #{_dti_forward_impl.1} parent=1 // pred_fallthru
      _
    // Predicated region
    $region86: #{_dti_forward_impl.1} parent=1 // pred_check
      _
    $region87: #{_dti_forward_impl.1} parent=1 // pred_check_branch
      %204 = sbr.rel (0) target = $region89
    $region88: #{_dti_forward_impl.1} parent=1 // pred_region
      %206 = dma.done [#allocation15], 128
    $region89: #{_dti_forward_impl.1} parent=1 // pred_fallthru
      _
    // Predicated region
    $region90: #{_dti_forward_impl.1} parent=1 // pred_check
      _
    $region91: #{_dti_forward_impl.1} parent=1 // pred_check_branch
      %208 = sbr.rel (0) target = $region93
    $region92: #{_dti_forward_impl.1} parent=1 // pred_region
      %210 = dma.done [#allocation18], 32768
    $region93: #{_dti_forward_impl.1} parent=1 // pred_fallthru
      _
    // Predicated region
    $region94: #{_dti_forward_impl.1} parent=1 // pred_check
      _
    $region95: #{_dti_forward_impl.1} parent=1 // pred_check_branch
      %212 = sbr.rel (0) target = $region97
    $region96: #{_dti_forward_impl.1} parent=1 // pred_region
      %214 = dma.done [#allocation18], 64
    $region97: #{_dti_forward_impl.1} parent=1 // pred_fallthru
      _
    // Predicated region
    $region98: #{_dti_forward_impl.1} parent=1 // pred_check
      _
    $region99: #{_dti_forward_impl.1} parent=1 // pred_check_branch
      %216 = sbr.rel (0) target = $region101
    $region100: #{_dti_forward_impl.1} parent=1 // pred_region
      %218 = dma.done [#allocation21], 64
    $region101: #{_dti_forward_impl.1} parent=1 // pred_fallthru
      _
    %v219 = vld [vmem:[#allocation3] sm:$0xff]
    %221 = vst [vmem:[#allocation1] ss:$4 sm:$0xff] %v219
    %v222 = vld.sshfl [vmem:[#allocation1] sm:$0xff pattern:$0x73625140]
    %v223 = vld.sshfl [vmem:[#allocation1 + $0x8] sm:$0xff pattern:$0x73625140]
    %v224 = vld.sshfl [vmem:[#allocation1 + $0x10] sm:$0xff pattern:$0x73625140]
    %v225 = vld.sshfl [vmem:[#allocation1 + $0x18] sm:$0xff pattern:$0x73625140]
    %v230 = vpack.c.bf16 %v222, %v222
    %v231 = vpack.c.bf16 %v223, %v223
    %v232 = vpack.c.bf16 %v224, %v224
    %v233 = vpack.c.bf16 %v225, %v225
    %v234 = vld [vmem:[#allocation5] sm:$0xff]
    %v235 = vld [vmem:[#allocation5 + $0x8] sm:$0xff]
    %v236 = vld [vmem:[#allocation5 + $0x10] sm:$0xff]
    %v237 = vld [vmem:[#allocation5 + $0x18] sm:$0xff]
    %v238 = vld [vmem:[#allocation5 + $0x20] sm:$0xff]
    %244 = vst [vmem:[#allocation1] ss:$4 sm:$0xff] %v234
    %s245 = scalar_lea.vmem [#allocation1], 32
    %246 = vst [vmem:[%s245] ss:$4 sm:$0xff] %v235
    %v247 = vld.sshfl [vmem:[#allocation1] sm:$0xff pattern:$0x73625140]
    %v248 = vld.sshfl [vmem:[#allocation1 + $0x8] sm:$0xff pattern:$0x73625140]
    %v249 = vld.sshfl [vmem:[#allocation1 + $0x10] sm:$0xff pattern:$0x73625140]
    %v250 = vld.sshfl [vmem:[#allocation1 + $0x18] sm:$0xff pattern:$0x73625140]
    %v251 = vld.sshfl [vmem:[#allocation1 + $0x20] sm:$0xff pattern:$0x73625140]
    %v252 = vld.sshfl [vmem:[#allocation1 + $0x28] sm:$0xff pattern:$0x73625140]
    %v253 = vld.sshfl [vmem:[#allocation1 + $0x30] sm:$0xff pattern:$0x73625140]
    %v254 = vld.sshfl [vmem:[#allocation1 + $0x38] sm:$0xff pattern:$0x73625140]
    %255 = vst [vmem:[#allocation1] ss:$4 sm:$0xff] %v236
    %256 = vst [vmem:[%s245] ss:$4 sm:$0xff] %v237
    %v257 = vld.sshfl [vmem:[#allocation1] sm:$0xff pattern:$0x73625140]
    %v258 = vld.sshfl [vmem:[#allocation1 + $0x8] sm:$0xff pattern:$0x73625140]
    %v259 = vld.sshfl [vmem:[#allocation1 + $0x10] sm:$0xff pattern:$0x73625140]
    %v260 = vld.sshfl [vmem:[#allocation1 + $0x18] sm:$0xff pattern:$0x73625140]
    %v261 = vld.sshfl [vmem:[#allocation1 + $0x20] sm:$0xff pattern:$0x73625140]
    %v262 = vld.sshfl [vmem:[#allocation1 + $0x28] sm:$0xff pattern:$0x73625140]
    %v263 = vld.sshfl [vmem:[#allocation1 + $0x30] sm:$0xff pattern:$0x73625140]
    %v264 = vld.sshfl [vmem:[#allocation1 + $0x38] sm:$0xff pattern:$0x73625140]
    %265 = vst [vmem:[#allocation1] ss:$4 sm:$0xff] %v238
    %v266 = vld.sshfl [vmem:[#allocation1] sm:$0xff pattern:$0x73625140]
    %v267 = vld.sshfl [vmem:[#allocation1 + $0x8] sm:$0xff pattern:$0x73625140]
    %v268 = vld.sshfl [vmem:[#allocation1 + $0x10] sm:$0xff pattern:$0x73625140]
    %v269 = vld.sshfl [vmem:[#allocation1 + $0x18] sm:$0xff pattern:$0x73625140]
    %v290 = vpack.c.bf16 %v247, %v247
    %v291 = vpack.c.bf16 %v248, %v248
    %v292 = vpack.c.bf16 %v249, %v249
    %v293 = vpack.c.bf16 %v250, %v250
    %v294 = vpack.c.bf16 %v251, %v251
    %v295 = vpack.c.bf16 %v252, %v252
    %v296 = vpack.c.bf16 %v253, %v253
    %v297 = vpack.c.bf16 %v254, %v254
    %v298 = vpack.c.bf16 %v257, %v257
    %v299 = vpack.c.bf16 %v258, %v258
    %v300 = vpack.c.bf16 %v259, %v259
    %v301 = vpack.c.bf16 %v260, %v260
    %v302 = vpack.c.bf16 %v261, %v261
    %v303 = vpack.c.bf16 %v262, %v262
    %v304 = vpack.c.bf16 %v263, %v263
    %v305 = vpack.c.bf16 %v264, %v264
    %v306 = vpack.c.bf16 %v266, %v266
    %v307 = vpack.c.bf16 %v267, %v267
    %v308 = vpack.c.bf16 %v268, %v268
    %v309 = vpack.c.bf16 %v269, %v269
    %v310 = vld [vmem:[#allocation7] sm:$0xff]
    %v311 = vld [vmem:[#allocation7 + $0x8] sm:$0xff]
    %v312 = vld [vmem:[#allocation7 + $0x10] sm:$0xff]
    %v313 = vld [vmem:[#allocation7 + $0x18] sm:$0xff]
    %v314 = vld [vmem:[#allocation7 + $0x20] sm:$0xff]
    %v315 = vld [vmem:[#allocation7 + $0x28] sm:$0xff]
    %v316 = vld [vmem:[#allocation7 + $0x30] sm:$0xff]
    %v317 = vld [vmem:[#allocation7 + $0x38] sm:$0xff]
    %v318 = vld [vmem:[#allocation7 + $0x40] sm:$0xff]
    %v319 = vld [vmem:[#allocation7 + $0x48] sm:$0xff]
    %v320 = vld [vmem:[#allocation7 + $0x50] sm:$0xff]
    %v321 = vld [vmem:[#allocation7 + $0x58] sm:$0xff]
    %v322 = vld [vmem:[#allocation7 + $0x60] sm:$0xff]
    %v323 = vld [vmem:[#allocation7 + $0x68] sm:$0xff]
    %v324 = vld [vmem:[#allocation7 + $0x70] sm:$0xff]
    %v325 = vld [vmem:[#allocation7 + $0x78] sm:$0xff]
    %v326 = vld [vmem:[#allocation7 + $0x80] sm:$0xff]
    %v327 = vld [vmem:[#allocation7 + $0x88] sm:$0xff]
    %v328 = vld [vmem:[#allocation7 + $0x90] sm:$0xff]
    %v329 = vld [vmem:[#allocation7 + $0x98] sm:$0xff]
    %v330 = vld [vmem:[#allocation7 + $0xa0] sm:$0xff]
    %v331 = vld [vmem:[#allocation7 + $0xa8] sm:$0xff]
    %v332 = vld [vmem:[#allocation7 + $0xb0] sm:$0xff]
    %v333 = vld [vmem:[#allocation7 + $0xb8] sm:$0xff]
    %v334 = vld [vmem:[#allocation7 + $0xc0] sm:$0xff]
    %v335 = vld [vmem:[#allocation7 + $0xc8] sm:$0xff]
    %v336 = vld [vmem:[#allocation7 + $0xd0] sm:$0xff]
    %v337 = vld [vmem:[#allocation7 + $0xd8] sm:$0xff]
    %v338 = vld [vmem:[#allocation7 + $0xe0] sm:$0xff]
    %v339 = vld [vmem:[#allocation7 + $0xe8] sm:$0xff]
    %v340 = vld [vmem:[#allocation7 + $0xf0] sm:$0xff]
    %v341 = vld [vmem:[#allocation7 + $0xf8] sm:$0xff]
    %v342 = vld [vmem:[#allocation7 + $0x100] sm:$0xff]
    %v343 = vld [vmem:[#allocation7 + $0x108] sm:$0xff]
    %v344 = vld [vmem:[#allocation7 + $0x110] sm:$0xff]
    %v345 = vld [vmem:[#allocation7 + $0x118] sm:$0xff]
    %v346 = vld [vmem:[#allocation7 + $0x120] sm:$0xff]
    %v347 = vld [vmem:[#allocation7 + $0x128] sm:$0xff]
    %v348 = vld [vmem:[#allocation7 + $0x130] sm:$0xff]
    %v349 = vld [vmem:[#allocation7 + $0x138] sm:$0xff]
    %v350 = vld [vmem:[#allocation7 + $0x140] sm:$0xff]
    %v351 = vld [vmem:[#allocation7 + $0x148] sm:$0xff]
    %v352 = vld [vmem:[#allocation7 + $0x150] sm:$0xff]
    %v353 = vld [vmem:[#allocation7 + $0x158] sm:$0xff]
    %v354 = vld [vmem:[#allocation7 + $0x160] sm:$0xff]
    %v355 = vld [vmem:[#allocation7 + $0x168] sm:$0xff]
    %v356 = vld [vmem:[#allocation7 + $0x170] sm:$0xff]
    %v357 = vld [vmem:[#allocation7 + $0x178] sm:$0xff]
    %v358 = vld [vmem:[#allocation7 + $0x180] sm:$0xff]
    %v359 = vld [vmem:[#allocation7 + $0x188] sm:$0xff]
    %v360 = vld [vmem:[#allocation7 + $0x190] sm:$0xff]
    %v361 = vld [vmem:[#allocation7 + $0x198] sm:$0xff]
    %v362 = vld [vmem:[#allocation7 + $0x1a0] sm:$0xff]
    %v363 = vld [vmem:[#allocation7 + $0x1a8] sm:$0xff]
    %v364 = vld [vmem:[#allocation7 + $0x1b0] sm:$0xff]
    %v365 = vld [vmem:[#allocation7 + $0x1b8] sm:$0xff]
    %v366 = vld [vmem:[#allocation7 + $0x1c0] sm:$0xff]
    %v367 = vld [vmem:[#allocation7 + $0x1c8] sm:$0xff]
    %v368 = vld [vmem:[#allocation7 + $0x1d0] sm:$0xff]
    %v369 = vld [vmem:[#allocation7 + $0x1d8] sm:$0xff]
    %v370 = vld [vmem:[#allocation7 + $0x1e0] sm:$0xff]
    %v371 = vld [vmem:[#allocation7 + $0x1e8] sm:$0xff]
    %v372 = vld [vmem:[#allocation7 + $0x1f0] sm:$0xff]
    %v373 = vld [vmem:[#allocation7 + $0x1f8] sm:$0xff]
    %v374 = vld [vmem:[#allocation8] sm:$0x3]
    %v376 = vperm.slane %v374, 0
    %v377 = vperm.slane %v374, 1
    %v444 = vunpack.c.l.b16 %v310
    %v445 = vunpack.c.h.b16 %v310
    %v446 = vunpack.c.l.b16 %v311
    %v447 = vunpack.c.h.b16 %v311
    %v448 = vunpack.c.l.b16 %v312
    %v449 = vunpack.c.h.b16 %v312
    %v450 = vunpack.c.l.b16 %v313
    %v451 = vunpack.c.h.b16 %v313
    %v452 = vunpack.c.l.b16 %v314
    %v453 = vunpack.c.h.b16 %v314
    %v454 = vunpack.c.l.b16 %v315
    %v455 = vunpack.c.h.b16 %v315
    %v456 = vunpack.c.l.b16 %v316
    %v457 = vunpack.c.h.b16 %v316
    %v458 = vunpack.c.l.b16 %v317
    %v459 = vunpack.c.h.b16 %v317
    %v460 = vunpack.c.l.b16 %v318
    %v461 = vunpack.c.h.b16 %v318
    %v462 = vunpack.c.l.b16 %v319
    %v463 = vunpack.c.h.b16 %v319
    %v464 = vunpack.c.l.b16 %v320
    %v465 = vunpack.c.h.b16 %v320
    %v466 = vunpack.c.l.b16 %v321
    %v467 = vunpack.c.h.b16 %v321
    %v468 = vunpack.c.l.b16 %v322
    %v469 = vunpack.c.h.b16 %v322
    %v470 = vunpack.c.l.b16 %v323
    %v471 = vunpack.c.h.b16 %v323
    %v472 = vunpack.c.l.b16 %v324
    %v473 = vunpack.c.h.b16 %v324
    %v474 = vunpack.c.l.b16 %v325
    %v475 = vunpack.c.h.b16 %v325
    %v476 = vunpack.c.l.b16 %v326
    %v477 = vunpack.c.h.b16 %v326
    %v478 = vunpack.c.l.b16 %v327
    %v479 = vunpack.c.h.b16 %v327
    %v480 = vunpack.c.l.b16 %v328
    %v481 = vunpack.c.h.b16 %v328
    %v482 = vunpack.c.l.b16 %v329
    %v483 = vunpack.c.h.b16 %v329
    %v484 = vunpack.c.l.b16 %v330
    %v485 = vunpack.c.h.b16 %v330
    %v486 = vunpack.c.l.b16 %v331
    %v487 = vunpack.c.h.b16 %v331
    %v488 = vunpack.c.l.b16 %v332
    %v489 = vunpack.c.h.b16 %v332
    %v490 = vunpack.c.l.b16 %v333
    %v491 = vunpack.c.h.b16 %v333
    %v492 = vunpack.c.l.b16 %v334
    %v493 = vunpack.c.h.b16 %v334
    %v494 = vunpack.c.l.b16 %v335
    %v495 = vunpack.c.h.b16 %v335
    %v496 = vunpack.c.l.b16 %v336
    %v497 = vunpack.c.h.b16 %v336
    %v498 = vunpack.c.l.b16 %v337
    %v499 = vunpack.c.h.b16 %v337
    %v500 = vunpack.c.l.b16 %v338
    %v501 = vunpack.c.h.b16 %v338
    %v502 = vunpack.c.l.b16 %v339
    %v503 = vunpack.c.h.b16 %v339
    %v504 = vunpack.c.l.b16 %v340
    %v505 = vunpack.c.h.b16 %v340
    %v506 = vunpack.c.l.b16 %v341
    %v507 = vunpack.c.h.b16 %v341
    %v508 = vunpack.c.l.b16 %v342
    %v509 = vunpack.c.h.b16 %v342
    %v510 = vunpack.c.l.b16 %v343
    %v511 = vunpack.c.h.b16 %v343
    %v512 = vunpack.c.l.b16 %v344
    %v513 = vunpack.c.h.b16 %v344
    %v514 = vunpack.c.l.b16 %v345
    %v515 = vunpack.c.h.b16 %v345
    %v516 = vunpack.c.l.b16 %v346
    %v517 = vunpack.c.h.b16 %v346
    %v518 = vunpack.c.l.b16 %v347
    %v519 = vunpack.c.h.b16 %v347
    %v520 = vunpack.c.l.b16 %v348
    %v521 = vunpack.c.h.b16 %v348
    %v522 = vunpack.c.l.b16 %v349
    %v523 = vunpack.c.h.b16 %v349
    %v524 = vunpack.c.l.b16 %v350
    %v525 = vunpack.c.h.b16 %v350
    %v526 = vunpack.c.l.b16 %v351
    %v527 = vunpack.c.h.b16 %v351
    %v528 = vunpack.c.l.b16 %v352
    %v529 = vunpack.c.h.b16 %v352
    %v530 = vunpack.c.l.b16 %v353
    %v531 = vunpack.c.h.b16 %v353
    %v532 = vunpack.c.l.b16 %v354
    %v533 = vunpack.c.h.b16 %v354
    %v534 = vunpack.c.l.b16 %v355
    %v535 = vunpack.c.h.b16 %v355
    %v536 = vunpack.c.l.b16 %v356
    %v537 = vunpack.c.h.b16 %v356
    %v538 = vunpack.c.l.b16 %v357
    %v539 = vunpack.c.h.b16 %v357
    %v540 = vunpack.c.l.b16 %v358
    %v541 = vunpack.c.h.b16 %v358
    %v542 = vunpack.c.l.b16 %v359
    %v543 = vunpack.c.h.b16 %v359
    %v544 = vunpack.c.l.b16 %v360
    %v545 = vunpack.c.h.b16 %v360
    %v546 = vunpack.c.l.b16 %v361
    %v547 = vunpack.c.h.b16 %v361
    %v548 = vunpack.c.l.b16 %v362
    %v549 = vunpack.c.h.b16 %v362
    %v550 = vunpack.c.l.b16 %v363
    %v551 = vunpack.c.h.b16 %v363
    %v552 = vunpack.c.l.b16 %v364
    %v553 = vunpack.c.h.b16 %v364
    %v554 = vunpack.c.l.b16 %v365
    %v555 = vunpack.c.h.b16 %v365
    %v556 = vunpack.c.l.b16 %v366
    %v557 = vunpack.c.h.b16 %v366
    %v558 = vunpack.c.l.b16 %v367
    %v559 = vunpack.c.h.b16 %v367
    %v560 = vunpack.c.l.b16 %v368
    %v561 = vunpack.c.h.b16 %v368
    %v562 = vunpack.c.l.b16 %v369
    %v563 = vunpack.c.h.b16 %v369
    %v564 = vunpack.c.l.b16 %v370
    %v565 = vunpack.c.h.b16 %v370
    %v566 = vunpack.c.l.b16 %v371
    %v567 = vunpack.c.h.b16 %v371
    %v568 = vunpack.c.l.b16 %v372
    %v569 = vunpack.c.h.b16 %v372
    %v570 = vunpack.c.l.b16 %v373
    %v571 = vunpack.c.h.b16 %v373
    %v572 = vpack.c.b16 %v446, %v444
    %v573 = vpack.c.b16 %v447, %v445
    %v574 = vpack.c.b16 %v450, %v448
    %v575 = vpack.c.b16 %v451, %v449
    %v576 = vpack.c.b16 %v454, %v452
    %v577 = vpack.c.b16 %v455, %v453
    %v578 = vpack.c.b16 %v458, %v456
    %v579 = vpack.c.b16 %v459, %v457
    %v580 = vpack.c.b16 %v462, %v460
    %v581 = vpack.c.b16 %v463, %v461
    %v582 = vpack.c.b16 %v466, %v464
    %v583 = vpack.c.b16 %v467, %v465
    %v584 = vpack.c.b16 %v470, %v468
    %v585 = vpack.c.b16 %v471, %v469
    %v586 = vpack.c.b16 %v474, %v472
    %v587 = vpack.c.b16 %v475, %v473
    %v588 = vpack.c.b16 %v478, %v476
    %v589 = vpack.c.b16 %v479, %v477
    %v590 = vpack.c.b16 %v482, %v480
    %v591 = vpack.c.b16 %v483, %v481
    %v592 = vpack.c.b16 %v486, %v484
    %v593 = vpack.c.b16 %v487, %v485
    %v594 = vpack.c.b16 %v490, %v488
    %v595 = vpack.c.b16 %v491, %v489
    %v596 = vpack.c.b16 %v494, %v492
    %v597 = vpack.c.b16 %v495, %v493
    %v598 = vpack.c.b16 %v498, %v496
    %v599 = vpack.c.b16 %v499, %v497
    %v600 = vpack.c.b16 %v502, %v500
    %v601 = vpack.c.b16 %v503, %v501
    %v602 = vpack.c.b16 %v506, %v504
    %v603 = vpack.c.b16 %v507, %v505
    %v604 = vpack.c.b16 %v510, %v508
    %v605 = vpack.c.b16 %v511, %v509
    %v606 = vpack.c.b16 %v514, %v512
    %v607 = vpack.c.b16 %v515, %v513
    %v608 = vpack.c.b16 %v518, %v516
    %v609 = vpack.c.b16 %v519, %v517
    %v610 = vpack.c.b16 %v522, %v520
    %v611 = vpack.c.b16 %v523, %v521
    %v612 = vpack.c.b16 %v526, %v524
    %v613 = vpack.c.b16 %v527, %v525
    %v614 = vpack.c.b16 %v530, %v528
    %v615 = vpack.c.b16 %v531, %v529
    %v616 = vpack.c.b16 %v534, %v532
    %v617 = vpack.c.b16 %v535, %v533
    %v618 = vpack.c.b16 %v538, %v536
    %v619 = vpack.c.b16 %v539, %v537
    %v620 = vpack.c.b16 %v542, %v540
    %v621 = vpack.c.b16 %v543, %v541
    %v622 = vpack.c.b16 %v546, %v544
    %v623 = vpack.c.b16 %v547, %v545
    %v624 = vpack.c.b16 %v550, %v548
    %v625 = vpack.c.b16 %v551, %v549
    %v626 = vpack.c.b16 %v554, %v552
    %v627 = vpack.c.b16 %v555, %v553
    %v628 = vpack.c.b16 %v558, %v556
    %v629 = vpack.c.b16 %v559, %v557
    %v630 = vpack.c.b16 %v562, %v560
    %v631 = vpack.c.b16 %v563, %v561
    %v632 = vpack.c.b16 %v566, %v564
    %v633 = vpack.c.b16 %v567, %v565
    %v634 = vpack.c.b16 %v570, %v568
    %v635 = vpack.c.b16 %v571, %v569
    %700 = vmatpush.bf16.msra.mxu0 %v586
    %701 = vmatpush.bf16.msra.mxu0 %v584
    %702 = vmatpush.bf16.msra.mxu0 %v582
    %703 = vmatpush.bf16.msra.mxu0 %v580
    %704 = vmatpush.bf16.msra.mxu0 %v578
    %705 = vmatpush.bf16.msra.mxu0 %v576
    %706 = vmatpush.bf16.msra.mxu0 %v574
    %707 = vmatpush.bf16.msra.mxu0 %v572
    %708 = vmatmul.bf16.gmra.mxu0 %v230
    %v709 = vpop.f32.mrf.mxu0
    %v710 = vadd.f32 %v376, %v709
    %v711 = vpop.f32.mrf.mxu0
    %712 = vdwg.mxu0
    %713 = vmatpush.bf16.msra.mxu0 %v602
    %714 = vmatpush.bf16.msra.mxu0 %v600
    %715 = vmatpush.bf16.msra.mxu0 %v598
    %716 = vmatpush.bf16.msra.mxu0 %v596
    %717 = vmatpush.bf16.msra.mxu0 %v594
    %718 = vmatpush.bf16.msra.mxu0 %v592
    %719 = vmatpush.bf16.msra.mxu0 %v590
    %720 = vmatpush.bf16.msra.mxu0 %v588
    %721 = vmatmul.bf16.gmra.mxu0 %v231
    %v722 = vpop.f32.mrf.mxu0
    %v723 = vadd.f32 %v710, %v722
    %v724 = vpop.f32.mrf.mxu0
    %725 = vdwg.mxu0
    %726 = vmatpush.bf16.msra.mxu0 %v618
    %727 = vmatpush.bf16.msra.mxu0 %v616
    %728 = vmatpush.bf16.msra.mxu0 %v614
    %729 = vmatpush.bf16.msra.mxu0 %v612
    %730 = vmatpush.bf16.msra.mxu0 %v610
    %731 = vmatpush.bf16.msra.mxu0 %v608
    %732 = vmatpush.bf16.msra.mxu0 %v606
    %733 = vmatpush.bf16.msra.mxu0 %v604
    %734 = vmatmul.bf16.gmra.mxu0 %v232
    %v735 = vpop.f32.mrf.mxu0
    %v736 = vadd.f32 %v723, %v735
    %v737 = vpop.f32.mrf.mxu0
    %738 = vdwg.mxu0
    %739 = vmatpush.bf16.msra.mxu0 %v634
    %740 = vmatpush.bf16.msra.mxu0 %v632
    %741 = vmatpush.bf16.msra.mxu0 %v630
    %742 = vmatpush.bf16.msra.mxu0 %v628
    %743 = vmatpush.bf16.msra.mxu0 %v626
    %744 = vmatpush.bf16.msra.mxu0 %v624
    %745 = vmatpush.bf16.msra.mxu0 %v622
    %746 = vmatpush.bf16.msra.mxu0 %v620
    %747 = vmatmul.bf16.gmra.mxu0 %v233
    %v748 = vpop.f32.mrf.mxu0
    %v749 = vadd.f32 %v736, %v748
    %v750 = vpop.f32.mrf.mxu0
    %751 = vdwg.mxu0
    %752 = vmatpush.bf16.msra.mxu0 %v587
    %753 = vmatpush.bf16.msra.mxu0 %v585
    %754 = vmatpush.bf16.msra.mxu0 %v583
    %755 = vmatpush.bf16.msra.mxu0 %v581
    %756 = vmatpush.bf16.msra.mxu0 %v579
    %757 = vmatpush.bf16.msra.mxu0 %v577
    %758 = vmatpush.bf16.msra.mxu0 %v575
    %759 = vmatpush.bf16.msra.mxu0 %v573
    %760 = vmatmul.bf16.gmra.mxu0 %v230
    %v761 = vpop.f32.mrf.mxu0
    %v762 = vadd.f32 %v377, %v761
    %v763 = vpop.f32.mrf.mxu0
    %764 = vdwg.mxu0
    %765 = vmatpush.bf16.msra.mxu0 %v603
    %766 = vmatpush.bf16.msra.mxu0 %v601
    %767 = vmatpush.bf16.msra.mxu0 %v599
    %768 = vmatpush.bf16.msra.mxu0 %v597
    %769 = vmatpush.bf16.msra.mxu0 %v595
    %770 = vmatpush.bf16.msra.mxu0 %v593
    %771 = vmatpush.bf16.msra.mxu0 %v591
    %772 = vmatpush.bf16.msra.mxu0 %v589
    %773 = vmatmul.bf16.gmra.mxu0 %v231
    %v774 = vpop.f32.mrf.mxu0
    %v775 = vadd.f32 %v762, %v774
    %v776 = vpop.f32.mrf.mxu0
    %777 = vdwg.mxu0
    %778 = vmatpush.bf16.msra.mxu0 %v619
    %779 = vmatpush.bf16.msra.mxu0 %v617
    %780 = vmatpush.bf16.msra.mxu0 %v615
    %781 = vmatpush.bf16.msra.mxu0 %v613
    %782 = vmatpush.bf16.msra.mxu0 %v611
    %783 = vmatpush.bf16.msra.mxu0 %v609
    %784 = vmatpush.bf16.msra.mxu0 %v607
    %785 = vmatpush.bf16.msra.mxu0 %v605
    %786 = vmatmul.bf16.gmra.mxu0 %v232
    %v787 = vpop.f32.mrf.mxu0
    %v788 = vadd.f32 %v775, %v787
    %v789 = vpop.f32.mrf.mxu0
    %790 = vdwg.mxu0
    %791 = vmatpush.bf16.msra.mxu0 %v635
    %792 = vmatpush.bf16.msra.mxu0 %v633
    %793 = vmatpush.bf16.msra.mxu0 %v631
    %794 = vmatpush.bf16.msra.mxu0 %v629
    %795 = vmatpush.bf16.msra.mxu0 %v627
    %796 = vmatpush.bf16.msra.mxu0 %v625
    %797 = vmatpush.bf16.msra.mxu0 %v623
    %798 = vmatpush.bf16.msra.mxu0 %v621
    %799 = vmatmul.bf16.gmra.mxu0 %v233
    %v800 = vpop.f32.mrf.mxu0
    %v801 = vadd.f32 %v788, %v800
    %v802 = vpop.f32.mrf.mxu0
    %803 = vdwg.mxu0
    %v804 = vmax.f32 %v749, 0.0
    %v805 = vmax.f32 %v801, 0.0
    %v806 = vpack.c.bf16 %v804, %v804
    %v807 = vpack.c.bf16 %v805, %v805
    %v808 = vld [vmem:[#allocation10] sm:$0xf]
    %v809 = vld [vmem:[#allocation10 + $0x4] sm:$0xf]
    %v810 = vld [vmem:[#allocation10 + $0x8] sm:$0xf]
    %v811 = vld [vmem:[#allocation10 + $0xc] sm:$0xf]
    %v812 = vld [vmem:[#allocation10 + $0x10] sm:$0xf]
    %v813 = vld [vmem:[#allocation10 + $0x14] sm:$0xf]
    %v814 = vld [vmem:[#allocation10 + $0x18] sm:$0xf]
    %v815 = vld [vmem:[#allocation10 + $0x1c] sm:$0xf]
    %v816 = vld [vmem:[#allocation10 + $0x20] sm:$0xf]
    %v817 = vld [vmem:[#allocation10 + $0x24] sm:$0xf]
    %v818 = vld [vmem:[#allocation10 + $0x28] sm:$0xf]
    %v819 = vld [vmem:[#allocation10 + $0x2c] sm:$0xf]
    %v820 = vld [vmem:[#allocation10 + $0x30] sm:$0xf]
    %v821 = vld [vmem:[#allocation10 + $0x34] sm:$0xf]
    %v822 = vld [vmem:[#allocation10 + $0x38] sm:$0xf]
    %v823 = vld [vmem:[#allocation10 + $0x3c] sm:$0xf]
    %v824 = vld [vmem:[#allocation10 + $0x40] sm:$0xf]
    %v825 = vld [vmem:[#allocation10 + $0x44] sm:$0xf]
    %v826 = vld [vmem:[#allocation10 + $0x48] sm:$0xf]
    %v827 = vld [vmem:[#allocation10 + $0x4c] sm:$0xf]
    %v828 = vld [vmem:[#allocation10 + $0x50] sm:$0xf]
    %v829 = vld [vmem:[#allocation10 + $0x54] sm:$0xf]
    %v830 = vld [vmem:[#allocation10 + $0x58] sm:$0xf]
    %v831 = vld [vmem:[#allocation10 + $0x5c] sm:$0xf]
    %v832 = vld [vmem:[#allocation10 + $0x60] sm:$0xf]
    %v833 = vld [vmem:[#allocation10 + $0x64] sm:$0xf]
    %v834 = vld [vmem:[#allocation10 + $0x68] sm:$0xf]
    %v835 = vld [vmem:[#allocation10 + $0x6c] sm:$0xf]
    %v836 = vld [vmem:[#allocation10 + $0x70] sm:$0xf]
    %v837 = vld [vmem:[#allocation10 + $0x74] sm:$0xf]
    %v838 = vld [vmem:[#allocation10 + $0x78] sm:$0xf]
    %v839 = vld [vmem:[#allocation10 + $0x7c] sm:$0xf]
    %v840 = vld [vmem:[#allocation11] sm:$0x1]
    %v842 = vperm.slane %v840, 0
    %v876 = vunpack.c.l.b16 %v808
    %v877 = vunpack.c.l.b16 %v809
    %v878 = vunpack.c.l.b16 %v810
    %v879 = vunpack.c.l.b16 %v811
    %v880 = vunpack.c.l.b16 %v812
    %v881 = vunpack.c.l.b16 %v813
    %v882 = vunpack.c.l.b16 %v814
    %v883 = vunpack.c.l.b16 %v815
    %v884 = vunpack.c.l.b16 %v816
    %v885 = vunpack.c.l.b16 %v817
    %v886 = vunpack.c.l.b16 %v818
    %v887 = vunpack.c.l.b16 %v819
    %v888 = vunpack.c.l.b16 %v820
    %v889 = vunpack.c.l.b16 %v821
    %v890 = vunpack.c.l.b16 %v822
    %v891 = vunpack.c.l.b16 %v823
    %v892 = vunpack.c.l.b16 %v824
    %v893 = vunpack.c.l.b16 %v825
    %v894 = vunpack.c.l.b16 %v826
    %v895 = vunpack.c.l.b16 %v827
    %v896 = vunpack.c.l.b16 %v828
    %v897 = vunpack.c.l.b16 %v829
    %v898 = vunpack.c.l.b16 %v830
    %v899 = vunpack.c.l.b16 %v831
    %v900 = vunpack.c.l.b16 %v832
    %v901 = vunpack.c.l.b16 %v833
    %v902 = vunpack.c.l.b16 %v834
    %v903 = vunpack.c.l.b16 %v835
    %v904 = vunpack.c.l.b16 %v836
    %v905 = vunpack.c.l.b16 %v837
    %v906 = vunpack.c.l.b16 %v838
    %v907 = vunpack.c.l.b16 %v839
    %v908 = vpack.c.b16 %v877, %v876
    %v909 = vpack.c.b16 %v879, %v878
    %v910 = vpack.c.b16 %v881, %v880
    %v911 = vpack.c.b16 %v883, %v882
    %v912 = vpack.c.b16 %v885, %v884
    %v913 = vpack.c.b16 %v887, %v886
    %v914 = vpack.c.b16 %v889, %v888
    %v915 = vpack.c.b16 %v891, %v890
    %v916 = vpack.c.b16 %v893, %v892
    %v917 = vpack.c.b16 %v895, %v894
    %v918 = vpack.c.b16 %v897, %v896
    %v919 = vpack.c.b16 %v899, %v898
    %v920 = vpack.c.b16 %v901, %v900
    %v921 = vpack.c.b16 %v903, %v902
    %v922 = vpack.c.b16 %v905, %v904
    %v923 = vpack.c.b16 %v907, %v906
    %940 = vmatpush.bf16.msra.mxu0 %v915
    %941 = vmatpush.bf16.msra.mxu0 %v914
    %942 = vmatpush.bf16.msra.mxu0 %v913
    %943 = vmatpush.bf16.msra.mxu0 %v912
    %944 = vmatpush.bf16.msra.mxu0 %v911
    %945 = vmatpush.bf16.msra.mxu0 %v910
    %946 = vmatpush.bf16.msra.mxu0 %v909
    %947 = vmatpush.bf16.msra.mxu0 %v908
    %948 = vmatmul.bf16.gmra.mxu0 %v806
    %v949 = vpop.f32.mrf.mxu0
    %v950 = vadd.f32 %v842, %v949
    %v951 = vpop.f32.mrf.mxu0
    %952 = vdwg.mxu0
    %953 = vmatpush.bf16.msra.mxu0 %v923
    %954 = vmatpush.bf16.msra.mxu0 %v922
    %955 = vmatpush.bf16.msra.mxu0 %v921
    %956 = vmatpush.bf16.msra.mxu0 %v920
    %957 = vmatpush.bf16.msra.mxu0 %v919
    %958 = vmatpush.bf16.msra.mxu0 %v918
    %959 = vmatpush.bf16.msra.mxu0 %v917
    %960 = vmatpush.bf16.msra.mxu0 %v916
    %961 = vmatmul.bf16.gmra.mxu0 %v807
    %v962 = vpop.f32.mrf.mxu0
    %v963 = vadd.f32 %v950, %v962
    %v964 = vpop.f32.mrf.mxu0
    %965 = vdwg.mxu0
    %v966 = vmax.f32 %v963, 0.0
    %v967 = vpack.c.bf16 %v966, %v966
    %v968 = vld [vmem:[#allocation13] sm:$0xff]
    %v969 = vld [vmem:[#allocation13 + $0x8] sm:$0xff]
    %v970 = vld [vmem:[#allocation13 + $0x10] sm:$0xff]
    %v971 = vld [vmem:[#allocation13 + $0x18] sm:$0xff]
    %v972 = vld [vmem:[#allocation13 + $0x20] sm:$0xff]
    %v973 = vld [vmem:[#allocation13 + $0x28] sm:$0xff]
    %v974 = vld [vmem:[#allocation13 + $0x30] sm:$0xff]
    %v975 = vld [vmem:[#allocation13 + $0x38] sm:$0xff]
    %v976 = vld [vmem:[#allocation13 + $0x40] sm:$0xff]
    %v977 = vld [vmem:[#allocation13 + $0x48] sm:$0xff]
    %v978 = vld [vmem:[#allocation13 + $0x50] sm:$0xff]
    %v979 = vld [vmem:[#allocation13 + $0x58] sm:$0xff]
    %v980 = vld [vmem:[#allocation13 + $0x60] sm:$0xff]
    %v981 = vld [vmem:[#allocation13 + $0x68] sm:$0xff]
    %v982 = vld [vmem:[#allocation13 + $0x70] sm:$0xff]
    %v983 = vld [vmem:[#allocation13 + $0x78] sm:$0xff]
    %v984 = vld [vmem:[#allocation13 + $0x80] sm:$0xff]
    %v985 = vld [vmem:[#allocation13 + $0x88] sm:$0xff]
    %v986 = vld [vmem:[#allocation13 + $0x90] sm:$0xff]
    %v987 = vld [vmem:[#allocation13 + $0x98] sm:$0xff]
    %v988 = vld [vmem:[#allocation13 + $0xa0] sm:$0xff]
    %v989 = vld [vmem:[#allocation13 + $0xa8] sm:$0xff]
    %v990 = vld [vmem:[#allocation13 + $0xb0] sm:$0xff]
    %v991 = vld [vmem:[#allocation13 + $0xb8] sm:$0xff]
    %v992 = vld [vmem:[#allocation13 + $0xc0] sm:$0xff]
    %v993 = vld [vmem:[#allocation13 + $0xc8] sm:$0xff]
    %v994 = vld [vmem:[#allocation13 + $0xd0] sm:$0xff]
    %v995 = vld [vmem:[#allocation13 + $0xd8] sm:$0xff]
    %v996 = vld [vmem:[#allocation13 + $0xe0] sm:$0xff]
    %v997 = vld [vmem:[#allocation13 + $0xe8] sm:$0xff]
    %v998 = vld [vmem:[#allocation13 + $0xf0] sm:$0xff]
    %v999 = vld [vmem:[#allocation13 + $0xf8] sm:$0xff]
    %v1000 = vld [vmem:[#allocation13 + $0x100] sm:$0xff]
    %v1001 = vld [vmem:[#allocation13 + $0x108] sm:$0xff]
    %v1002 = vld [vmem:[#allocation13 + $0x110] sm:$0xff]
    %v1003 = vld [vmem:[#allocation13 + $0x118] sm:$0xff]
    %v1004 = vld [vmem:[#allocation13 + $0x120] sm:$0xff]
    %v1005 = vld [vmem:[#allocation13 + $0x128] sm:$0xff]
    %v1006 = vld [vmem:[#allocation13 + $0x130] sm:$0xff]
    %v1007 = vld [vmem:[#allocation13 + $0x138] sm:$0xff]
    %v1008 = vld [vmem:[#allocation13 + $0x140] sm:$0xff]
    %v1009 = vld [vmem:[#allocation13 + $0x148] sm:$0xff]
    %v1010 = vld [vmem:[#allocation13 + $0x150] sm:$0xff]
    %v1011 = vld [vmem:[#allocation13 + $0x158] sm:$0xff]
    %v1012 = vld [vmem:[#allocation13 + $0x160] sm:$0xff]
    %v1013 = vld [vmem:[#allocation13 + $0x168] sm:$0xff]
    %v1014 = vld [vmem:[#allocation13 + $0x170] sm:$0xff]
    %v1015 = vld [vmem:[#allocation13 + $0x178] sm:$0xff]
    %v1016 = vld [vmem:[#allocation13 + $0x180] sm:$0xff]
    %v1017 = vld [vmem:[#allocation13 + $0x188] sm:$0xff]
    %v1018 = vld [vmem:[#allocation13 + $0x190] sm:$0xff]
    %v1019 = vld [vmem:[#allocation13 + $0x198] sm:$0xff]
    %v1020 = vld [vmem:[#allocation13 + $0x1a0] sm:$0xff]
    %v1021 = vld [vmem:[#allocation13 + $0x1a8] sm:$0xff]
    %v1022 = vld [vmem:[#allocation13 + $0x1b0] sm:$0xff]
    %v1023 = vld [vmem:[#allocation13 + $0x1b8] sm:$0xff]
    %v1024 = vld [vmem:[#allocation13 + $0x1c0] sm:$0xff]
    %v1025 = vld [vmem:[#allocation13 + $0x1c8] sm:$0xff]
    %v1026 = vld [vmem:[#allocation13 + $0x1d0] sm:$0xff]
    %v1027 = vld [vmem:[#allocation13 + $0x1d8] sm:$0xff]
    %v1028 = vld [vmem:[#allocation13 + $0x1e0] sm:$0xff]
    %v1029 = vld [vmem:[#allocation13 + $0x1e8] sm:$0xff]
    %v1030 = vld [vmem:[#allocation13 + $0x1f0] sm:$0xff]
    %v1031 = vld [vmem:[#allocation13 + $0x1f8] sm:$0xff]
    %v1032 = vld [vmem:[#allocation14] sm:$0xff]
    %v1033 = vld [vmem:[#allocation14 + $0x8] sm:$0xff]
    %v1034 = vld [vmem:[#allocation14 + $0x10] sm:$0xff]
    %v1035 = vld [vmem:[#allocation14 + $0x18] sm:$0xff]
    %v1036 = vld [vmem:[#allocation14 + $0x20] sm:$0xff]
    %v1037 = vld [vmem:[#allocation14 + $0x28] sm:$0xff]
    %v1038 = vld [vmem:[#allocation14 + $0x30] sm:$0xff]
    %v1039 = vld [vmem:[#allocation14 + $0x38] sm:$0xff]
    %v1040 = vld [vmem:[#allocation14 + $0x40] sm:$0xff]
    %v1041 = vld [vmem:[#allocation14 + $0x48] sm:$0xff]
    %v1042 = vld [vmem:[#allocation14 + $0x50] sm:$0xff]
    %v1043 = vld [vmem:[#allocation14 + $0x58] sm:$0xff]
    %v1044 = vld [vmem:[#allocation14 + $0x60] sm:$0xff]
    %v1045 = vld [vmem:[#allocation14 + $0x68] sm:$0xff]
    %v1046 = vld [vmem:[#allocation14 + $0x70] sm:$0xff]
    %v1047 = vld [vmem:[#allocation14 + $0x78] sm:$0xff]
    %v1048 = vld [vmem:[#allocation14 + $0x80] sm:$0xff]
    %v1049 = vld [vmem:[#allocation14 + $0x88] sm:$0xff]
    %v1050 = vld [vmem:[#allocation14 + $0x90] sm:$0xff]
    %v1051 = vld [vmem:[#allocation14 + $0x98] sm:$0xff]
    %v1052 = vld [vmem:[#allocation14 + $0xa0] sm:$0xff]
    %v1053 = vld [vmem:[#allocation14 + $0xa8] sm:$0xff]
    %v1054 = vld [vmem:[#allocation14 + $0xb0] sm:$0xff]
    %v1055 = vld [vmem:[#allocation14 + $0xb8] sm:$0xff]
    %v1056 = vld [vmem:[#allocation14 + $0xc0] sm:$0xff]
    %v1057 = vld [vmem:[#allocation14 + $0xc8] sm:$0xff]
    %v1058 = vld [vmem:[#allocation14 + $0xd0] sm:$0xff]
    %v1059 = vld [vmem:[#allocation14 + $0xd8] sm:$0xff]
    %v1060 = vld [vmem:[#allocation14 + $0xe0] sm:$0xff]
    %v1061 = vld [vmem:[#allocation14 + $0xe8] sm:$0xff]
    %v1062 = vld [vmem:[#allocation14 + $0xf0] sm:$0xff]
    %v1063 = vld [vmem:[#allocation14 + $0xf8] sm:$0xff]
    %v1064 = vld [vmem:[#allocation14 + $0x100] sm:$0xff]
    %v1065 = vld [vmem:[#allocation14 + $0x108] sm:$0xff]
    %v1066 = vld [vmem:[#allocation14 + $0x110] sm:$0xff]
    %v1067 = vld [vmem:[#allocation14 + $0x118] sm:$0xff]
    %v1068 = vld [vmem:[#allocation14 + $0x120] sm:$0xff]
    %v1069 = vld [vmem:[#allocation14 + $0x128] sm:$0xff]
    %v1070 = vld [vmem:[#allocation14 + $0x130] sm:$0xff]
    %v1071 = vld [vmem:[#allocation14 + $0x138] sm:$0xff]
    %v1072 = vld [vmem:[#allocation14 + $0x140] sm:$0xff]
    %v1073 = vld [vmem:[#allocation14 + $0x148] sm:$0xff]
    %v1074 = vld [vmem:[#allocation14 + $0x150] sm:$0xff]
    %v1075 = vld [vmem:[#allocation14 + $0x158] sm:$0xff]
    %v1076 = vld [vmem:[#allocation14 + $0x160] sm:$0xff]
    %v1077 = vld [vmem:[#allocation14 + $0x168] sm:$0xff]
    %v1078 = vld [vmem:[#allocation14 + $0x170] sm:$0xff]
    %v1079 = vld [vmem:[#allocation14 + $0x178] sm:$0xff]
    %v1080 = vld [vmem:[#allocation14 + $0x180] sm:$0xff]
    %v1081 = vld [vmem:[#allocation14 + $0x188] sm:$0xff]
    %v1082 = vld [vmem:[#allocation14 + $0x190] sm:$0xff]
    %v1083 = vld [vmem:[#allocation14 + $0x198] sm:$0xff]
    %v1084 = vld [vmem:[#allocation14 + $0x1a0] sm:$0xff]
    %v1085 = vld [vmem:[#allocation14 + $0x1a8] sm:$0xff]
    %v1086 = vld [vmem:[#allocation14 + $0x1b0] sm:$0xff]
    %v1087 = vld [vmem:[#allocation14 + $0x1b8] sm:$0xff]
    %v1088 = vld [vmem:[#allocation14 + $0x1c0] sm:$0xff]
    %v1089 = vld [vmem:[#allocation14 + $0x1c8] sm:$0xff]
    %v1090 = vld [vmem:[#allocation14 + $0x1d0] sm:$0xff]
    %v1091 = vld [vmem:[#allocation14 + $0x1d8] sm:$0xff]
    %v1092 = vld [vmem:[#allocation14 + $0x1e0] sm:$0xff]
    %v1093 = vld [vmem:[#allocation14 + $0x1e8] sm:$0xff]
    %v1094 = vld [vmem:[#allocation14 + $0x1f0] sm:$0xff]
    %v1095 = vld [vmem:[#allocation14 + $0x1f8] sm:$0xff]
    %v1096 = vld [vmem:[#allocation14 + $0x200] sm:$0xff]
    %v1097 = vld [vmem:[#allocation14 + $0x208] sm:$0xff]
    %v1098 = vld [vmem:[#allocation14 + $0x210] sm:$0xff]
    %v1099 = vld [vmem:[#allocation14 + $0x218] sm:$0xff]
    %v1100 = vld [vmem:[#allocation14 + $0x220] sm:$0xff]
    %v1101 = vld [vmem:[#allocation14 + $0x228] sm:$0xff]
    %v1102 = vld [vmem:[#allocation14 + $0x230] sm:$0xff]
    %v1103 = vld [vmem:[#allocation14 + $0x238] sm:$0xff]
    %v1104 = vld [vmem:[#allocation14 + $0x240] sm:$0xff]
    %v1105 = vld [vmem:[#allocation14 + $0x248] sm:$0xff]
    %v1106 = vld [vmem:[#allocation14 + $0x250] sm:$0xff]
    %v1107 = vld [vmem:[#allocation14 + $0x258] sm:$0xff]
    %v1108 = vld [vmem:[#allocation14 + $0x260] sm:$0xff]
    %v1109 = vld [vmem:[#allocation14 + $0x268] sm:$0xff]
    %v1110 = vld [vmem:[#allocation14 + $0x270] sm:$0xff]
    %v1111 = vld [vmem:[#allocation14 + $0x278] sm:$0xff]
    %v1112 = vld [vmem:[#allocation14 + $0x280] sm:$0xff]
    %v1113 = vld [vmem:[#allocation14 + $0x288] sm:$0xff]
    %v1114 = vld [vmem:[#allocation14 + $0x290] sm:$0xff]
    %v1115 = vld [vmem:[#allocation14 + $0x298] sm:$0xff]
    %v1116 = vld [vmem:[#allocation14 + $0x2a0] sm:$0xff]
    %v1117 = vld [vmem:[#allocation14 + $0x2a8] sm:$0xff]
    %v1118 = vld [vmem:[#allocation14 + $0x2b0] sm:$0xff]
    %v1119 = vld [vmem:[#allocation14 + $0x2b8] sm:$0xff]
    %v1120 = vld [vmem:[#allocation14 + $0x2c0] sm:$0xff]
    %v1121 = vld [vmem:[#allocation14 + $0x2c8] sm:$0xff]
    %v1122 = vld [vmem:[#allocation14 + $0x2d0] sm:$0xff]
    %v1123 = vld [vmem:[#allocation14 + $0x2d8] sm:$0xff]
    %v1124 = vld [vmem:[#allocation14 + $0x2e0] sm:$0xff]
    %v1125 = vld [vmem:[#allocation14 + $0x2e8] sm:$0xff]
    %v1126 = vld [vmem:[#allocation14 + $0x2f0] sm:$0xff]
    %v1127 = vld [vmem:[#allocation14 + $0x2f8] sm:$0xff]
    %v1128 = vld [vmem:[#allocation14 + $0x300] sm:$0xff]
    %v1129 = vld [vmem:[#allocation14 + $0x308] sm:$0xff]
    %v1130 = vld [vmem:[#allocation14 + $0x310] sm:$0xff]
    %v1131 = vld [vmem:[#allocation14 + $0x318] sm:$0xff]
    %v1132 = vld [vmem:[#allocation14 + $0x320] sm:$0xff]
    %v1133 = vld [vmem:[#allocation14 + $0x328] sm:$0xff]
    %v1134 = vld [vmem:[#allocation14 + $0x330] sm:$0xff]
    %v1135 = vld [vmem:[#allocation14 + $0x338] sm:$0xff]
    %v1136 = vld [vmem:[#allocation14 + $0x340] sm:$0xff]
    %v1137 = vld [vmem:[#allocation14 + $0x348] sm:$0xff]
    %v1138 = vld [vmem:[#allocation14 + $0x350] sm:$0xff]
    %v1139 = vld [vmem:[#allocation14 + $0x358] sm:$0xff]
    %v1140 = vld [vmem:[#allocation14 + $0x360] sm:$0xff]
    %v1141 = vld [vmem:[#allocation14 + $0x368] sm:$0xff]
    %v1142 = vld [vmem:[#allocation14 + $0x370] sm:$0xff]
    %v1143 = vld [vmem:[#allocation14 + $0x378] sm:$0xff]
    %v1144 = vld [vmem:[#allocation14 + $0x380] sm:$0xff]
    %v1145 = vld [vmem:[#allocation14 + $0x388] sm:$0xff]
    %v1146 = vld [vmem:[#allocation14 + $0x390] sm:$0xff]
    %v1147 = vld [vmem:[#allocation14 + $0x398] sm:$0xff]
    %v1148 = vld [vmem:[#allocation14 + $0x3a0] sm:$0xff]
    %v1149 = vld [vmem:[#allocation14 + $0x3a8] sm:$0xff]
    %v1150 = vld [vmem:[#allocation14 + $0x3b0] sm:$0xff]
    %v1151 = vld [vmem:[#allocation14 + $0x3b8] sm:$0xff]
    %v1152 = vld [vmem:[#allocation14 + $0x3c0] sm:$0xff]
    %v1153 = vld [vmem:[#allocation14 + $0x3c8] sm:$0xff]
    %v1154 = vld [vmem:[#allocation14 + $0x3d0] sm:$0xff]
    %v1155 = vld [vmem:[#allocation14 + $0x3d8] sm:$0xff]
    %v1156 = vld [vmem:[#allocation14 + $0x3e0] sm:$0xff]
    %v1157 = vld [vmem:[#allocation14 + $0x3e8] sm:$0xff]
    %v1158 = vld [vmem:[#allocation14 + $0x3f0] sm:$0xff]
    %v1159 = vld [vmem:[#allocation14 + $0x3f8] sm:$0xff]
    %v1160 = vld [vmem:[#allocation14 + $0x400] sm:$0xff]
    %v1161 = vld [vmem:[#allocation14 + $0x408] sm:$0xff]
    %v1162 = vld [vmem:[#allocation14 + $0x410] sm:$0xff]
    %v1163 = vld [vmem:[#allocation14 + $0x418] sm:$0xff]
    %v1164 = vld [vmem:[#allocation14 + $0x420] sm:$0xff]
    %v1165 = vld [vmem:[#allocation14 + $0x428] sm:$0xff]
    %v1166 = vld [vmem:[#allocation14 + $0x430] sm:$0xff]
    %v1167 = vld [vmem:[#allocation14 + $0x438] sm:$0xff]
    %v1168 = vld [vmem:[#allocation14 + $0x440] sm:$0xff]
    %v1169 = vld [vmem:[#allocation14 + $0x448] sm:$0xff]
    %v1170 = vld [vmem:[#allocation14 + $0x450] sm:$0xff]
    %v1171 = vld [vmem:[#allocation14 + $0x458] sm:$0xff]
    %v1172 = vld [vmem:[#allocation14 + $0x460] sm:$0xff]
    %v1173 = vld [vmem:[#allocation14 + $0x468] sm:$0xff]
    %v1174 = vld [vmem:[#allocation14 + $0x470] sm:$0xff]
    %v1175 = vld [vmem:[#allocation14 + $0x478] sm:$0xff]
    %v1176 = vld [vmem:[#allocation14 + $0x480] sm:$0xff]
    %v1177 = vld [vmem:[#allocation14 + $0x488] sm:$0xff]
    %v1178 = vld [vmem:[#allocation14 + $0x490] sm:$0xff]
    %v1179 = vld [vmem:[#allocation14 + $0x498] sm:$0xff]
    %v1180 = vld [vmem:[#allocation14 + $0x4a0] sm:$0xff]
    %v1181 = vld [vmem:[#allocation14 + $0x4a8] sm:$0xff]
    %v1182 = vld [vmem:[#allocation14 + $0x4b0] sm:$0xff]
    %v1183 = vld [vmem:[#allocation14 + $0x4b8] sm:$0xff]
    %v1184 = vld [vmem:[#allocation14 + $0x4c0] sm:$0xff]
    %v1185 = vld [vmem:[#allocation14 + $0x4c8] sm:$0xff]
    %v1186 = vld [vmem:[#allocation14 + $0x4d0] sm:$0xff]
    %v1187 = vld [vmem:[#allocation14 + $0x4d8] sm:$0xff]
    %v1188 = vld [vmem:[#allocation14 + $0x4e0] sm:$0xff]
    %v1189 = vld [vmem:[#allocation14 + $0x4e8] sm:$0xff]
    %v1190 = vld [vmem:[#allocation14 + $0x4f0] sm:$0xff]
    %v1191 = vld [vmem:[#allocation14 + $0x4f8] sm:$0xff]
    %v1192 = vld [vmem:[#allocation14 + $0x500] sm:$0xff]
    %v1193 = vld [vmem:[#allocation14 + $0x508] sm:$0xff]
    %v1194 = vld [vmem:[#allocation14 + $0x510] sm:$0xff]
    %v1195 = vld [vmem:[#allocation14 + $0x518] sm:$0xff]
    %v1196 = vld [vmem:[#allocation14 + $0x520] sm:$0xff]
    %v1197 = vld [vmem:[#allocation14 + $0x528] sm:$0xff]
    %v1198 = vld [vmem:[#allocation14 + $0x530] sm:$0xff]
    %v1199 = vld [vmem:[#allocation14 + $0x538] sm:$0xff]
    %v1200 = vld [vmem:[#allocation14 + $0x540] sm:$0xff]
    %v1201 = vld [vmem:[#allocation14 + $0x548] sm:$0xff]
    %v1202 = vld [vmem:[#allocation14 + $0x550] sm:$0xff]
    %v1203 = vld [vmem:[#allocation14 + $0x558] sm:$0xff]
    %v1204 = vld [vmem:[#allocation14 + $0x560] sm:$0xff]
    %v1205 = vld [vmem:[#allocation14 + $0x568] sm:$0xff]
    %v1206 = vld [vmem:[#allocation14 + $0x570] sm:$0xff]
    %v1207 = vld [vmem:[#allocation14 + $0x578] sm:$0xff]
    %v1208 = vld [vmem:[#allocation14 + $0x580] sm:$0xff]
    %v1209 = vld [vmem:[#allocation14 + $0x588] sm:$0xff]
    %v1210 = vld [vmem:[#allocation14 + $0x590] sm:$0xff]
    %v1211 = vld [vmem:[#allocation14 + $0x598] sm:$0xff]
    %v1212 = vld [vmem:[#allocation14 + $0x5a0] sm:$0xff]
    %v1213 = vld [vmem:[#allocation14 + $0x5a8] sm:$0xff]
    %v1214 = vld [vmem:[#allocation14 + $0x5b0] sm:$0xff]
    %v1215 = vld [vmem:[#allocation14 + $0x5b8] sm:$0xff]
    %v1216 = vld [vmem:[#allocation14 + $0x5c0] sm:$0xff]
    %v1217 = vld [vmem:[#allocation14 + $0x5c8] sm:$0xff]
    %v1218 = vld [vmem:[#allocation14 + $0x5d0] sm:$0xff]
    %v1219 = vld [vmem:[#allocation14 + $0x5d8] sm:$0xff]
    %v1220 = vld [vmem:[#allocation14 + $0x5e0] sm:$0xff]
    %v1221 = vld [vmem:[#allocation14 + $0x5e8] sm:$0xff]
    %v1222 = vld [vmem:[#allocation14 + $0x5f0] sm:$0xff]
    %v1223 = vld [vmem:[#allocation14 + $0x5f8] sm:$0xff]
    %v1224 = vld [vmem:[#allocation14 + $0x600] sm:$0xff]
    %v1225 = vld [vmem:[#allocation14 + $0x608] sm:$0xff]
    %v1226 = vld [vmem:[#allocation14 + $0x610] sm:$0xff]
    %v1227 = vld [vmem:[#allocation14 + $0x618] sm:$0xff]
    %v1228 = vld [vmem:[#allocation14 + $0x620] sm:$0xff]
    %v1229 = vld [vmem:[#allocation14 + $0x628] sm:$0xff]
    %v1230 = vld [vmem:[#allocation14 + $0x630] sm:$0xff]
    %v1231 = vld [vmem:[#allocation14 + $0x638] sm:$0xff]
    %v1232 = vld [vmem:[#allocation14 + $0x640] sm:$0xff]
    %v1233 = vld [vmem:[#allocation14 + $0x648] sm:$0xff]
    %v1234 = vld [vmem:[#allocation14 + $0x650] sm:$0xff]
    %v1235 = vld [vmem:[#allocation14 + $0x658] sm:$0xff]
    %v1236 = vld [vmem:[#allocation14 + $0x660] sm:$0xff]
    %v1237 = vld [vmem:[#allocation14 + $0x668] sm:$0xff]
    %v1238 = vld [vmem:[#allocation14 + $0x670] sm:$0xff]
    %v1239 = vld [vmem:[#allocation14 + $0x678] sm:$0xff]
    %v1240 = vld [vmem:[#allocation14 + $0x680] sm:$0xff]
    %v1241 = vld [vmem:[#allocation14 + $0x688] sm:$0xff]
    %v1242 = vld [vmem:[#allocation14 + $0x690] sm:$0xff]
    %v1243 = vld [vmem:[#allocation14 + $0x698] sm:$0xff]
    %v1244 = vld [vmem:[#allocation14 + $0x6a0] sm:$0xff]
    %v1245 = vld [vmem:[#allocation14 + $0x6a8] sm:$0xff]
    %v1246 = vld [vmem:[#allocation14 + $0x6b0] sm:$0xff]
    %v1247 = vld [vmem:[#allocation14 + $0x6b8] sm:$0xff]
    %v1248 = vld [vmem:[#allocation14 + $0x6c0] sm:$0xff]
    %v1249 = vld [vmem:[#allocation14 + $0x6c8] sm:$0xff]
    %v1250 = vld [vmem:[#allocation14 + $0x6d0] sm:$0xff]
    %v1251 = vld [vmem:[#allocation14 + $0x6d8] sm:$0xff]
    %v1252 = vld [vmem:[#allocation14 + $0x6e0] sm:$0xff]
    %v1253 = vld [vmem:[#allocation14 + $0x6e8] sm:$0xff]
    %v1254 = vld [vmem:[#allocation14 + $0x6f0] sm:$0xff]
    %v1255 = vld [vmem:[#allocation14 + $0x6f8] sm:$0xff]
    %v1256 = vld [vmem:[#allocation14 + $0x700] sm:$0xff]
    %v1257 = vld [vmem:[#allocation14 + $0x708] sm:$0xff]
    %v1258 = vld [vmem:[#allocation14 + $0x710] sm:$0xff]
    %v1259 = vld [vmem:[#allocation14 + $0x718] sm:$0xff]
    %v1260 = vld [vmem:[#allocation14 + $0x720] sm:$0xff]
    %v1261 = vld [vmem:[#allocation14 + $0x728] sm:$0xff]
    %v1262 = vld [vmem:[#allocation14 + $0x730] sm:$0xff]
    %v1263 = vld [vmem:[#allocation14 + $0x738] sm:$0xff]
    %v1264 = vld [vmem:[#allocation14 + $0x740] sm:$0xff]
    %v1265 = vld [vmem:[#allocation14 + $0x748] sm:$0xff]
    %v1266 = vld [vmem:[#allocation14 + $0x750] sm:$0xff]
    %v1267 = vld [vmem:[#allocation14 + $0x758] sm:$0xff]
    %v1268 = vld [vmem:[#allocation14 + $0x760] sm:$0xff]
    %v1269 = vld [vmem:[#allocation14 + $0x768] sm:$0xff]
    %v1270 = vld [vmem:[#allocation14 + $0x770] sm:$0xff]
    %v1271 = vld [vmem:[#allocation14 + $0x778] sm:$0xff]
    %v1272 = vld [vmem:[#allocation14 + $0x780] sm:$0xff]
    %v1273 = vld [vmem:[#allocation14 + $0x788] sm:$0xff]
    %v1274 = vld [vmem:[#allocation14 + $0x790] sm:$0xff]
    %v1275 = vld [vmem:[#allocation14 + $0x798] sm:$0xff]
    %v1276 = vld [vmem:[#allocation14 + $0x7a0] sm:$0xff]
    %v1277 = vld [vmem:[#allocation14 + $0x7a8] sm:$0xff]
    %v1278 = vld [vmem:[#allocation14 + $0x7b0] sm:$0xff]
    %v1279 = vld [vmem:[#allocation14 + $0x7b8] sm:$0xff]
    %v1280 = vld [vmem:[#allocation14 + $0x7c0] sm:$0xff]
    %v1281 = vld [vmem:[#allocation14 + $0x7c8] sm:$0xff]
    %v1282 = vld [vmem:[#allocation14 + $0x7d0] sm:$0xff]
    %v1283 = vld [vmem:[#allocation14 + $0x7d8] sm:$0xff]
    %v1284 = vld [vmem:[#allocation14 + $0x7e0] sm:$0xff]
    %v1285 = vld [vmem:[#allocation14 + $0x7e8] sm:$0xff]
    %v1286 = vld [vmem:[#allocation14 + $0x7f0] sm:$0xff]
    %v1287 = vld [vmem:[#allocation14 + $0x7f8] sm:$0xff]
    %v1288 = vld [vmem:[#allocation14 + $0x800] sm:$0xff]
    %v1289 = vld [vmem:[#allocation14 + $0x808] sm:$0xff]
    %v1290 = vld [vmem:[#allocation14 + $0x810] sm:$0xff]
    %v1291 = vld [vmem:[#allocation14 + $0x818] sm:$0xff]
    %v1292 = vld [vmem:[#allocation14 + $0x820] sm:$0xff]
    %v1293 = vld [vmem:[#allocation14 + $0x828] sm:$0xff]
    %v1294 = vld [vmem:[#allocation14 + $0x830] sm:$0xff]
    %v1295 = vld [vmem:[#allocation14 + $0x838] sm:$0xff]
    %v1296 = vld [vmem:[#allocation14 + $0x840] sm:$0xff]
    %v1297 = vld [vmem:[#allocation14 + $0x848] sm:$0xff]
    %v1298 = vld [vmem:[#allocation14 + $0x850] sm:$0xff]
    %v1299 = vld [vmem:[#allocation14 + $0x858] sm:$0xff]
    %v1300 = vld [vmem:[#allocation14 + $0x860] sm:$0xff]
    %v1301 = vld [vmem:[#allocation14 + $0x868] sm:$0xff]
    %v1302 = vld [vmem:[#allocation14 + $0x870] sm:$0xff]
    %v1303 = vld [vmem:[#allocation14 + $0x878] sm:$0xff]
    %v1304 = vld [vmem:[#allocation14 + $0x880] sm:$0xff]
    %v1305 = vld [vmem:[#allocation14 + $0x888] sm:$0xff]
    %v1306 = vld [vmem:[#allocation14 + $0x890] sm:$0xff]
    %v1307 = vld [vmem:[#allocation14 + $0x898] sm:$0xff]
    %v1308 = vld [vmem:[#allocation14 + $0x8a0] sm:$0xff]
    %v1309 = vld [vmem:[#allocation14 + $0x8a8] sm:$0xff]
    %v1310 = vld [vmem:[#allocation14 + $0x8b0] sm:$0xff]
    %v1311 = vld [vmem:[#allocation14 + $0x8b8] sm:$0xff]
    %v1312 = vld [vmem:[#allocation14 + $0x8c0] sm:$0xff]
    %v1313 = vld [vmem:[#allocation14 + $0x8c8] sm:$0xff]
    %v1314 = vld [vmem:[#allocation14 + $0x8d0] sm:$0xff]
    %v1315 = vld [vmem:[#allocation14 + $0x8d8] sm:$0xff]
    %v1316 = vld [vmem:[#allocation14 + $0x8e0] sm:$0xff]
    %v1317 = vld [vmem:[#allocation14 + $0x8e8] sm:$0xff]
    %v1318 = vld [vmem:[#allocation14 + $0x8f0] sm:$0xff]
    %v1319 = vld [vmem:[#allocation14 + $0x8f8] sm:$0xff]
    %v1320 = vld [vmem:[#allocation14 + $0x900] sm:$0xff]
    %v1321 = vld [vmem:[#allocation14 + $0x908] sm:$0xff]
    %v1322 = vld [vmem:[#allocation14 + $0x910] sm:$0xff]
    %v1323 = vld [vmem:[#allocation14 + $0x918] sm:$0xff]
    %v1324 = vld [vmem:[#allocation14 + $0x920] sm:$0xff]
    %v1325 = vld [vmem:[#allocation14 + $0x928] sm:$0xff]
    %v1326 = vld [vmem:[#allocation14 + $0x930] sm:$0xff]
    %v1327 = vld [vmem:[#allocation14 + $0x938] sm:$0xff]
    %v1328 = vld [vmem:[#allocation14 + $0x940] sm:$0xff]
    %v1329 = vld [vmem:[#allocation14 + $0x948] sm:$0xff]
    %v1330 = vld [vmem:[#allocation14 + $0x950] sm:$0xff]
    %v1331 = vld [vmem:[#allocation14 + $0x958] sm:$0xff]
    %v1332 = vld [vmem:[#allocation14 + $0x960] sm:$0xff]
    %v1333 = vld [vmem:[#allocation14 + $0x968] sm:$0xff]
    %v1334 = vld [vmem:[#allocation14 + $0x970] sm:$0xff]
    %v1335 = vld [vmem:[#allocation14 + $0x978] sm:$0xff]
    %v1336 = vld [vmem:[#allocation14 + $0x980] sm:$0xff]
    %v1337 = vld [vmem:[#allocation14 + $0x988] sm:$0xff]
    %v1338 = vld [vmem:[#allocation14 + $0x990] sm:$0xff]
    %v1339 = vld [vmem:[#allocation14 + $0x998] sm:$0xff]
    %v1340 = vld [vmem:[#allocation14 + $0x9a0] sm:$0xff]
    %v1341 = vld [vmem:[#allocation14 + $0x9a8] sm:$0xff]
    %v1342 = vld [vmem:[#allocation14 + $0x9b0] sm:$0xff]
    %v1343 = vld [vmem:[#allocation14 + $0x9b8] sm:$0xff]
    %v1344 = vld [vmem:[#allocation14 + $0x9c0] sm:$0xff]
    %v1345 = vld [vmem:[#allocation14 + $0x9c8] sm:$0xff]
    %v1346 = vld [vmem:[#allocation14 + $0x9d0] sm:$0xff]
    %v1347 = vld [vmem:[#allocation14 + $0x9d8] sm:$0xff]
    %v1348 = vld [vmem:[#allocation14 + $0x9e0] sm:$0xff]
    %v1349 = vld [vmem:[#allocation14 + $0x9e8] sm:$0xff]
    %v1350 = vld [vmem:[#allocation14 + $0x9f0] sm:$0xff]
    %v1351 = vld [vmem:[#allocation14 + $0x9f8] sm:$0xff]
    %v1352 = vld [vmem:[#allocation14 + $0xa00] sm:$0xff]
    %v1353 = vld [vmem:[#allocation14 + $0xa08] sm:$0xff]
    %v1354 = vld [vmem:[#allocation14 + $0xa10] sm:$0xff]
    %v1355 = vld [vmem:[#allocation14 + $0xa18] sm:$0xff]
    %v1356 = vld [vmem:[#allocation14 + $0xa20] sm:$0xff]
    %v1357 = vld [vmem:[#allocation14 + $0xa28] sm:$0xff]
    %v1358 = vld [vmem:[#allocation14 + $0xa30] sm:$0xff]
    %v1359 = vld [vmem:[#allocation14 + $0xa38] sm:$0xff]
    %v1360 = vld [vmem:[#allocation14 + $0xa40] sm:$0xff]
    %v1361 = vld [vmem:[#allocation14 + $0xa48] sm:$0xff]
    %v1362 = vld [vmem:[#allocation14 + $0xa50] sm:$0xff]
    %v1363 = vld [vmem:[#allocation14 + $0xa58] sm:$0xff]
    %v1364 = vld [vmem:[#allocation14 + $0xa60] sm:$0xff]
    %v1365 = vld [vmem:[#allocation14 + $0xa68] sm:$0xff]
    %v1366 = vld [vmem:[#allocation14 + $0xa70] sm:$0xff]
    %v1367 = vld [vmem:[#allocation14 + $0xa78] sm:$0xff]
    %v1368 = vld [vmem:[#allocation14 + $0xa80] sm:$0xff]
    %v1369 = vld [vmem:[#allocation14 + $0xa88] sm:$0xff]
    %v1370 = vld [vmem:[#allocation14 + $0xa90] sm:$0xff]
    %v1371 = vld [vmem:[#allocation14 + $0xa98] sm:$0xff]
    %v1372 = vld [vmem:[#allocation14 + $0xaa0] sm:$0xff]
    %v1373 = vld [vmem:[#allocation14 + $0xaa8] sm:$0xff]
    %v1374 = vld [vmem:[#allocation14 + $0xab0] sm:$0xff]
    %v1375 = vld [vmem:[#allocation14 + $0xab8] sm:$0xff]
    %v1376 = vld [vmem:[#allocation14 + $0xac0] sm:$0xff]
    %v1377 = vld [vmem:[#allocation14 + $0xac8] sm:$0xff]
    %v1378 = vld [vmem:[#allocation14 + $0xad0] sm:$0xff]
    %v1379 = vld [vmem:[#allocation14 + $0xad8] sm:$0xff]
    %v1380 = vld [vmem:[#allocation14 + $0xae0] sm:$0xff]
    %v1381 = vld [vmem:[#allocation14 + $0xae8] sm:$0xff]
    %v1382 = vld [vmem:[#allocation14 + $0xaf0] sm:$0xff]
    %v1383 = vld [vmem:[#allocation14 + $0xaf8] sm:$0xff]
    %v1384 = vld [vmem:[#allocation14 + $0xb00] sm:$0xff]
    %v1385 = vld [vmem:[#allocation14 + $0xb08] sm:$0xff]
    %v1386 = vld [vmem:[#allocation14 + $0xb10] sm:$0xff]
    %v1387 = vld [vmem:[#allocation14 + $0xb18] sm:$0xff]
    %v1388 = vld [vmem:[#allocation14 + $0xb20] sm:$0xff]
    %v1389 = vld [vmem:[#allocation14 + $0xb28] sm:$0xff]
    %v1390 = vld [vmem:[#allocation14 + $0xb30] sm:$0xff]
    %v1391 = vld [vmem:[#allocation14 + $0xb38] sm:$0xff]
    %v1392 = vld [vmem:[#allocation14 + $0xb40] sm:$0xff]
    %v1393 = vld [vmem:[#allocation14 + $0xb48] sm:$0xff]
    %v1394 = vld [vmem:[#allocation14 + $0xb50] sm:$0xff]
    %v1395 = vld [vmem:[#allocation14 + $0xb58] sm:$0xff]
    %v1396 = vld [vmem:[#allocation14 + $0xb60] sm:$0xff]
    %v1397 = vld [vmem:[#allocation14 + $0xb68] sm:$0xff]
    %v1398 = vld [vmem:[#allocation14 + $0xb70] sm:$0xff]
    %v1399 = vld [vmem:[#allocation14 + $0xb78] sm:$0xff]
    %v1400 = vld [vmem:[#allocation14 + $0xb80] sm:$0xff]
    %v1401 = vld [vmem:[#allocation14 + $0xb88] sm:$0xff]
    %v1402 = vld [vmem:[#allocation14 + $0xb90] sm:$0xff]
    %v1403 = vld [vmem:[#allocation14 + $0xb98] sm:$0xff]
    %v1404 = vld [vmem:[#allocation14 + $0xba0] sm:$0xff]
    %v1405 = vld [vmem:[#allocation14 + $0xba8] sm:$0xff]
    %v1406 = vld [vmem:[#allocation14 + $0xbb0] sm:$0xff]
    %v1407 = vld [vmem:[#allocation14 + $0xbb8] sm:$0xff]
    %v1408 = vld [vmem:[#allocation14 + $0xbc0] sm:$0xff]
    %v1409 = vld [vmem:[#allocation14 + $0xbc8] sm:$0xff]
    %v1410 = vld [vmem:[#allocation14 + $0xbd0] sm:$0xff]
    %v1411 = vld [vmem:[#allocation14 + $0xbd8] sm:$0xff]
    %v1412 = vld [vmem:[#allocation14 + $0xbe0] sm:$0xff]
    %v1413 = vld [vmem:[#allocation14 + $0xbe8] sm:$0xff]
    %v1414 = vld [vmem:[#allocation14 + $0xbf0] sm:$0xff]
    %v1415 = vld [vmem:[#allocation14 + $0xbf8] sm:$0xff]
    %v1416 = vld [vmem:[#allocation14 + $0xc00] sm:$0xff]
    %v1417 = vld [vmem:[#allocation14 + $0xc08] sm:$0xff]
    %v1418 = vld [vmem:[#allocation14 + $0xc10] sm:$0xff]
    %v1419 = vld [vmem:[#allocation14 + $0xc18] sm:$0xff]
    %v1420 = vld [vmem:[#allocation14 + $0xc20] sm:$0xff]
    %v1421 = vld [vmem:[#allocation14 + $0xc28] sm:$0xff]
    %v1422 = vld [vmem:[#allocation14 + $0xc30] sm:$0xff]
    %v1423 = vld [vmem:[#allocation14 + $0xc38] sm:$0xff]
    %v1424 = vld [vmem:[#allocation14 + $0xc40] sm:$0xff]
    %v1425 = vld [vmem:[#allocation14 + $0xc48] sm:$0xff]
    %v1426 = vld [vmem:[#allocation14 + $0xc50] sm:$0xff]
    %v1427 = vld [vmem:[#allocation14 + $0xc58] sm:$0xff]
    %v1428 = vld [vmem:[#allocation14 + $0xc60] sm:$0xff]
    %v1429 = vld [vmem:[#allocation14 + $0xc68] sm:$0xff]
    %v1430 = vld [vmem:[#allocation14 + $0xc70] sm:$0xff]
    %v1431 = vld [vmem:[#allocation14 + $0xc78] sm:$0xff]
    %v1432 = vld [vmem:[#allocation14 + $0xc80] sm:$0xff]
    %v1433 = vld [vmem:[#allocation14 + $0xc88] sm:$0xff]
    %v1434 = vld [vmem:[#allocation14 + $0xc90] sm:$0xff]
    %v1435 = vld [vmem:[#allocation14 + $0xc98] sm:$0xff]
    %v1436 = vld [vmem:[#allocation14 + $0xca0] sm:$0xff]
    %v1437 = vld [vmem:[#allocation14 + $0xca8] sm:$0xff]
    %v1438 = vld [vmem:[#allocation14 + $0xcb0] sm:$0xff]
    %v1439 = vld [vmem:[#allocation14 + $0xcb8] sm:$0xff]
    %v1440 = vld [vmem:[#allocation14 + $0xcc0] sm:$0xff]
    %v1441 = vld [vmem:[#allocation14 + $0xcc8] sm:$0xff]
    %v1442 = vld [vmem:[#allocation14 + $0xcd0] sm:$0xff]
    %v1443 = vld [vmem:[#allocation14 + $0xcd8] sm:$0xff]
    %v1444 = vld [vmem:[#allocation14 + $0xce0] sm:$0xff]
    %v1445 = vld [vmem:[#allocation14 + $0xce8] sm:$0xff]
    %v1446 = vld [vmem:[#allocation14 + $0xcf0] sm:$0xff]
    %v1447 = vld [vmem:[#allocation14 + $0xcf8] sm:$0xff]
    %v1448 = vld [vmem:[#allocation14 + $0xd00] sm:$0xff]
    %v1449 = vld [vmem:[#allocation14 + $0xd08] sm:$0xff]
    %v1450 = vld [vmem:[#allocation14 + $0xd10] sm:$0xff]
    %v1451 = vld [vmem:[#allocation14 + $0xd18] sm:$0xff]
    %v1452 = vld [vmem:[#allocation14 + $0xd20] sm:$0xff]
    %v1453 = vld [vmem:[#allocation14 + $0xd28] sm:$0xff]
    %v1454 = vld [vmem:[#allocation14 + $0xd30] sm:$0xff]
    %v1455 = vld [vmem:[#allocation14 + $0xd38] sm:$0xff]
    %v1456 = vld [vmem:[#allocation14 + $0xd40] sm:$0xff]
    %v1457 = vld [vmem:[#allocation14 + $0xd48] sm:$0xff]
    %v1458 = vld [vmem:[#allocation14 + $0xd50] sm:$0xff]
    %v1459 = vld [vmem:[#allocation14 + $0xd58] sm:$0xff]
    %v1460 = vld [vmem:[#allocation14 + $0xd60] sm:$0xff]
    %v1461 = vld [vmem:[#allocation14 + $0xd68] sm:$0xff]
    %v1462 = vld [vmem:[#allocation14 + $0xd70] sm:$0xff]
    %v1463 = vld [vmem:[#allocation14 + $0xd78] sm:$0xff]
    %v1464 = vld [vmem:[#allocation14 + $0xd80] sm:$0xff]
    %v1465 = vld [vmem:[#allocation14 + $0xd88] sm:$0xff]
    %v1466 = vld [vmem:[#allocation14 + $0xd90] sm:$0xff]
    %v1467 = vld [vmem:[#allocation14 + $0xd98] sm:$0xff]
    %v1468 = vld [vmem:[#allocation14 + $0xda0] sm:$0xff]
    %v1469 = vld [vmem:[#allocation14 + $0xda8] sm:$0xff]
    %v1470 = vld [vmem:[#allocation14 + $0xdb0] sm:$0xff]
    %v1471 = vld [vmem:[#allocation14 + $0xdb8] sm:$0xff]
    %v1472 = vld [vmem:[#allocation14 + $0xdc0] sm:$0xff]
    %v1473 = vld [vmem:[#allocation14 + $0xdc8] sm:$0xff]
    %v1474 = vld [vmem:[#allocation14 + $0xdd0] sm:$0xff]
    %v1475 = vld [vmem:[#allocation14 + $0xdd8] sm:$0xff]
    %v1476 = vld [vmem:[#allocation14 + $0xde0] sm:$0xff]
    %v1477 = vld [vmem:[#allocation14 + $0xde8] sm:$0xff]
    %v1478 = vld [vmem:[#allocation14 + $0xdf0] sm:$0xff]
    %v1479 = vld [vmem:[#allocation14 + $0xdf8] sm:$0xff]
    %v1480 = vld [vmem:[#allocation14 + $0xe00] sm:$0xff]
    %v1481 = vld [vmem:[#allocation14 + $0xe08] sm:$0xff]
    %v1482 = vld [vmem:[#allocation14 + $0xe10] sm:$0xff]
    %v1483 = vld [vmem:[#allocation14 + $0xe18] sm:$0xff]
    %v1484 = vld [vmem:[#allocation14 + $0xe20] sm:$0xff]
    %v1485 = vld [vmem:[#allocation14 + $0xe28] sm:$0xff]
    %v1486 = vld [vmem:[#allocation14 + $0xe30] sm:$0xff]
    %v1487 = vld [vmem:[#allocation14 + $0xe38] sm:$0xff]
    %v1488 = vld [vmem:[#allocation14 + $0xe40] sm:$0xff]
    %v1489 = vld [vmem:[#allocation14 + $0xe48] sm:$0xff]
    %v1490 = vld [vmem:[#allocation14 + $0xe50] sm:$0xff]
    %v1491 = vld [vmem:[#allocation14 + $0xe58] sm:$0xff]
    %v1492 = vld [vmem:[#allocation14 + $0xe60] sm:$0xff]
    %v1493 = vld [vmem:[#allocation14 + $0xe68] sm:$0xff]
    %v1494 = vld [vmem:[#allocation14 + $0xe70] sm:$0xff]
    %v1495 = vld [vmem:[#allocation14 + $0xe78] sm:$0xff]
    %v1496 = vld [vmem:[#allocation14 + $0xe80] sm:$0xff]
    %v1497 = vld [vmem:[#allocation14 + $0xe88] sm:$0xff]
    %v1498 = vld [vmem:[#allocation14 + $0xe90] sm:$0xff]
    %v1499 = vld [vmem:[#allocation14 + $0xe98] sm:$0xff]
    %v1500 = vld [vmem:[#allocation14 + $0xea0] sm:$0xff]
    %v1501 = vld [vmem:[#allocation14 + $0xea8] sm:$0xff]
    %v1502 = vld [vmem:[#allocation14 + $0xeb0] sm:$0xff]
    %v1503 = vld [vmem:[#allocation14 + $0xeb8] sm:$0xff]
    %v1504 = vld [vmem:[#allocation14 + $0xec0] sm:$0xff]
    %v1505 = vld [vmem:[#allocation14 + $0xec8] sm:$0xff]
    %v1506 = vld [vmem:[#allocation14 + $0xed0] sm:$0xff]
    %v1507 = vld [vmem:[#allocation14 + $0xed8] sm:$0xff]
    %v1508 = vld [vmem:[#allocation14 + $0xee0] sm:$0xff]
    %v1509 = vld [vmem:[#allocation14 + $0xee8] sm:$0xff]
    %v1510 = vld [vmem:[#allocation14 + $0xef0] sm:$0xff]
    %v1511 = vld [vmem:[#allocation14 + $0xef8] sm:$0xff]
    %v1512 = vld [vmem:[#allocation14 + $0xf00] sm:$0xff]
    %v1513 = vld [vmem:[#allocation14 + $0xf08] sm:$0xff]
    %v1514 = vld [vmem:[#allocation14 + $0xf10] sm:$0xff]
    %v1515 = vld [vmem:[#allocation14 + $0xf18] sm:$0xff]
    %v1516 = vld [vmem:[#allocation14 + $0xf20] sm:$0xff]
    %v1517 = vld [vmem:[#allocation14 + $0xf28] sm:$0xff]
    %v1518 = vld [vmem:[#allocation14 + $0xf30] sm:$0xff]
    %v1519 = vld [vmem:[#allocation14 + $0xf38] sm:$0xff]
    %v1520 = vld [vmem:[#allocation14 + $0xf40] sm:$0xff]
    %v1521 = vld [vmem:[#allocation14 + $0xf48] sm:$0xff]
    %v1522 = vld [vmem:[#allocation14 + $0xf50] sm:$0xff]
    %v1523 = vld [vmem:[#allocation14 + $0xf58] sm:$0xff]
    %v1524 = vld [vmem:[#allocation14 + $0xf60] sm:$0xff]
    %v1525 = vld [vmem:[#allocation14 + $0xf68] sm:$0xff]
    %v1526 = vld [vmem:[#allocation14 + $0xf70] sm:$0xff]
    %v1527 = vld [vmem:[#allocation14 + $0xf78] sm:$0xff]
    %v1528 = vld [vmem:[#allocation14 + $0xf80] sm:$0xff]
    %v1529 = vld [vmem:[#allocation14 + $0xf88] sm:$0xff]
    %v1530 = vld [vmem:[#allocation14 + $0xf90] sm:$0xff]
    %v1531 = vld [vmem:[#allocation14 + $0xf98] sm:$0xff]
    %v1532 = vld [vmem:[#allocation14 + $0xfa0] sm:$0xff]
    %v1533 = vld [vmem:[#allocation14 + $0xfa8] sm:$0xff]
    %v1534 = vld [vmem:[#allocation14 + $0xfb0] sm:$0xff]
    %v1535 = vld [vmem:[#allocation14 + $0xfb8] sm:$0xff]
    %v1536 = vld [vmem:[#allocation14 + $0xfc0] sm:$0xff]
    %v1537 = vld [vmem:[#allocation14 + $0xfc8] sm:$0xff]
    %v1538 = vld [vmem:[#allocation14 + $0xfd0] sm:$0xff]
    %v1539 = vld [vmem:[#allocation14 + $0xfd8] sm:$0xff]
    %v1540 = vld [vmem:[#allocation14 + $0xfe0] sm:$0xff]
    %v1541 = vld [vmem:[#allocation14 + $0xfe8] sm:$0xff]
    %v1542 = vld [vmem:[#allocation14 + $0xff0] sm:$0xff]
    %v1543 = vld [vmem:[#allocation14 + $0xff8] sm:$0xff]
    %v1544 = vld [vmem:[#allocation14 + $0x1000] sm:$0xff]
    %v1545 = vld [vmem:[#allocation14 + $0x1008] sm:$0xff]
    %v1546 = vld [vmem:[#allocation14 + $0x1010] sm:$0xff]
    %v1547 = vld [vmem:[#allocation14 + $0x1018] sm:$0xff]
    %v1548 = vld [vmem:[#allocation14 + $0x1020] sm:$0xff]
    %v1549 = vld [vmem:[#allocation14 + $0x1028] sm:$0xff]
    %v1550 = vld [vmem:[#allocation14 + $0x1030] sm:$0xff]
    %v1551 = vld [vmem:[#allocation14 + $0x1038] sm:$0xff]
    %v1552 = vld [vmem:[#allocation14 + $0x1040] sm:$0xff]
    %v1553 = vld [vmem:[#allocation14 + $0x1048] sm:$0xff]
    %v1554 = vld [vmem:[#allocation14 + $0x1050] sm:$0xff]
    %v1555 = vld [vmem:[#allocation14 + $0x1058] sm:$0xff]
    %v1556 = vld [vmem:[#allocation14 + $0x1060] sm:$0xff]
    %v1557 = vld [vmem:[#allocation14 + $0x1068] sm:$0xff]
    %v1558 = vld [vmem:[#allocation14 + $0x1070] sm:$0xff]
    %v1559 = vld [vmem:[#allocation14 + $0x1078] sm:$0xff]
    %v1560 = vld [vmem:[#allocation14 + $0x1080] sm:$0xff]
    %v1561 = vld [vmem:[#allocation14 + $0x1088] sm:$0xff]
    %v1562 = vld [vmem:[#allocation14 + $0x1090] sm:$0xff]
    %v1563 = vld [vmem:[#allocation14 + $0x1098] sm:$0xff]
    %v1564 = vld [vmem:[#allocation14 + $0x10a0] sm:$0xff]
    %v1565 = vld [vmem:[#allocation14 + $0x10a8] sm:$0xff]
    %v1566 = vld [vmem:[#allocation14 + $0x10b0] sm:$0xff]
    %v1567 = vld [vmem:[#allocation14 + $0x10b8] sm:$0xff]
    %v1568 = vld [vmem:[#allocation14 + $0x10c0] sm:$0xff]
    %v1569 = vld [vmem:[#allocation14 + $0x10c8] sm:$0xff]
    %v1570 = vld [vmem:[#allocation14 + $0x10d0] sm:$0xff]
    %v1571 = vld [vmem:[#allocation14 + $0x10d8] sm:$0xff]
    %v1572 = vld [vmem:[#allocation14 + $0x10e0] sm:$0xff]
    %v1573 = vld [vmem:[#allocation14 + $0x10e8] sm:$0xff]
    %v1574 = vld [vmem:[#allocation14 + $0x10f0] sm:$0xff]
    %v1575 = vld [vmem:[#allocation14 + $0x10f8] sm:$0xff]
    %v1576 = vld [vmem:[#allocation14 + $0x1100] sm:$0xff]
    %v1577 = vld [vmem:[#allocation14 + $0x1108] sm:$0xff]
    %v1578 = vld [vmem:[#allocation14 + $0x1110] sm:$0xff]
    %v1579 = vld [vmem:[#allocation14 + $0x1118] sm:$0xff]
    %v1580 = vld [vmem:[#allocation14 + $0x1120] sm:$0xff]
    %v1581 = vld [vmem:[#allocation14 + $0x1128] sm:$0xff]
    %v1582 = vld [vmem:[#allocation14 + $0x1130] sm:$0xff]
    %v1583 = vld [vmem:[#allocation14 + $0x1138] sm:$0xff]
    %v1584 = vld [vmem:[#allocation14 + $0x1140] sm:$0xff]
    %v1585 = vld [vmem:[#allocation14 + $0x1148] sm:$0xff]
    %v1586 = vld [vmem:[#allocation14 + $0x1150] sm:$0xff]
    %v1587 = vld [vmem:[#allocation14 + $0x1158] sm:$0xff]
    %v1588 = vld [vmem:[#allocation14 + $0x1160] sm:$0xff]
    %v1589 = vld [vmem:[#allocation14 + $0x1168] sm:$0xff]
    %v1590 = vld [vmem:[#allocation14 + $0x1170] sm:$0xff]
    %v1591 = vld [vmem:[#allocation14 + $0x1178] sm:$0xff]
    %v1592 = vld [vmem:[#allocation14 + $0x1180] sm:$0xff]
    %v1593 = vld [vmem:[#allocation14 + $0x1188] sm:$0xff]
    %v1594 = vld [vmem:[#allocation14 + $0x1190] sm:$0xff]
    %v1595 = vld [vmem:[#allocation14 + $0x1198] sm:$0xff]
    %v1596 = vld [vmem:[#allocation14 + $0x11a0] sm:$0xff]
    %v1597 = vld [vmem:[#allocation14 + $0x11a8] sm:$0xff]
    %v1598 = vld [vmem:[#allocation14 + $0x11b0] sm:$0xff]
    %v1599 = vld [vmem:[#allocation14 + $0x11b8] sm:$0xff]
    %v1600 = vld [vmem:[#allocation14 + $0x11c0] sm:$0xff]
    %v1601 = vld [vmem:[#allocation14 + $0x11c8] sm:$0xff]
    %v1602 = vld [vmem:[#allocation14 + $0x11d0] sm:$0xff]
    %v1603 = vld [vmem:[#allocation14 + $0x11d8] sm:$0xff]
    %v1604 = vld [vmem:[#allocation14 + $0x11e0] sm:$0xff]
    %v1605 = vld [vmem:[#allocation14 + $0x11e8] sm:$0xff]
    %v1606 = vld [vmem:[#allocation14 + $0x11f0] sm:$0xff]
    %v1607 = vld [vmem:[#allocation14 + $0x11f8] sm:$0xff]
    %v1608 = vld [vmem:[#allocation14 + $0x1200] sm:$0xff]
    %v1609 = vld [vmem:[#allocation14 + $0x1208] sm:$0xff]
    %v1610 = vld [vmem:[#allocation14 + $0x1210] sm:$0xff]
    %v1611 = vld [vmem:[#allocation14 + $0x1218] sm:$0xff]
    %v1612 = vld [vmem:[#allocation14 + $0x1220] sm:$0xff]
    %v1613 = vld [vmem:[#allocation14 + $0x1228] sm:$0xff]
    %v1614 = vld [vmem:[#allocation14 + $0x1230] sm:$0xff]
    %v1615 = vld [vmem:[#allocation14 + $0x1238] sm:$0xff]
    %v1616 = vld [vmem:[#allocation14 + $0x1240] sm:$0xff]
    %v1617 = vld [vmem:[#allocation14 + $0x1248] sm:$0xff]
    %v1618 = vld [vmem:[#allocation14 + $0x1250] sm:$0xff]
    %v1619 = vld [vmem:[#allocation14 + $0x1258] sm:$0xff]
    %v1620 = vld [vmem:[#allocation14 + $0x1260] sm:$0xff]
    %v1621 = vld [vmem:[#allocation14 + $0x1268] sm:$0xff]
    %v1622 = vld [vmem:[#allocation14 + $0x1270] sm:$0xff]
    %v1623 = vld [vmem:[#allocation14 + $0x1278] sm:$0xff]
    %v1624 = vld [vmem:[#allocation14 + $0x1280] sm:$0xff]
    %v1625 = vld [vmem:[#allocation14 + $0x1288] sm:$0xff]
    %v1626 = vld [vmem:[#allocation14 + $0x1290] sm:$0xff]
    %v1627 = vld [vmem:[#allocation14 + $0x1298] sm:$0xff]
    %v1628 = vld [vmem:[#allocation14 + $0x12a0] sm:$0xff]
    %v1629 = vld [vmem:[#allocation14 + $0x12a8] sm:$0xff]
    %v1630 = vld [vmem:[#allocation14 + $0x12b0] sm:$0xff]
    %v1631 = vld [vmem:[#allocation14 + $0x12b8] sm:$0xff]
    %v1632 = vld [vmem:[#allocation14 + $0x12c0] sm:$0xff]
    %v1633 = vld [vmem:[#allocation14 + $0x12c8] sm:$0xff]
    %v1634 = vld [vmem:[#allocation14 + $0x12d0] sm:$0xff]
    %v1635 = vld [vmem:[#allocation14 + $0x12d8] sm:$0xff]
    %v1636 = vld [vmem:[#allocation14 + $0x12e0] sm:$0xff]
    %v1637 = vld [vmem:[#allocation14 + $0x12e8] sm:$0xff]
    %v1638 = vld [vmem:[#allocation14 + $0x12f0] sm:$0xff]
    %v1639 = vld [vmem:[#allocation14 + $0x12f8] sm:$0xff]
    %v1640 = vld [vmem:[#allocation14 + $0x1300] sm:$0xff]
    %v1641 = vld [vmem:[#allocation14 + $0x1308] sm:$0xff]
    %v1642 = vld [vmem:[#allocation14 + $0x1310] sm:$0xff]
    %v1643 = vld [vmem:[#allocation14 + $0x1318] sm:$0xff]
    %v1644 = vld [vmem:[#allocation14 + $0x1320] sm:$0xff]
    %v1645 = vld [vmem:[#allocation14 + $0x1328] sm:$0xff]
    %v1646 = vld [vmem:[#allocation14 + $0x1330] sm:$0xff]
    %v1647 = vld [vmem:[#allocation14 + $0x1338] sm:$0xff]
    %v1648 = vld [vmem:[#allocation14 + $0x1340] sm:$0xff]
    %v1649 = vld [vmem:[#allocation14 + $0x1348] sm:$0xff]
    %v1650 = vld [vmem:[#allocation14 + $0x1350] sm:$0xff]
    %v1651 = vld [vmem:[#allocation14 + $0x1358] sm:$0xff]
    %v1652 = vld [vmem:[#allocation14 + $0x1360] sm:$0xff]
    %v1653 = vld [vmem:[#allocation14 + $0x1368] sm:$0xff]
    %v1654 = vld [vmem:[#allocation14 + $0x1370] sm:$0xff]
    %v1655 = vld [vmem:[#allocation14 + $0x1378] sm:$0xff]
    %v1656 = vld [vmem:[#allocation14 + $0x1380] sm:$0xff]
    %v1657 = vld [vmem:[#allocation14 + $0x1388] sm:$0xff]
    %v1658 = vld [vmem:[#allocation14 + $0x1390] sm:$0xff]
    %v1659 = vld [vmem:[#allocation14 + $0x1398] sm:$0xff]
    %v1660 = vld [vmem:[#allocation14 + $0x13a0] sm:$0xff]
    %v1661 = vld [vmem:[#allocation14 + $0x13a8] sm:$0xff]
    %v1662 = vld [vmem:[#allocation14 + $0x13b0] sm:$0xff]
    %v1663 = vld [vmem:[#allocation14 + $0x13b8] sm:$0xff]
    %v1664 = vld [vmem:[#allocation14 + $0x13c0] sm:$0xff]
    %v1665 = vld [vmem:[#allocation14 + $0x13c8] sm:$0xff]
    %v1666 = vld [vmem:[#allocation14 + $0x13d0] sm:$0xff]
    %v1667 = vld [vmem:[#allocation14 + $0x13d8] sm:$0xff]
    %v1668 = vld [vmem:[#allocation14 + $0x13e0] sm:$0xff]
    %v1669 = vld [vmem:[#allocation14 + $0x13e8] sm:$0xff]
    %v1670 = vld [vmem:[#allocation14 + $0x13f0] sm:$0xff]
    %v1671 = vld [vmem:[#allocation14 + $0x13f8] sm:$0xff]
    %v1672 = vld [vmem:[#allocation14 + $0x1400] sm:$0xff]
    %v1673 = vld [vmem:[#allocation14 + $0x1408] sm:$0xff]
    %v1674 = vld [vmem:[#allocation14 + $0x1410] sm:$0xff]
    %v1675 = vld [vmem:[#allocation14 + $0x1418] sm:$0xff]
    %v1676 = vld [vmem:[#allocation14 + $0x1420] sm:$0xff]
    %v1677 = vld [vmem:[#allocation14 + $0x1428] sm:$0xff]
    %v1678 = vld [vmem:[#allocation14 + $0x1430] sm:$0xff]
    %v1679 = vld [vmem:[#allocation14 + $0x1438] sm:$0xff]
    %v1680 = vld [vmem:[#allocation14 + $0x1440] sm:$0xff]
    %v1681 = vld [vmem:[#allocation14 + $0x1448] sm:$0xff]
    %v1682 = vld [vmem:[#allocation14 + $0x1450] sm:$0xff]
    %v1683 = vld [vmem:[#allocation14 + $0x1458] sm:$0xff]
    %v1684 = vld [vmem:[#allocation14 + $0x1460] sm:$0xff]
    %v1685 = vld [vmem:[#allocation14 + $0x1468] sm:$0xff]
    %v1686 = vld [vmem:[#allocation14 + $0x1470] sm:$0xff]
    %v1687 = vld [vmem:[#allocation14 + $0x1478] sm:$0xff]
    %v1688 = vld [vmem:[#allocation14 + $0x1480] sm:$0xff]
    %v1689 = vld [vmem:[#allocation14 + $0x1488] sm:$0xff]
    %v1690 = vld [vmem:[#allocation14 + $0x1490] sm:$0xff]
    %v1691 = vld [vmem:[#allocation14 + $0x1498] sm:$0xff]
    %v1692 = vld [vmem:[#allocation14 + $0x14a0] sm:$0xff]
    %v1693 = vld [vmem:[#allocation14 + $0x14a8] sm:$0xff]
    %v1694 = vld [vmem:[#allocation14 + $0x14b0] sm:$0xff]
    %v1695 = vld [vmem:[#allocation14 + $0x14b8] sm:$0xff]
    %v1696 = vld [vmem:[#allocation14 + $0x14c0] sm:$0xff]
    %v1697 = vld [vmem:[#allocation14 + $0x14c8] sm:$0xff]
    %v1698 = vld [vmem:[#allocation14 + $0x14d0] sm:$0xff]
    %v1699 = vld [vmem:[#allocation14 + $0x14d8] sm:$0xff]
    %v1700 = vld [vmem:[#allocation14 + $0x14e0] sm:$0xff]
    %v1701 = vld [vmem:[#allocation14 + $0x14e8] sm:$0xff]
    %v1702 = vld [vmem:[#allocation14 + $0x14f0] sm:$0xff]
    %v1703 = vld [vmem:[#allocation14 + $0x14f8] sm:$0xff]
    %v1704 = vld [vmem:[#allocation14 + $0x1500] sm:$0xff]
    %v1705 = vld [vmem:[#allocation14 + $0x1508] sm:$0xff]
    %v1706 = vld [vmem:[#allocation14 + $0x1510] sm:$0xff]
    %v1707 = vld [vmem:[#allocation14 + $0x1518] sm:$0xff]
    %v1708 = vld [vmem:[#allocation14 + $0x1520] sm:$0xff]
    %v1709 = vld [vmem:[#allocation14 + $0x1528] sm:$0xff]
    %v1710 = vld [vmem:[#allocation14 + $0x1530] sm:$0xff]
    %v1711 = vld [vmem:[#allocation14 + $0x1538] sm:$0xff]
    %v1712 = vld [vmem:[#allocation14 + $0x1540] sm:$0xff]
    %v1713 = vld [vmem:[#allocation14 + $0x1548] sm:$0xff]
    %v1714 = vld [vmem:[#allocation14 + $0x1550] sm:$0xff]
    %v1715 = vld [vmem:[#allocation14 + $0x1558] sm:$0xff]
    %v1716 = vld [vmem:[#allocation14 + $0x1560] sm:$0xff]
    %v1717 = vld [vmem:[#allocation14 + $0x1568] sm:$0xff]
    %v1718 = vld [vmem:[#allocation14 + $0x1570] sm:$0xff]
    %v1719 = vld [vmem:[#allocation14 + $0x1578] sm:$0xff]
    %v1720 = vld [vmem:[#allocation14 + $0x1580] sm:$0xff]
    %v1721 = vld [vmem:[#allocation14 + $0x1588] sm:$0xff]
    %v1722 = vld [vmem:[#allocation14 + $0x1590] sm:$0xff]
    %v1723 = vld [vmem:[#allocation14 + $0x1598] sm:$0xff]
    %v1724 = vld [vmem:[#allocation14 + $0x15a0] sm:$0xff]
    %v1725 = vld [vmem:[#allocation14 + $0x15a8] sm:$0xff]
    %v1726 = vld [vmem:[#allocation14 + $0x15b0] sm:$0xff]
    %v1727 = vld [vmem:[#allocation14 + $0x15b8] sm:$0xff]
    %v1728 = vld [vmem:[#allocation14 + $0x15c0] sm:$0xff]
    %v1729 = vld [vmem:[#allocation14 + $0x15c8] sm:$0xff]
    %v1730 = vld [vmem:[#allocation14 + $0x15d0] sm:$0xff]
    %v1731 = vld [vmem:[#allocation14 + $0x15d8] sm:$0xff]
    %v1732 = vld [vmem:[#allocation14 + $0x15e0] sm:$0xff]
    %v1733 = vld [vmem:[#allocation14 + $0x15e8] sm:$0xff]
    %v1734 = vld [vmem:[#allocation14 + $0x15f0] sm:$0xff]
    %v1735 = vld [vmem:[#allocation14 + $0x15f8] sm:$0xff]
    %v1736 = vld [vmem:[#allocation14 + $0x1600] sm:$0xff]
    %v1737 = vld [vmem:[#allocation14 + $0x1608] sm:$0xff]
    %v1738 = vld [vmem:[#allocation14 + $0x1610] sm:$0xff]
    %v1739 = vld [vmem:[#allocation14 + $0x1618] sm:$0xff]
    %v1740 = vld [vmem:[#allocation14 + $0x1620] sm:$0xff]
    %v1741 = vld [vmem:[#allocation14 + $0x1628] sm:$0xff]
    %v1742 = vld [vmem:[#allocation14 + $0x1630] sm:$0xff]
    %v1743 = vld [vmem:[#allocation14 + $0x1638] sm:$0xff]
    %v1744 = vld [vmem:[#allocation14 + $0x1640] sm:$0xff]
    %v1745 = vld [vmem:[#allocation14 + $0x1648] sm:$0xff]
    %v1746 = vld [vmem:[#allocation14 + $0x1650] sm:$0xff]
    %v1747 = vld [vmem:[#allocation14 + $0x1658] sm:$0xff]
    %v1748 = vld [vmem:[#allocation14 + $0x1660] sm:$0xff]
    %v1749 = vld [vmem:[#allocation14 + $0x1668] sm:$0xff]
    %v1750 = vld [vmem:[#allocation14 + $0x1670] sm:$0xff]
    %v1751 = vld [vmem:[#allocation14 + $0x1678] sm:$0xff]
    %v1752 = vld [vmem:[#allocation14 + $0x1680] sm:$0xff]
    %v1753 = vld [vmem:[#allocation14 + $0x1688] sm:$0xff]
    %v1754 = vld [vmem:[#allocation14 + $0x1690] sm:$0xff]
    %v1755 = vld [vmem:[#allocation14 + $0x1698] sm:$0xff]
    %v1756 = vld [vmem:[#allocation14 + $0x16a0] sm:$0xff]
    %v1757 = vld [vmem:[#allocation14 + $0x16a8] sm:$0xff]
    %v1758 = vld [vmem:[#allocation14 + $0x16b0] sm:$0xff]
    %v1759 = vld [vmem:[#allocation14 + $0x16b8] sm:$0xff]
    %v1760 = vld [vmem:[#allocation14 + $0x16c0] sm:$0xff]
    %v1761 = vld [vmem:[#allocation14 + $0x16c8] sm:$0xff]
    %v1762 = vld [vmem:[#allocation14 + $0x16d0] sm:$0xff]
    %v1763 = vld [vmem:[#allocation14 + $0x16d8] sm:$0xff]
    %v1764 = vld [vmem:[#allocation14 + $0x16e0] sm:$0xff]
    %v1765 = vld [vmem:[#allocation14 + $0x16e8] sm:$0xff]
    %v1766 = vld [vmem:[#allocation14 + $0x16f0] sm:$0xff]
    %v1767 = vld [vmem:[#allocation14 + $0x16f8] sm:$0xff]
    %v1768 = vld [vmem:[#allocation14 + $0x1700] sm:$0xff]
    %v1769 = vld [vmem:[#allocation14 + $0x1708] sm:$0xff]
    %v1770 = vld [vmem:[#allocation14 + $0x1710] sm:$0xff]
    %v1771 = vld [vmem:[#allocation14 + $0x1718] sm:$0xff]
    %v1772 = vld [vmem:[#allocation14 + $0x1720] sm:$0xff]
    %v1773 = vld [vmem:[#allocation14 + $0x1728] sm:$0xff]
    %v1774 = vld [vmem:[#allocation14 + $0x1730] sm:$0xff]
    %v1775 = vld [vmem:[#allocation14 + $0x1738] sm:$0xff]
    %v1776 = vld [vmem:[#allocation14 + $0x1740] sm:$0xff]
    %v1777 = vld [vmem:[#allocation14 + $0x1748] sm:$0xff]
    %v1778 = vld [vmem:[#allocation14 + $0x1750] sm:$0xff]
    %v1779 = vld [vmem:[#allocation14 + $0x1758] sm:$0xff]
    %v1780 = vld [vmem:[#allocation14 + $0x1760] sm:$0xff]
    %v1781 = vld [vmem:[#allocation14 + $0x1768] sm:$0xff]
    %v1782 = vld [vmem:[#allocation14 + $0x1770] sm:$0xff]
    %v1783 = vld [vmem:[#allocation14 + $0x1778] sm:$0xff]
    %v1784 = vld [vmem:[#allocation14 + $0x1780] sm:$0xff]
    %v1785 = vld [vmem:[#allocation14 + $0x1788] sm:$0xff]
    %v1786 = vld [vmem:[#allocation14 + $0x1790] sm:$0xff]
    %v1787 = vld [vmem:[#allocation14 + $0x1798] sm:$0xff]
    %v1788 = vld [vmem:[#allocation14 + $0x17a0] sm:$0xff]
    %v1789 = vld [vmem:[#allocation14 + $0x17a8] sm:$0xff]
    %v1790 = vld [vmem:[#allocation14 + $0x17b0] sm:$0xff]
    %v1791 = vld [vmem:[#allocation14 + $0x17b8] sm:$0xff]
    %v1792 = vld [vmem:[#allocation14 + $0x17c0] sm:$0xff]
    %v1793 = vld [vmem:[#allocation14 + $0x17c8] sm:$0xff]
    %v1794 = vld [vmem:[#allocation14 + $0x17d0] sm:$0xff]
    %v1795 = vld [vmem:[#allocation14 + $0x17d8] sm:$0xff]
    %v1796 = vld [vmem:[#allocation14 + $0x17e0] sm:$0xff]
    %v1797 = vld [vmem:[#allocation14 + $0x17e8] sm:$0xff]
    %v1798 = vld [vmem:[#allocation14 + $0x17f0] sm:$0xff]
    %v1799 = vld [vmem:[#allocation14 + $0x17f8] sm:$0xff]
    %v1800 = vld [vmem:[#allocation14 + $0x1800] sm:$0xff]
    %v1801 = vld [vmem:[#allocation14 + $0x1808] sm:$0xff]
    %v1802 = vld [vmem:[#allocation14 + $0x1810] sm:$0xff]
    %v1803 = vld [vmem:[#allocation14 + $0x1818] sm:$0xff]
    %v1804 = vld [vmem:[#allocation14 + $0x1820] sm:$0xff]
    %v1805 = vld [vmem:[#allocation14 + $0x1828] sm:$0xff]
    %v1806 = vld [vmem:[#allocation14 + $0x1830] sm:$0xff]
    %v1807 = vld [vmem:[#allocation14 + $0x1838] sm:$0xff]
    %v1808 = vld [vmem:[#allocation14 + $0x1840] sm:$0xff]
    %v1809 = vld [vmem:[#allocation14 + $0x1848] sm:$0xff]
    %v1810 = vld [vmem:[#allocation14 + $0x1850] sm:$0xff]
    %v1811 = vld [vmem:[#allocation14 + $0x1858] sm:$0xff]
    %v1812 = vld [vmem:[#allocation14 + $0x1860] sm:$0xff]
    %v1813 = vld [vmem:[#allocation14 + $0x1868] sm:$0xff]
    %v1814 = vld [vmem:[#allocation14 + $0x1870] sm:$0xff]
    %v1815 = vld [vmem:[#allocation14 + $0x1878] sm:$0xff]
    %v1816 = vld [vmem:[#allocation14 + $0x1880] sm:$0xff]
    %v1817 = vld [vmem:[#allocation14 + $0x1888] sm:$0xff]
    %v1818 = vld [vmem:[#allocation14 + $0x1890] sm:$0xff]
    %v1819 = vld [vmem:[#allocation14 + $0x1898] sm:$0xff]
    %v1820 = vld [vmem:[#allocation14 + $0x18a0] sm:$0xff]
    %v1821 = vld [vmem:[#allocation14 + $0x18a8] sm:$0xff]
    %v1822 = vld [vmem:[#allocation14 + $0x18b0] sm:$0xff]
    %v1823 = vld [vmem:[#allocation14 + $0x18b8] sm:$0xff]
    %v1824 = vld [vmem:[#allocation14 + $0x18c0] sm:$0xff]
    %v1825 = vld [vmem:[#allocation14 + $0x18c8] sm:$0xff]
    %v1826 = vld [vmem:[#allocation14 + $0x18d0] sm:$0xff]
    %v1827 = vld [vmem:[#allocation14 + $0x18d8] sm:$0xff]
    %v1828 = vld [vmem:[#allocation14 + $0x18e0] sm:$0xff]
    %v1829 = vld [vmem:[#allocation14 + $0x18e8] sm:$0xff]
    %v1830 = vld [vmem:[#allocation14 + $0x18f0] sm:$0xff]
    %v1831 = vld [vmem:[#allocation14 + $0x18f8] sm:$0xff]
    %v1832 = vld [vmem:[#allocation14 + $0x1900] sm:$0xff]
    %v1833 = vld [vmem:[#allocation14 + $0x1908] sm:$0xff]
    %v1834 = vld [vmem:[#allocation14 + $0x1910] sm:$0xff]
    %v1835 = vld [vmem:[#allocation14 + $0x1918] sm:$0xff]
    %v1836 = vld [vmem:[#allocation14 + $0x1920] sm:$0xff]
    %v1837 = vld [vmem:[#allocation14 + $0x1928] sm:$0xff]
    %v1838 = vld [vmem:[#allocation14 + $0x1930] sm:$0xff]
    %v1839 = vld [vmem:[#allocation14 + $0x1938] sm:$0xff]
    %v1840 = vld [vmem:[#allocation14 + $0x1940] sm:$0xff]
    %v1841 = vld [vmem:[#allocation14 + $0x1948] sm:$0xff]
    %v1842 = vld [vmem:[#allocation14 + $0x1950] sm:$0xff]
    %v1843 = vld [vmem:[#allocation14 + $0x1958] sm:$0xff]
    %v1844 = vld [vmem:[#allocation14 + $0x1960] sm:$0xff]
    %v1845 = vld [vmem:[#allocation14 + $0x1968] sm:$0xff]
    %v1846 = vld [vmem:[#allocation14 + $0x1970] sm:$0xff]
    %v1847 = vld [vmem:[#allocation14 + $0x1978] sm:$0xff]
    %v1848 = vld [vmem:[#allocation14 + $0x1980] sm:$0xff]
    %v1849 = vld [vmem:[#allocation14 + $0x1988] sm:$0xff]
    %v1850 = vld [vmem:[#allocation14 + $0x1990] sm:$0xff]
    %v1851 = vld [vmem:[#allocation14 + $0x1998] sm:$0xff]
    %v1852 = vld [vmem:[#allocation14 + $0x19a0] sm:$0xff]
    %v1853 = vld [vmem:[#allocation14 + $0x19a8] sm:$0xff]
    %v1854 = vld [vmem:[#allocation14 + $0x19b0] sm:$0xff]
    %v1855 = vld [vmem:[#allocation14 + $0x19b8] sm:$0xff]
    %v1856 = vld [vmem:[#allocation14 + $0x19c0] sm:$0xff]
    %v1857 = vld [vmem:[#allocation14 + $0x19c8] sm:$0xff]
    %v1858 = vld [vmem:[#allocation14 + $0x19d0] sm:$0xff]
    %v1859 = vld [vmem:[#allocation14 + $0x19d8] sm:$0xff]
    %v1860 = vld [vmem:[#allocation14 + $0x19e0] sm:$0xff]
    %v1861 = vld [vmem:[#allocation14 + $0x19e8] sm:$0xff]
    %v1862 = vld [vmem:[#allocation14 + $0x19f0] sm:$0xff]
    %v1863 = vld [vmem:[#allocation14 + $0x19f8] sm:$0xff]
    %v1864 = vld [vmem:[#allocation14 + $0x1a00] sm:$0xff]
    %v1865 = vld [vmem:[#allocation14 + $0x1a08] sm:$0xff]
    %v1866 = vld [vmem:[#allocation14 + $0x1a10] sm:$0xff]
    %v1867 = vld [vmem:[#allocation14 + $0x1a18] sm:$0xff]
    %v1868 = vld [vmem:[#allocation14 + $0x1a20] sm:$0xff]
    %v1869 = vld [vmem:[#allocation14 + $0x1a28] sm:$0xff]
    %v1870 = vld [vmem:[#allocation14 + $0x1a30] sm:$0xff]
    %v1871 = vld [vmem:[#allocation14 + $0x1a38] sm:$0xff]
    %v1872 = vld [vmem:[#allocation14 + $0x1a40] sm:$0xff]
    %v1873 = vld [vmem:[#allocation14 + $0x1a48] sm:$0xff]
    %v1874 = vld [vmem:[#allocation14 + $0x1a50] sm:$0xff]
    %v1875 = vld [vmem:[#allocation14 + $0x1a58] sm:$0xff]
    %v1876 = vld [vmem:[#allocation14 + $0x1a60] sm:$0xff]
    %v1877 = vld [vmem:[#allocation14 + $0x1a68] sm:$0xff]
    %v1878 = vld [vmem:[#allocation14 + $0x1a70] sm:$0xff]
    %v1879 = vld [vmem:[#allocation14 + $0x1a78] sm:$0xff]
    %v1880 = vld [vmem:[#allocation14 + $0x1a80] sm:$0xff]
    %v1881 = vld [vmem:[#allocation14 + $0x1a88] sm:$0xff]
    %v1882 = vld [vmem:[#allocation14 + $0x1a90] sm:$0xff]
    %v1883 = vld [vmem:[#allocation14 + $0x1a98] sm:$0xff]
    %v1884 = vld [vmem:[#allocation14 + $0x1aa0] sm:$0xff]
    %v1885 = vld [vmem:[#allocation14 + $0x1aa8] sm:$0xff]
    %v1886 = vld [vmem:[#allocation14 + $0x1ab0] sm:$0xff]
    %v1887 = vld [vmem:[#allocation14 + $0x1ab8] sm:$0xff]
    %v1888 = vld [vmem:[#allocation14 + $0x1ac0] sm:$0xff]
    %v1889 = vld [vmem:[#allocation14 + $0x1ac8] sm:$0xff]
    %v1890 = vld [vmem:[#allocation14 + $0x1ad0] sm:$0xff]
    %v1891 = vld [vmem:[#allocation14 + $0x1ad8] sm:$0xff]
    %v1892 = vld [vmem:[#allocation14 + $0x1ae0] sm:$0xff]
    %v1893 = vld [vmem:[#allocation14 + $0x1ae8] sm:$0xff]
    %v1894 = vld [vmem:[#allocation14 + $0x1af0] sm:$0xff]
    %v1895 = vld [vmem:[#allocation14 + $0x1af8] sm:$0xff]
    %v1896 = vld [vmem:[#allocation14 + $0x1b00] sm:$0xff]
    %v1897 = vld [vmem:[#allocation14 + $0x1b08] sm:$0xff]
    %v1898 = vld [vmem:[#allocation14 + $0x1b10] sm:$0xff]
    %v1899 = vld [vmem:[#allocation14 + $0x1b18] sm:$0xff]
    %v1900 = vld [vmem:[#allocation14 + $0x1b20] sm:$0xff]
    %v1901 = vld [vmem:[#allocation14 + $0x1b28] sm:$0xff]
    %v1902 = vld [vmem:[#allocation14 + $0x1b30] sm:$0xff]
    %v1903 = vld [vmem:[#allocation14 + $0x1b38] sm:$0xff]
    %v1904 = vld [vmem:[#allocation14 + $0x1b40] sm:$0xff]
    %v1905 = vld [vmem:[#allocation14 + $0x1b48] sm:$0xff]
    %v1906 = vld [vmem:[#allocation14 + $0x1b50] sm:$0xff]
    %v1907 = vld [vmem:[#allocation14 + $0x1b58] sm:$0xff]
    %v1908 = vld [vmem:[#allocation14 + $0x1b60] sm:$0xff]
    %v1909 = vld [vmem:[#allocation14 + $0x1b68] sm:$0xff]
    %v1910 = vld [vmem:[#allocation14 + $0x1b70] sm:$0xff]
    %v1911 = vld [vmem:[#allocation14 + $0x1b78] sm:$0xff]
    %v1912 = vld [vmem:[#allocation14 + $0x1b80] sm:$0xff]
    %v1913 = vld [vmem:[#allocation14 + $0x1b88] sm:$0xff]
    %v1914 = vld [vmem:[#allocation14 + $0x1b90] sm:$0xff]
    %v1915 = vld [vmem:[#allocation14 + $0x1b98] sm:$0xff]
    %v1916 = vld [vmem:[#allocation14 + $0x1ba0] sm:$0xff]
    %v1917 = vld [vmem:[#allocation14 + $0x1ba8] sm:$0xff]
    %v1918 = vld [vmem:[#allocation14 + $0x1bb0] sm:$0xff]
    %v1919 = vld [vmem:[#allocation14 + $0x1bb8] sm:$0xff]
    %v1920 = vld [vmem:[#allocation14 + $0x1bc0] sm:$0xff]
    %v1921 = vld [vmem:[#allocation14 + $0x1bc8] sm:$0xff]
    %v1922 = vld [vmem:[#allocation14 + $0x1bd0] sm:$0xff]
    %v1923 = vld [vmem:[#allocation14 + $0x1bd8] sm:$0xff]
    %v1924 = vld [vmem:[#allocation14 + $0x1be0] sm:$0xff]
    %v1925 = vld [vmem:[#allocation14 + $0x1be8] sm:$0xff]
    %v1926 = vld [vmem:[#allocation14 + $0x1bf0] sm:$0xff]
    %v1927 = vld [vmem:[#allocation14 + $0x1bf8] sm:$0xff]
    %v1928 = vld [vmem:[#allocation14 + $0x1c00] sm:$0xff]
    %v1929 = vld [vmem:[#allocation14 + $0x1c08] sm:$0xff]
    %v1930 = vld [vmem:[#allocation14 + $0x1c10] sm:$0xff]
    %v1931 = vld [vmem:[#allocation14 + $0x1c18] sm:$0xff]
    %v1932 = vld [vmem:[#allocation14 + $0x1c20] sm:$0xff]
    %v1933 = vld [vmem:[#allocation14 + $0x1c28] sm:$0xff]
    %v1934 = vld [vmem:[#allocation14 + $0x1c30] sm:$0xff]
    %v1935 = vld [vmem:[#allocation14 + $0x1c38] sm:$0xff]
    %v1936 = vld [vmem:[#allocation14 + $0x1c40] sm:$0xff]
    %v1937 = vld [vmem:[#allocation14 + $0x1c48] sm:$0xff]
    %v1938 = vld [vmem:[#allocation14 + $0x1c50] sm:$0xff]
    %v1939 = vld [vmem:[#allocation14 + $0x1c58] sm:$0xff]
    %v1940 = vld [vmem:[#allocation14 + $0x1c60] sm:$0xff]
    %v1941 = vld [vmem:[#allocation14 + $0x1c68] sm:$0xff]
    %v1942 = vld [vmem:[#allocation14 + $0x1c70] sm:$0xff]
    %v1943 = vld [vmem:[#allocation14 + $0x1c78] sm:$0xff]
    %v1944 = vld [vmem:[#allocation14 + $0x1c80] sm:$0xff]
    %v1945 = vld [vmem:[#allocation14 + $0x1c88] sm:$0xff]
    %v1946 = vld [vmem:[#allocation14 + $0x1c90] sm:$0xff]
    %v1947 = vld [vmem:[#allocation14 + $0x1c98] sm:$0xff]
    %v1948 = vld [vmem:[#allocation14 + $0x1ca0] sm:$0xff]
    %v1949 = vld [vmem:[#allocation14 + $0x1ca8] sm:$0xff]
    %v1950 = vld [vmem:[#allocation14 + $0x1cb0] sm:$0xff]
    %v1951 = vld [vmem:[#allocation14 + $0x1cb8] sm:$0xff]
    %v1952 = vld [vmem:[#allocation14 + $0x1cc0] sm:$0xff]
    %v1953 = vld [vmem:[#allocation14 + $0x1cc8] sm:$0xff]
    %v1954 = vld [vmem:[#allocation14 + $0x1cd0] sm:$0xff]
    %v1955 = vld [vmem:[#allocation14 + $0x1cd8] sm:$0xff]
    %v1956 = vld [vmem:[#allocation14 + $0x1ce0] sm:$0xff]
    %v1957 = vld [vmem:[#allocation14 + $0x1ce8] sm:$0xff]
    %v1958 = vld [vmem:[#allocation14 + $0x1cf0] sm:$0xff]
    %v1959 = vld [vmem:[#allocation14 + $0x1cf8] sm:$0xff]
    %v1960 = vld [vmem:[#allocation14 + $0x1d00] sm:$0xff]
    %v1961 = vld [vmem:[#allocation14 + $0x1d08] sm:$0xff]
    %v1962 = vld [vmem:[#allocation14 + $0x1d10] sm:$0xff]
    %v1963 = vld [vmem:[#allocation14 + $0x1d18] sm:$0xff]
    %v1964 = vld [vmem:[#allocation14 + $0x1d20] sm:$0xff]
    %v1965 = vld [vmem:[#allocation14 + $0x1d28] sm:$0xff]
    %v1966 = vld [vmem:[#allocation14 + $0x1d30] sm:$0xff]
    %v1967 = vld [vmem:[#allocation14 + $0x1d38] sm:$0xff]
    %v1968 = vld [vmem:[#allocation14 + $0x1d40] sm:$0xff]
    %v1969 = vld [vmem:[#allocation14 + $0x1d48] sm:$0xff]
    %v1970 = vld [vmem:[#allocation14 + $0x1d50] sm:$0xff]
    %v1971 = vld [vmem:[#allocation14 + $0x1d58] sm:$0xff]
    %v1972 = vld [vmem:[#allocation14 + $0x1d60] sm:$0xff]
    %v1973 = vld [vmem:[#allocation14 + $0x1d68] sm:$0xff]
    %v1974 = vld [vmem:[#allocation14 + $0x1d70] sm:$0xff]
    %v1975 = vld [vmem:[#allocation14 + $0x1d78] sm:$0xff]
    %v1976 = vld [vmem:[#allocation14 + $0x1d80] sm:$0xff]
    %v1977 = vld [vmem:[#allocation14 + $0x1d88] sm:$0xff]
    %v1978 = vld [vmem:[#allocation14 + $0x1d90] sm:$0xff]
    %v1979 = vld [vmem:[#allocation14 + $0x1d98] sm:$0xff]
    %v1980 = vld [vmem:[#allocation14 + $0x1da0] sm:$0xff]
    %v1981 = vld [vmem:[#allocation14 + $0x1da8] sm:$0xff]
    %v1982 = vld [vmem:[#allocation14 + $0x1db0] sm:$0xff]
    %v1983 = vld [vmem:[#allocation14 + $0x1db8] sm:$0xff]
    %v1984 = vld [vmem:[#allocation14 + $0x1dc0] sm:$0xff]
    %v1985 = vld [vmem:[#allocation14 + $0x1dc8] sm:$0xff]
    %v1986 = vld [vmem:[#allocation14 + $0x1dd0] sm:$0xff]
    %v1987 = vld [vmem:[#allocation14 + $0x1dd8] sm:$0xff]
    %v1988 = vld [vmem:[#allocation14 + $0x1de0] sm:$0xff]
    %v1989 = vld [vmem:[#allocation14 + $0x1de8] sm:$0xff]
    %v1990 = vld [vmem:[#allocation14 + $0x1df0] sm:$0xff]
    %v1991 = vld [vmem:[#allocation14 + $0x1df8] sm:$0xff]
    %v1992 = vld [vmem:[#allocation14 + $0x1e00] sm:$0xff]
    %v1993 = vld [vmem:[#allocation14 + $0x1e08] sm:$0xff]
    %v1994 = vld [vmem:[#allocation14 + $0x1e10] sm:$0xff]
    %v1995 = vld [vmem:[#allocation14 + $0x1e18] sm:$0xff]
    %v1996 = vld [vmem:[#allocation14 + $0x1e20] sm:$0xff]
    %v1997 = vld [vmem:[#allocation14 + $0x1e28] sm:$0xff]
    %v1998 = vld [vmem:[#allocation14 + $0x1e30] sm:$0xff]
    %v1999 = vld [vmem:[#allocation14 + $0x1e38] sm:$0xff]
    %v2000 = vld [vmem:[#allocation14 + $0x1e40] sm:$0xff]
    %v2001 = vld [vmem:[#allocation14 + $0x1e48] sm:$0xff]
    %v2002 = vld [vmem:[#allocation14 + $0x1e50] sm:$0xff]
    %v2003 = vld [vmem:[#allocation14 + $0x1e58] sm:$0xff]
    %v2004 = vld [vmem:[#allocation14 + $0x1e60] sm:$0xff]
    %v2005 = vld [vmem:[#allocation14 + $0x1e68] sm:$0xff]
    %v2006 = vld [vmem:[#allocation14 + $0x1e70] sm:$0xff]
    %v2007 = vld [vmem:[#allocation14 + $0x1e78] sm:$0xff]
    %v2008 = vld [vmem:[#allocation14 + $0x1e80] sm:$0xff]
    %v2009 = vld [vmem:[#allocation14 + $0x1e88] sm:$0xff]
    %v2010 = vld [vmem:[#allocation14 + $0x1e90] sm:$0xff]
    %v2011 = vld [vmem:[#allocation14 + $0x1e98] sm:$0xff]
    %v2012 = vld [vmem:[#allocation14 + $0x1ea0] sm:$0xff]
    %v2013 = vld [vmem:[#allocation14 + $0x1ea8] sm:$0xff]
    %v2014 = vld [vmem:[#allocation14 + $0x1eb0] sm:$0xff]
    %v2015 = vld [vmem:[#allocation14 + $0x1eb8] sm:$0xff]
    %v2016 = vld [vmem:[#allocation14 + $0x1ec0] sm:$0xff]
    %v2017 = vld [vmem:[#allocation14 + $0x1ec8] sm:$0xff]
    %v2018 = vld [vmem:[#allocation14 + $0x1ed0] sm:$0xff]
    %v2019 = vld [vmem:[#allocation14 + $0x1ed8] sm:$0xff]
    %v2020 = vld [vmem:[#allocation14 + $0x1ee0] sm:$0xff]
    %v2021 = vld [vmem:[#allocation14 + $0x1ee8] sm:$0xff]
    %v2022 = vld [vmem:[#allocation14 + $0x1ef0] sm:$0xff]
    %v2023 = vld [vmem:[#allocation14 + $0x1ef8] sm:$0xff]
    %v2024 = vld [vmem:[#allocation14 + $0x1f00] sm:$0xff]
    %v2025 = vld [vmem:[#allocation14 + $0x1f08] sm:$0xff]
    %v2026 = vld [vmem:[#allocation14 + $0x1f10] sm:$0xff]
    %v2027 = vld [vmem:[#allocation14 + $0x1f18] sm:$0xff]
    %v2028 = vld [vmem:[#allocation14 + $0x1f20] sm:$0xff]
    %v2029 = vld [vmem:[#allocation14 + $0x1f28] sm:$0xff]
    %v2030 = vld [vmem:[#allocation14 + $0x1f30] sm:$0xff]
    %v2031 = vld [vmem:[#allocation14 + $0x1f38] sm:$0xff]
    %v2032 = vld [vmem:[#allocation14 + $0x1f40] sm:$0xff]
    %v2033 = vld [vmem:[#allocation14 + $0x1f48] sm:$0xff]
    %v2034 = vld [vmem:[#allocation14 + $0x1f50] sm:$0xff]
    %v2035 = vld [vmem:[#allocation14 + $0x1f58] sm:$0xff]
    %v2036 = vld [vmem:[#allocation14 + $0x1f60] sm:$0xff]
    %v2037 = vld [vmem:[#allocation14 + $0x1f68] sm:$0xff]
    %v2038 = vld [vmem:[#allocation14 + $0x1f70] sm:$0xff]
    %v2039 = vld [vmem:[#allocation14 + $0x1f78] sm:$0xff]
    %v2040 = vld [vmem:[#allocation14 + $0x1f80] sm:$0xff]
    %v2041 = vld [vmem:[#allocation14 + $0x1f88] sm:$0xff]
    %v2042 = vld [vmem:[#allocation14 + $0x1f90] sm:$0xff]
    %v2043 = vld [vmem:[#allocation14 + $0x1f98] sm:$0xff]
    %v2044 = vld [vmem:[#allocation14 + $0x1fa0] sm:$0xff]
    %v2045 = vld [vmem:[#allocation14 + $0x1fa8] sm:$0xff]
    %v2046 = vld [vmem:[#allocation14 + $0x1fb0] sm:$0xff]
    %v2047 = vld [vmem:[#allocation14 + $0x1fb8] sm:$0xff]
    %v2048 = vld [vmem:[#allocation14 + $0x1fc0] sm:$0xff]
    %v2049 = vld [vmem:[#allocation14 + $0x1fc8] sm:$0xff]
    %v2050 = vld [vmem:[#allocation14 + $0x1fd0] sm:$0xff]
    %v2051 = vld [vmem:[#allocation14 + $0x1fd8] sm:$0xff]
    %v2052 = vld [vmem:[#allocation14 + $0x1fe0] sm:$0xff]
    %v2053 = vld [vmem:[#allocation14 + $0x1fe8] sm:$0xff]
    %v2054 = vld [vmem:[#allocation14 + $0x1ff0] sm:$0xff]
    %v2055 = vld [vmem:[#allocation14 + $0x1ff8] sm:$0xff]
    %v2056 = vld [vmem:[#allocation14 + $0x2000] sm:$0xff]
    %v2057 = vld [vmem:[#allocation14 + $0x2008] sm:$0xff]
    %v2058 = vld [vmem:[#allocation14 + $0x2010] sm:$0xff]
    %v2059 = vld [vmem:[#allocation14 + $0x2018] sm:$0xff]
    %v2060 = vld [vmem:[#allocation14 + $0x2020] sm:$0xff]
    %v2061 = vld [vmem:[#allocation14 + $0x2028] sm:$0xff]
    %v2062 = vld [vmem:[#allocation14 + $0x2030] sm:$0xff]
    %v2063 = vld [vmem:[#allocation14 + $0x2038] sm:$0xff]
    %v2064 = vld [vmem:[#allocation14 + $0x2040] sm:$0xff]
    %v2065 = vld [vmem:[#allocation14 + $0x2048] sm:$0xff]
    %v2066 = vld [vmem:[#allocation14 + $0x2050] sm:$0xff]
    %v2067 = vld [vmem:[#allocation14 + $0x2058] sm:$0xff]
    %v2068 = vld [vmem:[#allocation14 + $0x2060] sm:$0xff]
    %v2069 = vld [vmem:[#allocation14 + $0x2068] sm:$0xff]
    %v2070 = vld [vmem:[#allocation14 + $0x2070] sm:$0xff]
    %v2071 = vld [vmem:[#allocation14 + $0x2078] sm:$0xff]
    %v2072 = vld [vmem:[#allocation14 + $0x2080] sm:$0xff]
    %v2073 = vld [vmem:[#allocation14 + $0x2088] sm:$0xff]
    %v2074 = vld [vmem:[#allocation14 + $0x2090] sm:$0xff]
    %v2075 = vld [vmem:[#allocation14 + $0x2098] sm:$0xff]
    %v2076 = vld [vmem:[#allocation14 + $0x20a0] sm:$0xff]
    %v2077 = vld [vmem:[#allocation14 + $0x20a8] sm:$0xff]
    %v2078 = vld [vmem:[#allocation14 + $0x20b0] sm:$0xff]
    %v2079 = vld [vmem:[#allocation14 + $0x20b8] sm:$0xff]
    %v2080 = vld [vmem:[#allocation14 + $0x20c0] sm:$0xff]
    %v2081 = vld [vmem:[#allocation14 + $0x20c8] sm:$0xff]
    %v2082 = vld [vmem:[#allocation14 + $0x20d0] sm:$0xff]
    %v2083 = vld [vmem:[#allocation14 + $0x20d8] sm:$0xff]
    %v2084 = vld [vmem:[#allocation14 + $0x20e0] sm:$0xff]
    %v2085 = vld [vmem:[#allocation14 + $0x20e8] sm:$0xff]
    %v2086 = vld [vmem:[#allocation14 + $0x20f0] sm:$0xff]
    %v2087 = vld [vmem:[#allocation14 + $0x20f8] sm:$0xff]
    %v2088 = vld [vmem:[#allocation14 + $0x2100] sm:$0xff]
    %v2089 = vld [vmem:[#allocation14 + $0x2108] sm:$0xff]
    %v2090 = vld [vmem:[#allocation14 + $0x2110] sm:$0xff]
    %v2091 = vld [vmem:[#allocation14 + $0x2118] sm:$0xff]
    %v2092 = vld [vmem:[#allocation14 + $0x2120] sm:$0xff]
    %v2093 = vld [vmem:[#allocation14 + $0x2128] sm:$0xff]
    %v2094 = vld [vmem:[#allocation14 + $0x2130] sm:$0xff]
    %v2095 = vld [vmem:[#allocation14 + $0x2138] sm:$0xff]
    %v2096 = vld [vmem:[#allocation14 + $0x2140] sm:$0xff]
    %v2097 = vld [vmem:[#allocation14 + $0x2148] sm:$0xff]
    %v2098 = vld [vmem:[#allocation14 + $0x2150] sm:$0xff]
    %v2099 = vld [vmem:[#allocation14 + $0x2158] sm:$0xff]
    %v2100 = vld [vmem:[#allocation14 + $0x2160] sm:$0xff]
    %v2101 = vld [vmem:[#allocation14 + $0x2168] sm:$0xff]
    %v2102 = vld [vmem:[#allocation14 + $0x2170] sm:$0xff]
    %v2103 = vld [vmem:[#allocation14 + $0x2178] sm:$0xff]
    %v2104 = vld [vmem:[#allocation14 + $0x2180] sm:$0xff]
    %v2105 = vld [vmem:[#allocation14 + $0x2188] sm:$0xff]
    %v2106 = vld [vmem:[#allocation14 + $0x2190] sm:$0xff]
    %v2107 = vld [vmem:[#allocation14 + $0x2198] sm:$0xff]
    %v2108 = vld [vmem:[#allocation14 + $0x21a0] sm:$0xff]
    %v2109 = vld [vmem:[#allocation14 + $0x21a8] sm:$0xff]
    %v2110 = vld [vmem:[#allocation14 + $0x21b0] sm:$0xff]
    %v2111 = vld [vmem:[#allocation14 + $0x21b8] sm:$0xff]
    %v2112 = vld [vmem:[#allocation14 + $0x21c0] sm:$0xff]
    %v2113 = vld [vmem:[#allocation14 + $0x21c8] sm:$0xff]
    %v2114 = vld [vmem:[#allocation14 + $0x21d0] sm:$0xff]
    %v2115 = vld [vmem:[#allocation14 + $0x21d8] sm:$0xff]
    %v2116 = vld [vmem:[#allocation14 + $0x21e0] sm:$0xff]
    %v2117 = vld [vmem:[#allocation14 + $0x21e8] sm:$0xff]
    %v2118 = vld [vmem:[#allocation14 + $0x21f0] sm:$0xff]
    %v2119 = vld [vmem:[#allocation14 + $0x21f8] sm:$0xff]
    %v2120 = vld [vmem:[#allocation14 + $0x2200] sm:$0xff]
    %v2121 = vld [vmem:[#allocation14 + $0x2208] sm:$0xff]
    %v2122 = vld [vmem:[#allocation14 + $0x2210] sm:$0xff]
    %v2123 = vld [vmem:[#allocation14 + $0x2218] sm:$0xff]
    %v2124 = vld [vmem:[#allocation14 + $0x2220] sm:$0xff]
    %v2125 = vld [vmem:[#allocation14 + $0x2228] sm:$0xff]
    %v2126 = vld [vmem:[#allocation14 + $0x2230] sm:$0xff]
    %v2127 = vld [vmem:[#allocation14 + $0x2238] sm:$0xff]
    %v2128 = vld [vmem:[#allocation14 + $0x2240] sm:$0xff]
    %v2129 = vld [vmem:[#allocation14 + $0x2248] sm:$0xff]
    %v2130 = vld [vmem:[#allocation14 + $0x2250] sm:$0xff]
    %v2131 = vld [vmem:[#allocation14 + $0x2258] sm:$0xff]
    %v2132 = vld [vmem:[#allocation14 + $0x2260] sm:$0xff]
    %v2133 = vld [vmem:[#allocation14 + $0x2268] sm:$0xff]
    %v2134 = vld [vmem:[#allocation14 + $0x2270] sm:$0xff]
    %v2135 = vld [vmem:[#allocation14 + $0x2278] sm:$0xff]
    %v2136 = vld [vmem:[#allocation14 + $0x2280] sm:$0xff]
    %v2137 = vld [vmem:[#allocation14 + $0x2288] sm:$0xff]
    %v2138 = vld [vmem:[#allocation14 + $0x2290] sm:$0xff]
    %v2139 = vld [vmem:[#allocation14 + $0x2298] sm:$0xff]
    %v2140 = vld [vmem:[#allocation14 + $0x22a0] sm:$0xff]
    %v2141 = vld [vmem:[#allocation14 + $0x22a8] sm:$0xff]
    %v2142 = vld [vmem:[#allocation14 + $0x22b0] sm:$0xff]
    %v2143 = vld [vmem:[#allocation14 + $0x22b8] sm:$0xff]
    %v2144 = vld [vmem:[#allocation14 + $0x22c0] sm:$0xff]
    %v2145 = vld [vmem:[#allocation14 + $0x22c8] sm:$0xff]
    %v2146 = vld [vmem:[#allocation14 + $0x22d0] sm:$0xff]
    %v2147 = vld [vmem:[#allocation14 + $0x22d8] sm:$0xff]
    %v2148 = vld [vmem:[#allocation14 + $0x22e0] sm:$0xff]
    %v2149 = vld [vmem:[#allocation14 + $0x22e8] sm:$0xff]
    %v2150 = vld [vmem:[#allocation14 + $0x22f0] sm:$0xff]
    %v2151 = vld [vmem:[#allocation14 + $0x22f8] sm:$0xff]
    %v2152 = vld [vmem:[#allocation14 + $0x2300] sm:$0xff]
    %v2153 = vld [vmem:[#allocation14 + $0x2308] sm:$0xff]
    %v2154 = vld [vmem:[#allocation14 + $0x2310] sm:$0xff]
    %v2155 = vld [vmem:[#allocation14 + $0x2318] sm:$0xff]
    %v2156 = vld [vmem:[#allocation14 + $0x2320] sm:$0xff]
    %v2157 = vld [vmem:[#allocation14 + $0x2328] sm:$0xff]
    %v2158 = vld [vmem:[#allocation14 + $0x2330] sm:$0xff]
    %v2159 = vld [vmem:[#allocation14 + $0x2338] sm:$0xff]
    %v2160 = vld [vmem:[#allocation14 + $0x2340] sm:$0xff]
    %v2161 = vld [vmem:[#allocation14 + $0x2348] sm:$0xff]
    %v2162 = vld [vmem:[#allocation14 + $0x2350] sm:$0xff]
    %v2163 = vld [vmem:[#allocation14 + $0x2358] sm:$0xff]
    %v2164 = vld [vmem:[#allocation14 + $0x2360] sm:$0xff]
    %v2165 = vld [vmem:[#allocation14 + $0x2368] sm:$0xff]
    %v2166 = vld [vmem:[#allocation14 + $0x2370] sm:$0xff]
    %v2167 = vld [vmem:[#allocation14 + $0x2378] sm:$0xff]
    %v2168 = vld [vmem:[#allocation14 + $0x2380] sm:$0xff]
    %v2169 = vld [vmem:[#allocation14 + $0x2388] sm:$0xff]
    %v2170 = vld [vmem:[#allocation14 + $0x2390] sm:$0xff]
    %v2171 = vld [vmem:[#allocation14 + $0x2398] sm:$0xff]
    %v2172 = vld [vmem:[#allocation14 + $0x23a0] sm:$0xff]
    %v2173 = vld [vmem:[#allocation14 + $0x23a8] sm:$0xff]
    %v2174 = vld [vmem:[#allocation14 + $0x23b0] sm:$0xff]
    %v2175 = vld [vmem:[#allocation14 + $0x23b8] sm:$0xff]
    %v2176 = vld [vmem:[#allocation14 + $0x23c0] sm:$0xff]
    %v2177 = vld [vmem:[#allocation14 + $0x23c8] sm:$0xff]
    %v2178 = vld [vmem:[#allocation14 + $0x23d0] sm:$0xff]
    %v2179 = vld [vmem:[#allocation14 + $0x23d8] sm:$0xff]
    %v2180 = vld [vmem:[#allocation14 + $0x23e0] sm:$0xff]
    %v2181 = vld [vmem:[#allocation14 + $0x23e8] sm:$0xff]
    %v2182 = vld [vmem:[#allocation14 + $0x23f0] sm:$0xff]
    %v2183 = vld [vmem:[#allocation14 + $0x23f8] sm:$0xff]
    %v2184 = vld [vmem:[#allocation14 + $0x2400] sm:$0xff]
    %v2185 = vld [vmem:[#allocation14 + $0x2408] sm:$0xff]
    %v2186 = vld [vmem:[#allocation14 + $0x2410] sm:$0xff]
    %v2187 = vld [vmem:[#allocation14 + $0x2418] sm:$0xff]
    %v2188 = vld [vmem:[#allocation14 + $0x2420] sm:$0xff]
    %v2189 = vld [vmem:[#allocation14 + $0x2428] sm:$0xff]
    %v2190 = vld [vmem:[#allocation14 + $0x2430] sm:$0xff]
    %v2191 = vld [vmem:[#allocation14 + $0x2438] sm:$0xff]
    %v2192 = vld [vmem:[#allocation14 + $0x2440] sm:$0xff]
    %v2193 = vld [vmem:[#allocation14 + $0x2448] sm:$0xff]
    %v2194 = vld [vmem:[#allocation14 + $0x2450] sm:$0xff]
    %v2195 = vld [vmem:[#allocation14 + $0x2458] sm:$0xff]
    %v2196 = vld [vmem:[#allocation14 + $0x2460] sm:$0xff]
    %v2197 = vld [vmem:[#allocation14 + $0x2468] sm:$0xff]
    %v2198 = vld [vmem:[#allocation14 + $0x2470] sm:$0xff]
    %v2199 = vld [vmem:[#allocation14 + $0x2478] sm:$0xff]
    %v2200 = vld [vmem:[#allocation14 + $0x2480] sm:$0xff]
    %v2201 = vld [vmem:[#allocation14 + $0x2488] sm:$0xff]
    %v2202 = vld [vmem:[#allocation14 + $0x2490] sm:$0xff]
    %v2203 = vld [vmem:[#allocation14 + $0x2498] sm:$0xff]
    %v2204 = vld [vmem:[#allocation14 + $0x24a0] sm:$0xff]
    %v2205 = vld [vmem:[#allocation14 + $0x24a8] sm:$0xff]
    %v2206 = vld [vmem:[#allocation14 + $0x24b0] sm:$0xff]
    %v2207 = vld [vmem:[#allocation14 + $0x24b8] sm:$0xff]
    %v2208 = vld [vmem:[#allocation14 + $0x24c0] sm:$0xff]
    %v2209 = vld [vmem:[#allocation14 + $0x24c8] sm:$0xff]
    %v2210 = vld [vmem:[#allocation14 + $0x24d0] sm:$0xff]
    %v2211 = vld [vmem:[#allocation14 + $0x24d8] sm:$0xff]
    %v2212 = vld [vmem:[#allocation14 + $0x24e0] sm:$0xff]
    %v2213 = vld [vmem:[#allocation14 + $0x24e8] sm:$0xff]
    %v2214 = vld [vmem:[#allocation14 + $0x24f0] sm:$0xff]
    %v2215 = vld [vmem:[#allocation14 + $0x24f8] sm:$0xff]
    %v2216 = vld [vmem:[#allocation14 + $0x2500] sm:$0xff]
    %v2217 = vld [vmem:[#allocation14 + $0x2508] sm:$0xff]
    %v2218 = vld [vmem:[#allocation14 + $0x2510] sm:$0xff]
    %v2219 = vld [vmem:[#allocation14 + $0x2518] sm:$0xff]
    %v2220 = vld [vmem:[#allocation14 + $0x2520] sm:$0xff]
    %v2221 = vld [vmem:[#allocation14 + $0x2528] sm:$0xff]
    %v2222 = vld [vmem:[#allocation14 + $0x2530] sm:$0xff]
    %v2223 = vld [vmem:[#allocation14 + $0x2538] sm:$0xff]
    %v2224 = vld [vmem:[#allocation14 + $0x2540] sm:$0xff]
    %v2225 = vld [vmem:[#allocation14 + $0x2548] sm:$0xff]
    %v2226 = vld [vmem:[#allocation14 + $0x2550] sm:$0xff]
    %v2227 = vld [vmem:[#allocation14 + $0x2558] sm:$0xff]
    %v2228 = vld [vmem:[#allocation14 + $0x2560] sm:$0xff]
    %v2229 = vld [vmem:[#allocation14 + $0x2568] sm:$0xff]
    %v2230 = vld [vmem:[#allocation14 + $0x2570] sm:$0xff]
    %v2231 = vld [vmem:[#allocation14 + $0x2578] sm:$0xff]
    %v2232 = vld [vmem:[#allocation14 + $0x2580] sm:$0xff]
    %v2233 = vld [vmem:[#allocation14 + $0x2588] sm:$0xff]
    %v2234 = vld [vmem:[#allocation14 + $0x2590] sm:$0xff]
    %v2235 = vld [vmem:[#allocation14 + $0x2598] sm:$0xff]
    %v2236 = vld [vmem:[#allocation14 + $0x25a0] sm:$0xff]
    %v2237 = vld [vmem:[#allocation14 + $0x25a8] sm:$0xff]
    %v2238 = vld [vmem:[#allocation14 + $0x25b0] sm:$0xff]
    %v2239 = vld [vmem:[#allocation14 + $0x25b8] sm:$0xff]
    %v2240 = vld [vmem:[#allocation14 + $0x25c0] sm:$0xff]
    %v2241 = vld [vmem:[#allocation14 + $0x25c8] sm:$0xff]
    %v2242 = vld [vmem:[#allocation14 + $0x25d0] sm:$0xff]
    %v2243 = vld [vmem:[#allocation14 + $0x25d8] sm:$0xff]
    %v2244 = vld [vmem:[#allocation14 + $0x25e0] sm:$0xff]
    %v2245 = vld [vmem:[#allocation14 + $0x25e8] sm:$0xff]
    %v2246 = vld [vmem:[#allocation14 + $0x25f0] sm:$0xff]
    %v2247 = vld [vmem:[#allocation14 + $0x25f8] sm:$0xff]
    %v2248 = vld [vmem:[#allocation14 + $0x2600] sm:$0xff]
    %v2249 = vld [vmem:[#allocation14 + $0x2608] sm:$0xff]
    %v2250 = vld [vmem:[#allocation14 + $0x2610] sm:$0xff]
    %v2251 = vld [vmem:[#allocation14 + $0x2618] sm:$0xff]
    %v2252 = vld [vmem:[#allocation14 + $0x2620] sm:$0xff]
    %v2253 = vld [vmem:[#allocation14 + $0x2628] sm:$0xff]
    %v2254 = vld [vmem:[#allocation14 + $0x2630] sm:$0xff]
    %v2255 = vld [vmem:[#allocation14 + $0x2638] sm:$0xff]
    %v2256 = vld [vmem:[#allocation14 + $0x2640] sm:$0xff]
    %v2257 = vld [vmem:[#allocation14 + $0x2648] sm:$0xff]
    %v2258 = vld [vmem:[#allocation14 + $0x2650] sm:$0xff]
    %v2259 = vld [vmem:[#allocation14 + $0x2658] sm:$0xff]
    %v2260 = vld [vmem:[#allocation14 + $0x2660] sm:$0xff]
    %v2261 = vld [vmem:[#allocation14 + $0x2668] sm:$0xff]
    %v2262 = vld [vmem:[#allocation14 + $0x2670] sm:$0xff]
    %v2263 = vld [vmem:[#allocation14 + $0x2678] sm:$0xff]
    %v2264 = vld [vmem:[#allocation14 + $0x2680] sm:$0xff]
    %v2265 = vld [vmem:[#allocation14 + $0x2688] sm:$0xff]
    %v2266 = vld [vmem:[#allocation14 + $0x2690] sm:$0xff]
    %v2267 = vld [vmem:[#allocation14 + $0x2698] sm:$0xff]
    %v2268 = vld [vmem:[#allocation14 + $0x26a0] sm:$0xff]
    %v2269 = vld [vmem:[#allocation14 + $0x26a8] sm:$0xff]
    %v2270 = vld [vmem:[#allocation14 + $0x26b0] sm:$0xff]
    %v2271 = vld [vmem:[#allocation14 + $0x26b8] sm:$0xff]
    %v2272 = vld [vmem:[#allocation14 + $0x26c0] sm:$0xff]
    %v2273 = vld [vmem:[#allocation14 + $0x26c8] sm:$0xff]
    %v2274 = vld [vmem:[#allocation14 + $0x26d0] sm:$0xff]
    %v2275 = vld [vmem:[#allocation14 + $0x26d8] sm:$0xff]
    %v2276 = vld [vmem:[#allocation14 + $0x26e0] sm:$0xff]
    %v2277 = vld [vmem:[#allocation14 + $0x26e8] sm:$0xff]
    %v2278 = vld [vmem:[#allocation14 + $0x26f0] sm:$0xff]
    %v2279 = vld [vmem:[#allocation14 + $0x26f8] sm:$0xff]
    %v2280 = vld [vmem:[#allocation14 + $0x2700] sm:$0xff]
    %v2281 = vld [vmem:[#allocation14 + $0x2708] sm:$0xff]
    %v2282 = vld [vmem:[#allocation14 + $0x2710] sm:$0xff]
    %v2283 = vld [vmem:[#allocation14 + $0x2718] sm:$0xff]
    %v2284 = vld [vmem:[#allocation14 + $0x2720] sm:$0xff]
    %v2285 = vld [vmem:[#allocation14 + $0x2728] sm:$0xff]
    %v2286 = vld [vmem:[#allocation14 + $0x2730] sm:$0xff]
    %v2287 = vld [vmem:[#allocation14 + $0x2738] sm:$0xff]
    %v2288 = vld [vmem:[#allocation14 + $0x2740] sm:$0xff]
    %v2289 = vld [vmem:[#allocation14 + $0x2748] sm:$0xff]
    %v2290 = vld [vmem:[#allocation14 + $0x2750] sm:$0xff]
    %v2291 = vld [vmem:[#allocation14 + $0x2758] sm:$0xff]
    %v2292 = vld [vmem:[#allocation14 + $0x2760] sm:$0xff]
    %v2293 = vld [vmem:[#allocation14 + $0x2768] sm:$0xff]
    %v2294 = vld [vmem:[#allocation14 + $0x2770] sm:$0xff]
    %v2295 = vld [vmem:[#allocation14 + $0x2778] sm:$0xff]
    %v2296 = vld [vmem:[#allocation14 + $0x2780] sm:$0xff]
    %v2297 = vld [vmem:[#allocation14 + $0x2788] sm:$0xff]
    %v2298 = vld [vmem:[#allocation14 + $0x2790] sm:$0xff]
    %v2299 = vld [vmem:[#allocation14 + $0x2798] sm:$0xff]
    %v2300 = vld [vmem:[#allocation14 + $0x27a0] sm:$0xff]
    %v2301 = vld [vmem:[#allocation14 + $0x27a8] sm:$0xff]
    %v2302 = vld [vmem:[#allocation14 + $0x27b0] sm:$0xff]
    %v2303 = vld [vmem:[#allocation14 + $0x27b8] sm:$0xff]
    %v2304 = vld [vmem:[#allocation14 + $0x27c0] sm:$0xff]
    %v2305 = vld [vmem:[#allocation14 + $0x27c8] sm:$0xff]
    %v2306 = vld [vmem:[#allocation14 + $0x27d0] sm:$0xff]
    %v2307 = vld [vmem:[#allocation14 + $0x27d8] sm:$0xff]
    %v2308 = vld [vmem:[#allocation14 + $0x27e0] sm:$0xff]
    %v2309 = vld [vmem:[#allocation14 + $0x27e8] sm:$0xff]
    %v2310 = vld [vmem:[#allocation14 + $0x27f0] sm:$0xff]
    %v2311 = vld [vmem:[#allocation14 + $0x27f8] sm:$0xff]
    %v3592 = vunpack.c.l.b16 %v1032
    %v3593 = vunpack.c.h.b16 %v1032
    %v3594 = vunpack.c.l.b16 %v1033
    %v3595 = vunpack.c.h.b16 %v1033
    %v3596 = vunpack.c.l.b16 %v1034
    %v3597 = vunpack.c.h.b16 %v1034
    %v3598 = vunpack.c.l.b16 %v1035
    %v3599 = vunpack.c.h.b16 %v1035
    %v3600 = vunpack.c.l.b16 %v1036
    %v3601 = vunpack.c.h.b16 %v1036
    %v3602 = vunpack.c.l.b16 %v1037
    %v3603 = vunpack.c.h.b16 %v1037
    %v3604 = vunpack.c.l.b16 %v1038
    %v3605 = vunpack.c.h.b16 %v1038
    %v3606 = vunpack.c.l.b16 %v1039
    %v3607 = vunpack.c.h.b16 %v1039
    %v3608 = vunpack.c.l.b16 %v1040
    %v3609 = vunpack.c.h.b16 %v1040
    %v3610 = vunpack.c.l.b16 %v1041
    %v3611 = vunpack.c.h.b16 %v1041
    %v3612 = vunpack.c.l.b16 %v1042
    %v3613 = vunpack.c.h.b16 %v1042
    %v3614 = vunpack.c.l.b16 %v1043
    %v3615 = vunpack.c.h.b16 %v1043
    %v3616 = vunpack.c.l.b16 %v1044
    %v3617 = vunpack.c.h.b16 %v1044
    %v3618 = vunpack.c.l.b16 %v1045
    %v3619 = vunpack.c.h.b16 %v1045
    %v3620 = vunpack.c.l.b16 %v1046
    %v3621 = vunpack.c.h.b16 %v1046
    %v3622 = vunpack.c.l.b16 %v1047
    %v3623 = vunpack.c.h.b16 %v1047
    %v3624 = vunpack.c.l.b16 %v1048
    %v3625 = vunpack.c.h.b16 %v1048
    %v3626 = vunpack.c.l.b16 %v1049
    %v3627 = vunpack.c.h.b16 %v1049
    %v3628 = vunpack.c.l.b16 %v1050
    %v3629 = vunpack.c.h.b16 %v1050
    %v3630 = vunpack.c.l.b16 %v1051
    %v3631 = vunpack.c.h.b16 %v1051
    %v3632 = vunpack.c.l.b16 %v1052
    %v3633 = vunpack.c.h.b16 %v1052
    %v3634 = vunpack.c.l.b16 %v1053
    %v3635 = vunpack.c.h.b16 %v1053
    %v3636 = vunpack.c.l.b16 %v1054
    %v3637 = vunpack.c.h.b16 %v1054
    %v3638 = vunpack.c.l.b16 %v1055
    %v3639 = vunpack.c.h.b16 %v1055
    %v3640 = vunpack.c.l.b16 %v1056
    %v3641 = vunpack.c.h.b16 %v1056
    %v3642 = vunpack.c.l.b16 %v1057
    %v3643 = vunpack.c.h.b16 %v1057
    %v3644 = vunpack.c.l.b16 %v1058
    %v3645 = vunpack.c.h.b16 %v1058
    %v3646 = vunpack.c.l.b16 %v1059
    %v3647 = vunpack.c.h.b16 %v1059
    %v3648 = vunpack.c.l.b16 %v1060
    %v3649 = vunpack.c.h.b16 %v1060
    %v3650 = vunpack.c.l.b16 %v1061
    %v3651 = vunpack.c.h.b16 %v1061
    %v3652 = vunpack.c.l.b16 %v1062
    %v3653 = vunpack.c.h.b16 %v1062
    %v3654 = vunpack.c.l.b16 %v1063
    %v3655 = vunpack.c.h.b16 %v1063
    %v3656 = vunpack.c.l.b16 %v1064
    %v3657 = vunpack.c.h.b16 %v1064
    %v3658 = vunpack.c.l.b16 %v1065
    %v3659 = vunpack.c.h.b16 %v1065
    %v3660 = vunpack.c.l.b16 %v1066
    %v3661 = vunpack.c.h.b16 %v1066
    %v3662 = vunpack.c.l.b16 %v1067
    %v3663 = vunpack.c.h.b16 %v1067
    %v3664 = vunpack.c.l.b16 %v1068
    %v3665 = vunpack.c.h.b16 %v1068
    %v3666 = vunpack.c.l.b16 %v1069
    %v3667 = vunpack.c.h.b16 %v1069
    %v3668 = vunpack.c.l.b16 %v1070
    %v3669 = vunpack.c.h.b16 %v1070
    %v3670 = vunpack.c.l.b16 %v1071
    %v3671 = vunpack.c.h.b16 %v1071
    %v3672 = vunpack.c.l.b16 %v1072
    %v3673 = vunpack.c.h.b16 %v1072
    %v3674 = vunpack.c.l.b16 %v1073
    %v3675 = vunpack.c.h.b16 %v1073
    %v3676 = vunpack.c.l.b16 %v1074
    %v3677 = vunpack.c.h.b16 %v1074
    %v3678 = vunpack.c.l.b16 %v1075
    %v3679 = vunpack.c.h.b16 %v1075
    %v3680 = vunpack.c.l.b16 %v1076
    %v3681 = vunpack.c.h.b16 %v1076
    %v3682 = vunpack.c.l.b16 %v1077
    %v3683 = vunpack.c.h.b16 %v1077
    %v3684 = vunpack.c.l.b16 %v1078
    %v3685 = vunpack.c.h.b16 %v1078
    %v3686 = vunpack.c.l.b16 %v1079
    %v3687 = vunpack.c.h.b16 %v1079
    %v3688 = vunpack.c.l.b16 %v1080
    %v3689 = vunpack.c.h.b16 %v1080
    %v3690 = vunpack.c.l.b16 %v1081
    %v3691 = vunpack.c.h.b16 %v1081
    %v3692 = vunpack.c.l.b16 %v1082
    %v3693 = vunpack.c.h.b16 %v1082
    %v3694 = vunpack.c.l.b16 %v1083
    %v3695 = vunpack.c.h.b16 %v1083
    %v3696 = vunpack.c.l.b16 %v1084
    %v3697 = vunpack.c.h.b16 %v1084
    %v3698 = vunpack.c.l.b16 %v1085
    %v3699 = vunpack.c.h.b16 %v1085
    %v3700 = vunpack.c.l.b16 %v1086
    %v3701 = vunpack.c.h.b16 %v1086
    %v3702 = vunpack.c.l.b16 %v1087
    %v3703 = vunpack.c.h.b16 %v1087
    %v3704 = vunpack.c.l.b16 %v1088
    %v3705 = vunpack.c.h.b16 %v1088
    %v3706 = vunpack.c.l.b16 %v1089
    %v3707 = vunpack.c.h.b16 %v1089
    %v3708 = vunpack.c.l.b16 %v1090
    %v3709 = vunpack.c.h.b16 %v1090
    %v3710 = vunpack.c.l.b16 %v1091
    %v3711 = vunpack.c.h.b16 %v1091
    %v3712 = vunpack.c.l.b16 %v1092
    %v3713 = vunpack.c.h.b16 %v1092
    %v3714 = vunpack.c.l.b16 %v1093
    %v3715 = vunpack.c.h.b16 %v1093
    %v3716 = vunpack.c.l.b16 %v1094
    %v3717 = vunpack.c.h.b16 %v1094
    %v3718 = vunpack.c.l.b16 %v1095
    %v3719 = vunpack.c.h.b16 %v1095
    %v3720 = vunpack.c.l.b16 %v1096
    %v3721 = vunpack.c.h.b16 %v1096
    %v3722 = vunpack.c.l.b16 %v1097
    %v3723 = vunpack.c.h.b16 %v1097
    %v3724 = vunpack.c.l.b16 %v1098
    %v3725 = vunpack.c.h.b16 %v1098
    %v3726 = vunpack.c.l.b16 %v1099
    %v3727 = vunpack.c.h.b16 %v1099
    %v3728 = vunpack.c.l.b16 %v1100
    %v3729 = vunpack.c.h.b16 %v1100
    %v3730 = vunpack.c.l.b16 %v1101
    %v3731 = vunpack.c.h.b16 %v1101
    %v3732 = vunpack.c.l.b16 %v1102
    %v3733 = vunpack.c.h.b16 %v1102
    %v3734 = vunpack.c.l.b16 %v1103
    %v3735 = vunpack.c.h.b16 %v1103
    %v3736 = vunpack.c.l.b16 %v1104
    %v3737 = vunpack.c.h.b16 %v1104
    %v3738 = vunpack.c.l.b16 %v1105
    %v3739 = vunpack.c.h.b16 %v1105
    %v3740 = vunpack.c.l.b16 %v1106
    %v3741 = vunpack.c.h.b16 %v1106
    %v3742 = vunpack.c.l.b16 %v1107
    %v3743 = vunpack.c.h.b16 %v1107
    %v3744 = vunpack.c.l.b16 %v1108
    %v3745 = vunpack.c.h.b16 %v1108
    %v3746 = vunpack.c.l.b16 %v1109
    %v3747 = vunpack.c.h.b16 %v1109
    %v3748 = vunpack.c.l.b16 %v1110
    %v3749 = vunpack.c.h.b16 %v1110
    %v3750 = vunpack.c.l.b16 %v1111
    %v3751 = vunpack.c.h.b16 %v1111
    %v3752 = vunpack.c.l.b16 %v1112
    %v3753 = vunpack.c.h.b16 %v1112
    %v3754 = vunpack.c.l.b16 %v1113
    %v3755 = vunpack.c.h.b16 %v1113
    %v3756 = vunpack.c.l.b16 %v1114
    %v3757 = vunpack.c.h.b16 %v1114
    %v3758 = vunpack.c.l.b16 %v1115
    %v3759 = vunpack.c.h.b16 %v1115
    %v3760 = vunpack.c.l.b16 %v1116
    %v3761 = vunpack.c.h.b16 %v1116
    %v3762 = vunpack.c.l.b16 %v1117
    %v3763 = vunpack.c.h.b16 %v1117
    %v3764 = vunpack.c.l.b16 %v1118
    %v3765 = vunpack.c.h.b16 %v1118
    %v3766 = vunpack.c.l.b16 %v1119
    %v3767 = vunpack.c.h.b16 %v1119
    %v3768 = vunpack.c.l.b16 %v1120
    %v3769 = vunpack.c.h.b16 %v1120
    %v3770 = vunpack.c.l.b16 %v1121
    %v3771 = vunpack.c.h.b16 %v1121
    %v3772 = vunpack.c.l.b16 %v1122
    %v3773 = vunpack.c.h.b16 %v1122
    %v3774 = vunpack.c.l.b16 %v1123
    %v3775 = vunpack.c.h.b16 %v1123
    %v3776 = vunpack.c.l.b16 %v1124
    %v3777 = vunpack.c.h.b16 %v1124
    %v3778 = vunpack.c.l.b16 %v1125
    %v3779 = vunpack.c.h.b16 %v1125
    %v3780 = vunpack.c.l.b16 %v1126
    %v3781 = vunpack.c.h.b16 %v1126
    %v3782 = vunpack.c.l.b16 %v1127
    %v3783 = vunpack.c.h.b16 %v1127
    %v3784 = vunpack.c.l.b16 %v1128
    %v3785 = vunpack.c.h.b16 %v1128
    %v3786 = vunpack.c.l.b16 %v1129
    %v3787 = vunpack.c.h.b16 %v1129
    %v3788 = vunpack.c.l.b16 %v1130
    %v3789 = vunpack.c.h.b16 %v1130
    %v3790 = vunpack.c.l.b16 %v1131
    %v3791 = vunpack.c.h.b16 %v1131
    %v3792 = vunpack.c.l.b16 %v1132
    %v3793 = vunpack.c.h.b16 %v1132
    %v3794 = vunpack.c.l.b16 %v1133
    %v3795 = vunpack.c.h.b16 %v1133
    %v3796 = vunpack.c.l.b16 %v1134
    %v3797 = vunpack.c.h.b16 %v1134
    %v3798 = vunpack.c.l.b16 %v1135
    %v3799 = vunpack.c.h.b16 %v1135
    %v3800 = vunpack.c.l.b16 %v1136
    %v3801 = vunpack.c.h.b16 %v1136
    %v3802 = vunpack.c.l.b16 %v1137
    %v3803 = vunpack.c.h.b16 %v1137
    %v3804 = vunpack.c.l.b16 %v1138
    %v3805 = vunpack.c.h.b16 %v1138
    %v3806 = vunpack.c.l.b16 %v1139
    %v3807 = vunpack.c.h.b16 %v1139
    %v3808 = vunpack.c.l.b16 %v1140
    %v3809 = vunpack.c.h.b16 %v1140
    %v3810 = vunpack.c.l.b16 %v1141
    %v3811 = vunpack.c.h.b16 %v1141
    %v3812 = vunpack.c.l.b16 %v1142
    %v3813 = vunpack.c.h.b16 %v1142
    %v3814 = vunpack.c.l.b16 %v1143
    %v3815 = vunpack.c.h.b16 %v1143
    %v3816 = vunpack.c.l.b16 %v1144
    %v3817 = vunpack.c.h.b16 %v1144
    %v3818 = vunpack.c.l.b16 %v1145
    %v3819 = vunpack.c.h.b16 %v1145
    %v3820 = vunpack.c.l.b16 %v1146
    %v3821 = vunpack.c.h.b16 %v1146
    %v3822 = vunpack.c.l.b16 %v1147
    %v3823 = vunpack.c.h.b16 %v1147
    %v3824 = vunpack.c.l.b16 %v1148
    %v3825 = vunpack.c.h.b16 %v1148
    %v3826 = vunpack.c.l.b16 %v1149
    %v3827 = vunpack.c.h.b16 %v1149
    %v3828 = vunpack.c.l.b16 %v1150
    %v3829 = vunpack.c.h.b16 %v1150
    %v3830 = vunpack.c.l.b16 %v1151
    %v3831 = vunpack.c.h.b16 %v1151
    %v3832 = vunpack.c.l.b16 %v1152
    %v3833 = vunpack.c.h.b16 %v1152
    %v3834 = vunpack.c.l.b16 %v1153
    %v3835 = vunpack.c.h.b16 %v1153
    %v3836 = vunpack.c.l.b16 %v1154
    %v3837 = vunpack.c.h.b16 %v1154
    %v3838 = vunpack.c.l.b16 %v1155
    %v3839 = vunpack.c.h.b16 %v1155
    %v3840 = vunpack.c.l.b16 %v1156
    %v3841 = vunpack.c.h.b16 %v1156
    %v3842 = vunpack.c.l.b16 %v1157
    %v3843 = vunpack.c.h.b16 %v1157
    %v3844 = vunpack.c.l.b16 %v1158
    %v3845 = vunpack.c.h.b16 %v1158
    %v3846 = vunpack.c.l.b16 %v1159
    %v3847 = vunpack.c.h.b16 %v1159
    %v3848 = vunpack.c.l.b16 %v1160
    %v3849 = vunpack.c.h.b16 %v1160
    %v3850 = vunpack.c.l.b16 %v1161
    %v3851 = vunpack.c.h.b16 %v1161
    %v3852 = vunpack.c.l.b16 %v1162
    %v3853 = vunpack.c.h.b16 %v1162
    %v3854 = vunpack.c.l.b16 %v1163
    %v3855 = vunpack.c.h.b16 %v1163
    %v3856 = vunpack.c.l.b16 %v1164
    %v3857 = vunpack.c.h.b16 %v1164
    %v3858 = vunpack.c.l.b16 %v1165
    %v3859 = vunpack.c.h.b16 %v1165
    %v3860 = vunpack.c.l.b16 %v1166
    %v3861 = vunpack.c.h.b16 %v1166
    %v3862 = vunpack.c.l.b16 %v1167
    %v3863 = vunpack.c.h.b16 %v1167
    %v3864 = vunpack.c.l.b16 %v1168
    %v3865 = vunpack.c.h.b16 %v1168
    %v3866 = vunpack.c.l.b16 %v1169
    %v3867 = vunpack.c.h.b16 %v1169
    %v3868 = vunpack.c.l.b16 %v1170
    %v3869 = vunpack.c.h.b16 %v1170
    %v3870 = vunpack.c.l.b16 %v1171
    %v3871 = vunpack.c.h.b16 %v1171
    %v3872 = vunpack.c.l.b16 %v1172
    %v3873 = vunpack.c.h.b16 %v1172
    %v3874 = vunpack.c.l.b16 %v1173
    %v3875 = vunpack.c.h.b16 %v1173
    %v3876 = vunpack.c.l.b16 %v1174
    %v3877 = vunpack.c.h.b16 %v1174
    %v3878 = vunpack.c.l.b16 %v1175
    %v3879 = vunpack.c.h.b16 %v1175
    %v3880 = vunpack.c.l.b16 %v1176
    %v3881 = vunpack.c.h.b16 %v1176
    %v3882 = vunpack.c.l.b16 %v1177
    %v3883 = vunpack.c.h.b16 %v1177
    %v3884 = vunpack.c.l.b16 %v1178
    %v3885 = vunpack.c.h.b16 %v1178
    %v3886 = vunpack.c.l.b16 %v1179
    %v3887 = vunpack.c.h.b16 %v1179
    %v3888 = vunpack.c.l.b16 %v1180
    %v3889 = vunpack.c.h.b16 %v1180
    %v3890 = vunpack.c.l.b16 %v1181
    %v3891 = vunpack.c.h.b16 %v1181
    %v3892 = vunpack.c.l.b16 %v1182
    %v3893 = vunpack.c.h.b16 %v1182
    %v3894 = vunpack.c.l.b16 %v1183
    %v3895 = vunpack.c.h.b16 %v1183
    %v3896 = vunpack.c.l.b16 %v1184
    %v3897 = vunpack.c.h.b16 %v1184
    %v3898 = vunpack.c.l.b16 %v1185
    %v3899 = vunpack.c.h.b16 %v1185
    %v3900 = vunpack.c.l.b16 %v1186
    %v3901 = vunpack.c.h.b16 %v1186
    %v3902 = vunpack.c.l.b16 %v1187
    %v3903 = vunpack.c.h.b16 %v1187
    %v3904 = vunpack.c.l.b16 %v1188
    %v3905 = vunpack.c.h.b16 %v1188
    %v3906 = vunpack.c.l.b16 %v1189
    %v3907 = vunpack.c.h.b16 %v1189
    %v3908 = vunpack.c.l.b16 %v1190
    %v3909 = vunpack.c.h.b16 %v1190
    %v3910 = vunpack.c.l.b16 %v1191
    %v3911 = vunpack.c.h.b16 %v1191
    %v3912 = vunpack.c.l.b16 %v1192
    %v3913 = vunpack.c.h.b16 %v1192
    %v3914 = vunpack.c.l.b16 %v1193
    %v3915 = vunpack.c.h.b16 %v1193
    %v3916 = vunpack.c.l.b16 %v1194
    %v3917 = vunpack.c.h.b16 %v1194
    %v3918 = vunpack.c.l.b16 %v1195
    %v3919 = vunpack.c.h.b16 %v1195
    %v3920 = vunpack.c.l.b16 %v1196
    %v3921 = vunpack.c.h.b16 %v1196
    %v3922 = vunpack.c.l.b16 %v1197
    %v3923 = vunpack.c.h.b16 %v1197
    %v3924 = vunpack.c.l.b16 %v1198
    %v3925 = vunpack.c.h.b16 %v1198
    %v3926 = vunpack.c.l.b16 %v1199
    %v3927 = vunpack.c.h.b16 %v1199
    %v3928 = vunpack.c.l.b16 %v1200
    %v3929 = vunpack.c.h.b16 %v1200
    %v3930 = vunpack.c.l.b16 %v1201
    %v3931 = vunpack.c.h.b16 %v1201
    %v3932 = vunpack.c.l.b16 %v1202
    %v3933 = vunpack.c.h.b16 %v1202
    %v3934 = vunpack.c.l.b16 %v1203
    %v3935 = vunpack.c.h.b16 %v1203
    %v3936 = vunpack.c.l.b16 %v1204
    %v3937 = vunpack.c.h.b16 %v1204
    %v3938 = vunpack.c.l.b16 %v1205
    %v3939 = vunpack.c.h.b16 %v1205
    %v3940 = vunpack.c.l.b16 %v1206
    %v3941 = vunpack.c.h.b16 %v1206
    %v3942 = vunpack.c.l.b16 %v1207
    %v3943 = vunpack.c.h.b16 %v1207
    %v3944 = vunpack.c.l.b16 %v1208
    %v3945 = vunpack.c.h.b16 %v1208
    %v3946 = vunpack.c.l.b16 %v1209
    %v3947 = vunpack.c.h.b16 %v1209
    %v3948 = vunpack.c.l.b16 %v1210
    %v3949 = vunpack.c.h.b16 %v1210
    %v3950 = vunpack.c.l.b16 %v1211
    %v3951 = vunpack.c.h.b16 %v1211
    %v3952 = vunpack.c.l.b16 %v1212
    %v3953 = vunpack.c.h.b16 %v1212
    %v3954 = vunpack.c.l.b16 %v1213
    %v3955 = vunpack.c.h.b16 %v1213
    %v3956 = vunpack.c.l.b16 %v1214
    %v3957 = vunpack.c.h.b16 %v1214
    %v3958 = vunpack.c.l.b16 %v1215
    %v3959 = vunpack.c.h.b16 %v1215
    %v3960 = vunpack.c.l.b16 %v1216
    %v3961 = vunpack.c.h.b16 %v1216
    %v3962 = vunpack.c.l.b16 %v1217
    %v3963 = vunpack.c.h.b16 %v1217
    %v3964 = vunpack.c.l.b16 %v1218
    %v3965 = vunpack.c.h.b16 %v1218
    %v3966 = vunpack.c.l.b16 %v1219
    %v3967 = vunpack.c.h.b16 %v1219
    %v3968 = vunpack.c.l.b16 %v1220
    %v3969 = vunpack.c.h.b16 %v1220
    %v3970 = vunpack.c.l.b16 %v1221
    %v3971 = vunpack.c.h.b16 %v1221
    %v3972 = vunpack.c.l.b16 %v1222
    %v3973 = vunpack.c.h.b16 %v1222
    %v3974 = vunpack.c.l.b16 %v1223
    %v3975 = vunpack.c.h.b16 %v1223
    %v3976 = vunpack.c.l.b16 %v1224
    %v3977 = vunpack.c.h.b16 %v1224
    %v3978 = vunpack.c.l.b16 %v1225
    %v3979 = vunpack.c.h.b16 %v1225
    %v3980 = vunpack.c.l.b16 %v1226
    %v3981 = vunpack.c.h.b16 %v1226
    %v3982 = vunpack.c.l.b16 %v1227
    %v3983 = vunpack.c.h.b16 %v1227
    %v3984 = vunpack.c.l.b16 %v1228
    %v3985 = vunpack.c.h.b16 %v1228
    %v3986 = vunpack.c.l.b16 %v1229
    %v3987 = vunpack.c.h.b16 %v1229
    %v3988 = vunpack.c.l.b16 %v1230
    %v3989 = vunpack.c.h.b16 %v1230
    %v3990 = vunpack.c.l.b16 %v1231
    %v3991 = vunpack.c.h.b16 %v1231
    %v3992 = vunpack.c.l.b16 %v1232
    %v3993 = vunpack.c.h.b16 %v1232
    %v3994 = vunpack.c.l.b16 %v1233
    %v3995 = vunpack.c.h.b16 %v1233
    %v3996 = vunpack.c.l.b16 %v1234
    %v3997 = vunpack.c.h.b16 %v1234
    %v3998 = vunpack.c.l.b16 %v1235
    %v3999 = vunpack.c.h.b16 %v1235
    %v4000 = vunpack.c.l.b16 %v1236
    %v4001 = vunpack.c.h.b16 %v1236
    %v4002 = vunpack.c.l.b16 %v1237
    %v4003 = vunpack.c.h.b16 %v1237
    %v4004 = vunpack.c.l.b16 %v1238
    %v4005 = vunpack.c.h.b16 %v1238
    %v4006 = vunpack.c.l.b16 %v1239
    %v4007 = vunpack.c.h.b16 %v1239
    %v4008 = vunpack.c.l.b16 %v1240
    %v4009 = vunpack.c.h.b16 %v1240
    %v4010 = vunpack.c.l.b16 %v1241
    %v4011 = vunpack.c.h.b16 %v1241
    %v4012 = vunpack.c.l.b16 %v1242
    %v4013 = vunpack.c.h.b16 %v1242
    %v4014 = vunpack.c.l.b16 %v1243
    %v4015 = vunpack.c.h.b16 %v1243
    %v4016 = vunpack.c.l.b16 %v1244
    %v4017 = vunpack.c.h.b16 %v1244
    %v4018 = vunpack.c.l.b16 %v1245
    %v4019 = vunpack.c.h.b16 %v1245
    %v4020 = vunpack.c.l.b16 %v1246
    %v4021 = vunpack.c.h.b16 %v1246
    %v4022 = vunpack.c.l.b16 %v1247
    %v4023 = vunpack.c.h.b16 %v1247
    %v4024 = vunpack.c.l.b16 %v1248
    %v4025 = vunpack.c.h.b16 %v1248
    %v4026 = vunpack.c.l.b16 %v1249
    %v4027 = vunpack.c.h.b16 %v1249
    %v4028 = vunpack.c.l.b16 %v1250
    %v4029 = vunpack.c.h.b16 %v1250
    %v4030 = vunpack.c.l.b16 %v1251
    %v4031 = vunpack.c.h.b16 %v1251
    %v4032 = vunpack.c.l.b16 %v1252
    %v4033 = vunpack.c.h.b16 %v1252
    %v4034 = vunpack.c.l.b16 %v1253
    %v4035 = vunpack.c.h.b16 %v1253
    %v4036 = vunpack.c.l.b16 %v1254
    %v4037 = vunpack.c.h.b16 %v1254
    %v4038 = vunpack.c.l.b16 %v1255
    %v4039 = vunpack.c.h.b16 %v1255
    %v4040 = vunpack.c.l.b16 %v1256
    %v4041 = vunpack.c.h.b16 %v1256
    %v4042 = vunpack.c.l.b16 %v1257
    %v4043 = vunpack.c.h.b16 %v1257
    %v4044 = vunpack.c.l.b16 %v1258
    %v4045 = vunpack.c.h.b16 %v1258
    %v4046 = vunpack.c.l.b16 %v1259
    %v4047 = vunpack.c.h.b16 %v1259
    %v4048 = vunpack.c.l.b16 %v1260
    %v4049 = vunpack.c.h.b16 %v1260
    %v4050 = vunpack.c.l.b16 %v1261
    %v4051 = vunpack.c.h.b16 %v1261
    %v4052 = vunpack.c.l.b16 %v1262
    %v4053 = vunpack.c.h.b16 %v1262
    %v4054 = vunpack.c.l.b16 %v1263
    %v4055 = vunpack.c.h.b16 %v1263
    %v4056 = vunpack.c.l.b16 %v1264
    %v4057 = vunpack.c.h.b16 %v1264
    %v4058 = vunpack.c.l.b16 %v1265
    %v4059 = vunpack.c.h.b16 %v1265
    %v4060 = vunpack.c.l.b16 %v1266
    %v4061 = vunpack.c.h.b16 %v1266
    %v4062 = vunpack.c.l.b16 %v1267
    %v4063 = vunpack.c.h.b16 %v1267
    %v4064 = vunpack.c.l.b16 %v1268
    %v4065 = vunpack.c.h.b16 %v1268
    %v4066 = vunpack.c.l.b16 %v1269
    %v4067 = vunpack.c.h.b16 %v1269
    %v4068 = vunpack.c.l.b16 %v1270
    %v4069 = vunpack.c.h.b16 %v1270
    %v4070 = vunpack.c.l.b16 %v1271
    %v4071 = vunpack.c.h.b16 %v1271
    %v4072 = vunpack.c.l.b16 %v1272
    %v4073 = vunpack.c.h.b16 %v1272
    %v4074 = vunpack.c.l.b16 %v1273
    %v4075 = vunpack.c.h.b16 %v1273
    %v4076 = vunpack.c.l.b16 %v1274
    %v4077 = vunpack.c.h.b16 %v1274
    %v4078 = vunpack.c.l.b16 %v1275
    %v4079 = vunpack.c.h.b16 %v1275
    %v4080 = vunpack.c.l.b16 %v1276
    %v4081 = vunpack.c.h.b16 %v1276
    %v4082 = vunpack.c.l.b16 %v1277
    %v4083 = vunpack.c.h.b16 %v1277
    %v4084 = vunpack.c.l.b16 %v1278
    %v4085 = vunpack.c.h.b16 %v1278
    %v4086 = vunpack.c.l.b16 %v1279
    %v4087 = vunpack.c.h.b16 %v1279
    %v4088 = vunpack.c.l.b16 %v1280
    %v4089 = vunpack.c.h.b16 %v1280
    %v4090 = vunpack.c.l.b16 %v1281
    %v4091 = vunpack.c.h.b16 %v1281
    %v4092 = vunpack.c.l.b16 %v1282
    %v4093 = vunpack.c.h.b16 %v1282
    %v4094 = vunpack.c.l.b16 %v1283
    %v4095 = vunpack.c.h.b16 %v1283
    %v4096 = vunpack.c.l.b16 %v1284
    %v4097 = vunpack.c.h.b16 %v1284
    %v4098 = vunpack.c.l.b16 %v1285
    %v4099 = vunpack.c.h.b16 %v1285
    %v4100 = vunpack.c.l.b16 %v1286
    %v4101 = vunpack.c.h.b16 %v1286
    %v4102 = vunpack.c.l.b16 %v1287
    %v4103 = vunpack.c.h.b16 %v1287
    %v4104 = vunpack.c.l.b16 %v1288
    %v4105 = vunpack.c.h.b16 %v1288
    %v4106 = vunpack.c.l.b16 %v1289
    %v4107 = vunpack.c.h.b16 %v1289
    %v4108 = vunpack.c.l.b16 %v1290
    %v4109 = vunpack.c.h.b16 %v1290
    %v4110 = vunpack.c.l.b16 %v1291
    %v4111 = vunpack.c.h.b16 %v1291
    %v4112 = vunpack.c.l.b16 %v1292
    %v4113 = vunpack.c.h.b16 %v1292
    %v4114 = vunpack.c.l.b16 %v1293
    %v4115 = vunpack.c.h.b16 %v1293
    %v4116 = vunpack.c.l.b16 %v1294
    %v4117 = vunpack.c.h.b16 %v1294
    %v4118 = vunpack.c.l.b16 %v1295
    %v4119 = vunpack.c.h.b16 %v1295
    %v4120 = vunpack.c.l.b16 %v1296
    %v4121 = vunpack.c.h.b16 %v1296
    %v4122 = vunpack.c.l.b16 %v1297
    %v4123 = vunpack.c.h.b16 %v1297
    %v4124 = vunpack.c.l.b16 %v1298
    %v4125 = vunpack.c.h.b16 %v1298
    %v4126 = vunpack.c.l.b16 %v1299
    %v4127 = vunpack.c.h.b16 %v1299
    %v4128 = vunpack.c.l.b16 %v1300
    %v4129 = vunpack.c.h.b16 %v1300
    %v4130 = vunpack.c.l.b16 %v1301
    %v4131 = vunpack.c.h.b16 %v1301
    %v4132 = vunpack.c.l.b16 %v1302
    %v4133 = vunpack.c.h.b16 %v1302
    %v4134 = vunpack.c.l.b16 %v1303
    %v4135 = vunpack.c.h.b16 %v1303
    %v4136 = vunpack.c.l.b16 %v1304
    %v4137 = vunpack.c.h.b16 %v1304
    %v4138 = vunpack.c.l.b16 %v1305
    %v4139 = vunpack.c.h.b16 %v1305
    %v4140 = vunpack.c.l.b16 %v1306
    %v4141 = vunpack.c.h.b16 %v1306
    %v4142 = vunpack.c.l.b16 %v1307
    %v4143 = vunpack.c.h.b16 %v1307
    %v4144 = vunpack.c.l.b16 %v1308
    %v4145 = vunpack.c.h.b16 %v1308
    %v4146 = vunpack.c.l.b16 %v1309
    %v4147 = vunpack.c.h.b16 %v1309
    %v4148 = vunpack.c.l.b16 %v1310
    %v4149 = vunpack.c.h.b16 %v1310
    %v4150 = vunpack.c.l.b16 %v1311
    %v4151 = vunpack.c.h.b16 %v1311
    %v4152 = vunpack.c.l.b16 %v1312
    %v4153 = vunpack.c.h.b16 %v1312
    %v4154 = vunpack.c.l.b16 %v1313
    %v4155 = vunpack.c.h.b16 %v1313
    %v4156 = vunpack.c.l.b16 %v1314
    %v4157 = vunpack.c.h.b16 %v1314
    %v4158 = vunpack.c.l.b16 %v1315
    %v4159 = vunpack.c.h.b16 %v1315
    %v4160 = vunpack.c.l.b16 %v1316
    %v4161 = vunpack.c.h.b16 %v1316
    %v4162 = vunpack.c.l.b16 %v1317
    %v4163 = vunpack.c.h.b16 %v1317
    %v4164 = vunpack.c.l.b16 %v1318
    %v4165 = vunpack.c.h.b16 %v1318
    %v4166 = vunpack.c.l.b16 %v1319
    %v4167 = vunpack.c.h.b16 %v1319
    %v4168 = vunpack.c.l.b16 %v1320
    %v4169 = vunpack.c.h.b16 %v1320
    %v4170 = vunpack.c.l.b16 %v1321
    %v4171 = vunpack.c.h.b16 %v1321
    %v4172 = vunpack.c.l.b16 %v1322
    %v4173 = vunpack.c.h.b16 %v1322
    %v4174 = vunpack.c.l.b16 %v1323
    %v4175 = vunpack.c.h.b16 %v1323
    %v4176 = vunpack.c.l.b16 %v1324
    %v4177 = vunpack.c.h.b16 %v1324
    %v4178 = vunpack.c.l.b16 %v1325
    %v4179 = vunpack.c.h.b16 %v1325
    %v4180 = vunpack.c.l.b16 %v1326
    %v4181 = vunpack.c.h.b16 %v1326
    %v4182 = vunpack.c.l.b16 %v1327
    %v4183 = vunpack.c.h.b16 %v1327
    %v4184 = vunpack.c.l.b16 %v1328
    %v4185 = vunpack.c.h.b16 %v1328
    %v4186 = vunpack.c.l.b16 %v1329
    %v4187 = vunpack.c.h.b16 %v1329
    %v4188 = vunpack.c.l.b16 %v1330
    %v4189 = vunpack.c.h.b16 %v1330
    %v4190 = vunpack.c.l.b16 %v1331
    %v4191 = vunpack.c.h.b16 %v1331
    %v4192 = vunpack.c.l.b16 %v1332
    %v4193 = vunpack.c.h.b16 %v1332
    %v4194 = vunpack.c.l.b16 %v1333
    %v4195 = vunpack.c.h.b16 %v1333
    %v4196 = vunpack.c.l.b16 %v1334
    %v4197 = vunpack.c.h.b16 %v1334
    %v4198 = vunpack.c.l.b16 %v1335
    %v4199 = vunpack.c.h.b16 %v1335
    %v4200 = vunpack.c.l.b16 %v1336
    %v4201 = vunpack.c.h.b16 %v1336
    %v4202 = vunpack.c.l.b16 %v1337
    %v4203 = vunpack.c.h.b16 %v1337
    %v4204 = vunpack.c.l.b16 %v1338
    %v4205 = vunpack.c.h.b16 %v1338
    %v4206 = vunpack.c.l.b16 %v1339
    %v4207 = vunpack.c.h.b16 %v1339
    %v4208 = vunpack.c.l.b16 %v1340
    %v4209 = vunpack.c.h.b16 %v1340
    %v4210 = vunpack.c.l.b16 %v1341
    %v4211 = vunpack.c.h.b16 %v1341
    %v4212 = vunpack.c.l.b16 %v1342
    %v4213 = vunpack.c.h.b16 %v1342
    %v4214 = vunpack.c.l.b16 %v1343
    %v4215 = vunpack.c.h.b16 %v1343
    %v4216 = vunpack.c.l.b16 %v1344
    %v4217 = vunpack.c.h.b16 %v1344
    %v4218 = vunpack.c.l.b16 %v1345
    %v4219 = vunpack.c.h.b16 %v1345
    %v4220 = vunpack.c.l.b16 %v1346
    %v4221 = vunpack.c.h.b16 %v1346
    %v4222 = vunpack.c.l.b16 %v1347
    %v4223 = vunpack.c.h.b16 %v1347
    %v4224 = vunpack.c.l.b16 %v1348
    %v4225 = vunpack.c.h.b16 %v1348
    %v4226 = vunpack.c.l.b16 %v1349
    %v4227 = vunpack.c.h.b16 %v1349
    %v4228 = vunpack.c.l.b16 %v1350
    %v4229 = vunpack.c.h.b16 %v1350
    %v4230 = vunpack.c.l.b16 %v1351
    %v4231 = vunpack.c.h.b16 %v1351
    %v4232 = vunpack.c.l.b16 %v1352
    %v4233 = vunpack.c.h.b16 %v1352
    %v4234 = vunpack.c.l.b16 %v1353
    %v4235 = vunpack.c.h.b16 %v1353
    %v4236 = vunpack.c.l.b16 %v1354
    %v4237 = vunpack.c.h.b16 %v1354
    %v4238 = vunpack.c.l.b16 %v1355
    %v4239 = vunpack.c.h.b16 %v1355
    %v4240 = vunpack.c.l.b16 %v1356
    %v4241 = vunpack.c.h.b16 %v1356
    %v4242 = vunpack.c.l.b16 %v1357
    %v4243 = vunpack.c.h.b16 %v1357
    %v4244 = vunpack.c.l.b16 %v1358
    %v4245 = vunpack.c.h.b16 %v1358
    %v4246 = vunpack.c.l.b16 %v1359
    %v4247 = vunpack.c.h.b16 %v1359
    %v4248 = vunpack.c.l.b16 %v1360
    %v4249 = vunpack.c.h.b16 %v1360
    %v4250 = vunpack.c.l.b16 %v1361
    %v4251 = vunpack.c.h.b16 %v1361
    %v4252 = vunpack.c.l.b16 %v1362
    %v4253 = vunpack.c.h.b16 %v1362
    %v4254 = vunpack.c.l.b16 %v1363
    %v4255 = vunpack.c.h.b16 %v1363
    %v4256 = vunpack.c.l.b16 %v1364
    %v4257 = vunpack.c.h.b16 %v1364
    %v4258 = vunpack.c.l.b16 %v1365
    %v4259 = vunpack.c.h.b16 %v1365
    %v4260 = vunpack.c.l.b16 %v1366
    %v4261 = vunpack.c.h.b16 %v1366
    %v4262 = vunpack.c.l.b16 %v1367
    %v4263 = vunpack.c.h.b16 %v1367
    %v4264 = vunpack.c.l.b16 %v1368
    %v4265 = vunpack.c.h.b16 %v1368
    %v4266 = vunpack.c.l.b16 %v1369
    %v4267 = vunpack.c.h.b16 %v1369
    %v4268 = vunpack.c.l.b16 %v1370
    %v4269 = vunpack.c.h.b16 %v1370
    %v4270 = vunpack.c.l.b16 %v1371
    %v4271 = vunpack.c.h.b16 %v1371
    %v4272 = vunpack.c.l.b16 %v1372
    %v4273 = vunpack.c.h.b16 %v1372
    %v4274 = vunpack.c.l.b16 %v1373
    %v4275 = vunpack.c.h.b16 %v1373
    %v4276 = vunpack.c.l.b16 %v1374
    %v4277 = vunpack.c.h.b16 %v1374
    %v4278 = vunpack.c.l.b16 %v1375
    %v4279 = vunpack.c.h.b16 %v1375
    %v4280 = vunpack.c.l.b16 %v1376
    %v4281 = vunpack.c.h.b16 %v1376
    %v4282 = vunpack.c.l.b16 %v1377
    %v4283 = vunpack.c.h.b16 %v1377
    %v4284 = vunpack.c.l.b16 %v1378
    %v4285 = vunpack.c.h.b16 %v1378
    %v4286 = vunpack.c.l.b16 %v1379
    %v4287 = vunpack.c.h.b16 %v1379
    %v4288 = vunpack.c.l.b16 %v1380
    %v4289 = vunpack.c.h.b16 %v1380
    %v4290 = vunpack.c.l.b16 %v1381
    %v4291 = vunpack.c.h.b16 %v1381
    %v4292 = vunpack.c.l.b16 %v1382
    %v4293 = vunpack.c.h.b16 %v1382
    %v4294 = vunpack.c.l.b16 %v1383
    %v4295 = vunpack.c.h.b16 %v1383
    %v4296 = vunpack.c.l.b16 %v1384
    %v4297 = vunpack.c.h.b16 %v1384
    %v4298 = vunpack.c.l.b16 %v1385
    %v4299 = vunpack.c.h.b16 %v1385
    %v4300 = vunpack.c.l.b16 %v1386
    %v4301 = vunpack.c.h.b16 %v1386
    %v4302 = vunpack.c.l.b16 %v1387
    %v4303 = vunpack.c.h.b16 %v1387
    %v4304 = vunpack.c.l.b16 %v1388
    %v4305 = vunpack.c.h.b16 %v1388
    %v4306 = vunpack.c.l.b16 %v1389
    %v4307 = vunpack.c.h.b16 %v1389
    %v4308 = vunpack.c.l.b16 %v1390
    %v4309 = vunpack.c.h.b16 %v1390
    %v4310 = vunpack.c.l.b16 %v1391
    %v4311 = vunpack.c.h.b16 %v1391
    %v4312 = vunpack.c.l.b16 %v1392
    %v4313 = vunpack.c.h.b16 %v1392
    %v4314 = vunpack.c.l.b16 %v1393
    %v4315 = vunpack.c.h.b16 %v1393
    %v4316 = vunpack.c.l.b16 %v1394
    %v4317 = vunpack.c.h.b16 %v1394
    %v4318 = vunpack.c.l.b16 %v1395
    %v4319 = vunpack.c.h.b16 %v1395
    %v4320 = vunpack.c.l.b16 %v1396
    %v4321 = vunpack.c.h.b16 %v1396
    %v4322 = vunpack.c.l.b16 %v1397
    %v4323 = vunpack.c.h.b16 %v1397
    %v4324 = vunpack.c.l.b16 %v1398
    %v4325 = vunpack.c.h.b16 %v1398
    %v4326 = vunpack.c.l.b16 %v1399
    %v4327 = vunpack.c.h.b16 %v1399
    %v4328 = vunpack.c.l.b16 %v1400
    %v4329 = vunpack.c.h.b16 %v1400
    %v4330 = vunpack.c.l.b16 %v1401
    %v4331 = vunpack.c.h.b16 %v1401
    %v4332 = vunpack.c.l.b16 %v1402
    %v4333 = vunpack.c.h.b16 %v1402
    %v4334 = vunpack.c.l.b16 %v1403
    %v4335 = vunpack.c.h.b16 %v1403
    %v4336 = vunpack.c.l.b16 %v1404
    %v4337 = vunpack.c.h.b16 %v1404
    %v4338 = vunpack.c.l.b16 %v1405
    %v4339 = vunpack.c.h.b16 %v1405
    %v4340 = vunpack.c.l.b16 %v1406
    %v4341 = vunpack.c.h.b16 %v1406
    %v4342 = vunpack.c.l.b16 %v1407
    %v4343 = vunpack.c.h.b16 %v1407
    %v4344 = vunpack.c.l.b16 %v1408
    %v4345 = vunpack.c.h.b16 %v1408
    %v4346 = vunpack.c.l.b16 %v1409
    %v4347 = vunpack.c.h.b16 %v1409
    %v4348 = vunpack.c.l.b16 %v1410
    %v4349 = vunpack.c.h.b16 %v1410
    %v4350 = vunpack.c.l.b16 %v1411
    %v4351 = vunpack.c.h.b16 %v1411
    %v4352 = vunpack.c.l.b16 %v1412
    %v4353 = vunpack.c.h.b16 %v1412
    %v4354 = vunpack.c.l.b16 %v1413
    %v4355 = vunpack.c.h.b16 %v1413
    %v4356 = vunpack.c.l.b16 %v1414
    %v4357 = vunpack.c.h.b16 %v1414
    %v4358 = vunpack.c.l.b16 %v1415
    %v4359 = vunpack.c.h.b16 %v1415
    %v4360 = vunpack.c.l.b16 %v1416
    %v4361 = vunpack.c.h.b16 %v1416
    %v4362 = vunpack.c.l.b16 %v1417
    %v4363 = vunpack.c.h.b16 %v1417
    %v4364 = vunpack.c.l.b16 %v1418
    %v4365 = vunpack.c.h.b16 %v1418
    %v4366 = vunpack.c.l.b16 %v1419
    %v4367 = vunpack.c.h.b16 %v1419
    %v4368 = vunpack.c.l.b16 %v1420
    %v4369 = vunpack.c.h.b16 %v1420
    %v4370 = vunpack.c.l.b16 %v1421
    %v4371 = vunpack.c.h.b16 %v1421
    %v4372 = vunpack.c.l.b16 %v1422
    %v4373 = vunpack.c.h.b16 %v1422
    %v4374 = vunpack.c.l.b16 %v1423
    %v4375 = vunpack.c.h.b16 %v1423
    %v4376 = vunpack.c.l.b16 %v1424
    %v4377 = vunpack.c.h.b16 %v1424
    %v4378 = vunpack.c.l.b16 %v1425
    %v4379 = vunpack.c.h.b16 %v1425
    %v4380 = vunpack.c.l.b16 %v1426
    %v4381 = vunpack.c.h.b16 %v1426
    %v4382 = vunpack.c.l.b16 %v1427
    %v4383 = vunpack.c.h.b16 %v1427
    %v4384 = vunpack.c.l.b16 %v1428
    %v4385 = vunpack.c.h.b16 %v1428
    %v4386 = vunpack.c.l.b16 %v1429
    %v4387 = vunpack.c.h.b16 %v1429
    %v4388 = vunpack.c.l.b16 %v1430
    %v4389 = vunpack.c.h.b16 %v1430
    %v4390 = vunpack.c.l.b16 %v1431
    %v4391 = vunpack.c.h.b16 %v1431
    %v4392 = vunpack.c.l.b16 %v1432
    %v4393 = vunpack.c.h.b16 %v1432
    %v4394 = vunpack.c.l.b16 %v1433
    %v4395 = vunpack.c.h.b16 %v1433
    %v4396 = vunpack.c.l.b16 %v1434
    %v4397 = vunpack.c.h.b16 %v1434
    %v4398 = vunpack.c.l.b16 %v1435
    %v4399 = vunpack.c.h.b16 %v1435
    %v4400 = vunpack.c.l.b16 %v1436
    %v4401 = vunpack.c.h.b16 %v1436
    %v4402 = vunpack.c.l.b16 %v1437
    %v4403 = vunpack.c.h.b16 %v1437
    %v4404 = vunpack.c.l.b16 %v1438
    %v4405 = vunpack.c.h.b16 %v1438
    %v4406 = vunpack.c.l.b16 %v1439
    %v4407 = vunpack.c.h.b16 %v1439
    %v4408 = vunpack.c.l.b16 %v1440
    %v4409 = vunpack.c.h.b16 %v1440
    %v4410 = vunpack.c.l.b16 %v1441
    %v4411 = vunpack.c.h.b16 %v1441
    %v4412 = vunpack.c.l.b16 %v1442
    %v4413 = vunpack.c.h.b16 %v1442
    %v4414 = vunpack.c.l.b16 %v1443
    %v4415 = vunpack.c.h.b16 %v1443
    %v4416 = vunpack.c.l.b16 %v1444
    %v4417 = vunpack.c.h.b16 %v1444
    %v4418 = vunpack.c.l.b16 %v1445
    %v4419 = vunpack.c.h.b16 %v1445
    %v4420 = vunpack.c.l.b16 %v1446
    %v4421 = vunpack.c.h.b16 %v1446
    %v4422 = vunpack.c.l.b16 %v1447
    %v4423 = vunpack.c.h.b16 %v1447
    %v4424 = vunpack.c.l.b16 %v1448
    %v4425 = vunpack.c.h.b16 %v1448
    %v4426 = vunpack.c.l.b16 %v1449
    %v4427 = vunpack.c.h.b16 %v1449
    %v4428 = vunpack.c.l.b16 %v1450
    %v4429 = vunpack.c.h.b16 %v1450
    %v4430 = vunpack.c.l.b16 %v1451
    %v4431 = vunpack.c.h.b16 %v1451
    %v4432 = vunpack.c.l.b16 %v1452
    %v4433 = vunpack.c.h.b16 %v1452
    %v4434 = vunpack.c.l.b16 %v1453
    %v4435 = vunpack.c.h.b16 %v1453
    %v4436 = vunpack.c.l.b16 %v1454
    %v4437 = vunpack.c.h.b16 %v1454
    %v4438 = vunpack.c.l.b16 %v1455
    %v4439 = vunpack.c.h.b16 %v1455
    %v4440 = vunpack.c.l.b16 %v1456
    %v4441 = vunpack.c.h.b16 %v1456
    %v4442 = vunpack.c.l.b16 %v1457
    %v4443 = vunpack.c.h.b16 %v1457
    %v4444 = vunpack.c.l.b16 %v1458
    %v4445 = vunpack.c.h.b16 %v1458
    %v4446 = vunpack.c.l.b16 %v1459
    %v4447 = vunpack.c.h.b16 %v1459
    %v4448 = vunpack.c.l.b16 %v1460
    %v4449 = vunpack.c.h.b16 %v1460
    %v4450 = vunpack.c.l.b16 %v1461
    %v4451 = vunpack.c.h.b16 %v1461
    %v4452 = vunpack.c.l.b16 %v1462
    %v4453 = vunpack.c.h.b16 %v1462
    %v4454 = vunpack.c.l.b16 %v1463
    %v4455 = vunpack.c.h.b16 %v1463
    %v4456 = vunpack.c.l.b16 %v1464
    %v4457 = vunpack.c.h.b16 %v1464
    %v4458 = vunpack.c.l.b16 %v1465
    %v4459 = vunpack.c.h.b16 %v1465
    %v4460 = vunpack.c.l.b16 %v1466
    %v4461 = vunpack.c.h.b16 %v1466
    %v4462 = vunpack.c.l.b16 %v1467
    %v4463 = vunpack.c.h.b16 %v1467
    %v4464 = vunpack.c.l.b16 %v1468
    %v4465 = vunpack.c.h.b16 %v1468
    %v4466 = vunpack.c.l.b16 %v1469
    %v4467 = vunpack.c.h.b16 %v1469
    %v4468 = vunpack.c.l.b16 %v1470
    %v4469 = vunpack.c.h.b16 %v1470
    %v4470 = vunpack.c.l.b16 %v1471
    %v4471 = vunpack.c.h.b16 %v1471
    %v4472 = vunpack.c.l.b16 %v1472
    %v4473 = vunpack.c.h.b16 %v1472
    %v4474 = vunpack.c.l.b16 %v1473
    %v4475 = vunpack.c.h.b16 %v1473
    %v4476 = vunpack.c.l.b16 %v1474
    %v4477 = vunpack.c.h.b16 %v1474
    %v4478 = vunpack.c.l.b16 %v1475
    %v4479 = vunpack.c.h.b16 %v1475
    %v4480 = vunpack.c.l.b16 %v1476
    %v4481 = vunpack.c.h.b16 %v1476
    %v4482 = vunpack.c.l.b16 %v1477
    %v4483 = vunpack.c.h.b16 %v1477
    %v4484 = vunpack.c.l.b16 %v1478
    %v4485 = vunpack.c.h.b16 %v1478
    %v4486 = vunpack.c.l.b16 %v1479
    %v4487 = vunpack.c.h.b16 %v1479
    %v4488 = vunpack.c.l.b16 %v1480
    %v4489 = vunpack.c.h.b16 %v1480
    %v4490 = vunpack.c.l.b16 %v1481
    %v4491 = vunpack.c.h.b16 %v1481
    %v4492 = vunpack.c.l.b16 %v1482
    %v4493 = vunpack.c.h.b16 %v1482
    %v4494 = vunpack.c.l.b16 %v1483
    %v4495 = vunpack.c.h.b16 %v1483
    %v4496 = vunpack.c.l.b16 %v1484
    %v4497 = vunpack.c.h.b16 %v1484
    %v4498 = vunpack.c.l.b16 %v1485
    %v4499 = vunpack.c.h.b16 %v1485
    %v4500 = vunpack.c.l.b16 %v1486
    %v4501 = vunpack.c.h.b16 %v1486
    %v4502 = vunpack.c.l.b16 %v1487
    %v4503 = vunpack.c.h.b16 %v1487
    %v4504 = vunpack.c.l.b16 %v1488
    %v4505 = vunpack.c.h.b16 %v1488
    %v4506 = vunpack.c.l.b16 %v1489
    %v4507 = vunpack.c.h.b16 %v1489
    %v4508 = vunpack.c.l.b16 %v1490
    %v4509 = vunpack.c.h.b16 %v1490
    %v4510 = vunpack.c.l.b16 %v1491
    %v4511 = vunpack.c.h.b16 %v1491
    %v4512 = vunpack.c.l.b16 %v1492
    %v4513 = vunpack.c.h.b16 %v1492
    %v4514 = vunpack.c.l.b16 %v1493
    %v4515 = vunpack.c.h.b16 %v1493
    %v4516 = vunpack.c.l.b16 %v1494
    %v4517 = vunpack.c.h.b16 %v1494
    %v4518 = vunpack.c.l.b16 %v1495
    %v4519 = vunpack.c.h.b16 %v1495
    %v4520 = vunpack.c.l.b16 %v1496
    %v4521 = vunpack.c.h.b16 %v1496
    %v4522 = vunpack.c.l.b16 %v1497
    %v4523 = vunpack.c.h.b16 %v1497
    %v4524 = vunpack.c.l.b16 %v1498
    %v4525 = vunpack.c.h.b16 %v1498
    %v4526 = vunpack.c.l.b16 %v1499
    %v4527 = vunpack.c.h.b16 %v1499
    %v4528 = vunpack.c.l.b16 %v1500
    %v4529 = vunpack.c.h.b16 %v1500
    %v4530 = vunpack.c.l.b16 %v1501
    %v4531 = vunpack.c.h.b16 %v1501
    %v4532 = vunpack.c.l.b16 %v1502
    %v4533 = vunpack.c.h.b16 %v1502
    %v4534 = vunpack.c.l.b16 %v1503
    %v4535 = vunpack.c.h.b16 %v1503
    %v4536 = vunpack.c.l.b16 %v1504
    %v4537 = vunpack.c.h.b16 %v1504
    %v4538 = vunpack.c.l.b16 %v1505
    %v4539 = vunpack.c.h.b16 %v1505
    %v4540 = vunpack.c.l.b16 %v1506
    %v4541 = vunpack.c.h.b16 %v1506
    %v4542 = vunpack.c.l.b16 %v1507
    %v4543 = vunpack.c.h.b16 %v1507
    %v4544 = vunpack.c.l.b16 %v1508
    %v4545 = vunpack.c.h.b16 %v1508
    %v4546 = vunpack.c.l.b16 %v1509
    %v4547 = vunpack.c.h.b16 %v1509
    %v4548 = vunpack.c.l.b16 %v1510
    %v4549 = vunpack.c.h.b16 %v1510
    %v4550 = vunpack.c.l.b16 %v1511
    %v4551 = vunpack.c.h.b16 %v1511
    %v4552 = vunpack.c.l.b16 %v1512
    %v4553 = vunpack.c.h.b16 %v1512
    %v4554 = vunpack.c.l.b16 %v1513
    %v4555 = vunpack.c.h.b16 %v1513
    %v4556 = vunpack.c.l.b16 %v1514
    %v4557 = vunpack.c.h.b16 %v1514
    %v4558 = vunpack.c.l.b16 %v1515
    %v4559 = vunpack.c.h.b16 %v1515
    %v4560 = vunpack.c.l.b16 %v1516
    %v4561 = vunpack.c.h.b16 %v1516
    %v4562 = vunpack.c.l.b16 %v1517
    %v4563 = vunpack.c.h.b16 %v1517
    %v4564 = vunpack.c.l.b16 %v1518
    %v4565 = vunpack.c.h.b16 %v1518
    %v4566 = vunpack.c.l.b16 %v1519
    %v4567 = vunpack.c.h.b16 %v1519
    %v4568 = vunpack.c.l.b16 %v1520
    %v4569 = vunpack.c.h.b16 %v1520
    %v4570 = vunpack.c.l.b16 %v1521
    %v4571 = vunpack.c.h.b16 %v1521
    %v4572 = vunpack.c.l.b16 %v1522
    %v4573 = vunpack.c.h.b16 %v1522
    %v4574 = vunpack.c.l.b16 %v1523
    %v4575 = vunpack.c.h.b16 %v1523
    %v4576 = vunpack.c.l.b16 %v1524
    %v4577 = vunpack.c.h.b16 %v1524
    %v4578 = vunpack.c.l.b16 %v1525
    %v4579 = vunpack.c.h.b16 %v1525
    %v4580 = vunpack.c.l.b16 %v1526
    %v4581 = vunpack.c.h.b16 %v1526
    %v4582 = vunpack.c.l.b16 %v1527
    %v4583 = vunpack.c.h.b16 %v1527
    %v4584 = vunpack.c.l.b16 %v1528
    %v4585 = vunpack.c.h.b16 %v1528
    %v4586 = vunpack.c.l.b16 %v1529
    %v4587 = vunpack.c.h.b16 %v1529
    %v4588 = vunpack.c.l.b16 %v1530
    %v4589 = vunpack.c.h.b16 %v1530
    %v4590 = vunpack.c.l.b16 %v1531
    %v4591 = vunpack.c.h.b16 %v1531
    %v4592 = vunpack.c.l.b16 %v1532
    %v4593 = vunpack.c.h.b16 %v1532
    %v4594 = vunpack.c.l.b16 %v1533
    %v4595 = vunpack.c.h.b16 %v1533
    %v4596 = vunpack.c.l.b16 %v1534
    %v4597 = vunpack.c.h.b16 %v1534
    %v4598 = vunpack.c.l.b16 %v1535
    %v4599 = vunpack.c.h.b16 %v1535
    %v4600 = vunpack.c.l.b16 %v1536
    %v4601 = vunpack.c.h.b16 %v1536
    %v4602 = vunpack.c.l.b16 %v1537
    %v4603 = vunpack.c.h.b16 %v1537
    %v4604 = vunpack.c.l.b16 %v1538
    %v4605 = vunpack.c.h.b16 %v1538
    %v4606 = vunpack.c.l.b16 %v1539
    %v4607 = vunpack.c.h.b16 %v1539
    %v4608 = vunpack.c.l.b16 %v1540
    %v4609 = vunpack.c.h.b16 %v1540
    %v4610 = vunpack.c.l.b16 %v1541
    %v4611 = vunpack.c.h.b16 %v1541
    %v4612 = vunpack.c.l.b16 %v1542
    %v4613 = vunpack.c.h.b16 %v1542
    %v4614 = vunpack.c.l.b16 %v1543
    %v4615 = vunpack.c.h.b16 %v1543
    %v4616 = vunpack.c.l.b16 %v1544
    %v4617 = vunpack.c.h.b16 %v1544
    %v4618 = vunpack.c.l.b16 %v1545
    %v4619 = vunpack.c.h.b16 %v1545
    %v4620 = vunpack.c.l.b16 %v1546
    %v4621 = vunpack.c.h.b16 %v1546
    %v4622 = vunpack.c.l.b16 %v1547
    %v4623 = vunpack.c.h.b16 %v1547
    %v4624 = vunpack.c.l.b16 %v1548
    %v4625 = vunpack.c.h.b16 %v1548
    %v4626 = vunpack.c.l.b16 %v1549
    %v4627 = vunpack.c.h.b16 %v1549
    %v4628 = vunpack.c.l.b16 %v1550
    %v4629 = vunpack.c.h.b16 %v1550
    %v4630 = vunpack.c.l.b16 %v1551
    %v4631 = vunpack.c.h.b16 %v1551
    %v4632 = vunpack.c.l.b16 %v1552
    %v4633 = vunpack.c.h.b16 %v1552
    %v4634 = vunpack.c.l.b16 %v1553
    %v4635 = vunpack.c.h.b16 %v1553
    %v4636 = vunpack.c.l.b16 %v1554
    %v4637 = vunpack.c.h.b16 %v1554
    %v4638 = vunpack.c.l.b16 %v1555
    %v4639 = vunpack.c.h.b16 %v1555
    %v4640 = vunpack.c.l.b16 %v1556
    %v4641 = vunpack.c.h.b16 %v1556
    %v4642 = vunpack.c.l.b16 %v1557
    %v4643 = vunpack.c.h.b16 %v1557
    %v4644 = vunpack.c.l.b16 %v1558
    %v4645 = vunpack.c.h.b16 %v1558
    %v4646 = vunpack.c.l.b16 %v1559
    %v4647 = vunpack.c.h.b16 %v1559
    %v4648 = vunpack.c.l.b16 %v1560
    %v4649 = vunpack.c.h.b16 %v1560
    %v4650 = vunpack.c.l.b16 %v1561
    %v4651 = vunpack.c.h.b16 %v1561
    %v4652 = vunpack.c.l.b16 %v1562
    %v4653 = vunpack.c.h.b16 %v1562
    %v4654 = vunpack.c.l.b16 %v1563
    %v4655 = vunpack.c.h.b16 %v1563
    %v4656 = vunpack.c.l.b16 %v1564
    %v4657 = vunpack.c.h.b16 %v1564
    %v4658 = vunpack.c.l.b16 %v1565
    %v4659 = vunpack.c.h.b16 %v1565
    %v4660 = vunpack.c.l.b16 %v1566
    %v4661 = vunpack.c.h.b16 %v1566
    %v4662 = vunpack.c.l.b16 %v1567
    %v4663 = vunpack.c.h.b16 %v1567
    %v4664 = vunpack.c.l.b16 %v1568
    %v4665 = vunpack.c.h.b16 %v1568
    %v4666 = vunpack.c.l.b16 %v1569
    %v4667 = vunpack.c.h.b16 %v1569
    %v4668 = vunpack.c.l.b16 %v1570
    %v4669 = vunpack.c.h.b16 %v1570
    %v4670 = vunpack.c.l.b16 %v1571
    %v4671 = vunpack.c.h.b16 %v1571
    %v4672 = vunpack.c.l.b16 %v1572
    %v4673 = vunpack.c.h.b16 %v1572
    %v4674 = vunpack.c.l.b16 %v1573
    %v4675 = vunpack.c.h.b16 %v1573
    %v4676 = vunpack.c.l.b16 %v1574
    %v4677 = vunpack.c.h.b16 %v1574
    %v4678 = vunpack.c.l.b16 %v1575
    %v4679 = vunpack.c.h.b16 %v1575
    %v4680 = vunpack.c.l.b16 %v1576
    %v4681 = vunpack.c.h.b16 %v1576
    %v4682 = vunpack.c.l.b16 %v1577
    %v4683 = vunpack.c.h.b16 %v1577
    %v4684 = vunpack.c.l.b16 %v1578
    %v4685 = vunpack.c.h.b16 %v1578
    %v4686 = vunpack.c.l.b16 %v1579
    %v4687 = vunpack.c.h.b16 %v1579
    %v4688 = vunpack.c.l.b16 %v1580
    %v4689 = vunpack.c.h.b16 %v1580
    %v4690 = vunpack.c.l.b16 %v1581
    %v4691 = vunpack.c.h.b16 %v1581
    %v4692 = vunpack.c.l.b16 %v1582
    %v4693 = vunpack.c.h.b16 %v1582
    %v4694 = vunpack.c.l.b16 %v1583
    %v4695 = vunpack.c.h.b16 %v1583
    %v4696 = vunpack.c.l.b16 %v1584
    %v4697 = vunpack.c.h.b16 %v1584
    %v4698 = vunpack.c.l.b16 %v1585
    %v4699 = vunpack.c.h.b16 %v1585
    %v4700 = vunpack.c.l.b16 %v1586
    %v4701 = vunpack.c.h.b16 %v1586
    %v4702 = vunpack.c.l.b16 %v1587
    %v4703 = vunpack.c.h.b16 %v1587
    %v4704 = vunpack.c.l.b16 %v1588
    %v4705 = vunpack.c.h.b16 %v1588
    %v4706 = vunpack.c.l.b16 %v1589
    %v4707 = vunpack.c.h.b16 %v1589
    %v4708 = vunpack.c.l.b16 %v1590
    %v4709 = vunpack.c.h.b16 %v1590
    %v4710 = vunpack.c.l.b16 %v1591
    %v4711 = vunpack.c.h.b16 %v1591
    %v4712 = vunpack.c.l.b16 %v1592
    %v4713 = vunpack.c.h.b16 %v1592
    %v4714 = vunpack.c.l.b16 %v1593
    %v4715 = vunpack.c.h.b16 %v1593
    %v4716 = vunpack.c.l.b16 %v1594
    %v4717 = vunpack.c.h.b16 %v1594
    %v4718 = vunpack.c.l.b16 %v1595
    %v4719 = vunpack.c.h.b16 %v1595
    %v4720 = vunpack.c.l.b16 %v1596
    %v4721 = vunpack.c.h.b16 %v1596
    %v4722 = vunpack.c.l.b16 %v1597
    %v4723 = vunpack.c.h.b16 %v1597
    %v4724 = vunpack.c.l.b16 %v1598
    %v4725 = vunpack.c.h.b16 %v1598
    %v4726 = vunpack.c.l.b16 %v1599
    %v4727 = vunpack.c.h.b16 %v1599
    %v4728 = vunpack.c.l.b16 %v1600
    %v4729 = vunpack.c.h.b16 %v1600
    %v4730 = vunpack.c.l.b16 %v1601
    %v4731 = vunpack.c.h.b16 %v1601
    %v4732 = vunpack.c.l.b16 %v1602
    %v4733 = vunpack.c.h.b16 %v1602
    %v4734 = vunpack.c.l.b16 %v1603
    %v4735 = vunpack.c.h.b16 %v1603
    %v4736 = vunpack.c.l.b16 %v1604
    %v4737 = vunpack.c.h.b16 %v1604
    %v4738 = vunpack.c.l.b16 %v1605
    %v4739 = vunpack.c.h.b16 %v1605
    %v4740 = vunpack.c.l.b16 %v1606
    %v4741 = vunpack.c.h.b16 %v1606
    %v4742 = vunpack.c.l.b16 %v1607
    %v4743 = vunpack.c.h.b16 %v1607
    %v4744 = vunpack.c.l.b16 %v1608
    %v4745 = vunpack.c.h.b16 %v1608
    %v4746 = vunpack.c.l.b16 %v1609
    %v4747 = vunpack.c.h.b16 %v1609
    %v4748 = vunpack.c.l.b16 %v1610
    %v4749 = vunpack.c.h.b16 %v1610
    %v4750 = vunpack.c.l.b16 %v1611
    %v4751 = vunpack.c.h.b16 %v1611
    %v4752 = vunpack.c.l.b16 %v1612
    %v4753 = vunpack.c.h.b16 %v1612
    %v4754 = vunpack.c.l.b16 %v1613
    %v4755 = vunpack.c.h.b16 %v1613
    %v4756 = vunpack.c.l.b16 %v1614
    %v4757 = vunpack.c.h.b16 %v1614
    %v4758 = vunpack.c.l.b16 %v1615
    %v4759 = vunpack.c.h.b16 %v1615
    %v4760 = vunpack.c.l.b16 %v1616
    %v4761 = vunpack.c.h.b16 %v1616
    %v4762 = vunpack.c.l.b16 %v1617
    %v4763 = vunpack.c.h.b16 %v1617
    %v4764 = vunpack.c.l.b16 %v1618
    %v4765 = vunpack.c.h.b16 %v1618
    %v4766 = vunpack.c.l.b16 %v1619
    %v4767 = vunpack.c.h.b16 %v1619
    %v4768 = vunpack.c.l.b16 %v1620
    %v4769 = vunpack.c.h.b16 %v1620
    %v4770 = vunpack.c.l.b16 %v1621
    %v4771 = vunpack.c.h.b16 %v1621
    %v4772 = vunpack.c.l.b16 %v1622
    %v4773 = vunpack.c.h.b16 %v1622
    %v4774 = vunpack.c.l.b16 %v1623
    %v4775 = vunpack.c.h.b16 %v1623
    %v4776 = vunpack.c.l.b16 %v1624
    %v4777 = vunpack.c.h.b16 %v1624
    %v4778 = vunpack.c.l.b16 %v1625
    %v4779 = vunpack.c.h.b16 %v1625
    %v4780 = vunpack.c.l.b16 %v1626
    %v4781 = vunpack.c.h.b16 %v1626
    %v4782 = vunpack.c.l.b16 %v1627
    %v4783 = vunpack.c.h.b16 %v1627
    %v4784 = vunpack.c.l.b16 %v1628
    %v4785 = vunpack.c.h.b16 %v1628
    %v4786 = vunpack.c.l.b16 %v1629
    %v4787 = vunpack.c.h.b16 %v1629
    %v4788 = vunpack.c.l.b16 %v1630
    %v4789 = vunpack.c.h.b16 %v1630
    %v4790 = vunpack.c.l.b16 %v1631
    %v4791 = vunpack.c.h.b16 %v1631
    %v4792 = vunpack.c.l.b16 %v1632
    %v4793 = vunpack.c.h.b16 %v1632
    %v4794 = vunpack.c.l.b16 %v1633
    %v4795 = vunpack.c.h.b16 %v1633
    %v4796 = vunpack.c.l.b16 %v1634
    %v4797 = vunpack.c.h.b16 %v1634
    %v4798 = vunpack.c.l.b16 %v1635
    %v4799 = vunpack.c.h.b16 %v1635
    %v4800 = vunpack.c.l.b16 %v1636
    %v4801 = vunpack.c.h.b16 %v1636
    %v4802 = vunpack.c.l.b16 %v1637
    %v4803 = vunpack.c.h.b16 %v1637
    %v4804 = vunpack.c.l.b16 %v1638
    %v4805 = vunpack.c.h.b16 %v1638
    %v4806 = vunpack.c.l.b16 %v1639
    %v4807 = vunpack.c.h.b16 %v1639
    %v4808 = vunpack.c.l.b16 %v1640
    %v4809 = vunpack.c.h.b16 %v1640
    %v4810 = vunpack.c.l.b16 %v1641
    %v4811 = vunpack.c.h.b16 %v1641
    %v4812 = vunpack.c.l.b16 %v1642
    %v4813 = vunpack.c.h.b16 %v1642
    %v4814 = vunpack.c.l.b16 %v1643
    %v4815 = vunpack.c.h.b16 %v1643
    %v4816 = vunpack.c.l.b16 %v1644
    %v4817 = vunpack.c.h.b16 %v1644
    %v4818 = vunpack.c.l.b16 %v1645
    %v4819 = vunpack.c.h.b16 %v1645
    %v4820 = vunpack.c.l.b16 %v1646
    %v4821 = vunpack.c.h.b16 %v1646
    %v4822 = vunpack.c.l.b16 %v1647
    %v4823 = vunpack.c.h.b16 %v1647
    %v4824 = vunpack.c.l.b16 %v1648
    %v4825 = vunpack.c.h.b16 %v1648
    %v4826 = vunpack.c.l.b16 %v1649
    %v4827 = vunpack.c.h.b16 %v1649
    %v4828 = vunpack.c.l.b16 %v1650
    %v4829 = vunpack.c.h.b16 %v1650
    %v4830 = vunpack.c.l.b16 %v1651
    %v4831 = vunpack.c.h.b16 %v1651
    %v4832 = vunpack.c.l.b16 %v1652
    %v4833 = vunpack.c.h.b16 %v1652
    %v4834 = vunpack.c.l.b16 %v1653
    %v4835 = vunpack.c.h.b16 %v1653
    %v4836 = vunpack.c.l.b16 %v1654
    %v4837 = vunpack.c.h.b16 %v1654
    %v4838 = vunpack.c.l.b16 %v1655
    %v4839 = vunpack.c.h.b16 %v1655
    %v4840 = vunpack.c.l.b16 %v1656
    %v4841 = vunpack.c.h.b16 %v1656
    %v4842 = vunpack.c.l.b16 %v1657
    %v4843 = vunpack.c.h.b16 %v1657
    %v4844 = vunpack.c.l.b16 %v1658
    %v4845 = vunpack.c.h.b16 %v1658
    %v4846 = vunpack.c.l.b16 %v1659
    %v4847 = vunpack.c.h.b16 %v1659
    %v4848 = vunpack.c.l.b16 %v1660
    %v4849 = vunpack.c.h.b16 %v1660
    %v4850 = vunpack.c.l.b16 %v1661
    %v4851 = vunpack.c.h.b16 %v1661
    %v4852 = vunpack.c.l.b16 %v1662
    %v4853 = vunpack.c.h.b16 %v1662
    %v4854 = vunpack.c.l.b16 %v1663
    %v4855 = vunpack.c.h.b16 %v1663
    %v4856 = vunpack.c.l.b16 %v1664
    %v4857 = vunpack.c.h.b16 %v1664
    %v4858 = vunpack.c.l.b16 %v1665
    %v4859 = vunpack.c.h.b16 %v1665
    %v4860 = vunpack.c.l.b16 %v1666
    %v4861 = vunpack.c.h.b16 %v1666
    %v4862 = vunpack.c.l.b16 %v1667
    %v4863 = vunpack.c.h.b16 %v1667
    %v4864 = vunpack.c.l.b16 %v1668
    %v4865 = vunpack.c.h.b16 %v1668
    %v4866 = vunpack.c.l.b16 %v1669
    %v4867 = vunpack.c.h.b16 %v1669
    %v4868 = vunpack.c.l.b16 %v1670
    %v4869 = vunpack.c.h.b16 %v1670
    %v4870 = vunpack.c.l.b16 %v1671
    %v4871 = vunpack.c.h.b16 %v1671
    %v4872 = vunpack.c.l.b16 %v1672
    %v4873 = vunpack.c.h.b16 %v1672
    %v4874 = vunpack.c.l.b16 %v1673
    %v4875 = vunpack.c.h.b16 %v1673
    %v4876 = vunpack.c.l.b16 %v1674
    %v4877 = vunpack.c.h.b16 %v1674
    %v4878 = vunpack.c.l.b16 %v1675
    %v4879 = vunpack.c.h.b16 %v1675
    %v4880 = vunpack.c.l.b16 %v1676
    %v4881 = vunpack.c.h.b16 %v1676
    %v4882 = vunpack.c.l.b16 %v1677
    %v4883 = vunpack.c.h.b16 %v1677
    %v4884 = vunpack.c.l.b16 %v1678
    %v4885 = vunpack.c.h.b16 %v1678
    %v4886 = vunpack.c.l.b16 %v1679
    %v4887 = vunpack.c.h.b16 %v1679
    %v4888 = vunpack.c.l.b16 %v1680
    %v4889 = vunpack.c.h.b16 %v1680
    %v4890 = vunpack.c.l.b16 %v1681
    %v4891 = vunpack.c.h.b16 %v1681
    %v4892 = vunpack.c.l.b16 %v1682
    %v4893 = vunpack.c.h.b16 %v1682
    %v4894 = vunpack.c.l.b16 %v1683
    %v4895 = vunpack.c.h.b16 %v1683
    %v4896 = vunpack.c.l.b16 %v1684
    %v4897 = vunpack.c.h.b16 %v1684
    %v4898 = vunpack.c.l.b16 %v1685
    %v4899 = vunpack.c.h.b16 %v1685
    %v4900 = vunpack.c.l.b16 %v1686
    %v4901 = vunpack.c.h.b16 %v1686
    %v4902 = vunpack.c.l.b16 %v1687
    %v4903 = vunpack.c.h.b16 %v1687
    %v4904 = vunpack.c.l.b16 %v1688
    %v4905 = vunpack.c.h.b16 %v1688
    %v4906 = vunpack.c.l.b16 %v1689
    %v4907 = vunpack.c.h.b16 %v1689
    %v4908 = vunpack.c.l.b16 %v1690
    %v4909 = vunpack.c.h.b16 %v1690
    %v4910 = vunpack.c.l.b16 %v1691
    %v4911 = vunpack.c.h.b16 %v1691
    %v4912 = vunpack.c.l.b16 %v1692
    %v4913 = vunpack.c.h.b16 %v1692
    %v4914 = vunpack.c.l.b16 %v1693
    %v4915 = vunpack.c.h.b16 %v1693
    %v4916 = vunpack.c.l.b16 %v1694
    %v4917 = vunpack.c.h.b16 %v1694
    %v4918 = vunpack.c.l.b16 %v1695
    %v4919 = vunpack.c.h.b16 %v1695
    %v4920 = vunpack.c.l.b16 %v1696
    %v4921 = vunpack.c.h.b16 %v1696
    %v4922 = vunpack.c.l.b16 %v1697
    %v4923 = vunpack.c.h.b16 %v1697
    %v4924 = vunpack.c.l.b16 %v1698
    %v4925 = vunpack.c.h.b16 %v1698
    %v4926 = vunpack.c.l.b16 %v1699
    %v4927 = vunpack.c.h.b16 %v1699
    %v4928 = vunpack.c.l.b16 %v1700
    %v4929 = vunpack.c.h.b16 %v1700
    %v4930 = vunpack.c.l.b16 %v1701
    %v4931 = vunpack.c.h.b16 %v1701
    %v4932 = vunpack.c.l.b16 %v1702
    %v4933 = vunpack.c.h.b16 %v1702
    %v4934 = vunpack.c.l.b16 %v1703
    %v4935 = vunpack.c.h.b16 %v1703
    %v4936 = vunpack.c.l.b16 %v1704
    %v4937 = vunpack.c.h.b16 %v1704
    %v4938 = vunpack.c.l.b16 %v1705
    %v4939 = vunpack.c.h.b16 %v1705
    %v4940 = vunpack.c.l.b16 %v1706
    %v4941 = vunpack.c.h.b16 %v1706
    %v4942 = vunpack.c.l.b16 %v1707
    %v4943 = vunpack.c.h.b16 %v1707
    %v4944 = vunpack.c.l.b16 %v1708
    %v4945 = vunpack.c.h.b16 %v1708
    %v4946 = vunpack.c.l.b16 %v1709
    %v4947 = vunpack.c.h.b16 %v1709
    %v4948 = vunpack.c.l.b16 %v1710
    %v4949 = vunpack.c.h.b16 %v1710
    %v4950 = vunpack.c.l.b16 %v1711
    %v4951 = vunpack.c.h.b16 %v1711
    %v4952 = vunpack.c.l.b16 %v1712
    %v4953 = vunpack.c.h.b16 %v1712
    %v4954 = vunpack.c.l.b16 %v1713
    %v4955 = vunpack.c.h.b16 %v1713
    %v4956 = vunpack.c.l.b16 %v1714
    %v4957 = vunpack.c.h.b16 %v1714
    %v4958 = vunpack.c.l.b16 %v1715
    %v4959 = vunpack.c.h.b16 %v1715
    %v4960 = vunpack.c.l.b16 %v1716
    %v4961 = vunpack.c.h.b16 %v1716
    %v4962 = vunpack.c.l.b16 %v1717
    %v4963 = vunpack.c.h.b16 %v1717
    %v4964 = vunpack.c.l.b16 %v1718
    %v4965 = vunpack.c.h.b16 %v1718
    %v4966 = vunpack.c.l.b16 %v1719
    %v4967 = vunpack.c.h.b16 %v1719
    %v4968 = vunpack.c.l.b16 %v1720
    %v4969 = vunpack.c.h.b16 %v1720
    %v4970 = vunpack.c.l.b16 %v1721
    %v4971 = vunpack.c.h.b16 %v1721
    %v4972 = vunpack.c.l.b16 %v1722
    %v4973 = vunpack.c.h.b16 %v1722
    %v4974 = vunpack.c.l.b16 %v1723
    %v4975 = vunpack.c.h.b16 %v1723
    %v4976 = vunpack.c.l.b16 %v1724
    %v4977 = vunpack.c.h.b16 %v1724
    %v4978 = vunpack.c.l.b16 %v1725
    %v4979 = vunpack.c.h.b16 %v1725
    %v4980 = vunpack.c.l.b16 %v1726
    %v4981 = vunpack.c.h.b16 %v1726
    %v4982 = vunpack.c.l.b16 %v1727
    %v4983 = vunpack.c.h.b16 %v1727
    %v4984 = vunpack.c.l.b16 %v1728
    %v4985 = vunpack.c.h.b16 %v1728
    %v4986 = vunpack.c.l.b16 %v1729
    %v4987 = vunpack.c.h.b16 %v1729
    %v4988 = vunpack.c.l.b16 %v1730
    %v4989 = vunpack.c.h.b16 %v1730
    %v4990 = vunpack.c.l.b16 %v1731
    %v4991 = vunpack.c.h.b16 %v1731
    %v4992 = vunpack.c.l.b16 %v1732
    %v4993 = vunpack.c.h.b16 %v1732
    %v4994 = vunpack.c.l.b16 %v1733
    %v4995 = vunpack.c.h.b16 %v1733
    %v4996 = vunpack.c.l.b16 %v1734
    %v4997 = vunpack.c.h.b16 %v1734
    %v4998 = vunpack.c.l.b16 %v1735
    %v4999 = vunpack.c.h.b16 %v1735
    %v5000 = vunpack.c.l.b16 %v1736
    %v5001 = vunpack.c.h.b16 %v1736
    %v5002 = vunpack.c.l.b16 %v1737
    %v5003 = vunpack.c.h.b16 %v1737
    %v5004 = vunpack.c.l.b16 %v1738
    %v5005 = vunpack.c.h.b16 %v1738
    %v5006 = vunpack.c.l.b16 %v1739
    %v5007 = vunpack.c.h.b16 %v1739
    %v5008 = vunpack.c.l.b16 %v1740
    %v5009 = vunpack.c.h.b16 %v1740
    %v5010 = vunpack.c.l.b16 %v1741
    %v5011 = vunpack.c.h.b16 %v1741
    %v5012 = vunpack.c.l.b16 %v1742
    %v5013 = vunpack.c.h.b16 %v1742
    %v5014 = vunpack.c.l.b16 %v1743
    %v5015 = vunpack.c.h.b16 %v1743
    %v5016 = vunpack.c.l.b16 %v1744
    %v5017 = vunpack.c.h.b16 %v1744
    %v5018 = vunpack.c.l.b16 %v1745
    %v5019 = vunpack.c.h.b16 %v1745
    %v5020 = vunpack.c.l.b16 %v1746
    %v5021 = vunpack.c.h.b16 %v1746
    %v5022 = vunpack.c.l.b16 %v1747
    %v5023 = vunpack.c.h.b16 %v1747
    %v5024 = vunpack.c.l.b16 %v1748
    %v5025 = vunpack.c.h.b16 %v1748
    %v5026 = vunpack.c.l.b16 %v1749
    %v5027 = vunpack.c.h.b16 %v1749
    %v5028 = vunpack.c.l.b16 %v1750
    %v5029 = vunpack.c.h.b16 %v1750
    %v5030 = vunpack.c.l.b16 %v1751
    %v5031 = vunpack.c.h.b16 %v1751
    %v5032 = vunpack.c.l.b16 %v1752
    %v5033 = vunpack.c.h.b16 %v1752
    %v5034 = vunpack.c.l.b16 %v1753
    %v5035 = vunpack.c.h.b16 %v1753
    %v5036 = vunpack.c.l.b16 %v1754
    %v5037 = vunpack.c.h.b16 %v1754
    %v5038 = vunpack.c.l.b16 %v1755
    %v5039 = vunpack.c.h.b16 %v1755
    %v5040 = vunpack.c.l.b16 %v1756
    %v5041 = vunpack.c.h.b16 %v1756
    %v5042 = vunpack.c.l.b16 %v1757
    %v5043 = vunpack.c.h.b16 %v1757
    %v5044 = vunpack.c.l.b16 %v1758
    %v5045 = vunpack.c.h.b16 %v1758
    %v5046 = vunpack.c.l.b16 %v1759
    %v5047 = vunpack.c.h.b16 %v1759
    %v5048 = vunpack.c.l.b16 %v1760
    %v5049 = vunpack.c.h.b16 %v1760
    %v5050 = vunpack.c.l.b16 %v1761
    %v5051 = vunpack.c.h.b16 %v1761
    %v5052 = vunpack.c.l.b16 %v1762
    %v5053 = vunpack.c.h.b16 %v1762
    %v5054 = vunpack.c.l.b16 %v1763
    %v5055 = vunpack.c.h.b16 %v1763
    %v5056 = vunpack.c.l.b16 %v1764
    %v5057 = vunpack.c.h.b16 %v1764
    %v5058 = vunpack.c.l.b16 %v1765
    %v5059 = vunpack.c.h.b16 %v1765
    %v5060 = vunpack.c.l.b16 %v1766
    %v5061 = vunpack.c.h.b16 %v1766
    %v5062 = vunpack.c.l.b16 %v1767
    %v5063 = vunpack.c.h.b16 %v1767
    %v5064 = vunpack.c.l.b16 %v1768
    %v5065 = vunpack.c.h.b16 %v1768
    %v5066 = vunpack.c.l.b16 %v1769
    %v5067 = vunpack.c.h.b16 %v1769
    %v5068 = vunpack.c.l.b16 %v1770
    %v5069 = vunpack.c.h.b16 %v1770
    %v5070 = vunpack.c.l.b16 %v1771
    %v5071 = vunpack.c.h.b16 %v1771
    %v5072 = vunpack.c.l.b16 %v1772
    %v5073 = vunpack.c.h.b16 %v1772
    %v5074 = vunpack.c.l.b16 %v1773
    %v5075 = vunpack.c.h.b16 %v1773
    %v5076 = vunpack.c.l.b16 %v1774
    %v5077 = vunpack.c.h.b16 %v1774
    %v5078 = vunpack.c.l.b16 %v1775
    %v5079 = vunpack.c.h.b16 %v1775
    %v5080 = vunpack.c.l.b16 %v1776
    %v5081 = vunpack.c.h.b16 %v1776
    %v5082 = vunpack.c.l.b16 %v1777
    %v5083 = vunpack.c.h.b16 %v1777
    %v5084 = vunpack.c.l.b16 %v1778
    %v5085 = vunpack.c.h.b16 %v1778
    %v5086 = vunpack.c.l.b16 %v1779
    %v5087 = vunpack.c.h.b16 %v1779
    %v5088 = vunpack.c.l.b16 %v1780
    %v5089 = vunpack.c.h.b16 %v1780
    %v5090 = vunpack.c.l.b16 %v1781
    %v5091 = vunpack.c.h.b16 %v1781
    %v5092 = vunpack.c.l.b16 %v1782
    %v5093 = vunpack.c.h.b16 %v1782
    %v5094 = vunpack.c.l.b16 %v1783
    %v5095 = vunpack.c.h.b16 %v1783
    %v5096 = vunpack.c.l.b16 %v1784
    %v5097 = vunpack.c.h.b16 %v1784
    %v5098 = vunpack.c.l.b16 %v1785
    %v5099 = vunpack.c.h.b16 %v1785
    %v5100 = vunpack.c.l.b16 %v1786
    %v5101 = vunpack.c.h.b16 %v1786
    %v5102 = vunpack.c.l.b16 %v1787
    %v5103 = vunpack.c.h.b16 %v1787
    %v5104 = vunpack.c.l.b16 %v1788
    %v5105 = vunpack.c.h.b16 %v1788
    %v5106 = vunpack.c.l.b16 %v1789
    %v5107 = vunpack.c.h.b16 %v1789
    %v5108 = vunpack.c.l.b16 %v1790
    %v5109 = vunpack.c.h.b16 %v1790
    %v5110 = vunpack.c.l.b16 %v1791
    %v5111 = vunpack.c.h.b16 %v1791
    %v5112 = vunpack.c.l.b16 %v1792
    %v5113 = vunpack.c.h.b16 %v1792
    %v5114 = vunpack.c.l.b16 %v1793
    %v5115 = vunpack.c.h.b16 %v1793
    %v5116 = vunpack.c.l.b16 %v1794
    %v5117 = vunpack.c.h.b16 %v1794
    %v5118 = vunpack.c.l.b16 %v1795
    %v5119 = vunpack.c.h.b16 %v1795
    %v5120 = vunpack.c.l.b16 %v1796
    %v5121 = vunpack.c.h.b16 %v1796
    %v5122 = vunpack.c.l.b16 %v1797
    %v5123 = vunpack.c.h.b16 %v1797
    %v5124 = vunpack.c.l.b16 %v1798
    %v5125 = vunpack.c.h.b16 %v1798
    %v5126 = vunpack.c.l.b16 %v1799
    %v5127 = vunpack.c.h.b16 %v1799
    %v5128 = vunpack.c.l.b16 %v1800
    %v5129 = vunpack.c.h.b16 %v1800
    %v5130 = vunpack.c.l.b16 %v1801
    %v5131 = vunpack.c.h.b16 %v1801
    %v5132 = vunpack.c.l.b16 %v1802
    %v5133 = vunpack.c.h.b16 %v1802
    %v5134 = vunpack.c.l.b16 %v1803
    %v5135 = vunpack.c.h.b16 %v1803
    %v5136 = vunpack.c.l.b16 %v1804
    %v5137 = vunpack.c.h.b16 %v1804
    %v5138 = vunpack.c.l.b16 %v1805
    %v5139 = vunpack.c.h.b16 %v1805
    %v5140 = vunpack.c.l.b16 %v1806
    %v5141 = vunpack.c.h.b16 %v1806
    %v5142 = vunpack.c.l.b16 %v1807
    %v5143 = vunpack.c.h.b16 %v1807
    %v5144 = vunpack.c.l.b16 %v1808
    %v5145 = vunpack.c.h.b16 %v1808
    %v5146 = vunpack.c.l.b16 %v1809
    %v5147 = vunpack.c.h.b16 %v1809
    %v5148 = vunpack.c.l.b16 %v1810
    %v5149 = vunpack.c.h.b16 %v1810
    %v5150 = vunpack.c.l.b16 %v1811
    %v5151 = vunpack.c.h.b16 %v1811
    %v5152 = vunpack.c.l.b16 %v1812
    %v5153 = vunpack.c.h.b16 %v1812
    %v5154 = vunpack.c.l.b16 %v1813
    %v5155 = vunpack.c.h.b16 %v1813
    %v5156 = vunpack.c.l.b16 %v1814
    %v5157 = vunpack.c.h.b16 %v1814
    %v5158 = vunpack.c.l.b16 %v1815
    %v5159 = vunpack.c.h.b16 %v1815
    %v5160 = vunpack.c.l.b16 %v1816
    %v5161 = vunpack.c.h.b16 %v1816
    %v5162 = vunpack.c.l.b16 %v1817
    %v5163 = vunpack.c.h.b16 %v1817
    %v5164 = vunpack.c.l.b16 %v1818
    %v5165 = vunpack.c.h.b16 %v1818
    %v5166 = vunpack.c.l.b16 %v1819
    %v5167 = vunpack.c.h.b16 %v1819
    %v5168 = vunpack.c.l.b16 %v1820
    %v5169 = vunpack.c.h.b16 %v1820
    %v5170 = vunpack.c.l.b16 %v1821
    %v5171 = vunpack.c.h.b16 %v1821
    %v5172 = vunpack.c.l.b16 %v1822
    %v5173 = vunpack.c.h.b16 %v1822
    %v5174 = vunpack.c.l.b16 %v1823
    %v5175 = vunpack.c.h.b16 %v1823
    %v5176 = vunpack.c.l.b16 %v1824
    %v5177 = vunpack.c.h.b16 %v1824
    %v5178 = vunpack.c.l.b16 %v1825
    %v5179 = vunpack.c.h.b16 %v1825
    %v5180 = vunpack.c.l.b16 %v1826
    %v5181 = vunpack.c.h.b16 %v1826
    %v5182 = vunpack.c.l.b16 %v1827
    %v5183 = vunpack.c.h.b16 %v1827
    %v5184 = vunpack.c.l.b16 %v1828
    %v5185 = vunpack.c.h.b16 %v1828
    %v5186 = vunpack.c.l.b16 %v1829
    %v5187 = vunpack.c.h.b16 %v1829
    %v5188 = vunpack.c.l.b16 %v1830
    %v5189 = vunpack.c.h.b16 %v1830
    %v5190 = vunpack.c.l.b16 %v1831
    %v5191 = vunpack.c.h.b16 %v1831
    %v5192 = vunpack.c.l.b16 %v1832
    %v5193 = vunpack.c.h.b16 %v1832
    %v5194 = vunpack.c.l.b16 %v1833
    %v5195 = vunpack.c.h.b16 %v1833
    %v5196 = vunpack.c.l.b16 %v1834
    %v5197 = vunpack.c.h.b16 %v1834
    %v5198 = vunpack.c.l.b16 %v1835
    %v5199 = vunpack.c.h.b16 %v1835
    %v5200 = vunpack.c.l.b16 %v1836
    %v5201 = vunpack.c.h.b16 %v1836
    %v5202 = vunpack.c.l.b16 %v1837
    %v5203 = vunpack.c.h.b16 %v1837
    %v5204 = vunpack.c.l.b16 %v1838
    %v5205 = vunpack.c.h.b16 %v1838
    %v5206 = vunpack.c.l.b16 %v1839
    %v5207 = vunpack.c.h.b16 %v1839
    %v5208 = vunpack.c.l.b16 %v1840
    %v5209 = vunpack.c.h.b16 %v1840
    %v5210 = vunpack.c.l.b16 %v1841
    %v5211 = vunpack.c.h.b16 %v1841
    %v5212 = vunpack.c.l.b16 %v1842
    %v5213 = vunpack.c.h.b16 %v1842
    %v5214 = vunpack.c.l.b16 %v1843
    %v5215 = vunpack.c.h.b16 %v1843
    %v5216 = vunpack.c.l.b16 %v1844
    %v5217 = vunpack.c.h.b16 %v1844
    %v5218 = vunpack.c.l.b16 %v1845
    %v5219 = vunpack.c.h.b16 %v1845
    %v5220 = vunpack.c.l.b16 %v1846
    %v5221 = vunpack.c.h.b16 %v1846
    %v5222 = vunpack.c.l.b16 %v1847
    %v5223 = vunpack.c.h.b16 %v1847
    %v5224 = vunpack.c.l.b16 %v1848
    %v5225 = vunpack.c.h.b16 %v1848
    %v5226 = vunpack.c.l.b16 %v1849
    %v5227 = vunpack.c.h.b16 %v1849
    %v5228 = vunpack.c.l.b16 %v1850
    %v5229 = vunpack.c.h.b16 %v1850
    %v5230 = vunpack.c.l.b16 %v1851
    %v5231 = vunpack.c.h.b16 %v1851
    %v5232 = vunpack.c.l.b16 %v1852
    %v5233 = vunpack.c.h.b16 %v1852
    %v5234 = vunpack.c.l.b16 %v1853
    %v5235 = vunpack.c.h.b16 %v1853
    %v5236 = vunpack.c.l.b16 %v1854
    %v5237 = vunpack.c.h.b16 %v1854
    %v5238 = vunpack.c.l.b16 %v1855
    %v5239 = vunpack.c.h.b16 %v1855
    %v5240 = vunpack.c.l.b16 %v1856
    %v5241 = vunpack.c.h.b16 %v1856
    %v5242 = vunpack.c.l.b16 %v1857
    %v5243 = vunpack.c.h.b16 %v1857
    %v5244 = vunpack.c.l.b16 %v1858
    %v5245 = vunpack.c.h.b16 %v1858
    %v5246 = vunpack.c.l.b16 %v1859
    %v5247 = vunpack.c.h.b16 %v1859
    %v5248 = vunpack.c.l.b16 %v1860
    %v5249 = vunpack.c.h.b16 %v1860
    %v5250 = vunpack.c.l.b16 %v1861
    %v5251 = vunpack.c.h.b16 %v1861
    %v5252 = vunpack.c.l.b16 %v1862
    %v5253 = vunpack.c.h.b16 %v1862
    %v5254 = vunpack.c.l.b16 %v1863
    %v5255 = vunpack.c.h.b16 %v1863
    %v5256 = vunpack.c.l.b16 %v1864
    %v5257 = vunpack.c.h.b16 %v1864
    %v5258 = vunpack.c.l.b16 %v1865
    %v5259 = vunpack.c.h.b16 %v1865
    %v5260 = vunpack.c.l.b16 %v1866
    %v5261 = vunpack.c.h.b16 %v1866
    %v5262 = vunpack.c.l.b16 %v1867
    %v5263 = vunpack.c.h.b16 %v1867
    %v5264 = vunpack.c.l.b16 %v1868
    %v5265 = vunpack.c.h.b16 %v1868
    %v5266 = vunpack.c.l.b16 %v1869
    %v5267 = vunpack.c.h.b16 %v1869
    %v5268 = vunpack.c.l.b16 %v1870
    %v5269 = vunpack.c.h.b16 %v1870
    %v5270 = vunpack.c.l.b16 %v1871
    %v5271 = vunpack.c.h.b16 %v1871
    %v5272 = vunpack.c.l.b16 %v1872
    %v5273 = vunpack.c.h.b16 %v1872
    %v5274 = vunpack.c.l.b16 %v1873
    %v5275 = vunpack.c.h.b16 %v1873
    %v5276 = vunpack.c.l.b16 %v1874
    %v5277 = vunpack.c.h.b16 %v1874
    %v5278 = vunpack.c.l.b16 %v1875
    %v5279 = vunpack.c.h.b16 %v1875
    %v5280 = vunpack.c.l.b16 %v1876
    %v5281 = vunpack.c.h.b16 %v1876
    %v5282 = vunpack.c.l.b16 %v1877
    %v5283 = vunpack.c.h.b16 %v1877
    %v5284 = vunpack.c.l.b16 %v1878
    %v5285 = vunpack.c.h.b16 %v1878
    %v5286 = vunpack.c.l.b16 %v1879
    %v5287 = vunpack.c.h.b16 %v1879
    %v5288 = vunpack.c.l.b16 %v1880
    %v5289 = vunpack.c.h.b16 %v1880
    %v5290 = vunpack.c.l.b16 %v1881
    %v5291 = vunpack.c.h.b16 %v1881
    %v5292 = vunpack.c.l.b16 %v1882
    %v5293 = vunpack.c.h.b16 %v1882
    %v5294 = vunpack.c.l.b16 %v1883
    %v5295 = vunpack.c.h.b16 %v1883
    %v5296 = vunpack.c.l.b16 %v1884
    %v5297 = vunpack.c.h.b16 %v1884
    %v5298 = vunpack.c.l.b16 %v1885
    %v5299 = vunpack.c.h.b16 %v1885
    %v5300 = vunpack.c.l.b16 %v1886
    %v5301 = vunpack.c.h.b16 %v1886
    %v5302 = vunpack.c.l.b16 %v1887
    %v5303 = vunpack.c.h.b16 %v1887
    %v5304 = vunpack.c.l.b16 %v1888
    %v5305 = vunpack.c.h.b16 %v1888
    %v5306 = vunpack.c.l.b16 %v1889
    %v5307 = vunpack.c.h.b16 %v1889
    %v5308 = vunpack.c.l.b16 %v1890
    %v5309 = vunpack.c.h.b16 %v1890
    %v5310 = vunpack.c.l.b16 %v1891
    %v5311 = vunpack.c.h.b16 %v1891
    %v5312 = vunpack.c.l.b16 %v1892
    %v5313 = vunpack.c.h.b16 %v1892
    %v5314 = vunpack.c.l.b16 %v1893
    %v5315 = vunpack.c.h.b16 %v1893
    %v5316 = vunpack.c.l.b16 %v1894
    %v5317 = vunpack.c.h.b16 %v1894
    %v5318 = vunpack.c.l.b16 %v1895
    %v5319 = vunpack.c.h.b16 %v1895
    %v5320 = vunpack.c.l.b16 %v1896
    %v5321 = vunpack.c.h.b16 %v1896
    %v5322 = vunpack.c.l.b16 %v1897
    %v5323 = vunpack.c.h.b16 %v1897
    %v5324 = vunpack.c.l.b16 %v1898
    %v5325 = vunpack.c.h.b16 %v1898
    %v5326 = vunpack.c.l.b16 %v1899
    %v5327 = vunpack.c.h.b16 %v1899
    %v5328 = vunpack.c.l.b16 %v1900
    %v5329 = vunpack.c.h.b16 %v1900
    %v5330 = vunpack.c.l.b16 %v1901
    %v5331 = vunpack.c.h.b16 %v1901
    %v5332 = vunpack.c.l.b16 %v1902
    %v5333 = vunpack.c.h.b16 %v1902
    %v5334 = vunpack.c.l.b16 %v1903
    %v5335 = vunpack.c.h.b16 %v1903
    %v5336 = vunpack.c.l.b16 %v1904
    %v5337 = vunpack.c.h.b16 %v1904
    %v5338 = vunpack.c.l.b16 %v1905
    %v5339 = vunpack.c.h.b16 %v1905
    %v5340 = vunpack.c.l.b16 %v1906
    %v5341 = vunpack.c.h.b16 %v1906
    %v5342 = vunpack.c.l.b16 %v1907
    %v5343 = vunpack.c.h.b16 %v1907
    %v5344 = vunpack.c.l.b16 %v1908
    %v5345 = vunpack.c.h.b16 %v1908
    %v5346 = vunpack.c.l.b16 %v1909
    %v5347 = vunpack.c.h.b16 %v1909
    %v5348 = vunpack.c.l.b16 %v1910
    %v5349 = vunpack.c.h.b16 %v1910
    %v5350 = vunpack.c.l.b16 %v1911
    %v5351 = vunpack.c.h.b16 %v1911
    %v5352 = vunpack.c.l.b16 %v1912
    %v5353 = vunpack.c.h.b16 %v1912
    %v5354 = vunpack.c.l.b16 %v1913
    %v5355 = vunpack.c.h.b16 %v1913
    %v5356 = vunpack.c.l.b16 %v1914
    %v5357 = vunpack.c.h.b16 %v1914
    %v5358 = vunpack.c.l.b16 %v1915
    %v5359 = vunpack.c.h.b16 %v1915
    %v5360 = vunpack.c.l.b16 %v1916
    %v5361 = vunpack.c.h.b16 %v1916
    %v5362 = vunpack.c.l.b16 %v1917
    %v5363 = vunpack.c.h.b16 %v1917
    %v5364 = vunpack.c.l.b16 %v1918
    %v5365 = vunpack.c.h.b16 %v1918
    %v5366 = vunpack.c.l.b16 %v1919
    %v5367 = vunpack.c.h.b16 %v1919
    %v5368 = vunpack.c.l.b16 %v1920
    %v5369 = vunpack.c.h.b16 %v1920
    %v5370 = vunpack.c.l.b16 %v1921
    %v5371 = vunpack.c.h.b16 %v1921
    %v5372 = vunpack.c.l.b16 %v1922
    %v5373 = vunpack.c.h.b16 %v1922
    %v5374 = vunpack.c.l.b16 %v1923
    %v5375 = vunpack.c.h.b16 %v1923
    %v5376 = vunpack.c.l.b16 %v1924
    %v5377 = vunpack.c.h.b16 %v1924
    %v5378 = vunpack.c.l.b16 %v1925
    %v5379 = vunpack.c.h.b16 %v1925
    %v5380 = vunpack.c.l.b16 %v1926
    %v5381 = vunpack.c.h.b16 %v1926
    %v5382 = vunpack.c.l.b16 %v1927
    %v5383 = vunpack.c.h.b16 %v1927
    %v5384 = vunpack.c.l.b16 %v1928
    %v5385 = vunpack.c.h.b16 %v1928
    %v5386 = vunpack.c.l.b16 %v1929
    %v5387 = vunpack.c.h.b16 %v1929
    %v5388 = vunpack.c.l.b16 %v1930
    %v5389 = vunpack.c.h.b16 %v1930
    %v5390 = vunpack.c.l.b16 %v1931
    %v5391 = vunpack.c.h.b16 %v1931
    %v5392 = vunpack.c.l.b16 %v1932
    %v5393 = vunpack.c.h.b16 %v1932
    %v5394 = vunpack.c.l.b16 %v1933
    %v5395 = vunpack.c.h.b16 %v1933
    %v5396 = vunpack.c.l.b16 %v1934
    %v5397 = vunpack.c.h.b16 %v1934
    %v5398 = vunpack.c.l.b16 %v1935
    %v5399 = vunpack.c.h.b16 %v1935
    %v5400 = vunpack.c.l.b16 %v1936
    %v5401 = vunpack.c.h.b16 %v1936
    %v5402 = vunpack.c.l.b16 %v1937
    %v5403 = vunpack.c.h.b16 %v1937
    %v5404 = vunpack.c.l.b16 %v1938
    %v5405 = vunpack.c.h.b16 %v1938
    %v5406 = vunpack.c.l.b16 %v1939
    %v5407 = vunpack.c.h.b16 %v1939
    %v5408 = vunpack.c.l.b16 %v1940
    %v5409 = vunpack.c.h.b16 %v1940
    %v5410 = vunpack.c.l.b16 %v1941
    %v5411 = vunpack.c.h.b16 %v1941
    %v5412 = vunpack.c.l.b16 %v1942
    %v5413 = vunpack.c.h.b16 %v1942
    %v5414 = vunpack.c.l.b16 %v1943
    %v5415 = vunpack.c.h.b16 %v1943
    %v5416 = vunpack.c.l.b16 %v1944
    %v5417 = vunpack.c.h.b16 %v1944
    %v5418 = vunpack.c.l.b16 %v1945
    %v5419 = vunpack.c.h.b16 %v1945
    %v5420 = vunpack.c.l.b16 %v1946
    %v5421 = vunpack.c.h.b16 %v1946
    %v5422 = vunpack.c.l.b16 %v1947
    %v5423 = vunpack.c.h.b16 %v1947
    %v5424 = vunpack.c.l.b16 %v1948
    %v5425 = vunpack.c.h.b16 %v1948
    %v5426 = vunpack.c.l.b16 %v1949
    %v5427 = vunpack.c.h.b16 %v1949
    %v5428 = vunpack.c.l.b16 %v1950
    %v5429 = vunpack.c.h.b16 %v1950
    %v5430 = vunpack.c.l.b16 %v1951
    %v5431 = vunpack.c.h.b16 %v1951
    %v5432 = vunpack.c.l.b16 %v1952
    %v5433 = vunpack.c.h.b16 %v1952
    %v5434 = vunpack.c.l.b16 %v1953
    %v5435 = vunpack.c.h.b16 %v1953
    %v5436 = vunpack.c.l.b16 %v1954
    %v5437 = vunpack.c.h.b16 %v1954
    %v5438 = vunpack.c.l.b16 %v1955
    %v5439 = vunpack.c.h.b16 %v1955
    %v5440 = vunpack.c.l.b16 %v1956
    %v5441 = vunpack.c.h.b16 %v1956
    %v5442 = vunpack.c.l.b16 %v1957
    %v5443 = vunpack.c.h.b16 %v1957
    %v5444 = vunpack.c.l.b16 %v1958
    %v5445 = vunpack.c.h.b16 %v1958
    %v5446 = vunpack.c.l.b16 %v1959
    %v5447 = vunpack.c.h.b16 %v1959
    %v5448 = vunpack.c.l.b16 %v1960
    %v5449 = vunpack.c.h.b16 %v1960
    %v5450 = vunpack.c.l.b16 %v1961
    %v5451 = vunpack.c.h.b16 %v1961
    %v5452 = vunpack.c.l.b16 %v1962
    %v5453 = vunpack.c.h.b16 %v1962
    %v5454 = vunpack.c.l.b16 %v1963
    %v5455 = vunpack.c.h.b16 %v1963
    %v5456 = vunpack.c.l.b16 %v1964
    %v5457 = vunpack.c.h.b16 %v1964
    %v5458 = vunpack.c.l.b16 %v1965
    %v5459 = vunpack.c.h.b16 %v1965
    %v5460 = vunpack.c.l.b16 %v1966
    %v5461 = vunpack.c.h.b16 %v1966
    %v5462 = vunpack.c.l.b16 %v1967
    %v5463 = vunpack.c.h.b16 %v1967
    %v5464 = vunpack.c.l.b16 %v1968
    %v5465 = vunpack.c.h.b16 %v1968
    %v5466 = vunpack.c.l.b16 %v1969
    %v5467 = vunpack.c.h.b16 %v1969
    %v5468 = vunpack.c.l.b16 %v1970
    %v5469 = vunpack.c.h.b16 %v1970
    %v5470 = vunpack.c.l.b16 %v1971
    %v5471 = vunpack.c.h.b16 %v1971
    %v5472 = vunpack.c.l.b16 %v1972
    %v5473 = vunpack.c.h.b16 %v1972
    %v5474 = vunpack.c.l.b16 %v1973
    %v5475 = vunpack.c.h.b16 %v1973
    %v5476 = vunpack.c.l.b16 %v1974
    %v5477 = vunpack.c.h.b16 %v1974
    %v5478 = vunpack.c.l.b16 %v1975
    %v5479 = vunpack.c.h.b16 %v1975
    %v5480 = vunpack.c.l.b16 %v1976
    %v5481 = vunpack.c.h.b16 %v1976
    %v5482 = vunpack.c.l.b16 %v1977
    %v5483 = vunpack.c.h.b16 %v1977
    %v5484 = vunpack.c.l.b16 %v1978
    %v5485 = vunpack.c.h.b16 %v1978
    %v5486 = vunpack.c.l.b16 %v1979
    %v5487 = vunpack.c.h.b16 %v1979
    %v5488 = vunpack.c.l.b16 %v1980
    %v5489 = vunpack.c.h.b16 %v1980
    %v5490 = vunpack.c.l.b16 %v1981
    %v5491 = vunpack.c.h.b16 %v1981
    %v5492 = vunpack.c.l.b16 %v1982
    %v5493 = vunpack.c.h.b16 %v1982
    %v5494 = vunpack.c.l.b16 %v1983
    %v5495 = vunpack.c.h.b16 %v1983
    %v5496 = vunpack.c.l.b16 %v1984
    %v5497 = vunpack.c.h.b16 %v1984
    %v5498 = vunpack.c.l.b16 %v1985
    %v5499 = vunpack.c.h.b16 %v1985
    %v5500 = vunpack.c.l.b16 %v1986
    %v5501 = vunpack.c.h.b16 %v1986
    %v5502 = vunpack.c.l.b16 %v1987
    %v5503 = vunpack.c.h.b16 %v1987
    %v5504 = vunpack.c.l.b16 %v1988
    %v5505 = vunpack.c.h.b16 %v1988
    %v5506 = vunpack.c.l.b16 %v1989
    %v5507 = vunpack.c.h.b16 %v1989
    %v5508 = vunpack.c.l.b16 %v1990
    %v5509 = vunpack.c.h.b16 %v1990
    %v5510 = vunpack.c.l.b16 %v1991
    %v5511 = vunpack.c.h.b16 %v1991
    %v5512 = vunpack.c.l.b16 %v1992
    %v5513 = vunpack.c.h.b16 %v1992
    %v5514 = vunpack.c.l.b16 %v1993
    %v5515 = vunpack.c.h.b16 %v1993
    %v5516 = vunpack.c.l.b16 %v1994
    %v5517 = vunpack.c.h.b16 %v1994
    %v5518 = vunpack.c.l.b16 %v1995
    %v5519 = vunpack.c.h.b16 %v1995
    %v5520 = vunpack.c.l.b16 %v1996
    %v5521 = vunpack.c.h.b16 %v1996
    %v5522 = vunpack.c.l.b16 %v1997
    %v5523 = vunpack.c.h.b16 %v1997
    %v5524 = vunpack.c.l.b16 %v1998
    %v5525 = vunpack.c.h.b16 %v1998
    %v5526 = vunpack.c.l.b16 %v1999
    %v5527 = vunpack.c.h.b16 %v1999
    %v5528 = vunpack.c.l.b16 %v2000
    %v5529 = vunpack.c.h.b16 %v2000
    %v5530 = vunpack.c.l.b16 %v2001
    %v5531 = vunpack.c.h.b16 %v2001
    %v5532 = vunpack.c.l.b16 %v2002
    %v5533 = vunpack.c.h.b16 %v2002
    %v5534 = vunpack.c.l.b16 %v2003
    %v5535 = vunpack.c.h.b16 %v2003
    %v5536 = vunpack.c.l.b16 %v2004
    %v5537 = vunpack.c.h.b16 %v2004
    %v5538 = vunpack.c.l.b16 %v2005
    %v5539 = vunpack.c.h.b16 %v2005
    %v5540 = vunpack.c.l.b16 %v2006
    %v5541 = vunpack.c.h.b16 %v2006
    %v5542 = vunpack.c.l.b16 %v2007
    %v5543 = vunpack.c.h.b16 %v2007
    %v5544 = vunpack.c.l.b16 %v2008
    %v5545 = vunpack.c.h.b16 %v2008
    %v5546 = vunpack.c.l.b16 %v2009
    %v5547 = vunpack.c.h.b16 %v2009
    %v5548 = vunpack.c.l.b16 %v2010
    %v5549 = vunpack.c.h.b16 %v2010
    %v5550 = vunpack.c.l.b16 %v2011
    %v5551 = vunpack.c.h.b16 %v2011
    %v5552 = vunpack.c.l.b16 %v2012
    %v5553 = vunpack.c.h.b16 %v2012
    %v5554 = vunpack.c.l.b16 %v2013
    %v5555 = vunpack.c.h.b16 %v2013
    %v5556 = vunpack.c.l.b16 %v2014
    %v5557 = vunpack.c.h.b16 %v2014
    %v5558 = vunpack.c.l.b16 %v2015
    %v5559 = vunpack.c.h.b16 %v2015
    %v5560 = vunpack.c.l.b16 %v2016
    %v5561 = vunpack.c.h.b16 %v2016
    %v5562 = vunpack.c.l.b16 %v2017
    %v5563 = vunpack.c.h.b16 %v2017
    %v5564 = vunpack.c.l.b16 %v2018
    %v5565 = vunpack.c.h.b16 %v2018
    %v5566 = vunpack.c.l.b16 %v2019
    %v5567 = vunpack.c.h.b16 %v2019
    %v5568 = vunpack.c.l.b16 %v2020
    %v5569 = vunpack.c.h.b16 %v2020
    %v5570 = vunpack.c.l.b16 %v2021
    %v5571 = vunpack.c.h.b16 %v2021
    %v5572 = vunpack.c.l.b16 %v2022
    %v5573 = vunpack.c.h.b16 %v2022
    %v5574 = vunpack.c.l.b16 %v2023
    %v5575 = vunpack.c.h.b16 %v2023
    %v5576 = vunpack.c.l.b16 %v2024
    %v5577 = vunpack.c.h.b16 %v2024
    %v5578 = vunpack.c.l.b16 %v2025
    %v5579 = vunpack.c.h.b16 %v2025
    %v5580 = vunpack.c.l.b16 %v2026
    %v5581 = vunpack.c.h.b16 %v2026
    %v5582 = vunpack.c.l.b16 %v2027
    %v5583 = vunpack.c.h.b16 %v2027
    %v5584 = vunpack.c.l.b16 %v2028
    %v5585 = vunpack.c.h.b16 %v2028
    %v5586 = vunpack.c.l.b16 %v2029
    %v5587 = vunpack.c.h.b16 %v2029
    %v5588 = vunpack.c.l.b16 %v2030
    %v5589 = vunpack.c.h.b16 %v2030
    %v5590 = vunpack.c.l.b16 %v2031
    %v5591 = vunpack.c.h.b16 %v2031
    %v5592 = vunpack.c.l.b16 %v2032
    %v5593 = vunpack.c.h.b16 %v2032
    %v5594 = vunpack.c.l.b16 %v2033
    %v5595 = vunpack.c.h.b16 %v2033
    %v5596 = vunpack.c.l.b16 %v2034
    %v5597 = vunpack.c.h.b16 %v2034
    %v5598 = vunpack.c.l.b16 %v2035
    %v5599 = vunpack.c.h.b16 %v2035
    %v5600 = vunpack.c.l.b16 %v2036
    %v5601 = vunpack.c.h.b16 %v2036
    %v5602 = vunpack.c.l.b16 %v2037
    %v5603 = vunpack.c.h.b16 %v2037
    %v5604 = vunpack.c.l.b16 %v2038
    %v5605 = vunpack.c.h.b16 %v2038
    %v5606 = vunpack.c.l.b16 %v2039
    %v5607 = vunpack.c.h.b16 %v2039
    %v5608 = vunpack.c.l.b16 %v2040
    %v5609 = vunpack.c.h.b16 %v2040
    %v5610 = vunpack.c.l.b16 %v2041
    %v5611 = vunpack.c.h.b16 %v2041
    %v5612 = vunpack.c.l.b16 %v2042
    %v5613 = vunpack.c.h.b16 %v2042
    %v5614 = vunpack.c.l.b16 %v2043
    %v5615 = vunpack.c.h.b16 %v2043
    %v5616 = vunpack.c.l.b16 %v2044
    %v5617 = vunpack.c.h.b16 %v2044
    %v5618 = vunpack.c.l.b16 %v2045
    %v5619 = vunpack.c.h.b16 %v2045
    %v5620 = vunpack.c.l.b16 %v2046
    %v5621 = vunpack.c.h.b16 %v2046
    %v5622 = vunpack.c.l.b16 %v2047
    %v5623 = vunpack.c.h.b16 %v2047
    %v5624 = vunpack.c.l.b16 %v2048
    %v5625 = vunpack.c.h.b16 %v2048
    %v5626 = vunpack.c.l.b16 %v2049
    %v5627 = vunpack.c.h.b16 %v2049
    %v5628 = vunpack.c.l.b16 %v2050
    %v5629 = vunpack.c.h.b16 %v2050
    %v5630 = vunpack.c.l.b16 %v2051
    %v5631 = vunpack.c.h.b16 %v2051
    %v5632 = vunpack.c.l.b16 %v2052
    %v5633 = vunpack.c.h.b16 %v2052
    %v5634 = vunpack.c.l.b16 %v2053
    %v5635 = vunpack.c.h.b16 %v2053
    %v5636 = vunpack.c.l.b16 %v2054
    %v5637 = vunpack.c.h.b16 %v2054
    %v5638 = vunpack.c.l.b16 %v2055
    %v5639 = vunpack.c.h.b16 %v2055
    %v5640 = vunpack.c.l.b16 %v2056
    %v5641 = vunpack.c.h.b16 %v2056
    %v5642 = vunpack.c.l.b16 %v2057
    %v5643 = vunpack.c.h.b16 %v2057
    %v5644 = vunpack.c.l.b16 %v2058
    %v5645 = vunpack.c.h.b16 %v2058
    %v5646 = vunpack.c.l.b16 %v2059
    %v5647 = vunpack.c.h.b16 %v2059
    %v5648 = vunpack.c.l.b16 %v2060
    %v5649 = vunpack.c.h.b16 %v2060
    %v5650 = vunpack.c.l.b16 %v2061
    %v5651 = vunpack.c.h.b16 %v2061
    %v5652 = vunpack.c.l.b16 %v2062
    %v5653 = vunpack.c.h.b16 %v2062
    %v5654 = vunpack.c.l.b16 %v2063
    %v5655 = vunpack.c.h.b16 %v2063
    %v5656 = vunpack.c.l.b16 %v2064
    %v5657 = vunpack.c.h.b16 %v2064
    %v5658 = vunpack.c.l.b16 %v2065
    %v5659 = vunpack.c.h.b16 %v2065
    %v5660 = vunpack.c.l.b16 %v2066
    %v5661 = vunpack.c.h.b16 %v2066
    %v5662 = vunpack.c.l.b16 %v2067
    %v5663 = vunpack.c.h.b16 %v2067
    %v5664 = vunpack.c.l.b16 %v2068
    %v5665 = vunpack.c.h.b16 %v2068
    %v5666 = vunpack.c.l.b16 %v2069
    %v5667 = vunpack.c.h.b16 %v2069
    %v5668 = vunpack.c.l.b16 %v2070
    %v5669 = vunpack.c.h.b16 %v2070
    %v5670 = vunpack.c.l.b16 %v2071
    %v5671 = vunpack.c.h.b16 %v2071
    %v5672 = vunpack.c.l.b16 %v2072
    %v5673 = vunpack.c.h.b16 %v2072
    %v5674 = vunpack.c.l.b16 %v2073
    %v5675 = vunpack.c.h.b16 %v2073
    %v5676 = vunpack.c.l.b16 %v2074
    %v5677 = vunpack.c.h.b16 %v2074
    %v5678 = vunpack.c.l.b16 %v2075
    %v5679 = vunpack.c.h.b16 %v2075
    %v5680 = vunpack.c.l.b16 %v2076
    %v5681 = vunpack.c.h.b16 %v2076
    %v5682 = vunpack.c.l.b16 %v2077
    %v5683 = vunpack.c.h.b16 %v2077
    %v5684 = vunpack.c.l.b16 %v2078
    %v5685 = vunpack.c.h.b16 %v2078
    %v5686 = vunpack.c.l.b16 %v2079
    %v5687 = vunpack.c.h.b16 %v2079
    %v5688 = vunpack.c.l.b16 %v2080
    %v5689 = vunpack.c.h.b16 %v2080
    %v5690 = vunpack.c.l.b16 %v2081
    %v5691 = vunpack.c.h.b16 %v2081
    %v5692 = vunpack.c.l.b16 %v2082
    %v5693 = vunpack.c.h.b16 %v2082
    %v5694 = vunpack.c.l.b16 %v2083
    %v5695 = vunpack.c.h.b16 %v2083
    %v5696 = vunpack.c.l.b16 %v2084
    %v5697 = vunpack.c.h.b16 %v2084
    %v5698 = vunpack.c.l.b16 %v2085
    %v5699 = vunpack.c.h.b16 %v2085
    %v5700 = vunpack.c.l.b16 %v2086
    %v5701 = vunpack.c.h.b16 %v2086
    %v5702 = vunpack.c.l.b16 %v2087
    %v5703 = vunpack.c.h.b16 %v2087
    %v5704 = vunpack.c.l.b16 %v2088
    %v5705 = vunpack.c.h.b16 %v2088
    %v5706 = vunpack.c.l.b16 %v2089
    %v5707 = vunpack.c.h.b16 %v2089
    %v5708 = vunpack.c.l.b16 %v2090
    %v5709 = vunpack.c.h.b16 %v2090
    %v5710 = vunpack.c.l.b16 %v2091
    %v5711 = vunpack.c.h.b16 %v2091
    %v5712 = vunpack.c.l.b16 %v2092
    %v5713 = vunpack.c.h.b16 %v2092
    %v5714 = vunpack.c.l.b16 %v2093
    %v5715 = vunpack.c.h.b16 %v2093
    %v5716 = vunpack.c.l.b16 %v2094
    %v5717 = vunpack.c.h.b16 %v2094
    %v5718 = vunpack.c.l.b16 %v2095
    %v5719 = vunpack.c.h.b16 %v2095
    %v5720 = vunpack.c.l.b16 %v2096
    %v5721 = vunpack.c.h.b16 %v2096
    %v5722 = vunpack.c.l.b16 %v2097
    %v5723 = vunpack.c.h.b16 %v2097
    %v5724 = vunpack.c.l.b16 %v2098
    %v5725 = vunpack.c.h.b16 %v2098
    %v5726 = vunpack.c.l.b16 %v2099
    %v5727 = vunpack.c.h.b16 %v2099
    %v5728 = vunpack.c.l.b16 %v2100
    %v5729 = vunpack.c.h.b16 %v2100
    %v5730 = vunpack.c.l.b16 %v2101
    %v5731 = vunpack.c.h.b16 %v2101
    %v5732 = vunpack.c.l.b16 %v2102
    %v5733 = vunpack.c.h.b16 %v2102
    %v5734 = vunpack.c.l.b16 %v2103
    %v5735 = vunpack.c.h.b16 %v2103
    %v5736 = vunpack.c.l.b16 %v2104
    %v5737 = vunpack.c.h.b16 %v2104
    %v5738 = vunpack.c.l.b16 %v2105
    %v5739 = vunpack.c.h.b16 %v2105
    %v5740 = vunpack.c.l.b16 %v2106
    %v5741 = vunpack.c.h.b16 %v2106
    %v5742 = vunpack.c.l.b16 %v2107
    %v5743 = vunpack.c.h.b16 %v2107
    %v5744 = vunpack.c.l.b16 %v2108
    %v5745 = vunpack.c.h.b16 %v2108
    %v5746 = vunpack.c.l.b16 %v2109
    %v5747 = vunpack.c.h.b16 %v2109
    %v5748 = vunpack.c.l.b16 %v2110
    %v5749 = vunpack.c.h.b16 %v2110
    %v5750 = vunpack.c.l.b16 %v2111
    %v5751 = vunpack.c.h.b16 %v2111
    %v5752 = vunpack.c.l.b16 %v2112
    %v5753 = vunpack.c.h.b16 %v2112
    %v5754 = vunpack.c.l.b16 %v2113
    %v5755 = vunpack.c.h.b16 %v2113
    %v5756 = vunpack.c.l.b16 %v2114
    %v5757 = vunpack.c.h.b16 %v2114
    %v5758 = vunpack.c.l.b16 %v2115
    %v5759 = vunpack.c.h.b16 %v2115
    %v5760 = vunpack.c.l.b16 %v2116
    %v5761 = vunpack.c.h.b16 %v2116
    %v5762 = vunpack.c.l.b16 %v2117
    %v5763 = vunpack.c.h.b16 %v2117
    %v5764 = vunpack.c.l.b16 %v2118
    %v5765 = vunpack.c.h.b16 %v2118
    %v5766 = vunpack.c.l.b16 %v2119
    %v5767 = vunpack.c.h.b16 %v2119
    %v5768 = vunpack.c.l.b16 %v2120
    %v5769 = vunpack.c.h.b16 %v2120
    %v5770 = vunpack.c.l.b16 %v2121
    %v5771 = vunpack.c.h.b16 %v2121
    %v5772 = vunpack.c.l.b16 %v2122
    %v5773 = vunpack.c.h.b16 %v2122
    %v5774 = vunpack.c.l.b16 %v2123
    %v5775 = vunpack.c.h.b16 %v2123
    %v5776 = vunpack.c.l.b16 %v2124
    %v5777 = vunpack.c.h.b16 %v2124
    %v5778 = vunpack.c.l.b16 %v2125
    %v5779 = vunpack.c.h.b16 %v2125
    %v5780 = vunpack.c.l.b16 %v2126
    %v5781 = vunpack.c.h.b16 %v2126
    %v5782 = vunpack.c.l.b16 %v2127
    %v5783 = vunpack.c.h.b16 %v2127
    %v5784 = vunpack.c.l.b16 %v2128
    %v5785 = vunpack.c.h.b16 %v2128
    %v5786 = vunpack.c.l.b16 %v2129
    %v5787 = vunpack.c.h.b16 %v2129
    %v5788 = vunpack.c.l.b16 %v2130
    %v5789 = vunpack.c.h.b16 %v2130
    %v5790 = vunpack.c.l.b16 %v2131
    %v5791 = vunpack.c.h.b16 %v2131
    %v5792 = vunpack.c.l.b16 %v2132
    %v5793 = vunpack.c.h.b16 %v2132
    %v5794 = vunpack.c.l.b16 %v2133
    %v5795 = vunpack.c.h.b16 %v2133
    %v5796 = vunpack.c.l.b16 %v2134
    %v5797 = vunpack.c.h.b16 %v2134
    %v5798 = vunpack.c.l.b16 %v2135
    %v5799 = vunpack.c.h.b16 %v2135
    %v5800 = vunpack.c.l.b16 %v2136
    %v5801 = vunpack.c.h.b16 %v2136
    %v5802 = vunpack.c.l.b16 %v2137
    %v5803 = vunpack.c.h.b16 %v2137
    %v5804 = vunpack.c.l.b16 %v2138
    %v5805 = vunpack.c.h.b16 %v2138
    %v5806 = vunpack.c.l.b16 %v2139
    %v5807 = vunpack.c.h.b16 %v2139
    %v5808 = vunpack.c.l.b16 %v2140
    %v5809 = vunpack.c.h.b16 %v2140
    %v5810 = vunpack.c.l.b16 %v2141
    %v5811 = vunpack.c.h.b16 %v2141
    %v5812 = vunpack.c.l.b16 %v2142
    %v5813 = vunpack.c.h.b16 %v2142
    %v5814 = vunpack.c.l.b16 %v2143
    %v5815 = vunpack.c.h.b16 %v2143
    %v5816 = vunpack.c.l.b16 %v2144
    %v5817 = vunpack.c.h.b16 %v2144
    %v5818 = vunpack.c.l.b16 %v2145
    %v5819 = vunpack.c.h.b16 %v2145
    %v5820 = vunpack.c.l.b16 %v2146
    %v5821 = vunpack.c.h.b16 %v2146
    %v5822 = vunpack.c.l.b16 %v2147
    %v5823 = vunpack.c.h.b16 %v2147
    %v5824 = vunpack.c.l.b16 %v2148
    %v5825 = vunpack.c.h.b16 %v2148
    %v5826 = vunpack.c.l.b16 %v2149
    %v5827 = vunpack.c.h.b16 %v2149
    %v5828 = vunpack.c.l.b16 %v2150
    %v5829 = vunpack.c.h.b16 %v2150
    %v5830 = vunpack.c.l.b16 %v2151
    %v5831 = vunpack.c.h.b16 %v2151
    %v5832 = vunpack.c.l.b16 %v2152
    %v5833 = vunpack.c.h.b16 %v2152
    %v5834 = vunpack.c.l.b16 %v2153
    %v5835 = vunpack.c.h.b16 %v2153
    %v5836 = vunpack.c.l.b16 %v2154
    %v5837 = vunpack.c.h.b16 %v2154
    %v5838 = vunpack.c.l.b16 %v2155
    %v5839 = vunpack.c.h.b16 %v2155
    %v5840 = vunpack.c.l.b16 %v2156
    %v5841 = vunpack.c.h.b16 %v2156
    %v5842 = vunpack.c.l.b16 %v2157
    %v5843 = vunpack.c.h.b16 %v2157
    %v5844 = vunpack.c.l.b16 %v2158
    %v5845 = vunpack.c.h.b16 %v2158
    %v5846 = vunpack.c.l.b16 %v2159
    %v5847 = vunpack.c.h.b16 %v2159
    %v5848 = vunpack.c.l.b16 %v2160
    %v5849 = vunpack.c.h.b16 %v2160
    %v5850 = vunpack.c.l.b16 %v2161
    %v5851 = vunpack.c.h.b16 %v2161
    %v5852 = vunpack.c.l.b16 %v2162
    %v5853 = vunpack.c.h.b16 %v2162
    %v5854 = vunpack.c.l.b16 %v2163
    %v5855 = vunpack.c.h.b16 %v2163
    %v5856 = vunpack.c.l.b16 %v2164
    %v5857 = vunpack.c.h.b16 %v2164
    %v5858 = vunpack.c.l.b16 %v2165
    %v5859 = vunpack.c.h.b16 %v2165
    %v5860 = vunpack.c.l.b16 %v2166
    %v5861 = vunpack.c.h.b16 %v2166
    %v5862 = vunpack.c.l.b16 %v2167
    %v5863 = vunpack.c.h.b16 %v2167
    %v5864 = vunpack.c.l.b16 %v2168
    %v5865 = vunpack.c.h.b16 %v2168
    %v5866 = vunpack.c.l.b16 %v2169
    %v5867 = vunpack.c.h.b16 %v2169
    %v5868 = vunpack.c.l.b16 %v2170
    %v5869 = vunpack.c.h.b16 %v2170
    %v5870 = vunpack.c.l.b16 %v2171
    %v5871 = vunpack.c.h.b16 %v2171
    %v5872 = vunpack.c.l.b16 %v2172
    %v5873 = vunpack.c.h.b16 %v2172
    %v5874 = vunpack.c.l.b16 %v2173
    %v5875 = vunpack.c.h.b16 %v2173
    %v5876 = vunpack.c.l.b16 %v2174
    %v5877 = vunpack.c.h.b16 %v2174
    %v5878 = vunpack.c.l.b16 %v2175
    %v5879 = vunpack.c.h.b16 %v2175
    %v5880 = vunpack.c.l.b16 %v2176
    %v5881 = vunpack.c.h.b16 %v2176
    %v5882 = vunpack.c.l.b16 %v2177
    %v5883 = vunpack.c.h.b16 %v2177
    %v5884 = vunpack.c.l.b16 %v2178
    %v5885 = vunpack.c.h.b16 %v2178
    %v5886 = vunpack.c.l.b16 %v2179
    %v5887 = vunpack.c.h.b16 %v2179
    %v5888 = vunpack.c.l.b16 %v2180
    %v5889 = vunpack.c.h.b16 %v2180
    %v5890 = vunpack.c.l.b16 %v2181
    %v5891 = vunpack.c.h.b16 %v2181
    %v5892 = vunpack.c.l.b16 %v2182
    %v5893 = vunpack.c.h.b16 %v2182
    %v5894 = vunpack.c.l.b16 %v2183
    %v5895 = vunpack.c.h.b16 %v2183
    %v5896 = vunpack.c.l.b16 %v2184
    %v5897 = vunpack.c.h.b16 %v2184
    %v5898 = vunpack.c.l.b16 %v2185
    %v5899 = vunpack.c.h.b16 %v2185
    %v5900 = vunpack.c.l.b16 %v2186
    %v5901 = vunpack.c.h.b16 %v2186
    %v5902 = vunpack.c.l.b16 %v2187
    %v5903 = vunpack.c.h.b16 %v2187
    %v5904 = vunpack.c.l.b16 %v2188
    %v5905 = vunpack.c.h.b16 %v2188
    %v5906 = vunpack.c.l.b16 %v2189
    %v5907 = vunpack.c.h.b16 %v2189
    %v5908 = vunpack.c.l.b16 %v2190
    %v5909 = vunpack.c.h.b16 %v2190
    %v5910 = vunpack.c.l.b16 %v2191
    %v5911 = vunpack.c.h.b16 %v2191
    %v5912 = vunpack.c.l.b16 %v2192
    %v5913 = vunpack.c.h.b16 %v2192
    %v5914 = vunpack.c.l.b16 %v2193
    %v5915 = vunpack.c.h.b16 %v2193
    %v5916 = vunpack.c.l.b16 %v2194
    %v5917 = vunpack.c.h.b16 %v2194
    %v5918 = vunpack.c.l.b16 %v2195
    %v5919 = vunpack.c.h.b16 %v2195
    %v5920 = vunpack.c.l.b16 %v2196
    %v5921 = vunpack.c.h.b16 %v2196
    %v5922 = vunpack.c.l.b16 %v2197
    %v5923 = vunpack.c.h.b16 %v2197
    %v5924 = vunpack.c.l.b16 %v2198
    %v5925 = vunpack.c.h.b16 %v2198
    %v5926 = vunpack.c.l.b16 %v2199
    %v5927 = vunpack.c.h.b16 %v2199
    %v5928 = vunpack.c.l.b16 %v2200
    %v5929 = vunpack.c.h.b16 %v2200
    %v5930 = vunpack.c.l.b16 %v2201
    %v5931 = vunpack.c.h.b16 %v2201
    %v5932 = vunpack.c.l.b16 %v2202
    %v5933 = vunpack.c.h.b16 %v2202
    %v5934 = vunpack.c.l.b16 %v2203
    %v5935 = vunpack.c.h.b16 %v2203
    %v5936 = vunpack.c.l.b16 %v2204
    %v5937 = vunpack.c.h.b16 %v2204
    %v5938 = vunpack.c.l.b16 %v2205
    %v5939 = vunpack.c.h.b16 %v2205
    %v5940 = vunpack.c.l.b16 %v2206
    %v5941 = vunpack.c.h.b16 %v2206
    %v5942 = vunpack.c.l.b16 %v2207
    %v5943 = vunpack.c.h.b16 %v2207
    %v5944 = vunpack.c.l.b16 %v2208
    %v5945 = vunpack.c.h.b16 %v2208
    %v5946 = vunpack.c.l.b16 %v2209
    %v5947 = vunpack.c.h.b16 %v2209
    %v5948 = vunpack.c.l.b16 %v2210
    %v5949 = vunpack.c.h.b16 %v2210
    %v5950 = vunpack.c.l.b16 %v2211
    %v5951 = vunpack.c.h.b16 %v2211
    %v5952 = vunpack.c.l.b16 %v2212
    %v5953 = vunpack.c.h.b16 %v2212
    %v5954 = vunpack.c.l.b16 %v2213
    %v5955 = vunpack.c.h.b16 %v2213
    %v5956 = vunpack.c.l.b16 %v2214
    %v5957 = vunpack.c.h.b16 %v2214
    %v5958 = vunpack.c.l.b16 %v2215
    %v5959 = vunpack.c.h.b16 %v2215
    %v5960 = vunpack.c.l.b16 %v2216
    %v5961 = vunpack.c.h.b16 %v2216
    %v5962 = vunpack.c.l.b16 %v2217
    %v5963 = vunpack.c.h.b16 %v2217
    %v5964 = vunpack.c.l.b16 %v2218
    %v5965 = vunpack.c.h.b16 %v2218
    %v5966 = vunpack.c.l.b16 %v2219
    %v5967 = vunpack.c.h.b16 %v2219
    %v5968 = vunpack.c.l.b16 %v2220
    %v5969 = vunpack.c.h.b16 %v2220
    %v5970 = vunpack.c.l.b16 %v2221
    %v5971 = vunpack.c.h.b16 %v2221
    %v5972 = vunpack.c.l.b16 %v2222
    %v5973 = vunpack.c.h.b16 %v2222
    %v5974 = vunpack.c.l.b16 %v2223
    %v5975 = vunpack.c.h.b16 %v2223
    %v5976 = vunpack.c.l.b16 %v2224
    %v5977 = vunpack.c.h.b16 %v2224
    %v5978 = vunpack.c.l.b16 %v2225
    %v5979 = vunpack.c.h.b16 %v2225
    %v5980 = vunpack.c.l.b16 %v2226
    %v5981 = vunpack.c.h.b16 %v2226
    %v5982 = vunpack.c.l.b16 %v2227
    %v5983 = vunpack.c.h.b16 %v2227
    %v5984 = vunpack.c.l.b16 %v2228
    %v5985 = vunpack.c.h.b16 %v2228
    %v5986 = vunpack.c.l.b16 %v2229
    %v5987 = vunpack.c.h.b16 %v2229
    %v5988 = vunpack.c.l.b16 %v2230
    %v5989 = vunpack.c.h.b16 %v2230
    %v5990 = vunpack.c.l.b16 %v2231
    %v5991 = vunpack.c.h.b16 %v2231
    %v5992 = vunpack.c.l.b16 %v2232
    %v5993 = vunpack.c.h.b16 %v2232
    %v5994 = vunpack.c.l.b16 %v2233
    %v5995 = vunpack.c.h.b16 %v2233
    %v5996 = vunpack.c.l.b16 %v2234
    %v5997 = vunpack.c.h.b16 %v2234
    %v5998 = vunpack.c.l.b16 %v2235
    %v5999 = vunpack.c.h.b16 %v2235
    %v6000 = vunpack.c.l.b16 %v2236
    %v6001 = vunpack.c.h.b16 %v2236
    %v6002 = vunpack.c.l.b16 %v2237
    %v6003 = vunpack.c.h.b16 %v2237
    %v6004 = vunpack.c.l.b16 %v2238
    %v6005 = vunpack.c.h.b16 %v2238
    %v6006 = vunpack.c.l.b16 %v2239
    %v6007 = vunpack.c.h.b16 %v2239
    %v6008 = vunpack.c.l.b16 %v2240
    %v6009 = vunpack.c.h.b16 %v2240
    %v6010 = vunpack.c.l.b16 %v2241
    %v6011 = vunpack.c.h.b16 %v2241
    %v6012 = vunpack.c.l.b16 %v2242
    %v6013 = vunpack.c.h.b16 %v2242
    %v6014 = vunpack.c.l.b16 %v2243
    %v6015 = vunpack.c.h.b16 %v2243
    %v6016 = vunpack.c.l.b16 %v2244
    %v6017 = vunpack.c.h.b16 %v2244
    %v6018 = vunpack.c.l.b16 %v2245
    %v6019 = vunpack.c.h.b16 %v2245
    %v6020 = vunpack.c.l.b16 %v2246
    %v6021 = vunpack.c.h.b16 %v2246
    %v6022 = vunpack.c.l.b16 %v2247
    %v6023 = vunpack.c.h.b16 %v2247
    %v6024 = vunpack.c.l.b16 %v2248
    %v6025 = vunpack.c.h.b16 %v2248
    %v6026 = vunpack.c.l.b16 %v2249
    %v6027 = vunpack.c.h.b16 %v2249
    %v6028 = vunpack.c.l.b16 %v2250
    %v6029 = vunpack.c.h.b16 %v2250
    %v6030 = vunpack.c.l.b16 %v2251
    %v6031 = vunpack.c.h.b16 %v2251
    %v6032 = vunpack.c.l.b16 %v2252
    %v6033 = vunpack.c.h.b16 %v2252
    %v6034 = vunpack.c.l.b16 %v2253
    %v6035 = vunpack.c.h.b16 %v2253
    %v6036 = vunpack.c.l.b16 %v2254
    %v6037 = vunpack.c.h.b16 %v2254
    %v6038 = vunpack.c.l.b16 %v2255
    %v6039 = vunpack.c.h.b16 %v2255
    %v6040 = vunpack.c.l.b16 %v2256
    %v6041 = vunpack.c.h.b16 %v2256
    %v6042 = vunpack.c.l.b16 %v2257
    %v6043 = vunpack.c.h.b16 %v2257
    %v6044 = vunpack.c.l.b16 %v2258
    %v6045 = vunpack.c.h.b16 %v2258
    %v6046 = vunpack.c.l.b16 %v2259
    %v6047 = vunpack.c.h.b16 %v2259
    %v6048 = vunpack.c.l.b16 %v2260
    %v6049 = vunpack.c.h.b16 %v2260
    %v6050 = vunpack.c.l.b16 %v2261
    %v6051 = vunpack.c.h.b16 %v2261
    %v6052 = vunpack.c.l.b16 %v2262
    %v6053 = vunpack.c.h.b16 %v2262
    %v6054 = vunpack.c.l.b16 %v2263
    %v6055 = vunpack.c.h.b16 %v2263
    %v6056 = vunpack.c.l.b16 %v2264
    %v6057 = vunpack.c.h.b16 %v2264
    %v6058 = vunpack.c.l.b16 %v2265
    %v6059 = vunpack.c.h.b16 %v2265
    %v6060 = vunpack.c.l.b16 %v2266
    %v6061 = vunpack.c.h.b16 %v2266
    %v6062 = vunpack.c.l.b16 %v2267
    %v6063 = vunpack.c.h.b16 %v2267
    %v6064 = vunpack.c.l.b16 %v2268
    %v6065 = vunpack.c.h.b16 %v2268
    %v6066 = vunpack.c.l.b16 %v2269
    %v6067 = vunpack.c.h.b16 %v2269
    %v6068 = vunpack.c.l.b16 %v2270
    %v6069 = vunpack.c.h.b16 %v2270
    %v6070 = vunpack.c.l.b16 %v2271
    %v6071 = vunpack.c.h.b16 %v2271
    %v6072 = vunpack.c.l.b16 %v2272
    %v6073 = vunpack.c.h.b16 %v2272
    %v6074 = vunpack.c.l.b16 %v2273
    %v6075 = vunpack.c.h.b16 %v2273
    %v6076 = vunpack.c.l.b16 %v2274
    %v6077 = vunpack.c.h.b16 %v2274
    %v6078 = vunpack.c.l.b16 %v2275
    %v6079 = vunpack.c.h.b16 %v2275
    %v6080 = vunpack.c.l.b16 %v2276
    %v6081 = vunpack.c.h.b16 %v2276
    %v6082 = vunpack.c.l.b16 %v2277
    %v6083 = vunpack.c.h.b16 %v2277
    %v6084 = vunpack.c.l.b16 %v2278
    %v6085 = vunpack.c.h.b16 %v2278
    %v6086 = vunpack.c.l.b16 %v2279
    %v6087 = vunpack.c.h.b16 %v2279
    %v6088 = vunpack.c.l.b16 %v2280
    %v6089 = vunpack.c.h.b16 %v2280
    %v6090 = vunpack.c.l.b16 %v2281
    %v6091 = vunpack.c.h.b16 %v2281
    %v6092 = vunpack.c.l.b16 %v2282
    %v6093 = vunpack.c.h.b16 %v2282
    %v6094 = vunpack.c.l.b16 %v2283
    %v6095 = vunpack.c.h.b16 %v2283
    %v6096 = vunpack.c.l.b16 %v2284
    %v6097 = vunpack.c.h.b16 %v2284
    %v6098 = vunpack.c.l.b16 %v2285
    %v6099 = vunpack.c.h.b16 %v2285
    %v6100 = vunpack.c.l.b16 %v2286
    %v6101 = vunpack.c.h.b16 %v2286
    %v6102 = vunpack.c.l.b16 %v2287
    %v6103 = vunpack.c.h.b16 %v2287
    %v6104 = vunpack.c.l.b16 %v2288
    %v6105 = vunpack.c.h.b16 %v2288
    %v6106 = vunpack.c.l.b16 %v2289
    %v6107 = vunpack.c.h.b16 %v2289
    %v6108 = vunpack.c.l.b16 %v2290
    %v6109 = vunpack.c.h.b16 %v2290
    %v6110 = vunpack.c.l.b16 %v2291
    %v6111 = vunpack.c.h.b16 %v2291
    %v6112 = vunpack.c.l.b16 %v2292
    %v6113 = vunpack.c.h.b16 %v2292
    %v6114 = vunpack.c.l.b16 %v2293
    %v6115 = vunpack.c.h.b16 %v2293
    %v6116 = vunpack.c.l.b16 %v2294
    %v6117 = vunpack.c.h.b16 %v2294
    %v6118 = vunpack.c.l.b16 %v2295
    %v6119 = vunpack.c.h.b16 %v2295
    %v6120 = vunpack.c.l.b16 %v2296
    %v6121 = vunpack.c.h.b16 %v2296
    %v6122 = vunpack.c.l.b16 %v2297
    %v6123 = vunpack.c.h.b16 %v2297
    %v6124 = vunpack.c.l.b16 %v2298
    %v6125 = vunpack.c.h.b16 %v2298
    %v6126 = vunpack.c.l.b16 %v2299
    %v6127 = vunpack.c.h.b16 %v2299
    %v6128 = vunpack.c.l.b16 %v2300
    %v6129 = vunpack.c.h.b16 %v2300
    %v6130 = vunpack.c.l.b16 %v2301
    %v6131 = vunpack.c.h.b16 %v2301
    %v6132 = vunpack.c.l.b16 %v2302
    %v6133 = vunpack.c.h.b16 %v2302
    %v6134 = vunpack.c.l.b16 %v2303
    %v6135 = vunpack.c.h.b16 %v2303
    %v6136 = vunpack.c.l.b16 %v2304
    %v6137 = vunpack.c.h.b16 %v2304
    %v6138 = vunpack.c.l.b16 %v2305
    %v6139 = vunpack.c.h.b16 %v2305
    %v6140 = vunpack.c.l.b16 %v2306
    %v6141 = vunpack.c.h.b16 %v2306
    %v6142 = vunpack.c.l.b16 %v2307
    %v6143 = vunpack.c.h.b16 %v2307
    %v6144 = vunpack.c.l.b16 %v2308
    %v6145 = vunpack.c.h.b16 %v2308
    %v6146 = vunpack.c.l.b16 %v2309
    %v6147 = vunpack.c.h.b16 %v2309
    %v6148 = vunpack.c.l.b16 %v2310
    %v6149 = vunpack.c.h.b16 %v2310
    %v6150 = vunpack.c.l.b16 %v2311
    %v6151 = vunpack.c.h.b16 %v2311
    %v6152 = vpack.c.b16 %v3600, %v3592
    %v6153 = vpack.c.b16 %v3601, %v3593
    %v6154 = vpack.c.b16 %v3602, %v3594
    %v6155 = vpack.c.b16 %v3603, %v3595
    %v6156 = vpack.c.b16 %v3604, %v3596
    %v6157 = vpack.c.b16 %v3605, %v3597
    %v6158 = vpack.c.b16 %v3606, %v3598
    %v6159 = vpack.c.b16 %v3607, %v3599
    %v6160 = vpack.c.b16 %v3616, %v3608
    %v6161 = vpack.c.b16 %v3617, %v3609
    %v6162 = vpack.c.b16 %v3618, %v3610
    %v6163 = vpack.c.b16 %v3619, %v3611
    %v6164 = vpack.c.b16 %v3620, %v3612
    %v6165 = vpack.c.b16 %v3621, %v3613
    %v6166 = vpack.c.b16 %v3622, %v3614
    %v6167 = vpack.c.b16 %v3623, %v3615
    %v6168 = vpack.c.b16 %v3632, %v3624
    %v6169 = vpack.c.b16 %v3633, %v3625
    %v6170 = vpack.c.b16 %v3634, %v3626
    %v6171 = vpack.c.b16 %v3635, %v3627
    %v6172 = vpack.c.b16 %v3636, %v3628
    %v6173 = vpack.c.b16 %v3637, %v3629
    %v6174 = vpack.c.b16 %v3638, %v3630
    %v6175 = vpack.c.b16 %v3639, %v3631
    %v6176 = vpack.c.b16 %v3648, %v3640
    %v6177 = vpack.c.b16 %v3649, %v3641
    %v6178 = vpack.c.b16 %v3650, %v3642
    %v6179 = vpack.c.b16 %v3651, %v3643
    %v6180 = vpack.c.b16 %v3652, %v3644
    %v6181 = vpack.c.b16 %v3653, %v3645
    %v6182 = vpack.c.b16 %v3654, %v3646
    %v6183 = vpack.c.b16 %v3655, %v3647
    %v6184 = vpack.c.b16 %v3664, %v3656
    %v6185 = vpack.c.b16 %v3665, %v3657
    %v6186 = vpack.c.b16 %v3666, %v3658
    %v6187 = vpack.c.b16 %v3667, %v3659
    %v6188 = vpack.c.b16 %v3668, %v3660
    %v6189 = vpack.c.b16 %v3669, %v3661
    %v6190 = vpack.c.b16 %v3670, %v3662
    %v6191 = vpack.c.b16 %v3671, %v3663
    %v6192 = vpack.c.b16 %v3680, %v3672
    %v6193 = vpack.c.b16 %v3681, %v3673
    %v6194 = vpack.c.b16 %v3682, %v3674
    %v6195 = vpack.c.b16 %v3683, %v3675
    %v6196 = vpack.c.b16 %v3684, %v3676
    %v6197 = vpack.c.b16 %v3685, %v3677
    %v6198 = vpack.c.b16 %v3686, %v3678
    %v6199 = vpack.c.b16 %v3687, %v3679
    %v6200 = vpack.c.b16 %v3696, %v3688
    %v6201 = vpack.c.b16 %v3697, %v3689
    %v6202 = vpack.c.b16 %v3698, %v3690
    %v6203 = vpack.c.b16 %v3699, %v3691
    %v6204 = vpack.c.b16 %v3700, %v3692
    %v6205 = vpack.c.b16 %v3701, %v3693
    %v6206 = vpack.c.b16 %v3702, %v3694
    %v6207 = vpack.c.b16 %v3703, %v3695
    %v6208 = vpack.c.b16 %v3712, %v3704
    %v6209 = vpack.c.b16 %v3713, %v3705
    %v6210 = vpack.c.b16 %v3714, %v3706
    %v6211 = vpack.c.b16 %v3715, %v3707
    %v6212 = vpack.c.b16 %v3716, %v3708
    %v6213 = vpack.c.b16 %v3717, %v3709
    %v6214 = vpack.c.b16 %v3718, %v3710
    %v6215 = vpack.c.b16 %v3719, %v3711
    %v6216 = vpack.c.b16 %v3728, %v3720
    %v6217 = vpack.c.b16 %v3729, %v3721
    %v6218 = vpack.c.b16 %v3730, %v3722
    %v6219 = vpack.c.b16 %v3731, %v3723
    %v6220 = vpack.c.b16 %v3732, %v3724
    %v6221 = vpack.c.b16 %v3733, %v3725
    %v6222 = vpack.c.b16 %v3734, %v3726
    %v6223 = vpack.c.b16 %v3735, %v3727
    %v6224 = vpack.c.b16 %v3744, %v3736
    %v6225 = vpack.c.b16 %v3745, %v3737
    %v6226 = vpack.c.b16 %v3746, %v3738
    %v6227 = vpack.c.b16 %v3747, %v3739
    %v6228 = vpack.c.b16 %v3748, %v3740
    %v6229 = vpack.c.b16 %v3749, %v3741
    %v6230 = vpack.c.b16 %v3750, %v3742
    %v6231 = vpack.c.b16 %v3751, %v3743
    %v6232 = vpack.c.b16 %v3760, %v3752
    %v6233 = vpack.c.b16 %v3761, %v3753
    %v6234 = vpack.c.b16 %v3762, %v3754
    %v6235 = vpack.c.b16 %v3763, %v3755
    %v6236 = vpack.c.b16 %v3764, %v3756
    %v6237 = vpack.c.b16 %v3765, %v3757
    %v6238 = vpack.c.b16 %v3766, %v3758
    %v6239 = vpack.c.b16 %v3767, %v3759
    %v6240 = vpack.c.b16 %v3776, %v3768
    %v6241 = vpack.c.b16 %v3777, %v3769
    %v6242 = vpack.c.b16 %v3778, %v3770
    %v6243 = vpack.c.b16 %v3779, %v3771
    %v6244 = vpack.c.b16 %v3780, %v3772
    %v6245 = vpack.c.b16 %v3781, %v3773
    %v6246 = vpack.c.b16 %v3782, %v3774
    %v6247 = vpack.c.b16 %v3783, %v3775
    %v6248 = vpack.c.b16 %v3792, %v3784
    %v6249 = vpack.c.b16 %v3793, %v3785
    %v6250 = vpack.c.b16 %v3794, %v3786
    %v6251 = vpack.c.b16 %v3795, %v3787
    %v6252 = vpack.c.b16 %v3796, %v3788
    %v6253 = vpack.c.b16 %v3797, %v3789
    %v6254 = vpack.c.b16 %v3798, %v3790
    %v6255 = vpack.c.b16 %v3799, %v3791
    %v6256 = vpack.c.b16 %v3808, %v3800
    %v6257 = vpack.c.b16 %v3809, %v3801
    %v6258 = vpack.c.b16 %v3810, %v3802
    %v6259 = vpack.c.b16 %v3811, %v3803
    %v6260 = vpack.c.b16 %v3812, %v3804
    %v6261 = vpack.c.b16 %v3813, %v3805
    %v6262 = vpack.c.b16 %v3814, %v3806
    %v6263 = vpack.c.b16 %v3815, %v3807
    %v6264 = vpack.c.b16 %v3824, %v3816
    %v6265 = vpack.c.b16 %v3825, %v3817
    %v6266 = vpack.c.b16 %v3826, %v3818
    %v6267 = vpack.c.b16 %v3827, %v3819
    %v6268 = vpack.c.b16 %v3828, %v3820
    %v6269 = vpack.c.b16 %v3829, %v3821
    %v6270 = vpack.c.b16 %v3830, %v3822
    %v6271 = vpack.c.b16 %v3831, %v3823
    %v6272 = vpack.c.b16 %v3840, %v3832
    %v6273 = vpack.c.b16 %v3841, %v3833
    %v6274 = vpack.c.b16 %v3842, %v3834
    %v6275 = vpack.c.b16 %v3843, %v3835
    %v6276 = vpack.c.b16 %v3844, %v3836
    %v6277 = vpack.c.b16 %v3845, %v3837
    %v6278 = vpack.c.b16 %v3846, %v3838
    %v6279 = vpack.c.b16 %v3847, %v3839
    %v6280 = vpack.c.b16 %v3856, %v3848
    %v6281 = vpack.c.b16 %v3857, %v3849
    %v6282 = vpack.c.b16 %v3858, %v3850
    %v6283 = vpack.c.b16 %v3859, %v3851
    %v6284 = vpack.c.b16 %v3860, %v3852
    %v6285 = vpack.c.b16 %v3861, %v3853
    %v6286 = vpack.c.b16 %v3862, %v3854
    %v6287 = vpack.c.b16 %v3863, %v3855
    %v6288 = vpack.c.b16 %v3872, %v3864
    %v6289 = vpack.c.b16 %v3873, %v3865
    %v6290 = vpack.c.b16 %v3874, %v3866
    %v6291 = vpack.c.b16 %v3875, %v3867
    %v6292 = vpack.c.b16 %v3876, %v3868
    %v6293 = vpack.c.b16 %v3877, %v3869
    %v6294 = vpack.c.b16 %v3878, %v3870
    %v6295 = vpack.c.b16 %v3879, %v3871
    %v6296 = vpack.c.b16 %v3888, %v3880
    %v6297 = vpack.c.b16 %v3889, %v3881
    %v6298 = vpack.c.b16 %v3890, %v3882
    %v6299 = vpack.c.b16 %v3891, %v3883
    %v6300 = vpack.c.b16 %v3892, %v3884
    %v6301 = vpack.c.b16 %v3893, %v3885
    %v6302 = vpack.c.b16 %v3894, %v3886
    %v6303 = vpack.c.b16 %v3895, %v3887
    %v6304 = vpack.c.b16 %v3904, %v3896
    %v6305 = vpack.c.b16 %v3905, %v3897
    %v6306 = vpack.c.b16 %v3906, %v3898
    %v6307 = vpack.c.b16 %v3907, %v3899
    %v6308 = vpack.c.b16 %v3908, %v3900
    %v6309 = vpack.c.b16 %v3909, %v3901
    %v6310 = vpack.c.b16 %v3910, %v3902
    %v6311 = vpack.c.b16 %v3911, %v3903
    %v6312 = vpack.c.b16 %v3920, %v3912
    %v6313 = vpack.c.b16 %v3921, %v3913
    %v6314 = vpack.c.b16 %v3922, %v3914
    %v6315 = vpack.c.b16 %v3923, %v3915
    %v6316 = vpack.c.b16 %v3924, %v3916
    %v6317 = vpack.c.b16 %v3925, %v3917
    %v6318 = vpack.c.b16 %v3926, %v3918
    %v6319 = vpack.c.b16 %v3927, %v3919
    %v6320 = vpack.c.b16 %v3936, %v3928
    %v6321 = vpack.c.b16 %v3937, %v3929
    %v6322 = vpack.c.b16 %v3938, %v3930
    %v6323 = vpack.c.b16 %v3939, %v3931
    %v6324 = vpack.c.b16 %v3940, %v3932
    %v6325 = vpack.c.b16 %v3941, %v3933
    %v6326 = vpack.c.b16 %v3942, %v3934
    %v6327 = vpack.c.b16 %v3943, %v3935
    %v6328 = vpack.c.b16 %v3952, %v3944
    %v6329 = vpack.c.b16 %v3953, %v3945
    %v6330 = vpack.c.b16 %v3954, %v3946
    %v6331 = vpack.c.b16 %v3955, %v3947
    %v6332 = vpack.c.b16 %v3956, %v3948
    %v6333 = vpack.c.b16 %v3957, %v3949
    %v6334 = vpack.c.b16 %v3958, %v3950
    %v6335 = vpack.c.b16 %v3959, %v3951
    %v6336 = vpack.c.b16 %v3968, %v3960
    %v6337 = vpack.c.b16 %v3969, %v3961
    %v6338 = vpack.c.b16 %v3970, %v3962
    %v6339 = vpack.c.b16 %v3971, %v3963
    %v6340 = vpack.c.b16 %v3972, %v3964
    %v6341 = vpack.c.b16 %v3973, %v3965
    %v6342 = vpack.c.b16 %v3974, %v3966
    %v6343 = vpack.c.b16 %v3975, %v3967
    %v6344 = vpack.c.b16 %v3984, %v3976
    %v6345 = vpack.c.b16 %v3985, %v3977
    %v6346 = vpack.c.b16 %v3986, %v3978
    %v6347 = vpack.c.b16 %v3987, %v3979
    %v6348 = vpack.c.b16 %v3988, %v3980
    %v6349 = vpack.c.b16 %v3989, %v3981
    %v6350 = vpack.c.b16 %v3990, %v3982
    %v6351 = vpack.c.b16 %v3991, %v3983
    %v6352 = vpack.c.b16 %v4000, %v3992
    %v6353 = vpack.c.b16 %v4001, %v3993
    %v6354 = vpack.c.b16 %v4002, %v3994
    %v6355 = vpack.c.b16 %v4003, %v3995
    %v6356 = vpack.c.b16 %v4004, %v3996
    %v6357 = vpack.c.b16 %v4005, %v3997
    %v6358 = vpack.c.b16 %v4006, %v3998
    %v6359 = vpack.c.b16 %v4007, %v3999
    %v6360 = vpack.c.b16 %v4016, %v4008
    %v6361 = vpack.c.b16 %v4017, %v4009
    %v6362 = vpack.c.b16 %v4018, %v4010
    %v6363 = vpack.c.b16 %v4019, %v4011
    %v6364 = vpack.c.b16 %v4020, %v4012
    %v6365 = vpack.c.b16 %v4021, %v4013
    %v6366 = vpack.c.b16 %v4022, %v4014
    %v6367 = vpack.c.b16 %v4023, %v4015
    %v6368 = vpack.c.b16 %v4032, %v4024
    %v6369 = vpack.c.b16 %v4033, %v4025
    %v6370 = vpack.c.b16 %v4034, %v4026
    %v6371 = vpack.c.b16 %v4035, %v4027
    %v6372 = vpack.c.b16 %v4036, %v4028
    %v6373 = vpack.c.b16 %v4037, %v4029
    %v6374 = vpack.c.b16 %v4038, %v4030
    %v6375 = vpack.c.b16 %v4039, %v4031
    %v6376 = vpack.c.b16 %v4048, %v4040
    %v6377 = vpack.c.b16 %v4049, %v4041
    %v6378 = vpack.c.b16 %v4050, %v4042
    %v6379 = vpack.c.b16 %v4051, %v4043
    %v6380 = vpack.c.b16 %v4052, %v4044
    %v6381 = vpack.c.b16 %v4053, %v4045
    %v6382 = vpack.c.b16 %v4054, %v4046
    %v6383 = vpack.c.b16 %v4055, %v4047
    %v6384 = vpack.c.b16 %v4064, %v4056
    %v6385 = vpack.c.b16 %v4065, %v4057
    %v6386 = vpack.c.b16 %v4066, %v4058
    %v6387 = vpack.c.b16 %v4067, %v4059
    %v6388 = vpack.c.b16 %v4068, %v4060
    %v6389 = vpack.c.b16 %v4069, %v4061
    %v6390 = vpack.c.b16 %v4070, %v4062
    %v6391 = vpack.c.b16 %v4071, %v4063
    %v6392 = vpack.c.b16 %v4080, %v4072
    %v6393 = vpack.c.b16 %v4081, %v4073
    %v6394 = vpack.c.b16 %v4082, %v4074
    %v6395 = vpack.c.b16 %v4083, %v4075
    %v6396 = vpack.c.b16 %v4084, %v4076
    %v6397 = vpack.c.b16 %v4085, %v4077
    %v6398 = vpack.c.b16 %v4086, %v4078
    %v6399 = vpack.c.b16 %v4087, %v4079
    %v6400 = vpack.c.b16 %v4096, %v4088
    %v6401 = vpack.c.b16 %v4097, %v4089
    %v6402 = vpack.c.b16 %v4098, %v4090
    %v6403 = vpack.c.b16 %v4099, %v4091
    %v6404 = vpack.c.b16 %v4100, %v4092
    %v6405 = vpack.c.b16 %v4101, %v4093
    %v6406 = vpack.c.b16 %v4102, %v4094
    %v6407 = vpack.c.b16 %v4103, %v4095
    %v6408 = vpack.c.b16 %v4112, %v4104
    %v6409 = vpack.c.b16 %v4113, %v4105
    %v6410 = vpack.c.b16 %v4114, %v4106
    %v6411 = vpack.c.b16 %v4115, %v4107
    %v6412 = vpack.c.b16 %v4116, %v4108
    %v6413 = vpack.c.b16 %v4117, %v4109
    %v6414 = vpack.c.b16 %v4118, %v4110
    %v6415 = vpack.c.b16 %v4119, %v4111
    %v6416 = vpack.c.b16 %v4128, %v4120
    %v6417 = vpack.c.b16 %v4129, %v4121
    %v6418 = vpack.c.b16 %v4130, %v4122
    %v6419 = vpack.c.b16 %v4131, %v4123
    %v6420 = vpack.c.b16 %v4132, %v4124
    %v6421 = vpack.c.b16 %v4133, %v4125
    %v6422 = vpack.c.b16 %v4134, %v4126
    %v6423 = vpack.c.b16 %v4135, %v4127
    %v6424 = vpack.c.b16 %v4144, %v4136
    %v6425 = vpack.c.b16 %v4145, %v4137
    %v6426 = vpack.c.b16 %v4146, %v4138
    %v6427 = vpack.c.b16 %v4147, %v4139
    %v6428 = vpack.c.b16 %v4148, %v4140
    %v6429 = vpack.c.b16 %v4149, %v4141
    %v6430 = vpack.c.b16 %v4150, %v4142
    %v6431 = vpack.c.b16 %v4151, %v4143
    %v6432 = vpack.c.b16 %v4160, %v4152
    %v6433 = vpack.c.b16 %v4161, %v4153
    %v6434 = vpack.c.b16 %v4162, %v4154
    %v6435 = vpack.c.b16 %v4163, %v4155
    %v6436 = vpack.c.b16 %v4164, %v4156
    %v6437 = vpack.c.b16 %v4165, %v4157
    %v6438 = vpack.c.b16 %v4166, %v4158
    %v6439 = vpack.c.b16 %v4167, %v4159
    %v6440 = vpack.c.b16 %v4176, %v4168
    %v6441 = vpack.c.b16 %v4177, %v4169
    %v6442 = vpack.c.b16 %v4178, %v4170
    %v6443 = vpack.c.b16 %v4179, %v4171
    %v6444 = vpack.c.b16 %v4180, %v4172
    %v6445 = vpack.c.b16 %v4181, %v4173
    %v6446 = vpack.c.b16 %v4182, %v4174
    %v6447 = vpack.c.b16 %v4183, %v4175
    %v6448 = vpack.c.b16 %v4192, %v4184
    %v6449 = vpack.c.b16 %v4193, %v4185
    %v6450 = vpack.c.b16 %v4194, %v4186
    %v6451 = vpack.c.b16 %v4195, %v4187
    %v6452 = vpack.c.b16 %v4196, %v4188
    %v6453 = vpack.c.b16 %v4197, %v4189
    %v6454 = vpack.c.b16 %v4198, %v4190
    %v6455 = vpack.c.b16 %v4199, %v4191
    %v6456 = vpack.c.b16 %v4208, %v4200
    %v6457 = vpack.c.b16 %v4209, %v4201
    %v6458 = vpack.c.b16 %v4210, %v4202
    %v6459 = vpack.c.b16 %v4211, %v4203
    %v6460 = vpack.c.b16 %v4212, %v4204
    %v6461 = vpack.c.b16 %v4213, %v4205
    %v6462 = vpack.c.b16 %v4214, %v4206
    %v6463 = vpack.c.b16 %v4215, %v4207
    %v6464 = vpack.c.b16 %v4224, %v4216
    %v6465 = vpack.c.b16 %v4225, %v4217
    %v6466 = vpack.c.b16 %v4226, %v4218
    %v6467 = vpack.c.b16 %v4227, %v4219
    %v6468 = vpack.c.b16 %v4228, %v4220
    %v6469 = vpack.c.b16 %v4229, %v4221
    %v6470 = vpack.c.b16 %v4230, %v4222
    %v6471 = vpack.c.b16 %v4231, %v4223
    %v6472 = vpack.c.b16 %v4240, %v4232
    %v6473 = vpack.c.b16 %v4241, %v4233
    %v6474 = vpack.c.b16 %v4242, %v4234
    %v6475 = vpack.c.b16 %v4243, %v4235
    %v6476 = vpack.c.b16 %v4244, %v4236
    %v6477 = vpack.c.b16 %v4245, %v4237
    %v6478 = vpack.c.b16 %v4246, %v4238
    %v6479 = vpack.c.b16 %v4247, %v4239
    %v6480 = vpack.c.b16 %v4256, %v4248
    %v6481 = vpack.c.b16 %v4257, %v4249
    %v6482 = vpack.c.b16 %v4258, %v4250
    %v6483 = vpack.c.b16 %v4259, %v4251
    %v6484 = vpack.c.b16 %v4260, %v4252
    %v6485 = vpack.c.b16 %v4261, %v4253
    %v6486 = vpack.c.b16 %v4262, %v4254
    %v6487 = vpack.c.b16 %v4263, %v4255
    %v6488 = vpack.c.b16 %v4272, %v4264
    %v6489 = vpack.c.b16 %v4273, %v4265
    %v6490 = vpack.c.b16 %v4274, %v4266
    %v6491 = vpack.c.b16 %v4275, %v4267
    %v6492 = vpack.c.b16 %v4276, %v4268
    %v6493 = vpack.c.b16 %v4277, %v4269
    %v6494 = vpack.c.b16 %v4278, %v4270
    %v6495 = vpack.c.b16 %v4279, %v4271
    %v6496 = vpack.c.b16 %v4288, %v4280
    %v6497 = vpack.c.b16 %v4289, %v4281
    %v6498 = vpack.c.b16 %v4290, %v4282
    %v6499 = vpack.c.b16 %v4291, %v4283
    %v6500 = vpack.c.b16 %v4292, %v4284
    %v6501 = vpack.c.b16 %v4293, %v4285
    %v6502 = vpack.c.b16 %v4294, %v4286
    %v6503 = vpack.c.b16 %v4295, %v4287
    %v6504 = vpack.c.b16 %v4304, %v4296
    %v6505 = vpack.c.b16 %v4305, %v4297
    %v6506 = vpack.c.b16 %v4306, %v4298
    %v6507 = vpack.c.b16 %v4307, %v4299
    %v6508 = vpack.c.b16 %v4308, %v4300
    %v6509 = vpack.c.b16 %v4309, %v4301
    %v6510 = vpack.c.b16 %v4310, %v4302
    %v6511 = vpack.c.b16 %v4311, %v4303
    %v6512 = vpack.c.b16 %v4320, %v4312
    %v6513 = vpack.c.b16 %v4321, %v4313
    %v6514 = vpack.c.b16 %v4322, %v4314
    %v6515 = vpack.c.b16 %v4323, %v4315
    %v6516 = vpack.c.b16 %v4324, %v4316
    %v6517 = vpack.c.b16 %v4325, %v4317
    %v6518 = vpack.c.b16 %v4326, %v4318
    %v6519 = vpack.c.b16 %v4327, %v4319
    %v6520 = vpack.c.b16 %v4336, %v4328
    %v6521 = vpack.c.b16 %v4337, %v4329
    %v6522 = vpack.c.b16 %v4338, %v4330
    %v6523 = vpack.c.b16 %v4339, %v4331
    %v6524 = vpack.c.b16 %v4340, %v4332
    %v6525 = vpack.c.b16 %v4341, %v4333
    %v6526 = vpack.c.b16 %v4342, %v4334
    %v6527 = vpack.c.b16 %v4343, %v4335
    %v6528 = vpack.c.b16 %v4352, %v4344
    %v6529 = vpack.c.b16 %v4353, %v4345
    %v6530 = vpack.c.b16 %v4354, %v4346
    %v6531 = vpack.c.b16 %v4355, %v4347
    %v6532 = vpack.c.b16 %v4356, %v4348
    %v6533 = vpack.c.b16 %v4357, %v4349
    %v6534 = vpack.c.b16 %v4358, %v4350
    %v6535 = vpack.c.b16 %v4359, %v4351
    %v6536 = vpack.c.b16 %v4368, %v4360
    %v6537 = vpack.c.b16 %v4369, %v4361
    %v6538 = vpack.c.b16 %v4370, %v4362
    %v6539 = vpack.c.b16 %v4371, %v4363
    %v6540 = vpack.c.b16 %v4372, %v4364
    %v6541 = vpack.c.b16 %v4373, %v4365
    %v6542 = vpack.c.b16 %v4374, %v4366
    %v6543 = vpack.c.b16 %v4375, %v4367
    %v6544 = vpack.c.b16 %v4384, %v4376
    %v6545 = vpack.c.b16 %v4385, %v4377
    %v6546 = vpack.c.b16 %v4386, %v4378
    %v6547 = vpack.c.b16 %v4387, %v4379
    %v6548 = vpack.c.b16 %v4388, %v4380
    %v6549 = vpack.c.b16 %v4389, %v4381
    %v6550 = vpack.c.b16 %v4390, %v4382
    %v6551 = vpack.c.b16 %v4391, %v4383
    %v6552 = vpack.c.b16 %v4400, %v4392
    %v6553 = vpack.c.b16 %v4401, %v4393
    %v6554 = vpack.c.b16 %v4402, %v4394
    %v6555 = vpack.c.b16 %v4403, %v4395
    %v6556 = vpack.c.b16 %v4404, %v4396
    %v6557 = vpack.c.b16 %v4405, %v4397
    %v6558 = vpack.c.b16 %v4406, %v4398
    %v6559 = vpack.c.b16 %v4407, %v4399
    %v6560 = vpack.c.b16 %v4416, %v4408
    %v6561 = vpack.c.b16 %v4417, %v4409
    %v6562 = vpack.c.b16 %v4418, %v4410
    %v6563 = vpack.c.b16 %v4419, %v4411
    %v6564 = vpack.c.b16 %v4420, %v4412
    %v6565 = vpack.c.b16 %v4421, %v4413
    %v6566 = vpack.c.b16 %v4422, %v4414
    %v6567 = vpack.c.b16 %v4423, %v4415
    %v6568 = vpack.c.b16 %v4432, %v4424
    %v6569 = vpack.c.b16 %v4433, %v4425
    %v6570 = vpack.c.b16 %v4434, %v4426
    %v6571 = vpack.c.b16 %v4435, %v4427
    %v6572 = vpack.c.b16 %v4436, %v4428
    %v6573 = vpack.c.b16 %v4437, %v4429
    %v6574 = vpack.c.b16 %v4438, %v4430
    %v6575 = vpack.c.b16 %v4439, %v4431
    %v6576 = vpack.c.b16 %v4448, %v4440
    %v6577 = vpack.c.b16 %v4449, %v4441
    %v6578 = vpack.c.b16 %v4450, %v4442
    %v6579 = vpack.c.b16 %v4451, %v4443
    %v6580 = vpack.c.b16 %v4452, %v4444
    %v6581 = vpack.c.b16 %v4453, %v4445
    %v6582 = vpack.c.b16 %v4454, %v4446
    %v6583 = vpack.c.b16 %v4455, %v4447
    %v6584 = vpack.c.b16 %v4464, %v4456
    %v6585 = vpack.c.b16 %v4465, %v4457
    %v6586 = vpack.c.b16 %v4466, %v4458
    %v6587 = vpack.c.b16 %v4467, %v4459
    %v6588 = vpack.c.b16 %v4468, %v4460
    %v6589 = vpack.c.b16 %v4469, %v4461
    %v6590 = vpack.c.b16 %v4470, %v4462
    %v6591 = vpack.c.b16 %v4471, %v4463
    %v6592 = vpack.c.b16 %v4480, %v4472
    %v6593 = vpack.c.b16 %v4481, %v4473
    %v6594 = vpack.c.b16 %v4482, %v4474
    %v6595 = vpack.c.b16 %v4483, %v4475
    %v6596 = vpack.c.b16 %v4484, %v4476
    %v6597 = vpack.c.b16 %v4485, %v4477
    %v6598 = vpack.c.b16 %v4486, %v4478
    %v6599 = vpack.c.b16 %v4487, %v4479
    %v6600 = vpack.c.b16 %v4496, %v4488
    %v6601 = vpack.c.b16 %v4497, %v4489
    %v6602 = vpack.c.b16 %v4498, %v4490
    %v6603 = vpack.c.b16 %v4499, %v4491
    %v6604 = vpack.c.b16 %v4500, %v4492
    %v6605 = vpack.c.b16 %v4501, %v4493
    %v6606 = vpack.c.b16 %v4502, %v4494
    %v6607 = vpack.c.b16 %v4503, %v4495
    %v6608 = vpack.c.b16 %v4512, %v4504
    %v6609 = vpack.c.b16 %v4513, %v4505
    %v6610 = vpack.c.b16 %v4514, %v4506
    %v6611 = vpack.c.b16 %v4515, %v4507
    %v6612 = vpack.c.b16 %v4516, %v4508
    %v6613 = vpack.c.b16 %v4517, %v4509
    %v6614 = vpack.c.b16 %v4518, %v4510
    %v6615 = vpack.c.b16 %v4519, %v4511
    %v6616 = vpack.c.b16 %v4528, %v4520
    %v6617 = vpack.c.b16 %v4529, %v4521
    %v6618 = vpack.c.b16 %v4530, %v4522
    %v6619 = vpack.c.b16 %v4531, %v4523
    %v6620 = vpack.c.b16 %v4532, %v4524
    %v6621 = vpack.c.b16 %v4533, %v4525
    %v6622 = vpack.c.b16 %v4534, %v4526
    %v6623 = vpack.c.b16 %v4535, %v4527
    %v6624 = vpack.c.b16 %v4544, %v4536
    %v6625 = vpack.c.b16 %v4545, %v4537
    %v6626 = vpack.c.b16 %v4546, %v4538
    %v6627 = vpack.c.b16 %v4547, %v4539
    %v6628 = vpack.c.b16 %v4548, %v4540
    %v6629 = vpack.c.b16 %v4549, %v4541
    %v6630 = vpack.c.b16 %v4550, %v4542
    %v6631 = vpack.c.b16 %v4551, %v4543
    %v6632 = vpack.c.b16 %v4560, %v4552
    %v6633 = vpack.c.b16 %v4561, %v4553
    %v6634 = vpack.c.b16 %v4562, %v4554
    %v6635 = vpack.c.b16 %v4563, %v4555
    %v6636 = vpack.c.b16 %v4564, %v4556
    %v6637 = vpack.c.b16 %v4565, %v4557
    %v6638 = vpack.c.b16 %v4566, %v4558
    %v6639 = vpack.c.b16 %v4567, %v4559
    %v6640 = vpack.c.b16 %v4576, %v4568
    %v6641 = vpack.c.b16 %v4577, %v4569
    %v6642 = vpack.c.b16 %v4578, %v4570
    %v6643 = vpack.c.b16 %v4579, %v4571
    %v6644 = vpack.c.b16 %v4580, %v4572
    %v6645 = vpack.c.b16 %v4581, %v4573
    %v6646 = vpack.c.b16 %v4582, %v4574
    %v6647 = vpack.c.b16 %v4583, %v4575
    %v6648 = vpack.c.b16 %v4592, %v4584
    %v6649 = vpack.c.b16 %v4593, %v4585
    %v6650 = vpack.c.b16 %v4594, %v4586
    %v6651 = vpack.c.b16 %v4595, %v4587
    %v6652 = vpack.c.b16 %v4596, %v4588
    %v6653 = vpack.c.b16 %v4597, %v4589
    %v6654 = vpack.c.b16 %v4598, %v4590
    %v6655 = vpack.c.b16 %v4599, %v4591
    %v6656 = vpack.c.b16 %v4608, %v4600
    %v6657 = vpack.c.b16 %v4609, %v4601
    %v6658 = vpack.c.b16 %v4610, %v4602
    %v6659 = vpack.c.b16 %v4611, %v4603
    %v6660 = vpack.c.b16 %v4612, %v4604
    %v6661 = vpack.c.b16 %v4613, %v4605
    %v6662 = vpack.c.b16 %v4614, %v4606
    %v6663 = vpack.c.b16 %v4615, %v4607
    %v6664 = vpack.c.b16 %v4624, %v4616
    %v6665 = vpack.c.b16 %v4625, %v4617
    %v6666 = vpack.c.b16 %v4626, %v4618
    %v6667 = vpack.c.b16 %v4627, %v4619
    %v6668 = vpack.c.b16 %v4628, %v4620
    %v6669 = vpack.c.b16 %v4629, %v4621
    %v6670 = vpack.c.b16 %v4630, %v4622
    %v6671 = vpack.c.b16 %v4631, %v4623
    %v6672 = vpack.c.b16 %v4640, %v4632
    %v6673 = vpack.c.b16 %v4641, %v4633
    %v6674 = vpack.c.b16 %v4642, %v4634
    %v6675 = vpack.c.b16 %v4643, %v4635
    %v6676 = vpack.c.b16 %v4644, %v4636
    %v6677 = vpack.c.b16 %v4645, %v4637
    %v6678 = vpack.c.b16 %v4646, %v4638
    %v6679 = vpack.c.b16 %v4647, %v4639
    %v6680 = vpack.c.b16 %v4656, %v4648
    %v6681 = vpack.c.b16 %v4657, %v4649
    %v6682 = vpack.c.b16 %v4658, %v4650
    %v6683 = vpack.c.b16 %v4659, %v4651
    %v6684 = vpack.c.b16 %v4660, %v4652
    %v6685 = vpack.c.b16 %v4661, %v4653
    %v6686 = vpack.c.b16 %v4662, %v4654
    %v6687 = vpack.c.b16 %v4663, %v4655
    %v6688 = vpack.c.b16 %v4672, %v4664
    %v6689 = vpack.c.b16 %v4673, %v4665
    %v6690 = vpack.c.b16 %v4674, %v4666
    %v6691 = vpack.c.b16 %v4675, %v4667
    %v6692 = vpack.c.b16 %v4676, %v4668
    %v6693 = vpack.c.b16 %v4677, %v4669
    %v6694 = vpack.c.b16 %v4678, %v4670
    %v6695 = vpack.c.b16 %v4679, %v4671
    %v6696 = vpack.c.b16 %v4688, %v4680
    %v6697 = vpack.c.b16 %v4689, %v4681
    %v6698 = vpack.c.b16 %v4690, %v4682
    %v6699 = vpack.c.b16 %v4691, %v4683
    %v6700 = vpack.c.b16 %v4692, %v4684
    %v6701 = vpack.c.b16 %v4693, %v4685
    %v6702 = vpack.c.b16 %v4694, %v4686
    %v6703 = vpack.c.b16 %v4695, %v4687
    %v6704 = vpack.c.b16 %v4704, %v4696
    %v6705 = vpack.c.b16 %v4705, %v4697
    %v6706 = vpack.c.b16 %v4706, %v4698
    %v6707 = vpack.c.b16 %v4707, %v4699
    %v6708 = vpack.c.b16 %v4708, %v4700
    %v6709 = vpack.c.b16 %v4709, %v4701
    %v6710 = vpack.c.b16 %v4710, %v4702
    %v6711 = vpack.c.b16 %v4711, %v4703
    %v6712 = vpack.c.b16 %v4720, %v4712
    %v6713 = vpack.c.b16 %v4721, %v4713
    %v6714 = vpack.c.b16 %v4722, %v4714
    %v6715 = vpack.c.b16 %v4723, %v4715
    %v6716 = vpack.c.b16 %v4724, %v4716
    %v6717 = vpack.c.b16 %v4725, %v4717
    %v6718 = vpack.c.b16 %v4726, %v4718
    %v6719 = vpack.c.b16 %v4727, %v4719
    %v6720 = vpack.c.b16 %v4736, %v4728
    %v6721 = vpack.c.b16 %v4737, %v4729
    %v6722 = vpack.c.b16 %v4738, %v4730
    %v6723 = vpack.c.b16 %v4739, %v4731
    %v6724 = vpack.c.b16 %v4740, %v4732
    %v6725 = vpack.c.b16 %v4741, %v4733
    %v6726 = vpack.c.b16 %v4742, %v4734
    %v6727 = vpack.c.b16 %v4743, %v4735
    %v6728 = vpack.c.b16 %v4752, %v4744
    %v6729 = vpack.c.b16 %v4753, %v4745
    %v6730 = vpack.c.b16 %v4754, %v4746
    %v6731 = vpack.c.b16 %v4755, %v4747
    %v6732 = vpack.c.b16 %v4756, %v4748
    %v6733 = vpack.c.b16 %v4757, %v4749
    %v6734 = vpack.c.b16 %v4758, %v4750
    %v6735 = vpack.c.b16 %v4759, %v4751
    %v6736 = vpack.c.b16 %v4768, %v4760
    %v6737 = vpack.c.b16 %v4769, %v4761
    %v6738 = vpack.c.b16 %v4770, %v4762
    %v6739 = vpack.c.b16 %v4771, %v4763
    %v6740 = vpack.c.b16 %v4772, %v4764
    %v6741 = vpack.c.b16 %v4773, %v4765
    %v6742 = vpack.c.b16 %v4774, %v4766
    %v6743 = vpack.c.b16 %v4775, %v4767
    %v6744 = vpack.c.b16 %v4784, %v4776
    %v6745 = vpack.c.b16 %v4785, %v4777
    %v6746 = vpack.c.b16 %v4786, %v4778
    %v6747 = vpack.c.b16 %v4787, %v4779
    %v6748 = vpack.c.b16 %v4788, %v4780
    %v6749 = vpack.c.b16 %v4789, %v4781
    %v6750 = vpack.c.b16 %v4790, %v4782
    %v6751 = vpack.c.b16 %v4791, %v4783
    %v6752 = vpack.c.b16 %v4800, %v4792
    %v6753 = vpack.c.b16 %v4801, %v4793
    %v6754 = vpack.c.b16 %v4802, %v4794
    %v6755 = vpack.c.b16 %v4803, %v4795
    %v6756 = vpack.c.b16 %v4804, %v4796
    %v6757 = vpack.c.b16 %v4805, %v4797
    %v6758 = vpack.c.b16 %v4806, %v4798
    %v6759 = vpack.c.b16 %v4807, %v4799
    %v6760 = vpack.c.b16 %v4816, %v4808
    %v6761 = vpack.c.b16 %v4817, %v4809
    %v6762 = vpack.c.b16 %v4818, %v4810
    %v6763 = vpack.c.b16 %v4819, %v4811
    %v6764 = vpack.c.b16 %v4820, %v4812
    %v6765 = vpack.c.b16 %v4821, %v4813
    %v6766 = vpack.c.b16 %v4822, %v4814
    %v6767 = vpack.c.b16 %v4823, %v4815
    %v6768 = vpack.c.b16 %v4832, %v4824
    %v6769 = vpack.c.b16 %v4833, %v4825
    %v6770 = vpack.c.b16 %v4834, %v4826
    %v6771 = vpack.c.b16 %v4835, %v4827
    %v6772 = vpack.c.b16 %v4836, %v4828
    %v6773 = vpack.c.b16 %v4837, %v4829
    %v6774 = vpack.c.b16 %v4838, %v4830
    %v6775 = vpack.c.b16 %v4839, %v4831
    %v6776 = vpack.c.b16 %v4848, %v4840
    %v6777 = vpack.c.b16 %v4849, %v4841
    %v6778 = vpack.c.b16 %v4850, %v4842
    %v6779 = vpack.c.b16 %v4851, %v4843
    %v6780 = vpack.c.b16 %v4852, %v4844
    %v6781 = vpack.c.b16 %v4853, %v4845
    %v6782 = vpack.c.b16 %v4854, %v4846
    %v6783 = vpack.c.b16 %v4855, %v4847
    %v6784 = vpack.c.b16 %v4864, %v4856
    %v6785 = vpack.c.b16 %v4865, %v4857
    %v6786 = vpack.c.b16 %v4866, %v4858
    %v6787 = vpack.c.b16 %v4867, %v4859
    %v6788 = vpack.c.b16 %v4868, %v4860
    %v6789 = vpack.c.b16 %v4869, %v4861
    %v6790 = vpack.c.b16 %v4870, %v4862
    %v6791 = vpack.c.b16 %v4871, %v4863
    %v6792 = vpack.c.b16 %v4880, %v4872
    %v6793 = vpack.c.b16 %v4881, %v4873
    %v6794 = vpack.c.b16 %v4882, %v4874
    %v6795 = vpack.c.b16 %v4883, %v4875
    %v6796 = vpack.c.b16 %v4884, %v4876
    %v6797 = vpack.c.b16 %v4885, %v4877
    %v6798 = vpack.c.b16 %v4886, %v4878
    %v6799 = vpack.c.b16 %v4887, %v4879
    %v6800 = vpack.c.b16 %v4896, %v4888
    %v6801 = vpack.c.b16 %v4897, %v4889
    %v6802 = vpack.c.b16 %v4898, %v4890
    %v6803 = vpack.c.b16 %v4899, %v4891
    %v6804 = vpack.c.b16 %v4900, %v4892
    %v6805 = vpack.c.b16 %v4901, %v4893
    %v6806 = vpack.c.b16 %v4902, %v4894
    %v6807 = vpack.c.b16 %v4903, %v4895
    %v6808 = vpack.c.b16 %v4912, %v4904
    %v6809 = vpack.c.b16 %v4913, %v4905
    %v6810 = vpack.c.b16 %v4914, %v4906
    %v6811 = vpack.c.b16 %v4915, %v4907
    %v6812 = vpack.c.b16 %v4916, %v4908
    %v6813 = vpack.c.b16 %v4917, %v4909
    %v6814 = vpack.c.b16 %v4918, %v4910
    %v6815 = vpack.c.b16 %v4919, %v4911
    %v6816 = vpack.c.b16 %v4928, %v4920
    %v6817 = vpack.c.b16 %v4929, %v4921
    %v6818 = vpack.c.b16 %v4930, %v4922
    %v6819 = vpack.c.b16 %v4931, %v4923
    %v6820 = vpack.c.b16 %v4932, %v4924
    %v6821 = vpack.c.b16 %v4933, %v4925
    %v6822 = vpack.c.b16 %v4934, %v4926
    %v6823 = vpack.c.b16 %v4935, %v4927
    %v6824 = vpack.c.b16 %v4944, %v4936
    %v6825 = vpack.c.b16 %v4945, %v4937
    %v6826 = vpack.c.b16 %v4946, %v4938
    %v6827 = vpack.c.b16 %v4947, %v4939
    %v6828 = vpack.c.b16 %v4948, %v4940
    %v6829 = vpack.c.b16 %v4949, %v4941
    %v6830 = vpack.c.b16 %v4950, %v4942
    %v6831 = vpack.c.b16 %v4951, %v4943
    %v6832 = vpack.c.b16 %v4960, %v4952
    %v6833 = vpack.c.b16 %v4961, %v4953
    %v6834 = vpack.c.b16 %v4962, %v4954
    %v6835 = vpack.c.b16 %v4963, %v4955
    %v6836 = vpack.c.b16 %v4964, %v4956
    %v6837 = vpack.c.b16 %v4965, %v4957
    %v6838 = vpack.c.b16 %v4966, %v4958
    %v6839 = vpack.c.b16 %v4967, %v4959
    %v6840 = vpack.c.b16 %v4976, %v4968
    %v6841 = vpack.c.b16 %v4977, %v4969
    %v6842 = vpack.c.b16 %v4978, %v4970
    %v6843 = vpack.c.b16 %v4979, %v4971
    %v6844 = vpack.c.b16 %v4980, %v4972
    %v6845 = vpack.c.b16 %v4981, %v4973
    %v6846 = vpack.c.b16 %v4982, %v4974
    %v6847 = vpack.c.b16 %v4983, %v4975
    %v6848 = vpack.c.b16 %v4992, %v4984
    %v6849 = vpack.c.b16 %v4993, %v4985
    %v6850 = vpack.c.b16 %v4994, %v4986
    %v6851 = vpack.c.b16 %v4995, %v4987
    %v6852 = vpack.c.b16 %v4996, %v4988
    %v6853 = vpack.c.b16 %v4997, %v4989
    %v6854 = vpack.c.b16 %v4998, %v4990
    %v6855 = vpack.c.b16 %v4999, %v4991
    %v6856 = vpack.c.b16 %v5008, %v5000
    %v6857 = vpack.c.b16 %v5009, %v5001
    %v6858 = vpack.c.b16 %v5010, %v5002
    %v6859 = vpack.c.b16 %v5011, %v5003
    %v6860 = vpack.c.b16 %v5012, %v5004
    %v6861 = vpack.c.b16 %v5013, %v5005
    %v6862 = vpack.c.b16 %v5014, %v5006
    %v6863 = vpack.c.b16 %v5015, %v5007
    %v6864 = vpack.c.b16 %v5024, %v5016
    %v6865 = vpack.c.b16 %v5025, %v5017
    %v6866 = vpack.c.b16 %v5026, %v5018
    %v6867 = vpack.c.b16 %v5027, %v5019
    %v6868 = vpack.c.b16 %v5028, %v5020
    %v6869 = vpack.c.b16 %v5029, %v5021
    %v6870 = vpack.c.b16 %v5030, %v5022
    %v6871 = vpack.c.b16 %v5031, %v5023
    %v6872 = vpack.c.b16 %v5040, %v5032
    %v6873 = vpack.c.b16 %v5041, %v5033
    %v6874 = vpack.c.b16 %v5042, %v5034
    %v6875 = vpack.c.b16 %v5043, %v5035
    %v6876 = vpack.c.b16 %v5044, %v5036
    %v6877 = vpack.c.b16 %v5045, %v5037
    %v6878 = vpack.c.b16 %v5046, %v5038
    %v6879 = vpack.c.b16 %v5047, %v5039
    %v6880 = vpack.c.b16 %v5056, %v5048
    %v6881 = vpack.c.b16 %v5057, %v5049
    %v6882 = vpack.c.b16 %v5058, %v5050
    %v6883 = vpack.c.b16 %v5059, %v5051
    %v6884 = vpack.c.b16 %v5060, %v5052
    %v6885 = vpack.c.b16 %v5061, %v5053
    %v6886 = vpack.c.b16 %v5062, %v5054
    %v6887 = vpack.c.b16 %v5063, %v5055
    %v6888 = vpack.c.b16 %v5072, %v5064
    %v6889 = vpack.c.b16 %v5073, %v5065
    %v6890 = vpack.c.b16 %v5074, %v5066
    %v6891 = vpack.c.b16 %v5075, %v5067
    %v6892 = vpack.c.b16 %v5076, %v5068
    %v6893 = vpack.c.b16 %v5077, %v5069
    %v6894 = vpack.c.b16 %v5078, %v5070
    %v6895 = vpack.c.b16 %v5079, %v5071
    %v6896 = vpack.c.b16 %v5088, %v5080
    %v6897 = vpack.c.b16 %v5089, %v5081
    %v6898 = vpack.c.b16 %v5090, %v5082
    %v6899 = vpack.c.b16 %v5091, %v5083
    %v6900 = vpack.c.b16 %v5092, %v5084
    %v6901 = vpack.c.b16 %v5093, %v5085
    %v6902 = vpack.c.b16 %v5094, %v5086
    %v6903 = vpack.c.b16 %v5095, %v5087
    %v6904 = vpack.c.b16 %v5104, %v5096
    %v6905 = vpack.c.b16 %v5105, %v5097
    %v6906 = vpack.c.b16 %v5106, %v5098
    %v6907 = vpack.c.b16 %v5107, %v5099
    %v6908 = vpack.c.b16 %v5108, %v5100
    %v6909 = vpack.c.b16 %v5109, %v5101
    %v6910 = vpack.c.b16 %v5110, %v5102
    %v6911 = vpack.c.b16 %v5111, %v5103
    %v6912 = vpack.c.b16 %v5120, %v5112
    %v6913 = vpack.c.b16 %v5121, %v5113
    %v6914 = vpack.c.b16 %v5122, %v5114
    %v6915 = vpack.c.b16 %v5123, %v5115
    %v6916 = vpack.c.b16 %v5124, %v5116
    %v6917 = vpack.c.b16 %v5125, %v5117
    %v6918 = vpack.c.b16 %v5126, %v5118
    %v6919 = vpack.c.b16 %v5127, %v5119
    %v6920 = vpack.c.b16 %v5136, %v5128
    %v6921 = vpack.c.b16 %v5137, %v5129
    %v6922 = vpack.c.b16 %v5138, %v5130
    %v6923 = vpack.c.b16 %v5139, %v5131
    %v6924 = vpack.c.b16 %v5140, %v5132
    %v6925 = vpack.c.b16 %v5141, %v5133
    %v6926 = vpack.c.b16 %v5142, %v5134
    %v6927 = vpack.c.b16 %v5143, %v5135
    %v6928 = vpack.c.b16 %v5152, %v5144
    %v6929 = vpack.c.b16 %v5153, %v5145
    %v6930 = vpack.c.b16 %v5154, %v5146
    %v6931 = vpack.c.b16 %v5155, %v5147
    %v6932 = vpack.c.b16 %v5156, %v5148
    %v6933 = vpack.c.b16 %v5157, %v5149
    %v6934 = vpack.c.b16 %v5158, %v5150
    %v6935 = vpack.c.b16 %v5159, %v5151
    %v6936 = vpack.c.b16 %v5168, %v5160
    %v6937 = vpack.c.b16 %v5169, %v5161
    %v6938 = vpack.c.b16 %v5170, %v5162
    %v6939 = vpack.c.b16 %v5171, %v5163
    %v6940 = vpack.c.b16 %v5172, %v5164
    %v6941 = vpack.c.b16 %v5173, %v5165
    %v6942 = vpack.c.b16 %v5174, %v5166
    %v6943 = vpack.c.b16 %v5175, %v5167
    %v6944 = vpack.c.b16 %v5184, %v5176
    %v6945 = vpack.c.b16 %v5185, %v5177
    %v6946 = vpack.c.b16 %v5186, %v5178
    %v6947 = vpack.c.b16 %v5187, %v5179
    %v6948 = vpack.c.b16 %v5188, %v5180
    %v6949 = vpack.c.b16 %v5189, %v5181
    %v6950 = vpack.c.b16 %v5190, %v5182
    %v6951 = vpack.c.b16 %v5191, %v5183
    %v6952 = vpack.c.b16 %v5200, %v5192
    %v6953 = vpack.c.b16 %v5201, %v5193
    %v6954 = vpack.c.b16 %v5202, %v5194
    %v6955 = vpack.c.b16 %v5203, %v5195
    %v6956 = vpack.c.b16 %v5204, %v5196
    %v6957 = vpack.c.b16 %v5205, %v5197
    %v6958 = vpack.c.b16 %v5206, %v5198
    %v6959 = vpack.c.b16 %v5207, %v5199
    %v6960 = vpack.c.b16 %v5216, %v5208
    %v6961 = vpack.c.b16 %v5217, %v5209
    %v6962 = vpack.c.b16 %v5218, %v5210
    %v6963 = vpack.c.b16 %v5219, %v5211
    %v6964 = vpack.c.b16 %v5220, %v5212
    %v6965 = vpack.c.b16 %v5221, %v5213
    %v6966 = vpack.c.b16 %v5222, %v5214
    %v6967 = vpack.c.b16 %v5223, %v5215
    %v6968 = vpack.c.b16 %v5232, %v5224
    %v6969 = vpack.c.b16 %v5233, %v5225
    %v6970 = vpack.c.b16 %v5234, %v5226
    %v6971 = vpack.c.b16 %v5235, %v5227
    %v6972 = vpack.c.b16 %v5236, %v5228
    %v6973 = vpack.c.b16 %v5237, %v5229
    %v6974 = vpack.c.b16 %v5238, %v5230
    %v6975 = vpack.c.b16 %v5239, %v5231
    %v6976 = vpack.c.b16 %v5248, %v5240
    %v6977 = vpack.c.b16 %v5249, %v5241
    %v6978 = vpack.c.b16 %v5250, %v5242
    %v6979 = vpack.c.b16 %v5251, %v5243
    %v6980 = vpack.c.b16 %v5252, %v5244
    %v6981 = vpack.c.b16 %v5253, %v5245
    %v6982 = vpack.c.b16 %v5254, %v5246
    %v6983 = vpack.c.b16 %v5255, %v5247
    %v6984 = vpack.c.b16 %v5264, %v5256
    %v6985 = vpack.c.b16 %v5265, %v5257
    %v6986 = vpack.c.b16 %v5266, %v5258
    %v6987 = vpack.c.b16 %v5267, %v5259
    %v6988 = vpack.c.b16 %v5268, %v5260
    %v6989 = vpack.c.b16 %v5269, %v5261
    %v6990 = vpack.c.b16 %v5270, %v5262
    %v6991 = vpack.c.b16 %v5271, %v5263
    %v6992 = vpack.c.b16 %v5280, %v5272
    %v6993 = vpack.c.b16 %v5281, %v5273
    %v6994 = vpack.c.b16 %v5282, %v5274
    %v6995 = vpack.c.b16 %v5283, %v5275
    %v6996 = vpack.c.b16 %v5284, %v5276
    %v6997 = vpack.c.b16 %v5285, %v5277
    %v6998 = vpack.c.b16 %v5286, %v5278
    %v6999 = vpack.c.b16 %v5287, %v5279
    %v7000 = vpack.c.b16 %v5296, %v5288
    %v7001 = vpack.c.b16 %v5297, %v5289
    %v7002 = vpack.c.b16 %v5298, %v5290
    %v7003 = vpack.c.b16 %v5299, %v5291
    %v7004 = vpack.c.b16 %v5300, %v5292
    %v7005 = vpack.c.b16 %v5301, %v5293
    %v7006 = vpack.c.b16 %v5302, %v5294
    %v7007 = vpack.c.b16 %v5303, %v5295
    %v7008 = vpack.c.b16 %v5312, %v5304
    %v7009 = vpack.c.b16 %v5313, %v5305
    %v7010 = vpack.c.b16 %v5314, %v5306
    %v7011 = vpack.c.b16 %v5315, %v5307
    %v7012 = vpack.c.b16 %v5316, %v5308
    %v7013 = vpack.c.b16 %v5317, %v5309
    %v7014 = vpack.c.b16 %v5318, %v5310
    %v7015 = vpack.c.b16 %v5319, %v5311
    %v7016 = vpack.c.b16 %v5328, %v5320
    %v7017 = vpack.c.b16 %v5329, %v5321
    %v7018 = vpack.c.b16 %v5330, %v5322
    %v7019 = vpack.c.b16 %v5331, %v5323
    %v7020 = vpack.c.b16 %v5332, %v5324
    %v7021 = vpack.c.b16 %v5333, %v5325
    %v7022 = vpack.c.b16 %v5334, %v5326
    %v7023 = vpack.c.b16 %v5335, %v5327
    %v7024 = vpack.c.b16 %v5344, %v5336
    %v7025 = vpack.c.b16 %v5345, %v5337
    %v7026 = vpack.c.b16 %v5346, %v5338
    %v7027 = vpack.c.b16 %v5347, %v5339
    %v7028 = vpack.c.b16 %v5348, %v5340
    %v7029 = vpack.c.b16 %v5349, %v5341
    %v7030 = vpack.c.b16 %v5350, %v5342
    %v7031 = vpack.c.b16 %v5351, %v5343
    %v7032 = vpack.c.b16 %v5360, %v5352
    %v7033 = vpack.c.b16 %v5361, %v5353
    %v7034 = vpack.c.b16 %v5362, %v5354
    %v7035 = vpack.c.b16 %v5363, %v5355
    %v7036 = vpack.c.b16 %v5364, %v5356
    %v7037 = vpack.c.b16 %v5365, %v5357
    %v7038 = vpack.c.b16 %v5366, %v5358
    %v7039 = vpack.c.b16 %v5367, %v5359
    %v7040 = vpack.c.b16 %v5376, %v5368
    %v7041 = vpack.c.b16 %v5377, %v5369
    %v7042 = vpack.c.b16 %v5378, %v5370
    %v7043 = vpack.c.b16 %v5379, %v5371
    %v7044 = vpack.c.b16 %v5380, %v5372
    %v7045 = vpack.c.b16 %v5381, %v5373
    %v7046 = vpack.c.b16 %v5382, %v5374
    %v7047 = vpack.c.b16 %v5383, %v5375
    %v7048 = vpack.c.b16 %v5392, %v5384
    %v7049 = vpack.c.b16 %v5393, %v5385
    %v7050 = vpack.c.b16 %v5394, %v5386
    %v7051 = vpack.c.b16 %v5395, %v5387
    %v7052 = vpack.c.b16 %v5396, %v5388
    %v7053 = vpack.c.b16 %v5397, %v5389
    %v7054 = vpack.c.b16 %v5398, %v5390
    %v7055 = vpack.c.b16 %v5399, %v5391
    %v7056 = vpack.c.b16 %v5408, %v5400
    %v7057 = vpack.c.b16 %v5409, %v5401
    %v7058 = vpack.c.b16 %v5410, %v5402
    %v7059 = vpack.c.b16 %v5411, %v5403
    %v7060 = vpack.c.b16 %v5412, %v5404
    %v7061 = vpack.c.b16 %v5413, %v5405
    %v7062 = vpack.c.b16 %v5414, %v5406
    %v7063 = vpack.c.b16 %v5415, %v5407
    %v7064 = vpack.c.b16 %v5424, %v5416
    %v7065 = vpack.c.b16 %v5425, %v5417
    %v7066 = vpack.c.b16 %v5426, %v5418
    %v7067 = vpack.c.b16 %v5427, %v5419
    %v7068 = vpack.c.b16 %v5428, %v5420
    %v7069 = vpack.c.b16 %v5429, %v5421
    %v7070 = vpack.c.b16 %v5430, %v5422
    %v7071 = vpack.c.b16 %v5431, %v5423
    %v7072 = vpack.c.b16 %v5440, %v5432
    %v7073 = vpack.c.b16 %v5441, %v5433
    %v7074 = vpack.c.b16 %v5442, %v5434
    %v7075 = vpack.c.b16 %v5443, %v5435
    %v7076 = vpack.c.b16 %v5444, %v5436
    %v7077 = vpack.c.b16 %v5445, %v5437
    %v7078 = vpack.c.b16 %v5446, %v5438
    %v7079 = vpack.c.b16 %v5447, %v5439
    %v7080 = vpack.c.b16 %v5456, %v5448
    %v7081 = vpack.c.b16 %v5457, %v5449
    %v7082 = vpack.c.b16 %v5458, %v5450
    %v7083 = vpack.c.b16 %v5459, %v5451
    %v7084 = vpack.c.b16 %v5460, %v5452
    %v7085 = vpack.c.b16 %v5461, %v5453
    %v7086 = vpack.c.b16 %v5462, %v5454
    %v7087 = vpack.c.b16 %v5463, %v5455
    %v7088 = vpack.c.b16 %v5472, %v5464
    %v7089 = vpack.c.b16 %v5473, %v5465
    %v7090 = vpack.c.b16 %v5474, %v5466
    %v7091 = vpack.c.b16 %v5475, %v5467
    %v7092 = vpack.c.b16 %v5476, %v5468
    %v7093 = vpack.c.b16 %v5477, %v5469
    %v7094 = vpack.c.b16 %v5478, %v5470
    %v7095 = vpack.c.b16 %v5479, %v5471
    %v7096 = vpack.c.b16 %v5488, %v5480
    %v7097 = vpack.c.b16 %v5489, %v5481
    %v7098 = vpack.c.b16 %v5490, %v5482
    %v7099 = vpack.c.b16 %v5491, %v5483
    %v7100 = vpack.c.b16 %v5492, %v5484
    %v7101 = vpack.c.b16 %v5493, %v5485
    %v7102 = vpack.c.b16 %v5494, %v5486
    %v7103 = vpack.c.b16 %v5495, %v5487
    %v7104 = vpack.c.b16 %v5504, %v5496
    %v7105 = vpack.c.b16 %v5505, %v5497
    %v7106 = vpack.c.b16 %v5506, %v5498
    %v7107 = vpack.c.b16 %v5507, %v5499
    %v7108 = vpack.c.b16 %v5508, %v5500
    %v7109 = vpack.c.b16 %v5509, %v5501
    %v7110 = vpack.c.b16 %v5510, %v5502
    %v7111 = vpack.c.b16 %v5511, %v5503
    %v7112 = vpack.c.b16 %v5520, %v5512
    %v7113 = vpack.c.b16 %v5521, %v5513
    %v7114 = vpack.c.b16 %v5522, %v5514
    %v7115 = vpack.c.b16 %v5523, %v5515
    %v7116 = vpack.c.b16 %v5524, %v5516
    %v7117 = vpack.c.b16 %v5525, %v5517
    %v7118 = vpack.c.b16 %v5526, %v5518
    %v7119 = vpack.c.b16 %v5527, %v5519
    %v7120 = vpack.c.b16 %v5536, %v5528
    %v7121 = vpack.c.b16 %v5537, %v5529
    %v7122 = vpack.c.b16 %v5538, %v5530
    %v7123 = vpack.c.b16 %v5539, %v5531
    %v7124 = vpack.c.b16 %v5540, %v5532
    %v7125 = vpack.c.b16 %v5541, %v5533
    %v7126 = vpack.c.b16 %v5542, %v5534
    %v7127 = vpack.c.b16 %v5543, %v5535
    %v7128 = vpack.c.b16 %v5552, %v5544
    %v7129 = vpack.c.b16 %v5553, %v5545
    %v7130 = vpack.c.b16 %v5554, %v5546
    %v7131 = vpack.c.b16 %v5555, %v5547
    %v7132 = vpack.c.b16 %v5556, %v5548
    %v7133 = vpack.c.b16 %v5557, %v5549
    %v7134 = vpack.c.b16 %v5558, %v5550
    %v7135 = vpack.c.b16 %v5559, %v5551
    %v7136 = vpack.c.b16 %v5568, %v5560
    %v7137 = vpack.c.b16 %v5569, %v5561
    %v7138 = vpack.c.b16 %v5570, %v5562
    %v7139 = vpack.c.b16 %v5571, %v5563
    %v7140 = vpack.c.b16 %v5572, %v5564
    %v7141 = vpack.c.b16 %v5573, %v5565
    %v7142 = vpack.c.b16 %v5574, %v5566
    %v7143 = vpack.c.b16 %v5575, %v5567
    %v7144 = vpack.c.b16 %v5584, %v5576
    %v7145 = vpack.c.b16 %v5585, %v5577
    %v7146 = vpack.c.b16 %v5586, %v5578
    %v7147 = vpack.c.b16 %v5587, %v5579
    %v7148 = vpack.c.b16 %v5588, %v5580
    %v7149 = vpack.c.b16 %v5589, %v5581
    %v7150 = vpack.c.b16 %v5590, %v5582
    %v7151 = vpack.c.b16 %v5591, %v5583
    %v7152 = vpack.c.b16 %v5600, %v5592
    %v7153 = vpack.c.b16 %v5601, %v5593
    %v7154 = vpack.c.b16 %v5602, %v5594
    %v7155 = vpack.c.b16 %v5603, %v5595
    %v7156 = vpack.c.b16 %v5604, %v5596
    %v7157 = vpack.c.b16 %v5605, %v5597
    %v7158 = vpack.c.b16 %v5606, %v5598
    %v7159 = vpack.c.b16 %v5607, %v5599
    %v7160 = vpack.c.b16 %v5616, %v5608
    %v7161 = vpack.c.b16 %v5617, %v5609
    %v7162 = vpack.c.b16 %v5618, %v5610
    %v7163 = vpack.c.b16 %v5619, %v5611
    %v7164 = vpack.c.b16 %v5620, %v5612
    %v7165 = vpack.c.b16 %v5621, %v5613
    %v7166 = vpack.c.b16 %v5622, %v5614
    %v7167 = vpack.c.b16 %v5623, %v5615
    %v7168 = vpack.c.b16 %v5632, %v5624
    %v7169 = vpack.c.b16 %v5633, %v5625
    %v7170 = vpack.c.b16 %v5634, %v5626
    %v7171 = vpack.c.b16 %v5635, %v5627
    %v7172 = vpack.c.b16 %v5636, %v5628
    %v7173 = vpack.c.b16 %v5637, %v5629
    %v7174 = vpack.c.b16 %v5638, %v5630
    %v7175 = vpack.c.b16 %v5639, %v5631
    %v7176 = vpack.c.b16 %v5648, %v5640
    %v7177 = vpack.c.b16 %v5649, %v5641
    %v7178 = vpack.c.b16 %v5650, %v5642
    %v7179 = vpack.c.b16 %v5651, %v5643
    %v7180 = vpack.c.b16 %v5652, %v5644
    %v7181 = vpack.c.b16 %v5653, %v5645
    %v7182 = vpack.c.b16 %v5654, %v5646
    %v7183 = vpack.c.b16 %v5655, %v5647
    %v7184 = vpack.c.b16 %v5664, %v5656
    %v7185 = vpack.c.b16 %v5665, %v5657
    %v7186 = vpack.c.b16 %v5666, %v5658
    %v7187 = vpack.c.b16 %v5667, %v5659
    %v7188 = vpack.c.b16 %v5668, %v5660
    %v7189 = vpack.c.b16 %v5669, %v5661
    %v7190 = vpack.c.b16 %v5670, %v5662
    %v7191 = vpack.c.b16 %v5671, %v5663
    %v7192 = vpack.c.b16 %v5680, %v5672
    %v7193 = vpack.c.b16 %v5681, %v5673
    %v7194 = vpack.c.b16 %v5682, %v5674
    %v7195 = vpack.c.b16 %v5683, %v5675
    %v7196 = vpack.c.b16 %v5684, %v5676
    %v7197 = vpack.c.b16 %v5685, %v5677
    %v7198 = vpack.c.b16 %v5686, %v5678
    %v7199 = vpack.c.b16 %v5687, %v5679
    %v7200 = vpack.c.b16 %v5696, %v5688
    %v7201 = vpack.c.b16 %v5697, %v5689
    %v7202 = vpack.c.b16 %v5698, %v5690
    %v7203 = vpack.c.b16 %v5699, %v5691
    %v7204 = vpack.c.b16 %v5700, %v5692
    %v7205 = vpack.c.b16 %v5701, %v5693
    %v7206 = vpack.c.b16 %v5702, %v5694
    %v7207 = vpack.c.b16 %v5703, %v5695
    %v7208 = vpack.c.b16 %v5712, %v5704
    %v7209 = vpack.c.b16 %v5713, %v5705
    %v7210 = vpack.c.b16 %v5714, %v5706
    %v7211 = vpack.c.b16 %v5715, %v5707
    %v7212 = vpack.c.b16 %v5716, %v5708
    %v7213 = vpack.c.b16 %v5717, %v5709
    %v7214 = vpack.c.b16 %v5718, %v5710
    %v7215 = vpack.c.b16 %v5719, %v5711
    %v7216 = vpack.c.b16 %v5728, %v5720
    %v7217 = vpack.c.b16 %v5729, %v5721
    %v7218 = vpack.c.b16 %v5730, %v5722
    %v7219 = vpack.c.b16 %v5731, %v5723
    %v7220 = vpack.c.b16 %v5732, %v5724
    %v7221 = vpack.c.b16 %v5733, %v5725
    %v7222 = vpack.c.b16 %v5734, %v5726
    %v7223 = vpack.c.b16 %v5735, %v5727
    %v7224 = vpack.c.b16 %v5744, %v5736
    %v7225 = vpack.c.b16 %v5745, %v5737
    %v7226 = vpack.c.b16 %v5746, %v5738
    %v7227 = vpack.c.b16 %v5747, %v5739
    %v7228 = vpack.c.b16 %v5748, %v5740
    %v7229 = vpack.c.b16 %v5749, %v5741
    %v7230 = vpack.c.b16 %v5750, %v5742
    %v7231 = vpack.c.b16 %v5751, %v5743
    %v7232 = vpack.c.b16 %v5760, %v5752
    %v7233 = vpack.c.b16 %v5761, %v5753
    %v7234 = vpack.c.b16 %v5762, %v5754
    %v7235 = vpack.c.b16 %v5763, %v5755
    %v7236 = vpack.c.b16 %v5764, %v5756
    %v7237 = vpack.c.b16 %v5765, %v5757
    %v7238 = vpack.c.b16 %v5766, %v5758
    %v7239 = vpack.c.b16 %v5767, %v5759
    %v7240 = vpack.c.b16 %v5776, %v5768
    %v7241 = vpack.c.b16 %v5777, %v5769
    %v7242 = vpack.c.b16 %v5778, %v5770
    %v7243 = vpack.c.b16 %v5779, %v5771
    %v7244 = vpack.c.b16 %v5780, %v5772
    %v7245 = vpack.c.b16 %v5781, %v5773
    %v7246 = vpack.c.b16 %v5782, %v5774
    %v7247 = vpack.c.b16 %v5783, %v5775
    %v7248 = vpack.c.b16 %v5792, %v5784
    %v7249 = vpack.c.b16 %v5793, %v5785
    %v7250 = vpack.c.b16 %v5794, %v5786
    %v7251 = vpack.c.b16 %v5795, %v5787
    %v7252 = vpack.c.b16 %v5796, %v5788
    %v7253 = vpack.c.b16 %v5797, %v5789
    %v7254 = vpack.c.b16 %v5798, %v5790
    %v7255 = vpack.c.b16 %v5799, %v5791
    %v7256 = vpack.c.b16 %v5808, %v5800
    %v7257 = vpack.c.b16 %v5809, %v5801
    %v7258 = vpack.c.b16 %v5810, %v5802
    %v7259 = vpack.c.b16 %v5811, %v5803
    %v7260 = vpack.c.b16 %v5812, %v5804
    %v7261 = vpack.c.b16 %v5813, %v5805
    %v7262 = vpack.c.b16 %v5814, %v5806
    %v7263 = vpack.c.b16 %v5815, %v5807
    %v7264 = vpack.c.b16 %v5824, %v5816
    %v7265 = vpack.c.b16 %v5825, %v5817
    %v7266 = vpack.c.b16 %v5826, %v5818
    %v7267 = vpack.c.b16 %v5827, %v5819
    %v7268 = vpack.c.b16 %v5828, %v5820
    %v7269 = vpack.c.b16 %v5829, %v5821
    %v7270 = vpack.c.b16 %v5830, %v5822
    %v7271 = vpack.c.b16 %v5831, %v5823
    %v7272 = vpack.c.b16 %v5840, %v5832
    %v7273 = vpack.c.b16 %v5841, %v5833
    %v7274 = vpack.c.b16 %v5842, %v5834
    %v7275 = vpack.c.b16 %v5843, %v5835
    %v7276 = vpack.c.b16 %v5844, %v5836
    %v7277 = vpack.c.b16 %v5845, %v5837
    %v7278 = vpack.c.b16 %v5846, %v5838
    %v7279 = vpack.c.b16 %v5847, %v5839
    %v7280 = vpack.c.b16 %v5856, %v5848
    %v7281 = vpack.c.b16 %v5857, %v5849
    %v7282 = vpack.c.b16 %v5858, %v5850
    %v7283 = vpack.c.b16 %v5859, %v5851
    %v7284 = vpack.c.b16 %v5860, %v5852
    %v7285 = vpack.c.b16 %v5861, %v5853
    %v7286 = vpack.c.b16 %v5862, %v5854
    %v7287 = vpack.c.b16 %v5863, %v5855
    %v7288 = vpack.c.b16 %v5872, %v5864
    %v7289 = vpack.c.b16 %v5873, %v5865
    %v7290 = vpack.c.b16 %v5874, %v5866
    %v7291 = vpack.c.b16 %v5875, %v5867
    %v7292 = vpack.c.b16 %v5876, %v5868
    %v7293 = vpack.c.b16 %v5877, %v5869
    %v7294 = vpack.c.b16 %v5878, %v5870
    %v7295 = vpack.c.b16 %v5879, %v5871
    %v7296 = vpack.c.b16 %v5888, %v5880
    %v7297 = vpack.c.b16 %v5889, %v5881
    %v7298 = vpack.c.b16 %v5890, %v5882
    %v7299 = vpack.c.b16 %v5891, %v5883
    %v7300 = vpack.c.b16 %v5892, %v5884
    %v7301 = vpack.c.b16 %v5893, %v5885
    %v7302 = vpack.c.b16 %v5894, %v5886
    %v7303 = vpack.c.b16 %v5895, %v5887
    %v7304 = vpack.c.b16 %v5904, %v5896
    %v7305 = vpack.c.b16 %v5905, %v5897
    %v7306 = vpack.c.b16 %v5906, %v5898
    %v7307 = vpack.c.b16 %v5907, %v5899
    %v7308 = vpack.c.b16 %v5908, %v5900
    %v7309 = vpack.c.b16 %v5909, %v5901
    %v7310 = vpack.c.b16 %v5910, %v5902
    %v7311 = vpack.c.b16 %v5911, %v5903
    %v7312 = vpack.c.b16 %v5920, %v5912
    %v7313 = vpack.c.b16 %v5921, %v5913
    %v7314 = vpack.c.b16 %v5922, %v5914
    %v7315 = vpack.c.b16 %v5923, %v5915
    %v7316 = vpack.c.b16 %v5924, %v5916
    %v7317 = vpack.c.b16 %v5925, %v5917
    %v7318 = vpack.c.b16 %v5926, %v5918
    %v7319 = vpack.c.b16 %v5927, %v5919
    %v7320 = vpack.c.b16 %v5936, %v5928
    %v7321 = vpack.c.b16 %v5937, %v5929
    %v7322 = vpack.c.b16 %v5938, %v5930
    %v7323 = vpack.c.b16 %v5939, %v5931
    %v7324 = vpack.c.b16 %v5940, %v5932
    %v7325 = vpack.c.b16 %v5941, %v5933
    %v7326 = vpack.c.b16 %v5942, %v5934
    %v7327 = vpack.c.b16 %v5943, %v5935
    %v7328 = vpack.c.b16 %v5952, %v5944
    %v7329 = vpack.c.b16 %v5953, %v5945
    %v7330 = vpack.c.b16 %v5954, %v5946
    %v7331 = vpack.c.b16 %v5955, %v5947
    %v7332 = vpack.c.b16 %v5956, %v5948
    %v7333 = vpack.c.b16 %v5957, %v5949
    %v7334 = vpack.c.b16 %v5958, %v5950
    %v7335 = vpack.c.b16 %v5959, %v5951
    %v7336 = vpack.c.b16 %v5968, %v5960
    %v7337 = vpack.c.b16 %v5969, %v5961
    %v7338 = vpack.c.b16 %v5970, %v5962
    %v7339 = vpack.c.b16 %v5971, %v5963
    %v7340 = vpack.c.b16 %v5972, %v5964
    %v7341 = vpack.c.b16 %v5973, %v5965
    %v7342 = vpack.c.b16 %v5974, %v5966
    %v7343 = vpack.c.b16 %v5975, %v5967
    %v7344 = vpack.c.b16 %v5984, %v5976
    %v7345 = vpack.c.b16 %v5985, %v5977
    %v7346 = vpack.c.b16 %v5986, %v5978
    %v7347 = vpack.c.b16 %v5987, %v5979
    %v7348 = vpack.c.b16 %v5988, %v5980
    %v7349 = vpack.c.b16 %v5989, %v5981
    %v7350 = vpack.c.b16 %v5990, %v5982
    %v7351 = vpack.c.b16 %v5991, %v5983
    %v7352 = vpack.c.b16 %v6000, %v5992
    %v7353 = vpack.c.b16 %v6001, %v5993
    %v7354 = vpack.c.b16 %v6002, %v5994
    %v7355 = vpack.c.b16 %v6003, %v5995
    %v7356 = vpack.c.b16 %v6004, %v5996
    %v7357 = vpack.c.b16 %v6005, %v5997
    %v7358 = vpack.c.b16 %v6006, %v5998
    %v7359 = vpack.c.b16 %v6007, %v5999
    %v7360 = vpack.c.b16 %v6016, %v6008
    %v7361 = vpack.c.b16 %v6017, %v6009
    %v7362 = vpack.c.b16 %v6018, %v6010
    %v7363 = vpack.c.b16 %v6019, %v6011
    %v7364 = vpack.c.b16 %v6020, %v6012
    %v7365 = vpack.c.b16 %v6021, %v6013
    %v7366 = vpack.c.b16 %v6022, %v6014
    %v7367 = vpack.c.b16 %v6023, %v6015
    %v7368 = vpack.c.b16 %v6032, %v6024
    %v7369 = vpack.c.b16 %v6033, %v6025
    %v7370 = vpack.c.b16 %v6034, %v6026
    %v7371 = vpack.c.b16 %v6035, %v6027
    %v7372 = vpack.c.b16 %v6036, %v6028
    %v7373 = vpack.c.b16 %v6037, %v6029
    %v7374 = vpack.c.b16 %v6038, %v6030
    %v7375 = vpack.c.b16 %v6039, %v6031
    %v7376 = vpack.c.b16 %v6048, %v6040
    %v7377 = vpack.c.b16 %v6049, %v6041
    %v7378 = vpack.c.b16 %v6050, %v6042
    %v7379 = vpack.c.b16 %v6051, %v6043
    %v7380 = vpack.c.b16 %v6052, %v6044
    %v7381 = vpack.c.b16 %v6053, %v6045
    %v7382 = vpack.c.b16 %v6054, %v6046
    %v7383 = vpack.c.b16 %v6055, %v6047
    %v7384 = vpack.c.b16 %v6064, %v6056
    %v7385 = vpack.c.b16 %v6065, %v6057
    %v7386 = vpack.c.b16 %v6066, %v6058
    %v7387 = vpack.c.b16 %v6067, %v6059
    %v7388 = vpack.c.b16 %v6068, %v6060
    %v7389 = vpack.c.b16 %v6069, %v6061
    %v7390 = vpack.c.b16 %v6070, %v6062
    %v7391 = vpack.c.b16 %v6071, %v6063
    %v7392 = vpack.c.b16 %v6080, %v6072
    %v7393 = vpack.c.b16 %v6081, %v6073
    %v7394 = vpack.c.b16 %v6082, %v6074
    %v7395 = vpack.c.b16 %v6083, %v6075
    %v7396 = vpack.c.b16 %v6084, %v6076
    %v7397 = vpack.c.b16 %v6085, %v6077
    %v7398 = vpack.c.b16 %v6086, %v6078
    %v7399 = vpack.c.b16 %v6087, %v6079
    %v7400 = vpack.c.b16 %v6096, %v6088
    %v7401 = vpack.c.b16 %v6097, %v6089
    %v7402 = vpack.c.b16 %v6098, %v6090
    %v7403 = vpack.c.b16 %v6099, %v6091
    %v7404 = vpack.c.b16 %v6100, %v6092
    %v7405 = vpack.c.b16 %v6101, %v6093
    %v7406 = vpack.c.b16 %v6102, %v6094
    %v7407 = vpack.c.b16 %v6103, %v6095
    %v7408 = vpack.c.b16 %v6112, %v6104
    %v7409 = vpack.c.b16 %v6113, %v6105
    %v7410 = vpack.c.b16 %v6114, %v6106
    %v7411 = vpack.c.b16 %v6115, %v6107
    %v7412 = vpack.c.b16 %v6116, %v6108
    %v7413 = vpack.c.b16 %v6117, %v6109
    %v7414 = vpack.c.b16 %v6118, %v6110
    %v7415 = vpack.c.b16 %v6119, %v6111
    %v7416 = vpack.c.b16 %v6128, %v6120
    %v7417 = vpack.c.b16 %v6129, %v6121
    %v7418 = vpack.c.b16 %v6130, %v6122
    %v7419 = vpack.c.b16 %v6131, %v6123
    %v7420 = vpack.c.b16 %v6132, %v6124
    %v7421 = vpack.c.b16 %v6133, %v6125
    %v7422 = vpack.c.b16 %v6134, %v6126
    %v7423 = vpack.c.b16 %v6135, %v6127
    %v7424 = vpack.c.b16 %v6144, %v6136
    %v7425 = vpack.c.b16 %v6145, %v6137
    %v7426 = vpack.c.b16 %v6146, %v6138
    %v7427 = vpack.c.b16 %v6147, %v6139
    %v7428 = vpack.c.b16 %v6148, %v6140
    %v7429 = vpack.c.b16 %v6149, %v6141
    %v7430 = vpack.c.b16 %v6150, %v6142
    %v7431 = vpack.c.b16 %v6151, %v6143
    %8712 = vmatpush.bf16.msra.mxu0 %v6208
    %8713 = vmatpush.bf16.msra.mxu0 %v6200
    %8714 = vmatpush.bf16.msra.mxu0 %v6192
    %8715 = vmatpush.bf16.msra.mxu0 %v6184
    %8716 = vmatpush.bf16.msra.mxu0 %v6176
    %8717 = vmatpush.bf16.msra.mxu0 %v6168
    %8718 = vmatpush.bf16.msra.mxu0 %v6160
    %8719 = vmatpush.bf16.msra.mxu0 %v6152
    %8720 = vmatmul.bf16.gmra.mxu0 %v290
    %v8721 = vpop.f32.mrf.mxu0
    %v8722 = vadd.f32 0.0, %v8721
    %v8723 = vpop.f32.mrf.mxu0
    %8724 = vdwg.mxu0
    %8725 = vmatpush.bf16.msra.mxu0 %v6272
    %8726 = vmatpush.bf16.msra.mxu0 %v6264
    %8727 = vmatpush.bf16.msra.mxu0 %v6256
    %8728 = vmatpush.bf16.msra.mxu0 %v6248
    %8729 = vmatpush.bf16.msra.mxu0 %v6240
    %8730 = vmatpush.bf16.msra.mxu0 %v6232
    %8731 = vmatpush.bf16.msra.mxu0 %v6224
    %8732 = vmatpush.bf16.msra.mxu0 %v6216
    %8733 = vmatmul.bf16.gmra.mxu0 %v291
    %v8734 = vpop.f32.mrf.mxu0
    %v8735 = vadd.f32 %v8722, %v8734
    %v8736 = vpop.f32.mrf.mxu0
    %8737 = vdwg.mxu0
    %8738 = vmatpush.bf16.msra.mxu0 %v6336
    %8739 = vmatpush.bf16.msra.mxu0 %v6328
    %8740 = vmatpush.bf16.msra.mxu0 %v6320
    %8741 = vmatpush.bf16.msra.mxu0 %v6312
    %8742 = vmatpush.bf16.msra.mxu0 %v6304
    %8743 = vmatpush.bf16.msra.mxu0 %v6296
    %8744 = vmatpush.bf16.msra.mxu0 %v6288
    %8745 = vmatpush.bf16.msra.mxu0 %v6280
    %8746 = vmatmul.bf16.gmra.mxu0 %v292
    %v8747 = vpop.f32.mrf.mxu0
    %v8748 = vadd.f32 %v8735, %v8747
    %v8749 = vpop.f32.mrf.mxu0
    %8750 = vdwg.mxu0
    %8751 = vmatpush.bf16.msra.mxu0 %v6400
    %8752 = vmatpush.bf16.msra.mxu0 %v6392
    %8753 = vmatpush.bf16.msra.mxu0 %v6384
    %8754 = vmatpush.bf16.msra.mxu0 %v6376
    %8755 = vmatpush.bf16.msra.mxu0 %v6368
    %8756 = vmatpush.bf16.msra.mxu0 %v6360
    %8757 = vmatpush.bf16.msra.mxu0 %v6352
    %8758 = vmatpush.bf16.msra.mxu0 %v6344
    %8759 = vmatmul.bf16.gmra.mxu0 %v293
    %v8760 = vpop.f32.mrf.mxu0
    %v8761 = vadd.f32 %v8748, %v8760
    %v8762 = vpop.f32.mrf.mxu0
    %8763 = vdwg.mxu0
    %8764 = vmatpush.bf16.msra.mxu0 %v6464
    %8765 = vmatpush.bf16.msra.mxu0 %v6456
    %8766 = vmatpush.bf16.msra.mxu0 %v6448
    %8767 = vmatpush.bf16.msra.mxu0 %v6440
    %8768 = vmatpush.bf16.msra.mxu0 %v6432
    %8769 = vmatpush.bf16.msra.mxu0 %v6424
    %8770 = vmatpush.bf16.msra.mxu0 %v6416
    %8771 = vmatpush.bf16.msra.mxu0 %v6408
    %8772 = vmatmul.bf16.gmra.mxu0 %v294
    %v8773 = vpop.f32.mrf.mxu0
    %v8774 = vadd.f32 %v8761, %v8773
    %v8775 = vpop.f32.mrf.mxu0
    %8776 = vdwg.mxu0
    %8777 = vmatpush.bf16.msra.mxu0 %v6528
    %8778 = vmatpush.bf16.msra.mxu0 %v6520
    %8779 = vmatpush.bf16.msra.mxu0 %v6512
    %8780 = vmatpush.bf16.msra.mxu0 %v6504
    %8781 = vmatpush.bf16.msra.mxu0 %v6496
    %8782 = vmatpush.bf16.msra.mxu0 %v6488
    %8783 = vmatpush.bf16.msra.mxu0 %v6480
    %8784 = vmatpush.bf16.msra.mxu0 %v6472
    %8785 = vmatmul.bf16.gmra.mxu0 %v295
    %v8786 = vpop.f32.mrf.mxu0
    %v8787 = vadd.f32 %v8774, %v8786
    %v8788 = vpop.f32.mrf.mxu0
    %8789 = vdwg.mxu0
    %8790 = vmatpush.bf16.msra.mxu0 %v6592
    %8791 = vmatpush.bf16.msra.mxu0 %v6584
    %8792 = vmatpush.bf16.msra.mxu0 %v6576
    %8793 = vmatpush.bf16.msra.mxu0 %v6568
    %8794 = vmatpush.bf16.msra.mxu0 %v6560
    %8795 = vmatpush.bf16.msra.mxu0 %v6552
    %8796 = vmatpush.bf16.msra.mxu0 %v6544
    %8797 = vmatpush.bf16.msra.mxu0 %v6536
    %8798 = vmatmul.bf16.gmra.mxu0 %v296
    %v8799 = vpop.f32.mrf.mxu0
    %v8800 = vadd.f32 %v8787, %v8799
    %v8801 = vpop.f32.mrf.mxu0
    %8802 = vdwg.mxu0
    %8803 = vmatpush.bf16.msra.mxu0 %v6656
    %8804 = vmatpush.bf16.msra.mxu0 %v6648
    %8805 = vmatpush.bf16.msra.mxu0 %v6640
    %8806 = vmatpush.bf16.msra.mxu0 %v6632
    %8807 = vmatpush.bf16.msra.mxu0 %v6624
    %8808 = vmatpush.bf16.msra.mxu0 %v6616
    %8809 = vmatpush.bf16.msra.mxu0 %v6608
    %8810 = vmatpush.bf16.msra.mxu0 %v6600
    %8811 = vmatmul.bf16.gmra.mxu0 %v297
    %v8812 = vpop.f32.mrf.mxu0
    %v8813 = vadd.f32 %v8800, %v8812
    %v8814 = vpop.f32.mrf.mxu0
    %8815 = vdwg.mxu0
    %8816 = vmatpush.bf16.msra.mxu0 %v6720
    %8817 = vmatpush.bf16.msra.mxu0 %v6712
    %8818 = vmatpush.bf16.msra.mxu0 %v6704
    %8819 = vmatpush.bf16.msra.mxu0 %v6696
    %8820 = vmatpush.bf16.msra.mxu0 %v6688
    %8821 = vmatpush.bf16.msra.mxu0 %v6680
    %8822 = vmatpush.bf16.msra.mxu0 %v6672
    %8823 = vmatpush.bf16.msra.mxu0 %v6664
    %8824 = vmatmul.bf16.gmra.mxu0 %v298
    %v8825 = vpop.f32.mrf.mxu0
    %v8826 = vadd.f32 %v8813, %v8825
    %v8827 = vpop.f32.mrf.mxu0
    %8828 = vdwg.mxu0
    %8829 = vmatpush.bf16.msra.mxu0 %v6784
    %8830 = vmatpush.bf16.msra.mxu0 %v6776
    %8831 = vmatpush.bf16.msra.mxu0 %v6768
    %8832 = vmatpush.bf16.msra.mxu0 %v6760
    %8833 = vmatpush.bf16.msra.mxu0 %v6752
    %8834 = vmatpush.bf16.msra.mxu0 %v6744
    %8835 = vmatpush.bf16.msra.mxu0 %v6736
    %8836 = vmatpush.bf16.msra.mxu0 %v6728
    %8837 = vmatmul.bf16.gmra.mxu0 %v299
    %v8838 = vpop.f32.mrf.mxu0
    %v8839 = vadd.f32 %v8826, %v8838
    %v8840 = vpop.f32.mrf.mxu0
    %8841 = vdwg.mxu0
    %8842 = vmatpush.bf16.msra.mxu0 %v6848
    %8843 = vmatpush.bf16.msra.mxu0 %v6840
    %8844 = vmatpush.bf16.msra.mxu0 %v6832
    %8845 = vmatpush.bf16.msra.mxu0 %v6824
    %8846 = vmatpush.bf16.msra.mxu0 %v6816
    %8847 = vmatpush.bf16.msra.mxu0 %v6808
    %8848 = vmatpush.bf16.msra.mxu0 %v6800
    %8849 = vmatpush.bf16.msra.mxu0 %v6792
    %8850 = vmatmul.bf16.gmra.mxu0 %v300
    %v8851 = vpop.f32.mrf.mxu0
    %v8852 = vadd.f32 %v8839, %v8851
    %v8853 = vpop.f32.mrf.mxu0
    %8854 = vdwg.mxu0
    %8855 = vmatpush.bf16.msra.mxu0 %v6912
    %8856 = vmatpush.bf16.msra.mxu0 %v6904
    %8857 = vmatpush.bf16.msra.mxu0 %v6896
    %8858 = vmatpush.bf16.msra.mxu0 %v6888
    %8859 = vmatpush.bf16.msra.mxu0 %v6880
    %8860 = vmatpush.bf16.msra.mxu0 %v6872
    %8861 = vmatpush.bf16.msra.mxu0 %v6864
    %8862 = vmatpush.bf16.msra.mxu0 %v6856
    %8863 = vmatmul.bf16.gmra.mxu0 %v301
    %v8864 = vpop.f32.mrf.mxu0
    %v8865 = vadd.f32 %v8852, %v8864
    %v8866 = vpop.f32.mrf.mxu0
    %8867 = vdwg.mxu0
    %8868 = vmatpush.bf16.msra.mxu0 %v6976
    %8869 = vmatpush.bf16.msra.mxu0 %v6968
    %8870 = vmatpush.bf16.msra.mxu0 %v6960
    %8871 = vmatpush.bf16.msra.mxu0 %v6952
    %8872 = vmatpush.bf16.msra.mxu0 %v6944
    %8873 = vmatpush.bf16.msra.mxu0 %v6936
    %8874 = vmatpush.bf16.msra.mxu0 %v6928
    %8875 = vmatpush.bf16.msra.mxu0 %v6920
    %8876 = vmatmul.bf16.gmra.mxu0 %v302
    %v8877 = vpop.f32.mrf.mxu0
    %v8878 = vadd.f32 %v8865, %v8877
    %v8879 = vpop.f32.mrf.mxu0
    %8880 = vdwg.mxu0
    %8881 = vmatpush.bf16.msra.mxu0 %v7040
    %8882 = vmatpush.bf16.msra.mxu0 %v7032
    %8883 = vmatpush.bf16.msra.mxu0 %v7024
    %8884 = vmatpush.bf16.msra.mxu0 %v7016
    %8885 = vmatpush.bf16.msra.mxu0 %v7008
    %8886 = vmatpush.bf16.msra.mxu0 %v7000
    %8887 = vmatpush.bf16.msra.mxu0 %v6992
    %8888 = vmatpush.bf16.msra.mxu0 %v6984
    %8889 = vmatmul.bf16.gmra.mxu0 %v303
    %v8890 = vpop.f32.mrf.mxu0
    %v8891 = vadd.f32 %v8878, %v8890
    %v8892 = vpop.f32.mrf.mxu0
    %8893 = vdwg.mxu0
    %8894 = vmatpush.bf16.msra.mxu0 %v7104
    %8895 = vmatpush.bf16.msra.mxu0 %v7096
    %8896 = vmatpush.bf16.msra.mxu0 %v7088
    %8897 = vmatpush.bf16.msra.mxu0 %v7080
    %8898 = vmatpush.bf16.msra.mxu0 %v7072
    %8899 = vmatpush.bf16.msra.mxu0 %v7064
    %8900 = vmatpush.bf16.msra.mxu0 %v7056
    %8901 = vmatpush.bf16.msra.mxu0 %v7048
    %8902 = vmatmul.bf16.gmra.mxu0 %v304
    %v8903 = vpop.f32.mrf.mxu0
    %v8904 = vadd.f32 %v8891, %v8903
    %v8905 = vpop.f32.mrf.mxu0
    %8906 = vdwg.mxu0
    %8907 = vmatpush.bf16.msra.mxu0 %v7168
    %8908 = vmatpush.bf16.msra.mxu0 %v7160
    %8909 = vmatpush.bf16.msra.mxu0 %v7152
    %8910 = vmatpush.bf16.msra.mxu0 %v7144
    %8911 = vmatpush.bf16.msra.mxu0 %v7136
    %8912 = vmatpush.bf16.msra.mxu0 %v7128
    %8913 = vmatpush.bf16.msra.mxu0 %v7120
    %8914 = vmatpush.bf16.msra.mxu0 %v7112
    %8915 = vmatmul.bf16.gmra.mxu0 %v305
    %v8916 = vpop.f32.mrf.mxu0
    %v8917 = vadd.f32 %v8904, %v8916
    %v8918 = vpop.f32.mrf.mxu0
    %8919 = vdwg.mxu0
    %8920 = vmatpush.bf16.msra.mxu0 %v7232
    %8921 = vmatpush.bf16.msra.mxu0 %v7224
    %8922 = vmatpush.bf16.msra.mxu0 %v7216
    %8923 = vmatpush.bf16.msra.mxu0 %v7208
    %8924 = vmatpush.bf16.msra.mxu0 %v7200
    %8925 = vmatpush.bf16.msra.mxu0 %v7192
    %8926 = vmatpush.bf16.msra.mxu0 %v7184
    %8927 = vmatpush.bf16.msra.mxu0 %v7176
    %8928 = vmatmul.bf16.gmra.mxu0 %v306
    %v8929 = vpop.f32.mrf.mxu0
    %v8930 = vadd.f32 %v8917, %v8929
    %v8931 = vpop.f32.mrf.mxu0
    %8932 = vdwg.mxu0
    %8933 = vmatpush.bf16.msra.mxu0 %v7296
    %8934 = vmatpush.bf16.msra.mxu0 %v7288
    %8935 = vmatpush.bf16.msra.mxu0 %v7280
    %8936 = vmatpush.bf16.msra.mxu0 %v7272
    %8937 = vmatpush.bf16.msra.mxu0 %v7264
    %8938 = vmatpush.bf16.msra.mxu0 %v7256
    %8939 = vmatpush.bf16.msra.mxu0 %v7248
    %8940 = vmatpush.bf16.msra.mxu0 %v7240
    %8941 = vmatmul.bf16.gmra.mxu0 %v307
    %v8942 = vpop.f32.mrf.mxu0
    %v8943 = vadd.f32 %v8930, %v8942
    %v8944 = vpop.f32.mrf.mxu0
    %8945 = vdwg.mxu0
    %8946 = vmatpush.bf16.msra.mxu0 %v7360
    %8947 = vmatpush.bf16.msra.mxu0 %v7352
    %8948 = vmatpush.bf16.msra.mxu0 %v7344
    %8949 = vmatpush.bf16.msra.mxu0 %v7336
    %8950 = vmatpush.bf16.msra.mxu0 %v7328
    %8951 = vmatpush.bf16.msra.mxu0 %v7320
    %8952 = vmatpush.bf16.msra.mxu0 %v7312
    %8953 = vmatpush.bf16.msra.mxu0 %v7304
    %8954 = vmatmul.bf16.gmra.mxu0 %v308
    %v8955 = vpop.f32.mrf.mxu0
    %v8956 = vadd.f32 %v8943, %v8955
    %v8957 = vpop.f32.mrf.mxu0
    %8958 = vdwg.mxu0
    %8959 = vmatpush.bf16.msra.mxu0 %v7424
    %8960 = vmatpush.bf16.msra.mxu0 %v7416
    %8961 = vmatpush.bf16.msra.mxu0 %v7408
    %8962 = vmatpush.bf16.msra.mxu0 %v7400
    %8963 = vmatpush.bf16.msra.mxu0 %v7392
    %8964 = vmatpush.bf16.msra.mxu0 %v7384
    %8965 = vmatpush.bf16.msra.mxu0 %v7376
    %8966 = vmatpush.bf16.msra.mxu0 %v7368
    %8967 = vmatmul.bf16.gmra.mxu0 %v309
    %v8968 = vpop.f32.mrf.mxu0
    %v8969 = vadd.f32 %v8956, %v8968
    %v8970 = vpop.f32.mrf.mxu0
    %8971 = vdwg.mxu0
    %8972 = vmatpush.bf16.msra.mxu0 %v6209
    %8973 = vmatpush.bf16.msra.mxu0 %v6201
    %8974 = vmatpush.bf16.msra.mxu0 %v6193
    %8975 = vmatpush.bf16.msra.mxu0 %v6185
    %8976 = vmatpush.bf16.msra.mxu0 %v6177
    %8977 = vmatpush.bf16.msra.mxu0 %v6169
    %8978 = vmatpush.bf16.msra.mxu0 %v6161
    %8979 = vmatpush.bf16.msra.mxu0 %v6153
    %8980 = vmatmul.bf16.gmra.mxu0 %v290
    %v8981 = vpop.f32.mrf.mxu0
    %v8982 = vadd.f32 0.0, %v8981
    %v8983 = vpop.f32.mrf.mxu0
    %8984 = vdwg.mxu0
    %8985 = vmatpush.bf16.msra.mxu0 %v6273
    %8986 = vmatpush.bf16.msra.mxu0 %v6265
    %8987 = vmatpush.bf16.msra.mxu0 %v6257
    %8988 = vmatpush.bf16.msra.mxu0 %v6249
    %8989 = vmatpush.bf16.msra.mxu0 %v6241
    %8990 = vmatpush.bf16.msra.mxu0 %v6233
    %8991 = vmatpush.bf16.msra.mxu0 %v6225
    %8992 = vmatpush.bf16.msra.mxu0 %v6217
    %8993 = vmatmul.bf16.gmra.mxu0 %v291
    %v8994 = vpop.f32.mrf.mxu0
    %v8995 = vadd.f32 %v8982, %v8994
    %v8996 = vpop.f32.mrf.mxu0
    %8997 = vdwg.mxu0
    %8998 = vmatpush.bf16.msra.mxu0 %v6337
    %8999 = vmatpush.bf16.msra.mxu0 %v6329
    %9000 = vmatpush.bf16.msra.mxu0 %v6321
    %9001 = vmatpush.bf16.msra.mxu0 %v6313
    %9002 = vmatpush.bf16.msra.mxu0 %v6305
    %9003 = vmatpush.bf16.msra.mxu0 %v6297
    %9004 = vmatpush.bf16.msra.mxu0 %v6289
    %9005 = vmatpush.bf16.msra.mxu0 %v6281
    %9006 = vmatmul.bf16.gmra.mxu0 %v292
    %v9007 = vpop.f32.mrf.mxu0
    %v9008 = vadd.f32 %v8995, %v9007
    %v9009 = vpop.f32.mrf.mxu0
    %9010 = vdwg.mxu0
    %9011 = vmatpush.bf16.msra.mxu0 %v6401
    %9012 = vmatpush.bf16.msra.mxu0 %v6393
    %9013 = vmatpush.bf16.msra.mxu0 %v6385
    %9014 = vmatpush.bf16.msra.mxu0 %v6377
    %9015 = vmatpush.bf16.msra.mxu0 %v6369
    %9016 = vmatpush.bf16.msra.mxu0 %v6361
    %9017 = vmatpush.bf16.msra.mxu0 %v6353
    %9018 = vmatpush.bf16.msra.mxu0 %v6345
    %9019 = vmatmul.bf16.gmra.mxu0 %v293
    %v9020 = vpop.f32.mrf.mxu0
    %v9021 = vadd.f32 %v9008, %v9020
    %v9022 = vpop.f32.mrf.mxu0
    %9023 = vdwg.mxu0
    %9024 = vmatpush.bf16.msra.mxu0 %v6465
    %9025 = vmatpush.bf16.msra.mxu0 %v6457
    %9026 = vmatpush.bf16.msra.mxu0 %v6449
    %9027 = vmatpush.bf16.msra.mxu0 %v6441
    %9028 = vmatpush.bf16.msra.mxu0 %v6433
    %9029 = vmatpush.bf16.msra.mxu0 %v6425
    %9030 = vmatpush.bf16.msra.mxu0 %v6417
    %9031 = vmatpush.bf16.msra.mxu0 %v6409
    %9032 = vmatmul.bf16.gmra.mxu0 %v294
    %v9033 = vpop.f32.mrf.mxu0
    %v9034 = vadd.f32 %v9021, %v9033
    %v9035 = vpop.f32.mrf.mxu0
    %9036 = vdwg.mxu0
    %9037 = vmatpush.bf16.msra.mxu0 %v6529
    %9038 = vmatpush.bf16.msra.mxu0 %v6521
    %9039 = vmatpush.bf16.msra.mxu0 %v6513
    %9040 = vmatpush.bf16.msra.mxu0 %v6505
    %9041 = vmatpush.bf16.msra.mxu0 %v6497
    %9042 = vmatpush.bf16.msra.mxu0 %v6489
    %9043 = vmatpush.bf16.msra.mxu0 %v6481
    %9044 = vmatpush.bf16.msra.mxu0 %v6473
    %9045 = vmatmul.bf16.gmra.mxu0 %v295
    %v9046 = vpop.f32.mrf.mxu0
    %v9047 = vadd.f32 %v9034, %v9046
    %v9048 = vpop.f32.mrf.mxu0
    %9049 = vdwg.mxu0
    %9050 = vmatpush.bf16.msra.mxu0 %v6593
    %9051 = vmatpush.bf16.msra.mxu0 %v6585
    %9052 = vmatpush.bf16.msra.mxu0 %v6577
    %9053 = vmatpush.bf16.msra.mxu0 %v6569
    %9054 = vmatpush.bf16.msra.mxu0 %v6561
    %9055 = vmatpush.bf16.msra.mxu0 %v6553
    %9056 = vmatpush.bf16.msra.mxu0 %v6545
    %9057 = vmatpush.bf16.msra.mxu0 %v6537
    %9058 = vmatmul.bf16.gmra.mxu0 %v296
    %v9059 = vpop.f32.mrf.mxu0
    %v9060 = vadd.f32 %v9047, %v9059
    %v9061 = vpop.f32.mrf.mxu0
    %9062 = vdwg.mxu0
    %9063 = vmatpush.bf16.msra.mxu0 %v6657
    %9064 = vmatpush.bf16.msra.mxu0 %v6649
    %9065 = vmatpush.bf16.msra.mxu0 %v6641
    %9066 = vmatpush.bf16.msra.mxu0 %v6633
    %9067 = vmatpush.bf16.msra.mxu0 %v6625
    %9068 = vmatpush.bf16.msra.mxu0 %v6617
    %9069 = vmatpush.bf16.msra.mxu0 %v6609
    %9070 = vmatpush.bf16.msra.mxu0 %v6601
    %9071 = vmatmul.bf16.gmra.mxu0 %v297
    %v9072 = vpop.f32.mrf.mxu0
    %v9073 = vadd.f32 %v9060, %v9072
    %v9074 = vpop.f32.mrf.mxu0
    %9075 = vdwg.mxu0
    %9076 = vmatpush.bf16.msra.mxu0 %v6721
    %9077 = vmatpush.bf16.msra.mxu0 %v6713
    %9078 = vmatpush.bf16.msra.mxu0 %v6705
    %9079 = vmatpush.bf16.msra.mxu0 %v6697
    %9080 = vmatpush.bf16.msra.mxu0 %v6689
    %9081 = vmatpush.bf16.msra.mxu0 %v6681
    %9082 = vmatpush.bf16.msra.mxu0 %v6673
    %9083 = vmatpush.bf16.msra.mxu0 %v6665
    %9084 = vmatmul.bf16.gmra.mxu0 %v298
    %v9085 = vpop.f32.mrf.mxu0
    %v9086 = vadd.f32 %v9073, %v9085
    %v9087 = vpop.f32.mrf.mxu0
    %9088 = vdwg.mxu0
    %9089 = vmatpush.bf16.msra.mxu0 %v6785
    %9090 = vmatpush.bf16.msra.mxu0 %v6777
    %9091 = vmatpush.bf16.msra.mxu0 %v6769
    %9092 = vmatpush.bf16.msra.mxu0 %v6761
    %9093 = vmatpush.bf16.msra.mxu0 %v6753
    %9094 = vmatpush.bf16.msra.mxu0 %v6745
    %9095 = vmatpush.bf16.msra.mxu0 %v6737
    %9096 = vmatpush.bf16.msra.mxu0 %v6729
    %9097 = vmatmul.bf16.gmra.mxu0 %v299
    %v9098 = vpop.f32.mrf.mxu0
    %v9099 = vadd.f32 %v9086, %v9098
    %v9100 = vpop.f32.mrf.mxu0
    %9101 = vdwg.mxu0
    %9102 = vmatpush.bf16.msra.mxu0 %v6849
    %9103 = vmatpush.bf16.msra.mxu0 %v6841
    %9104 = vmatpush.bf16.msra.mxu0 %v6833
    %9105 = vmatpush.bf16.msra.mxu0 %v6825
    %9106 = vmatpush.bf16.msra.mxu0 %v6817
    %9107 = vmatpush.bf16.msra.mxu0 %v6809
    %9108 = vmatpush.bf16.msra.mxu0 %v6801
    %9109 = vmatpush.bf16.msra.mxu0 %v6793
    %9110 = vmatmul.bf16.gmra.mxu0 %v300
    %v9111 = vpop.f32.mrf.mxu0
    %v9112 = vadd.f32 %v9099, %v9111
    %v9113 = vpop.f32.mrf.mxu0
    %9114 = vdwg.mxu0
    %9115 = vmatpush.bf16.msra.mxu0 %v6913
    %9116 = vmatpush.bf16.msra.mxu0 %v6905
    %9117 = vmatpush.bf16.msra.mxu0 %v6897
    %9118 = vmatpush.bf16.msra.mxu0 %v6889
    %9119 = vmatpush.bf16.msra.mxu0 %v6881
    %9120 = vmatpush.bf16.msra.mxu0 %v6873
    %9121 = vmatpush.bf16.msra.mxu0 %v6865
    %9122 = vmatpush.bf16.msra.mxu0 %v6857
    %9123 = vmatmul.bf16.gmra.mxu0 %v301
    %v9124 = vpop.f32.mrf.mxu0
    %v9125 = vadd.f32 %v9112, %v9124
    %v9126 = vpop.f32.mrf.mxu0
    %9127 = vdwg.mxu0
    %9128 = vmatpush.bf16.msra.mxu0 %v6977
    %9129 = vmatpush.bf16.msra.mxu0 %v6969
    %9130 = vmatpush.bf16.msra.mxu0 %v6961
    %9131 = vmatpush.bf16.msra.mxu0 %v6953
    %9132 = vmatpush.bf16.msra.mxu0 %v6945
    %9133 = vmatpush.bf16.msra.mxu0 %v6937
    %9134 = vmatpush.bf16.msra.mxu0 %v6929
    %9135 = vmatpush.bf16.msra.mxu0 %v6921
    %9136 = vmatmul.bf16.gmra.mxu0 %v302
    %v9137 = vpop.f32.mrf.mxu0
    %v9138 = vadd.f32 %v9125, %v9137
    %v9139 = vpop.f32.mrf.mxu0
    %9140 = vdwg.mxu0
    %9141 = vmatpush.bf16.msra.mxu0 %v7041
    %9142 = vmatpush.bf16.msra.mxu0 %v7033
    %9143 = vmatpush.bf16.msra.mxu0 %v7025
    %9144 = vmatpush.bf16.msra.mxu0 %v7017
    %9145 = vmatpush.bf16.msra.mxu0 %v7009
    %9146 = vmatpush.bf16.msra.mxu0 %v7001
    %9147 = vmatpush.bf16.msra.mxu0 %v6993
    %9148 = vmatpush.bf16.msra.mxu0 %v6985
    %9149 = vmatmul.bf16.gmra.mxu0 %v303
    %v9150 = vpop.f32.mrf.mxu0
    %v9151 = vadd.f32 %v9138, %v9150
    %v9152 = vpop.f32.mrf.mxu0
    %9153 = vdwg.mxu0
    %9154 = vmatpush.bf16.msra.mxu0 %v7105
    %9155 = vmatpush.bf16.msra.mxu0 %v7097
    %9156 = vmatpush.bf16.msra.mxu0 %v7089
    %9157 = vmatpush.bf16.msra.mxu0 %v7081
    %9158 = vmatpush.bf16.msra.mxu0 %v7073
    %9159 = vmatpush.bf16.msra.mxu0 %v7065
    %9160 = vmatpush.bf16.msra.mxu0 %v7057
    %9161 = vmatpush.bf16.msra.mxu0 %v7049
    %9162 = vmatmul.bf16.gmra.mxu0 %v304
    %v9163 = vpop.f32.mrf.mxu0
    %v9164 = vadd.f32 %v9151, %v9163
    %v9165 = vpop.f32.mrf.mxu0
    %9166 = vdwg.mxu0
    %9167 = vmatpush.bf16.msra.mxu0 %v7169
    %9168 = vmatpush.bf16.msra.mxu0 %v7161
    %9169 = vmatpush.bf16.msra.mxu0 %v7153
    %9170 = vmatpush.bf16.msra.mxu0 %v7145
    %9171 = vmatpush.bf16.msra.mxu0 %v7137
    %9172 = vmatpush.bf16.msra.mxu0 %v7129
    %9173 = vmatpush.bf16.msra.mxu0 %v7121
    %9174 = vmatpush.bf16.msra.mxu0 %v7113
    %9175 = vmatmul.bf16.gmra.mxu0 %v305
    %v9176 = vpop.f32.mrf.mxu0
    %v9177 = vadd.f32 %v9164, %v9176
    %v9178 = vpop.f32.mrf.mxu0
    %9179 = vdwg.mxu0
    %9180 = vmatpush.bf16.msra.mxu0 %v7233
    %9181 = vmatpush.bf16.msra.mxu0 %v7225
    %9182 = vmatpush.bf16.msra.mxu0 %v7217
    %9183 = vmatpush.bf16.msra.mxu0 %v7209
    %9184 = vmatpush.bf16.msra.mxu0 %v7201
    %9185 = vmatpush.bf16.msra.mxu0 %v7193
    %9186 = vmatpush.bf16.msra.mxu0 %v7185
    %9187 = vmatpush.bf16.msra.mxu0 %v7177
    %9188 = vmatmul.bf16.gmra.mxu0 %v306
    %v9189 = vpop.f32.mrf.mxu0
    %v9190 = vadd.f32 %v9177, %v9189
    %v9191 = vpop.f32.mrf.mxu0
    %9192 = vdwg.mxu0
    %9193 = vmatpush.bf16.msra.mxu0 %v7297
    %9194 = vmatpush.bf16.msra.mxu0 %v7289
    %9195 = vmatpush.bf16.msra.mxu0 %v7281
    %9196 = vmatpush.bf16.msra.mxu0 %v7273
    %9197 = vmatpush.bf16.msra.mxu0 %v7265
    %9198 = vmatpush.bf16.msra.mxu0 %v7257
    %9199 = vmatpush.bf16.msra.mxu0 %v7249
    %9200 = vmatpush.bf16.msra.mxu0 %v7241
    %9201 = vmatmul.bf16.gmra.mxu0 %v307
    %v9202 = vpop.f32.mrf.mxu0
    %v9203 = vadd.f32 %v9190, %v9202
    %v9204 = vpop.f32.mrf.mxu0
    %9205 = vdwg.mxu0
    %9206 = vmatpush.bf16.msra.mxu0 %v7361
    %9207 = vmatpush.bf16.msra.mxu0 %v7353
    %9208 = vmatpush.bf16.msra.mxu0 %v7345
    %9209 = vmatpush.bf16.msra.mxu0 %v7337
    %9210 = vmatpush.bf16.msra.mxu0 %v7329
    %9211 = vmatpush.bf16.msra.mxu0 %v7321
    %9212 = vmatpush.bf16.msra.mxu0 %v7313
    %9213 = vmatpush.bf16.msra.mxu0 %v7305
    %9214 = vmatmul.bf16.gmra.mxu0 %v308
    %v9215 = vpop.f32.mrf.mxu0
    %v9216 = vadd.f32 %v9203, %v9215
    %v9217 = vpop.f32.mrf.mxu0
    %9218 = vdwg.mxu0
    %9219 = vmatpush.bf16.msra.mxu0 %v7425
    %9220 = vmatpush.bf16.msra.mxu0 %v7417
    %9221 = vmatpush.bf16.msra.mxu0 %v7409
    %9222 = vmatpush.bf16.msra.mxu0 %v7401
    %9223 = vmatpush.bf16.msra.mxu0 %v7393
    %9224 = vmatpush.bf16.msra.mxu0 %v7385
    %9225 = vmatpush.bf16.msra.mxu0 %v7377
    %9226 = vmatpush.bf16.msra.mxu0 %v7369
    %9227 = vmatmul.bf16.gmra.mxu0 %v309
    %v9228 = vpop.f32.mrf.mxu0
    %v9229 = vadd.f32 %v9216, %v9228
    %v9230 = vpop.f32.mrf.mxu0
    %9231 = vdwg.mxu0
    %9232 = vmatpush.bf16.msra.mxu0 %v6210
    %9233 = vmatpush.bf16.msra.mxu0 %v6202
    %9234 = vmatpush.bf16.msra.mxu0 %v6194
    %9235 = vmatpush.bf16.msra.mxu0 %v6186
    %9236 = vmatpush.bf16.msra.mxu0 %v6178
    %9237 = vmatpush.bf16.msra.mxu0 %v6170
    %9238 = vmatpush.bf16.msra.mxu0 %v6162
    %9239 = vmatpush.bf16.msra.mxu0 %v6154
    %9240 = vmatmul.bf16.gmra.mxu0 %v290
    %v9241 = vpop.f32.mrf.mxu0
    %v9242 = vadd.f32 0.0, %v9241
    %v9243 = vpop.f32.mrf.mxu0
    %9244 = vdwg.mxu0
    %9245 = vmatpush.bf16.msra.mxu0 %v6274
    %9246 = vmatpush.bf16.msra.mxu0 %v6266
    %9247 = vmatpush.bf16.msra.mxu0 %v6258
    %9248 = vmatpush.bf16.msra.mxu0 %v6250
    %9249 = vmatpush.bf16.msra.mxu0 %v6242
    %9250 = vmatpush.bf16.msra.mxu0 %v6234
    %9251 = vmatpush.bf16.msra.mxu0 %v6226
    %9252 = vmatpush.bf16.msra.mxu0 %v6218
    %9253 = vmatmul.bf16.gmra.mxu0 %v291
    %v9254 = vpop.f32.mrf.mxu0
    %v9255 = vadd.f32 %v9242, %v9254
    %v9256 = vpop.f32.mrf.mxu0
    %9257 = vdwg.mxu0
    %9258 = vmatpush.bf16.msra.mxu0 %v6338
    %9259 = vmatpush.bf16.msra.mxu0 %v6330
    %9260 = vmatpush.bf16.msra.mxu0 %v6322
    %9261 = vmatpush.bf16.msra.mxu0 %v6314
    %9262 = vmatpush.bf16.msra.mxu0 %v6306
    %9263 = vmatpush.bf16.msra.mxu0 %v6298
    %9264 = vmatpush.bf16.msra.mxu0 %v6290
    %9265 = vmatpush.bf16.msra.mxu0 %v6282
    %9266 = vmatmul.bf16.gmra.mxu0 %v292
    %v9267 = vpop.f32.mrf.mxu0
    %v9268 = vadd.f32 %v9255, %v9267
    %v9269 = vpop.f32.mrf.mxu0
    %9270 = vdwg.mxu0
    %9271 = vmatpush.bf16.msra.mxu0 %v6402
    %9272 = vmatpush.bf16.msra.mxu0 %v6394
    %9273 = vmatpush.bf16.msra.mxu0 %v6386
    %9274 = vmatpush.bf16.msra.mxu0 %v6378
    %9275 = vmatpush.bf16.msra.mxu0 %v6370
    %9276 = vmatpush.bf16.msra.mxu0 %v6362
    %9277 = vmatpush.bf16.msra.mxu0 %v6354
    %9278 = vmatpush.bf16.msra.mxu0 %v6346
    %9279 = vmatmul.bf16.gmra.mxu0 %v293
    %v9280 = vpop.f32.mrf.mxu0
    %v9281 = vadd.f32 %v9268, %v9280
    %v9282 = vpop.f32.mrf.mxu0
    %9283 = vdwg.mxu0
    %9284 = vmatpush.bf16.msra.mxu0 %v6466
    %9285 = vmatpush.bf16.msra.mxu0 %v6458
    %9286 = vmatpush.bf16.msra.mxu0 %v6450
    %9287 = vmatpush.bf16.msra.mxu0 %v6442
    %9288 = vmatpush.bf16.msra.mxu0 %v6434
    %9289 = vmatpush.bf16.msra.mxu0 %v6426
    %9290 = vmatpush.bf16.msra.mxu0 %v6418
    %9291 = vmatpush.bf16.msra.mxu0 %v6410
    %9292 = vmatmul.bf16.gmra.mxu0 %v294
    %v9293 = vpop.f32.mrf.mxu0
    %v9294 = vadd.f32 %v9281, %v9293
    %v9295 = vpop.f32.mrf.mxu0
    %9296 = vdwg.mxu0
    %9297 = vmatpush.bf16.msra.mxu0 %v6530
    %9298 = vmatpush.bf16.msra.mxu0 %v6522
    %9299 = vmatpush.bf16.msra.mxu0 %v6514
    %9300 = vmatpush.bf16.msra.mxu0 %v6506
    %9301 = vmatpush.bf16.msra.mxu0 %v6498
    %9302 = vmatpush.bf16.msra.mxu0 %v6490
    %9303 = vmatpush.bf16.msra.mxu0 %v6482
    %9304 = vmatpush.bf16.msra.mxu0 %v6474
    %9305 = vmatmul.bf16.gmra.mxu0 %v295
    %v9306 = vpop.f32.mrf.mxu0
    %v9307 = vadd.f32 %v9294, %v9306
    %v9308 = vpop.f32.mrf.mxu0
    %9309 = vdwg.mxu0
    %9310 = vmatpush.bf16.msra.mxu0 %v6594
    %9311 = vmatpush.bf16.msra.mxu0 %v6586
    %9312 = vmatpush.bf16.msra.mxu0 %v6578
    %9313 = vmatpush.bf16.msra.mxu0 %v6570
    %9314 = vmatpush.bf16.msra.mxu0 %v6562
    %9315 = vmatpush.bf16.msra.mxu0 %v6554
    %9316 = vmatpush.bf16.msra.mxu0 %v6546
    %9317 = vmatpush.bf16.msra.mxu0 %v6538
    %9318 = vmatmul.bf16.gmra.mxu0 %v296
    %v9319 = vpop.f32.mrf.mxu0
    %v9320 = vadd.f32 %v9307, %v9319
    %v9321 = vpop.f32.mrf.mxu0
    %9322 = vdwg.mxu0
    %9323 = vmatpush.bf16.msra.mxu0 %v6658
    %9324 = vmatpush.bf16.msra.mxu0 %v6650
    %9325 = vmatpush.bf16.msra.mxu0 %v6642
    %9326 = vmatpush.bf16.msra.mxu0 %v6634
    %9327 = vmatpush.bf16.msra.mxu0 %v6626
    %9328 = vmatpush.bf16.msra.mxu0 %v6618
    %9329 = vmatpush.bf16.msra.mxu0 %v6610
    %9330 = vmatpush.bf16.msra.mxu0 %v6602
    %9331 = vmatmul.bf16.gmra.mxu0 %v297
    %v9332 = vpop.f32.mrf.mxu0
    %v9333 = vadd.f32 %v9320, %v9332
    %v9334 = vpop.f32.mrf.mxu0
    %9335 = vdwg.mxu0
    %9336 = vmatpush.bf16.msra.mxu0 %v6722
    %9337 = vmatpush.bf16.msra.mxu0 %v6714
    %9338 = vmatpush.bf16.msra.mxu0 %v6706
    %9339 = vmatpush.bf16.msra.mxu0 %v6698
    %9340 = vmatpush.bf16.msra.mxu0 %v6690
    %9341 = vmatpush.bf16.msra.mxu0 %v6682
    %9342 = vmatpush.bf16.msra.mxu0 %v6674
    %9343 = vmatpush.bf16.msra.mxu0 %v6666
    %9344 = vmatmul.bf16.gmra.mxu0 %v298
    %v9345 = vpop.f32.mrf.mxu0
    %v9346 = vadd.f32 %v9333, %v9345
    %v9347 = vpop.f32.mrf.mxu0
    %9348 = vdwg.mxu0
    %9349 = vmatpush.bf16.msra.mxu0 %v6786
    %9350 = vmatpush.bf16.msra.mxu0 %v6778
    %9351 = vmatpush.bf16.msra.mxu0 %v6770
    %9352 = vmatpush.bf16.msra.mxu0 %v6762
    %9353 = vmatpush.bf16.msra.mxu0 %v6754
    %9354 = vmatpush.bf16.msra.mxu0 %v6746
    %9355 = vmatpush.bf16.msra.mxu0 %v6738
    %9356 = vmatpush.bf16.msra.mxu0 %v6730
    %9357 = vmatmul.bf16.gmra.mxu0 %v299
    %v9358 = vpop.f32.mrf.mxu0
    %v9359 = vadd.f32 %v9346, %v9358
    %v9360 = vpop.f32.mrf.mxu0
    %9361 = vdwg.mxu0
    %9362 = vmatpush.bf16.msra.mxu0 %v6850
    %9363 = vmatpush.bf16.msra.mxu0 %v6842
    %9364 = vmatpush.bf16.msra.mxu0 %v6834
    %9365 = vmatpush.bf16.msra.mxu0 %v6826
    %9366 = vmatpush.bf16.msra.mxu0 %v6818
    %9367 = vmatpush.bf16.msra.mxu0 %v6810
    %9368 = vmatpush.bf16.msra.mxu0 %v6802
    %9369 = vmatpush.bf16.msra.mxu0 %v6794
    %9370 = vmatmul.bf16.gmra.mxu0 %v300
    %v9371 = vpop.f32.mrf.mxu0
    %v9372 = vadd.f32 %v9359, %v9371
    %v9373 = vpop.f32.mrf.mxu0
    %9374 = vdwg.mxu0
    %9375 = vmatpush.bf16.msra.mxu0 %v6914
    %9376 = vmatpush.bf16.msra.mxu0 %v6906
    %9377 = vmatpush.bf16.msra.mxu0 %v6898
    %9378 = vmatpush.bf16.msra.mxu0 %v6890
    %9379 = vmatpush.bf16.msra.mxu0 %v6882
    %9380 = vmatpush.bf16.msra.mxu0 %v6874
    %9381 = vmatpush.bf16.msra.mxu0 %v6866
    %9382 = vmatpush.bf16.msra.mxu0 %v6858
    %9383 = vmatmul.bf16.gmra.mxu0 %v301
    %v9384 = vpop.f32.mrf.mxu0
    %v9385 = vadd.f32 %v9372, %v9384
    %v9386 = vpop.f32.mrf.mxu0
    %9387 = vdwg.mxu0
    %9388 = vmatpush.bf16.msra.mxu0 %v6978
    %9389 = vmatpush.bf16.msra.mxu0 %v6970
    %9390 = vmatpush.bf16.msra.mxu0 %v6962
    %9391 = vmatpush.bf16.msra.mxu0 %v6954
    %9392 = vmatpush.bf16.msra.mxu0 %v6946
    %9393 = vmatpush.bf16.msra.mxu0 %v6938
    %9394 = vmatpush.bf16.msra.mxu0 %v6930
    %9395 = vmatpush.bf16.msra.mxu0 %v6922
    %9396 = vmatmul.bf16.gmra.mxu0 %v302
    %v9397 = vpop.f32.mrf.mxu0
    %v9398 = vadd.f32 %v9385, %v9397
    %v9399 = vpop.f32.mrf.mxu0
    %9400 = vdwg.mxu0
    %9401 = vmatpush.bf16.msra.mxu0 %v7042
    %9402 = vmatpush.bf16.msra.mxu0 %v7034
    %9403 = vmatpush.bf16.msra.mxu0 %v7026
    %9404 = vmatpush.bf16.msra.mxu0 %v7018
    %9405 = vmatpush.bf16.msra.mxu0 %v7010
    %9406 = vmatpush.bf16.msra.mxu0 %v7002
    %9407 = vmatpush.bf16.msra.mxu0 %v6994
    %9408 = vmatpush.bf16.msra.mxu0 %v6986
    %9409 = vmatmul.bf16.gmra.mxu0 %v303
    %v9410 = vpop.f32.mrf.mxu0
    %v9411 = vadd.f32 %v9398, %v9410
    %v9412 = vpop.f32.mrf.mxu0
    %9413 = vdwg.mxu0
    %9414 = vmatpush.bf16.msra.mxu0 %v7106
    %9415 = vmatpush.bf16.msra.mxu0 %v7098
    %9416 = vmatpush.bf16.msra.mxu0 %v7090
    %9417 = vmatpush.bf16.msra.mxu0 %v7082
    %9418 = vmatpush.bf16.msra.mxu0 %v7074
    %9419 = vmatpush.bf16.msra.mxu0 %v7066
    %9420 = vmatpush.bf16.msra.mxu0 %v7058
    %9421 = vmatpush.bf16.msra.mxu0 %v7050
    %9422 = vmatmul.bf16.gmra.mxu0 %v304
    %v9423 = vpop.f32.mrf.mxu0
    %v9424 = vadd.f32 %v9411, %v9423
    %v9425 = vpop.f32.mrf.mxu0
    %9426 = vdwg.mxu0
    %9427 = vmatpush.bf16.msra.mxu0 %v7170
    %9428 = vmatpush.bf16.msra.mxu0 %v7162
    %9429 = vmatpush.bf16.msra.mxu0 %v7154
    %9430 = vmatpush.bf16.msra.mxu0 %v7146
    %9431 = vmatpush.bf16.msra.mxu0 %v7138
    %9432 = vmatpush.bf16.msra.mxu0 %v7130
    %9433 = vmatpush.bf16.msra.mxu0 %v7122
    %9434 = vmatpush.bf16.msra.mxu0 %v7114
    %9435 = vmatmul.bf16.gmra.mxu0 %v305
    %v9436 = vpop.f32.mrf.mxu0
    %v9437 = vadd.f32 %v9424, %v9436
    %v9438 = vpop.f32.mrf.mxu0
    %9439 = vdwg.mxu0
    %9440 = vmatpush.bf16.msra.mxu0 %v7234
    %9441 = vmatpush.bf16.msra.mxu0 %v7226
    %9442 = vmatpush.bf16.msra.mxu0 %v7218
    %9443 = vmatpush.bf16.msra.mxu0 %v7210
    %9444 = vmatpush.bf16.msra.mxu0 %v7202
    %9445 = vmatpush.bf16.msra.mxu0 %v7194
    %9446 = vmatpush.bf16.msra.mxu0 %v7186
    %9447 = vmatpush.bf16.msra.mxu0 %v7178
    %9448 = vmatmul.bf16.gmra.mxu0 %v306
    %v9449 = vpop.f32.mrf.mxu0
    %v9450 = vadd.f32 %v9437, %v9449
    %v9451 = vpop.f32.mrf.mxu0
    %9452 = vdwg.mxu0
    %9453 = vmatpush.bf16.msra.mxu0 %v7298
    %9454 = vmatpush.bf16.msra.mxu0 %v7290
    %9455 = vmatpush.bf16.msra.mxu0 %v7282
    %9456 = vmatpush.bf16.msra.mxu0 %v7274
    %9457 = vmatpush.bf16.msra.mxu0 %v7266
    %9458 = vmatpush.bf16.msra.mxu0 %v7258
    %9459 = vmatpush.bf16.msra.mxu0 %v7250
    %9460 = vmatpush.bf16.msra.mxu0 %v7242
    %9461 = vmatmul.bf16.gmra.mxu0 %v307
    %v9462 = vpop.f32.mrf.mxu0
    %v9463 = vadd.f32 %v9450, %v9462
    %v9464 = vpop.f32.mrf.mxu0
    %9465 = vdwg.mxu0
    %9466 = vmatpush.bf16.msra.mxu0 %v7362
    %9467 = vmatpush.bf16.msra.mxu0 %v7354
    %9468 = vmatpush.bf16.msra.mxu0 %v7346
    %9469 = vmatpush.bf16.msra.mxu0 %v7338
    %9470 = vmatpush.bf16.msra.mxu0 %v7330
    %9471 = vmatpush.bf16.msra.mxu0 %v7322
    %9472 = vmatpush.bf16.msra.mxu0 %v7314
    %9473 = vmatpush.bf16.msra.mxu0 %v7306
    %9474 = vmatmul.bf16.gmra.mxu0 %v308
    %v9475 = vpop.f32.mrf.mxu0
    %v9476 = vadd.f32 %v9463, %v9475
    %v9477 = vpop.f32.mrf.mxu0
    %9478 = vdwg.mxu0
    %9479 = vmatpush.bf16.msra.mxu0 %v7426
    %9480 = vmatpush.bf16.msra.mxu0 %v7418
    %9481 = vmatpush.bf16.msra.mxu0 %v7410
    %9482 = vmatpush.bf16.msra.mxu0 %v7402
    %9483 = vmatpush.bf16.msra.mxu0 %v7394
    %9484 = vmatpush.bf16.msra.mxu0 %v7386
    %9485 = vmatpush.bf16.msra.mxu0 %v7378
    %9486 = vmatpush.bf16.msra.mxu0 %v7370
    %9487 = vmatmul.bf16.gmra.mxu0 %v309
    %v9488 = vpop.f32.mrf.mxu0
    %v9489 = vadd.f32 %v9476, %v9488
    %v9490 = vpop.f32.mrf.mxu0
    %9491 = vdwg.mxu0
    %9492 = vmatpush.bf16.msra.mxu0 %v6211
    %9493 = vmatpush.bf16.msra.mxu0 %v6203
    %9494 = vmatpush.bf16.msra.mxu0 %v6195
    %9495 = vmatpush.bf16.msra.mxu0 %v6187
    %9496 = vmatpush.bf16.msra.mxu0 %v6179
    %9497 = vmatpush.bf16.msra.mxu0 %v6171
    %9498 = vmatpush.bf16.msra.mxu0 %v6163
    %9499 = vmatpush.bf16.msra.mxu0 %v6155
    %9500 = vmatmul.bf16.gmra.mxu0 %v290
    %v9501 = vpop.f32.mrf.mxu0
    %v9502 = vadd.f32 0.0, %v9501
    %v9503 = vpop.f32.mrf.mxu0
    %9504 = vdwg.mxu0
    %9505 = vmatpush.bf16.msra.mxu0 %v6275
    %9506 = vmatpush.bf16.msra.mxu0 %v6267
    %9507 = vmatpush.bf16.msra.mxu0 %v6259
    %9508 = vmatpush.bf16.msra.mxu0 %v6251
    %9509 = vmatpush.bf16.msra.mxu0 %v6243
    %9510 = vmatpush.bf16.msra.mxu0 %v6235
    %9511 = vmatpush.bf16.msra.mxu0 %v6227
    %9512 = vmatpush.bf16.msra.mxu0 %v6219
    %9513 = vmatmul.bf16.gmra.mxu0 %v291
    %v9514 = vpop.f32.mrf.mxu0
    %v9515 = vadd.f32 %v9502, %v9514
    %v9516 = vpop.f32.mrf.mxu0
    %9517 = vdwg.mxu0
    %9518 = vmatpush.bf16.msra.mxu0 %v6339
    %9519 = vmatpush.bf16.msra.mxu0 %v6331
    %9520 = vmatpush.bf16.msra.mxu0 %v6323
    %9521 = vmatpush.bf16.msra.mxu0 %v6315
    %9522 = vmatpush.bf16.msra.mxu0 %v6307
    %9523 = vmatpush.bf16.msra.mxu0 %v6299
    %9524 = vmatpush.bf16.msra.mxu0 %v6291
    %9525 = vmatpush.bf16.msra.mxu0 %v6283
    %9526 = vmatmul.bf16.gmra.mxu0 %v292
    %v9527 = vpop.f32.mrf.mxu0
    %v9528 = vadd.f32 %v9515, %v9527
    %v9529 = vpop.f32.mrf.mxu0
    %9530 = vdwg.mxu0
    %9531 = vmatpush.bf16.msra.mxu0 %v6403
    %9532 = vmatpush.bf16.msra.mxu0 %v6395
    %9533 = vmatpush.bf16.msra.mxu0 %v6387
    %9534 = vmatpush.bf16.msra.mxu0 %v6379
    %9535 = vmatpush.bf16.msra.mxu0 %v6371
    %9536 = vmatpush.bf16.msra.mxu0 %v6363
    %9537 = vmatpush.bf16.msra.mxu0 %v6355
    %9538 = vmatpush.bf16.msra.mxu0 %v6347
    %9539 = vmatmul.bf16.gmra.mxu0 %v293
    %v9540 = vpop.f32.mrf.mxu0
    %v9541 = vadd.f32 %v9528, %v9540
    %v9542 = vpop.f32.mrf.mxu0
    %9543 = vdwg.mxu0
    %9544 = vmatpush.bf16.msra.mxu0 %v6467
    %9545 = vmatpush.bf16.msra.mxu0 %v6459
    %9546 = vmatpush.bf16.msra.mxu0 %v6451
    %9547 = vmatpush.bf16.msra.mxu0 %v6443
    %9548 = vmatpush.bf16.msra.mxu0 %v6435
    %9549 = vmatpush.bf16.msra.mxu0 %v6427
    %9550 = vmatpush.bf16.msra.mxu0 %v6419
    %9551 = vmatpush.bf16.msra.mxu0 %v6411
    %9552 = vmatmul.bf16.gmra.mxu0 %v294
    %v9553 = vpop.f32.mrf.mxu0
    %v9554 = vadd.f32 %v9541, %v9553
    %v9555 = vpop.f32.mrf.mxu0
    %9556 = vdwg.mxu0
    %9557 = vmatpush.bf16.msra.mxu0 %v6531
    %9558 = vmatpush.bf16.msra.mxu0 %v6523
    %9559 = vmatpush.bf16.msra.mxu0 %v6515
    %9560 = vmatpush.bf16.msra.mxu0 %v6507
    %9561 = vmatpush.bf16.msra.mxu0 %v6499
    %9562 = vmatpush.bf16.msra.mxu0 %v6491
    %9563 = vmatpush.bf16.msra.mxu0 %v6483
    %9564 = vmatpush.bf16.msra.mxu0 %v6475
    %9565 = vmatmul.bf16.gmra.mxu0 %v295
    %v9566 = vpop.f32.mrf.mxu0
    %v9567 = vadd.f32 %v9554, %v9566
    %v9568 = vpop.f32.mrf.mxu0
    %9569 = vdwg.mxu0
    %9570 = vmatpush.bf16.msra.mxu0 %v6595
    %9571 = vmatpush.bf16.msra.mxu0 %v6587
    %9572 = vmatpush.bf16.msra.mxu0 %v6579
    %9573 = vmatpush.bf16.msra.mxu0 %v6571
    %9574 = vmatpush.bf16.msra.mxu0 %v6563
    %9575 = vmatpush.bf16.msra.mxu0 %v6555
    %9576 = vmatpush.bf16.msra.mxu0 %v6547
    %9577 = vmatpush.bf16.msra.mxu0 %v6539
    %9578 = vmatmul.bf16.gmra.mxu0 %v296
    %v9579 = vpop.f32.mrf.mxu0
    %v9580 = vadd.f32 %v9567, %v9579
    %v9581 = vpop.f32.mrf.mxu0
    %9582 = vdwg.mxu0
    %9583 = vmatpush.bf16.msra.mxu0 %v6659
    %9584 = vmatpush.bf16.msra.mxu0 %v6651
    %9585 = vmatpush.bf16.msra.mxu0 %v6643
    %9586 = vmatpush.bf16.msra.mxu0 %v6635
    %9587 = vmatpush.bf16.msra.mxu0 %v6627
    %9588 = vmatpush.bf16.msra.mxu0 %v6619
    %9589 = vmatpush.bf16.msra.mxu0 %v6611
    %9590 = vmatpush.bf16.msra.mxu0 %v6603
    %9591 = vmatmul.bf16.gmra.mxu0 %v297
    %v9592 = vpop.f32.mrf.mxu0
    %v9593 = vadd.f32 %v9580, %v9592
    %v9594 = vpop.f32.mrf.mxu0
    %9595 = vdwg.mxu0
    %9596 = vmatpush.bf16.msra.mxu0 %v6723
    %9597 = vmatpush.bf16.msra.mxu0 %v6715
    %9598 = vmatpush.bf16.msra.mxu0 %v6707
    %9599 = vmatpush.bf16.msra.mxu0 %v6699
    %9600 = vmatpush.bf16.msra.mxu0 %v6691
    %9601 = vmatpush.bf16.msra.mxu0 %v6683
    %9602 = vmatpush.bf16.msra.mxu0 %v6675
    %9603 = vmatpush.bf16.msra.mxu0 %v6667
    %9604 = vmatmul.bf16.gmra.mxu0 %v298
    %v9605 = vpop.f32.mrf.mxu0
    %v9606 = vadd.f32 %v9593, %v9605
    %v9607 = vpop.f32.mrf.mxu0
    %9608 = vdwg.mxu0
    %9609 = vmatpush.bf16.msra.mxu0 %v6787
    %9610 = vmatpush.bf16.msra.mxu0 %v6779
    %9611 = vmatpush.bf16.msra.mxu0 %v6771
    %9612 = vmatpush.bf16.msra.mxu0 %v6763
    %9613 = vmatpush.bf16.msra.mxu0 %v6755
    %9614 = vmatpush.bf16.msra.mxu0 %v6747
    %9615 = vmatpush.bf16.msra.mxu0 %v6739
    %9616 = vmatpush.bf16.msra.mxu0 %v6731
    %9617 = vmatmul.bf16.gmra.mxu0 %v299
    %v9618 = vpop.f32.mrf.mxu0
    %v9619 = vadd.f32 %v9606, %v9618
    %v9620 = vpop.f32.mrf.mxu0
    %9621 = vdwg.mxu0
    %9622 = vmatpush.bf16.msra.mxu0 %v6851
    %9623 = vmatpush.bf16.msra.mxu0 %v6843
    %9624 = vmatpush.bf16.msra.mxu0 %v6835
    %9625 = vmatpush.bf16.msra.mxu0 %v6827
    %9626 = vmatpush.bf16.msra.mxu0 %v6819
    %9627 = vmatpush.bf16.msra.mxu0 %v6811
    %9628 = vmatpush.bf16.msra.mxu0 %v6803
    %9629 = vmatpush.bf16.msra.mxu0 %v6795
    %9630 = vmatmul.bf16.gmra.mxu0 %v300
    %v9631 = vpop.f32.mrf.mxu0
    %v9632 = vadd.f32 %v9619, %v9631
    %v9633 = vpop.f32.mrf.mxu0
    %9634 = vdwg.mxu0
    %9635 = vmatpush.bf16.msra.mxu0 %v6915
    %9636 = vmatpush.bf16.msra.mxu0 %v6907
    %9637 = vmatpush.bf16.msra.mxu0 %v6899
    %9638 = vmatpush.bf16.msra.mxu0 %v6891
    %9639 = vmatpush.bf16.msra.mxu0 %v6883
    %9640 = vmatpush.bf16.msra.mxu0 %v6875
    %9641 = vmatpush.bf16.msra.mxu0 %v6867
    %9642 = vmatpush.bf16.msra.mxu0 %v6859
    %9643 = vmatmul.bf16.gmra.mxu0 %v301
    %v9644 = vpop.f32.mrf.mxu0
    %v9645 = vadd.f32 %v9632, %v9644
    %v9646 = vpop.f32.mrf.mxu0
    %9647 = vdwg.mxu0
    %9648 = vmatpush.bf16.msra.mxu0 %v6979
    %9649 = vmatpush.bf16.msra.mxu0 %v6971
    %9650 = vmatpush.bf16.msra.mxu0 %v6963
    %9651 = vmatpush.bf16.msra.mxu0 %v6955
    %9652 = vmatpush.bf16.msra.mxu0 %v6947
    %9653 = vmatpush.bf16.msra.mxu0 %v6939
    %9654 = vmatpush.bf16.msra.mxu0 %v6931
    %9655 = vmatpush.bf16.msra.mxu0 %v6923
    %9656 = vmatmul.bf16.gmra.mxu0 %v302
    %v9657 = vpop.f32.mrf.mxu0
    %v9658 = vadd.f32 %v9645, %v9657
    %v9659 = vpop.f32.mrf.mxu0
    %9660 = vdwg.mxu0
    %9661 = vmatpush.bf16.msra.mxu0 %v7043
    %9662 = vmatpush.bf16.msra.mxu0 %v7035
    %9663 = vmatpush.bf16.msra.mxu0 %v7027
    %9664 = vmatpush.bf16.msra.mxu0 %v7019
    %9665 = vmatpush.bf16.msra.mxu0 %v7011
    %9666 = vmatpush.bf16.msra.mxu0 %v7003
    %9667 = vmatpush.bf16.msra.mxu0 %v6995
    %9668 = vmatpush.bf16.msra.mxu0 %v6987
    %9669 = vmatmul.bf16.gmra.mxu0 %v303
    %v9670 = vpop.f32.mrf.mxu0
    %v9671 = vadd.f32 %v9658, %v9670
    %v9672 = vpop.f32.mrf.mxu0
    %9673 = vdwg.mxu0
    %9674 = vmatpush.bf16.msra.mxu0 %v7107
    %9675 = vmatpush.bf16.msra.mxu0 %v7099
    %9676 = vmatpush.bf16.msra.mxu0 %v7091
    %9677 = vmatpush.bf16.msra.mxu0 %v7083
    %9678 = vmatpush.bf16.msra.mxu0 %v7075
    %9679 = vmatpush.bf16.msra.mxu0 %v7067
    %9680 = vmatpush.bf16.msra.mxu0 %v7059
    %9681 = vmatpush.bf16.msra.mxu0 %v7051
    %9682 = vmatmul.bf16.gmra.mxu0 %v304
    %v9683 = vpop.f32.mrf.mxu0
    %v9684 = vadd.f32 %v9671, %v9683
    %v9685 = vpop.f32.mrf.mxu0
    %9686 = vdwg.mxu0
    %9687 = vmatpush.bf16.msra.mxu0 %v7171
    %9688 = vmatpush.bf16.msra.mxu0 %v7163
    %9689 = vmatpush.bf16.msra.mxu0 %v7155
    %9690 = vmatpush.bf16.msra.mxu0 %v7147
    %9691 = vmatpush.bf16.msra.mxu0 %v7139
    %9692 = vmatpush.bf16.msra.mxu0 %v7131
    %9693 = vmatpush.bf16.msra.mxu0 %v7123
    %9694 = vmatpush.bf16.msra.mxu0 %v7115
    %9695 = vmatmul.bf16.gmra.mxu0 %v305
    %v9696 = vpop.f32.mrf.mxu0
    %v9697 = vadd.f32 %v9684, %v9696
    %v9698 = vpop.f32.mrf.mxu0
    %9699 = vdwg.mxu0
    %9700 = vmatpush.bf16.msra.mxu0 %v7235
    %9701 = vmatpush.bf16.msra.mxu0 %v7227
    %9702 = vmatpush.bf16.msra.mxu0 %v7219
    %9703 = vmatpush.bf16.msra.mxu0 %v7211
    %9704 = vmatpush.bf16.msra.mxu0 %v7203
    %9705 = vmatpush.bf16.msra.mxu0 %v7195
    %9706 = vmatpush.bf16.msra.mxu0 %v7187
    %9707 = vmatpush.bf16.msra.mxu0 %v7179
    %9708 = vmatmul.bf16.gmra.mxu0 %v306
    %v9709 = vpop.f32.mrf.mxu0
    %v9710 = vadd.f32 %v9697, %v9709
    %v9711 = vpop.f32.mrf.mxu0
    %9712 = vdwg.mxu0
    %9713 = vmatpush.bf16.msra.mxu0 %v7299
    %9714 = vmatpush.bf16.msra.mxu0 %v7291
    %9715 = vmatpush.bf16.msra.mxu0 %v7283
    %9716 = vmatpush.bf16.msra.mxu0 %v7275
    %9717 = vmatpush.bf16.msra.mxu0 %v7267
    %9718 = vmatpush.bf16.msra.mxu0 %v7259
    %9719 = vmatpush.bf16.msra.mxu0 %v7251
    %9720 = vmatpush.bf16.msra.mxu0 %v7243
    %9721 = vmatmul.bf16.gmra.mxu0 %v307
    %v9722 = vpop.f32.mrf.mxu0
    %v9723 = vadd.f32 %v9710, %v9722
    %v9724 = vpop.f32.mrf.mxu0
    %9725 = vdwg.mxu0
    %9726 = vmatpush.bf16.msra.mxu0 %v7363
    %9727 = vmatpush.bf16.msra.mxu0 %v7355
    %9728 = vmatpush.bf16.msra.mxu0 %v7347
    %9729 = vmatpush.bf16.msra.mxu0 %v7339
    %9730 = vmatpush.bf16.msra.mxu0 %v7331
    %9731 = vmatpush.bf16.msra.mxu0 %v7323
    %9732 = vmatpush.bf16.msra.mxu0 %v7315
    %9733 = vmatpush.bf16.msra.mxu0 %v7307
    %9734 = vmatmul.bf16.gmra.mxu0 %v308
    %v9735 = vpop.f32.mrf.mxu0
    %v9736 = vadd.f32 %v9723, %v9735
    %v9737 = vpop.f32.mrf.mxu0
    %9738 = vdwg.mxu0
    %9739 = vmatpush.bf16.msra.mxu0 %v7427
    %9740 = vmatpush.bf16.msra.mxu0 %v7419
    %9741 = vmatpush.bf16.msra.mxu0 %v7411
    %9742 = vmatpush.bf16.msra.mxu0 %v7403
    %9743 = vmatpush.bf16.msra.mxu0 %v7395
    %9744 = vmatpush.bf16.msra.mxu0 %v7387
    %9745 = vmatpush.bf16.msra.mxu0 %v7379
    %9746 = vmatpush.bf16.msra.mxu0 %v7371
    %9747 = vmatmul.bf16.gmra.mxu0 %v309
    %v9748 = vpop.f32.mrf.mxu0
    %v9749 = vadd.f32 %v9736, %v9748
    %v9750 = vpop.f32.mrf.mxu0
    %9751 = vdwg.mxu0
    %9752 = vmatpush.bf16.msra.mxu0 %v6212
    %9753 = vmatpush.bf16.msra.mxu0 %v6204
    %9754 = vmatpush.bf16.msra.mxu0 %v6196
    %9755 = vmatpush.bf16.msra.mxu0 %v6188
    %9756 = vmatpush.bf16.msra.mxu0 %v6180
    %9757 = vmatpush.bf16.msra.mxu0 %v6172
    %9758 = vmatpush.bf16.msra.mxu0 %v6164
    %9759 = vmatpush.bf16.msra.mxu0 %v6156
    %9760 = vmatmul.bf16.gmra.mxu0 %v290
    %v9761 = vpop.f32.mrf.mxu0
    %v9762 = vadd.f32 0.0, %v9761
    %v9763 = vpop.f32.mrf.mxu0
    %9764 = vdwg.mxu0
    %9765 = vmatpush.bf16.msra.mxu0 %v6276
    %9766 = vmatpush.bf16.msra.mxu0 %v6268
    %9767 = vmatpush.bf16.msra.mxu0 %v6260
    %9768 = vmatpush.bf16.msra.mxu0 %v6252
    %9769 = vmatpush.bf16.msra.mxu0 %v6244
    %9770 = vmatpush.bf16.msra.mxu0 %v6236
    %9771 = vmatpush.bf16.msra.mxu0 %v6228
    %9772 = vmatpush.bf16.msra.mxu0 %v6220
    %9773 = vmatmul.bf16.gmra.mxu0 %v291
    %v9774 = vpop.f32.mrf.mxu0
    %v9775 = vadd.f32 %v9762, %v9774
    %v9776 = vpop.f32.mrf.mxu0
    %9777 = vdwg.mxu0
    %9778 = vmatpush.bf16.msra.mxu0 %v6340
    %9779 = vmatpush.bf16.msra.mxu0 %v6332
    %9780 = vmatpush.bf16.msra.mxu0 %v6324
    %9781 = vmatpush.bf16.msra.mxu0 %v6316
    %9782 = vmatpush.bf16.msra.mxu0 %v6308
    %9783 = vmatpush.bf16.msra.mxu0 %v6300
    %9784 = vmatpush.bf16.msra.mxu0 %v6292
    %9785 = vmatpush.bf16.msra.mxu0 %v6284
    %9786 = vmatmul.bf16.gmra.mxu0 %v292
    %v9787 = vpop.f32.mrf.mxu0
    %v9788 = vadd.f32 %v9775, %v9787
    %v9789 = vpop.f32.mrf.mxu0
    %9790 = vdwg.mxu0
    %9791 = vmatpush.bf16.msra.mxu0 %v6404
    %9792 = vmatpush.bf16.msra.mxu0 %v6396
    %9793 = vmatpush.bf16.msra.mxu0 %v6388
    %9794 = vmatpush.bf16.msra.mxu0 %v6380
    %9795 = vmatpush.bf16.msra.mxu0 %v6372
    %9796 = vmatpush.bf16.msra.mxu0 %v6364
    %9797 = vmatpush.bf16.msra.mxu0 %v6356
    %9798 = vmatpush.bf16.msra.mxu0 %v6348
    %9799 = vmatmul.bf16.gmra.mxu0 %v293
    %v9800 = vpop.f32.mrf.mxu0
    %v9801 = vadd.f32 %v9788, %v9800
    %v9802 = vpop.f32.mrf.mxu0
    %9803 = vdwg.mxu0
    %9804 = vmatpush.bf16.msra.mxu0 %v6468
    %9805 = vmatpush.bf16.msra.mxu0 %v6460
    %9806 = vmatpush.bf16.msra.mxu0 %v6452
    %9807 = vmatpush.bf16.msra.mxu0 %v6444
    %9808 = vmatpush.bf16.msra.mxu0 %v6436
    %9809 = vmatpush.bf16.msra.mxu0 %v6428
    %9810 = vmatpush.bf16.msra.mxu0 %v6420
    %9811 = vmatpush.bf16.msra.mxu0 %v6412
    %9812 = vmatmul.bf16.gmra.mxu0 %v294
    %v9813 = vpop.f32.mrf.mxu0
    %v9814 = vadd.f32 %v9801, %v9813
    %v9815 = vpop.f32.mrf.mxu0
    %9816 = vdwg.mxu0
    %9817 = vmatpush.bf16.msra.mxu0 %v6532
    %9818 = vmatpush.bf16.msra.mxu0 %v6524
    %9819 = vmatpush.bf16.msra.mxu0 %v6516
    %9820 = vmatpush.bf16.msra.mxu0 %v6508
    %9821 = vmatpush.bf16.msra.mxu0 %v6500
    %9822 = vmatpush.bf16.msra.mxu0 %v6492
    %9823 = vmatpush.bf16.msra.mxu0 %v6484
    %9824 = vmatpush.bf16.msra.mxu0 %v6476
    %9825 = vmatmul.bf16.gmra.mxu0 %v295
    %v9826 = vpop.f32.mrf.mxu0
    %v9827 = vadd.f32 %v9814, %v9826
    %v9828 = vpop.f32.mrf.mxu0
    %9829 = vdwg.mxu0
    %9830 = vmatpush.bf16.msra.mxu0 %v6596
    %9831 = vmatpush.bf16.msra.mxu0 %v6588
    %9832 = vmatpush.bf16.msra.mxu0 %v6580
    %9833 = vmatpush.bf16.msra.mxu0 %v6572
    %9834 = vmatpush.bf16.msra.mxu0 %v6564
    %9835 = vmatpush.bf16.msra.mxu0 %v6556
    %9836 = vmatpush.bf16.msra.mxu0 %v6548
    %9837 = vmatpush.bf16.msra.mxu0 %v6540
    %9838 = vmatmul.bf16.gmra.mxu0 %v296
    %v9839 = vpop.f32.mrf.mxu0
    %v9840 = vadd.f32 %v9827, %v9839
    %v9841 = vpop.f32.mrf.mxu0
    %9842 = vdwg.mxu0
    %9843 = vmatpush.bf16.msra.mxu0 %v6660
    %9844 = vmatpush.bf16.msra.mxu0 %v6652
    %9845 = vmatpush.bf16.msra.mxu0 %v6644
    %9846 = vmatpush.bf16.msra.mxu0 %v6636
    %9847 = vmatpush.bf16.msra.mxu0 %v6628
    %9848 = vmatpush.bf16.msra.mxu0 %v6620
    %9849 = vmatpush.bf16.msra.mxu0 %v6612
    %9850 = vmatpush.bf16.msra.mxu0 %v6604
    %9851 = vmatmul.bf16.gmra.mxu0 %v297
    %v9852 = vpop.f32.mrf.mxu0
    %v9853 = vadd.f32 %v9840, %v9852
    %v9854 = vpop.f32.mrf.mxu0
    %9855 = vdwg.mxu0
    %9856 = vmatpush.bf16.msra.mxu0 %v6724
    %9857 = vmatpush.bf16.msra.mxu0 %v6716
    %9858 = vmatpush.bf16.msra.mxu0 %v6708
    %9859 = vmatpush.bf16.msra.mxu0 %v6700
    %9860 = vmatpush.bf16.msra.mxu0 %v6692
    %9861 = vmatpush.bf16.msra.mxu0 %v6684
    %9862 = vmatpush.bf16.msra.mxu0 %v6676
    %9863 = vmatpush.bf16.msra.mxu0 %v6668
    %9864 = vmatmul.bf16.gmra.mxu0 %v298
    %v9865 = vpop.f32.mrf.mxu0
    %v9866 = vadd.f32 %v9853, %v9865
    %v9867 = vpop.f32.mrf.mxu0
    %9868 = vdwg.mxu0
    %9869 = vmatpush.bf16.msra.mxu0 %v6788
    %9870 = vmatpush.bf16.msra.mxu0 %v6780
    %9871 = vmatpush.bf16.msra.mxu0 %v6772
    %9872 = vmatpush.bf16.msra.mxu0 %v6764
    %9873 = vmatpush.bf16.msra.mxu0 %v6756
    %9874 = vmatpush.bf16.msra.mxu0 %v6748
    %9875 = vmatpush.bf16.msra.mxu0 %v6740
    %9876 = vmatpush.bf16.msra.mxu0 %v6732
    %9877 = vmatmul.bf16.gmra.mxu0 %v299
    %v9878 = vpop.f32.mrf.mxu0
    %v9879 = vadd.f32 %v9866, %v9878
    %v9880 = vpop.f32.mrf.mxu0
    %9881 = vdwg.mxu0
    %9882 = vmatpush.bf16.msra.mxu0 %v6852
    %9883 = vmatpush.bf16.msra.mxu0 %v6844
    %9884 = vmatpush.bf16.msra.mxu0 %v6836
    %9885 = vmatpush.bf16.msra.mxu0 %v6828
    %9886 = vmatpush.bf16.msra.mxu0 %v6820
    %9887 = vmatpush.bf16.msra.mxu0 %v6812
    %9888 = vmatpush.bf16.msra.mxu0 %v6804
    %9889 = vmatpush.bf16.msra.mxu0 %v6796
    %9890 = vmatmul.bf16.gmra.mxu0 %v300
    %v9891 = vpop.f32.mrf.mxu0
    %v9892 = vadd.f32 %v9879, %v9891
    %v9893 = vpop.f32.mrf.mxu0
    %9894 = vdwg.mxu0
    %9895 = vmatpush.bf16.msra.mxu0 %v6916
    %9896 = vmatpush.bf16.msra.mxu0 %v6908
    %9897 = vmatpush.bf16.msra.mxu0 %v6900
    %9898 = vmatpush.bf16.msra.mxu0 %v6892
    %9899 = vmatpush.bf16.msra.mxu0 %v6884
    %9900 = vmatpush.bf16.msra.mxu0 %v6876
    %9901 = vmatpush.bf16.msra.mxu0 %v6868
    %9902 = vmatpush.bf16.msra.mxu0 %v6860
    %9903 = vmatmul.bf16.gmra.mxu0 %v301
    %v9904 = vpop.f32.mrf.mxu0
    %v9905 = vadd.f32 %v9892, %v9904
    %v9906 = vpop.f32.mrf.mxu0
    %9907 = vdwg.mxu0
    %9908 = vmatpush.bf16.msra.mxu0 %v6980
    %9909 = vmatpush.bf16.msra.mxu0 %v6972
    %9910 = vmatpush.bf16.msra.mxu0 %v6964
    %9911 = vmatpush.bf16.msra.mxu0 %v6956
    %9912 = vmatpush.bf16.msra.mxu0 %v6948
    %9913 = vmatpush.bf16.msra.mxu0 %v6940
    %9914 = vmatpush.bf16.msra.mxu0 %v6932
    %9915 = vmatpush.bf16.msra.mxu0 %v6924
    %9916 = vmatmul.bf16.gmra.mxu0 %v302
    %v9917 = vpop.f32.mrf.mxu0
    %v9918 = vadd.f32 %v9905, %v9917
    %v9919 = vpop.f32.mrf.mxu0
    %9920 = vdwg.mxu0
    %9921 = vmatpush.bf16.msra.mxu0 %v7044
    %9922 = vmatpush.bf16.msra.mxu0 %v7036
    %9923 = vmatpush.bf16.msra.mxu0 %v7028
    %9924 = vmatpush.bf16.msra.mxu0 %v7020
    %9925 = vmatpush.bf16.msra.mxu0 %v7012
    %9926 = vmatpush.bf16.msra.mxu0 %v7004
    %9927 = vmatpush.bf16.msra.mxu0 %v6996
    %9928 = vmatpush.bf16.msra.mxu0 %v6988
    %9929 = vmatmul.bf16.gmra.mxu0 %v303
    %v9930 = vpop.f32.mrf.mxu0
    %v9931 = vadd.f32 %v9918, %v9930
    %v9932 = vpop.f32.mrf.mxu0
    %9933 = vdwg.mxu0
    %9934 = vmatpush.bf16.msra.mxu0 %v7108
    %9935 = vmatpush.bf16.msra.mxu0 %v7100
    %9936 = vmatpush.bf16.msra.mxu0 %v7092
    %9937 = vmatpush.bf16.msra.mxu0 %v7084
    %9938 = vmatpush.bf16.msra.mxu0 %v7076
    %9939 = vmatpush.bf16.msra.mxu0 %v7068
    %9940 = vmatpush.bf16.msra.mxu0 %v7060
    %9941 = vmatpush.bf16.msra.mxu0 %v7052
    %9942 = vmatmul.bf16.gmra.mxu0 %v304
    %v9943 = vpop.f32.mrf.mxu0
    %v9944 = vadd.f32 %v9931, %v9943
    %v9945 = vpop.f32.mrf.mxu0
    %9946 = vdwg.mxu0
    %9947 = vmatpush.bf16.msra.mxu0 %v7172
    %9948 = vmatpush.bf16.msra.mxu0 %v7164
    %9949 = vmatpush.bf16.msra.mxu0 %v7156
    %9950 = vmatpush.bf16.msra.mxu0 %v7148
    %9951 = vmatpush.bf16.msra.mxu0 %v7140
    %9952 = vmatpush.bf16.msra.mxu0 %v7132
    %9953 = vmatpush.bf16.msra.mxu0 %v7124
    %9954 = vmatpush.bf16.msra.mxu0 %v7116
    %9955 = vmatmul.bf16.gmra.mxu0 %v305
    %v9956 = vpop.f32.mrf.mxu0
    %v9957 = vadd.f32 %v9944, %v9956
    %v9958 = vpop.f32.mrf.mxu0
    %9959 = vdwg.mxu0
    %9960 = vmatpush.bf16.msra.mxu0 %v7236
    %9961 = vmatpush.bf16.msra.mxu0 %v7228
    %9962 = vmatpush.bf16.msra.mxu0 %v7220
    %9963 = vmatpush.bf16.msra.mxu0 %v7212
    %9964 = vmatpush.bf16.msra.mxu0 %v7204
    %9965 = vmatpush.bf16.msra.mxu0 %v7196
    %9966 = vmatpush.bf16.msra.mxu0 %v7188
    %9967 = vmatpush.bf16.msra.mxu0 %v7180
    %9968 = vmatmul.bf16.gmra.mxu0 %v306
    %v9969 = vpop.f32.mrf.mxu0
    %v9970 = vadd.f32 %v9957, %v9969
    %v9971 = vpop.f32.mrf.mxu0
    %9972 = vdwg.mxu0
    %9973 = vmatpush.bf16.msra.mxu0 %v7300
    %9974 = vmatpush.bf16.msra.mxu0 %v7292
    %9975 = vmatpush.bf16.msra.mxu0 %v7284
    %9976 = vmatpush.bf16.msra.mxu0 %v7276
    %9977 = vmatpush.bf16.msra.mxu0 %v7268
    %9978 = vmatpush.bf16.msra.mxu0 %v7260
    %9979 = vmatpush.bf16.msra.mxu0 %v7252
    %9980 = vmatpush.bf16.msra.mxu0 %v7244
    %9981 = vmatmul.bf16.gmra.mxu0 %v307
    %v9982 = vpop.f32.mrf.mxu0
    %v9983 = vadd.f32 %v9970, %v9982
    %v9984 = vpop.f32.mrf.mxu0
    %9985 = vdwg.mxu0
    %9986 = vmatpush.bf16.msra.mxu0 %v7364
    %9987 = vmatpush.bf16.msra.mxu0 %v7356
    %9988 = vmatpush.bf16.msra.mxu0 %v7348
    %9989 = vmatpush.bf16.msra.mxu0 %v7340
    %9990 = vmatpush.bf16.msra.mxu0 %v7332
    %9991 = vmatpush.bf16.msra.mxu0 %v7324
    %9992 = vmatpush.bf16.msra.mxu0 %v7316
    %9993 = vmatpush.bf16.msra.mxu0 %v7308
    %9994 = vmatmul.bf16.gmra.mxu0 %v308
    %v9995 = vpop.f32.mrf.mxu0
    %v9996 = vadd.f32 %v9983, %v9995
    %v9997 = vpop.f32.mrf.mxu0
    %9998 = vdwg.mxu0
    %9999 = vmatpush.bf16.msra.mxu0 %v7428
    %10000 = vmatpush.bf16.msra.mxu0 %v7420
    %10001 = vmatpush.bf16.msra.mxu0 %v7412
    %10002 = vmatpush.bf16.msra.mxu0 %v7404
    %10003 = vmatpush.bf16.msra.mxu0 %v7396
    %10004 = vmatpush.bf16.msra.mxu0 %v7388
    %10005 = vmatpush.bf16.msra.mxu0 %v7380
    %10006 = vmatpush.bf16.msra.mxu0 %v7372
    %10007 = vmatmul.bf16.gmra.mxu0 %v309
    %v10008 = vpop.f32.mrf.mxu0
    %v10009 = vadd.f32 %v9996, %v10008
    %v10010 = vpop.f32.mrf.mxu0
    %10011 = vdwg.mxu0
    %10012 = vmatpush.bf16.msra.mxu0 %v6213
    %10013 = vmatpush.bf16.msra.mxu0 %v6205
    %10014 = vmatpush.bf16.msra.mxu0 %v6197
    %10015 = vmatpush.bf16.msra.mxu0 %v6189
    %10016 = vmatpush.bf16.msra.mxu0 %v6181
    %10017 = vmatpush.bf16.msra.mxu0 %v6173
    %10018 = vmatpush.bf16.msra.mxu0 %v6165
    %10019 = vmatpush.bf16.msra.mxu0 %v6157
    %10020 = vmatmul.bf16.gmra.mxu0 %v290
    %v10021 = vpop.f32.mrf.mxu0
    %v10022 = vadd.f32 0.0, %v10021
    %v10023 = vpop.f32.mrf.mxu0
    %10024 = vdwg.mxu0
    %10025 = vmatpush.bf16.msra.mxu0 %v6277
    %10026 = vmatpush.bf16.msra.mxu0 %v6269
    %10027 = vmatpush.bf16.msra.mxu0 %v6261
    %10028 = vmatpush.bf16.msra.mxu0 %v6253
    %10029 = vmatpush.bf16.msra.mxu0 %v6245
    %10030 = vmatpush.bf16.msra.mxu0 %v6237
    %10031 = vmatpush.bf16.msra.mxu0 %v6229
    %10032 = vmatpush.bf16.msra.mxu0 %v6221
    %10033 = vmatmul.bf16.gmra.mxu0 %v291
    %v10034 = vpop.f32.mrf.mxu0
    %v10035 = vadd.f32 %v10022, %v10034
    %v10036 = vpop.f32.mrf.mxu0
    %10037 = vdwg.mxu0
    %10038 = vmatpush.bf16.msra.mxu0 %v6341
    %10039 = vmatpush.bf16.msra.mxu0 %v6333
    %10040 = vmatpush.bf16.msra.mxu0 %v6325
    %10041 = vmatpush.bf16.msra.mxu0 %v6317
    %10042 = vmatpush.bf16.msra.mxu0 %v6309
    %10043 = vmatpush.bf16.msra.mxu0 %v6301
    %10044 = vmatpush.bf16.msra.mxu0 %v6293
    %10045 = vmatpush.bf16.msra.mxu0 %v6285
    %10046 = vmatmul.bf16.gmra.mxu0 %v292
    %v10047 = vpop.f32.mrf.mxu0
    %v10048 = vadd.f32 %v10035, %v10047
    %v10049 = vpop.f32.mrf.mxu0
    %10050 = vdwg.mxu0
    %10051 = vmatpush.bf16.msra.mxu0 %v6405
    %10052 = vmatpush.bf16.msra.mxu0 %v6397
    %10053 = vmatpush.bf16.msra.mxu0 %v6389
    %10054 = vmatpush.bf16.msra.mxu0 %v6381
    %10055 = vmatpush.bf16.msra.mxu0 %v6373
    %10056 = vmatpush.bf16.msra.mxu0 %v6365
    %10057 = vmatpush.bf16.msra.mxu0 %v6357
    %10058 = vmatpush.bf16.msra.mxu0 %v6349
    %10059 = vmatmul.bf16.gmra.mxu0 %v293
    %v10060 = vpop.f32.mrf.mxu0
    %v10061 = vadd.f32 %v10048, %v10060
    %v10062 = vpop.f32.mrf.mxu0
    %10063 = vdwg.mxu0
    %10064 = vmatpush.bf16.msra.mxu0 %v6469
    %10065 = vmatpush.bf16.msra.mxu0 %v6461
    %10066 = vmatpush.bf16.msra.mxu0 %v6453
    %10067 = vmatpush.bf16.msra.mxu0 %v6445
    %10068 = vmatpush.bf16.msra.mxu0 %v6437
    %10069 = vmatpush.bf16.msra.mxu0 %v6429
    %10070 = vmatpush.bf16.msra.mxu0 %v6421
    %10071 = vmatpush.bf16.msra.mxu0 %v6413
    %10072 = vmatmul.bf16.gmra.mxu0 %v294
    %v10073 = vpop.f32.mrf.mxu0
    %v10074 = vadd.f32 %v10061, %v10073
    %v10075 = vpop.f32.mrf.mxu0
    %10076 = vdwg.mxu0
    %10077 = vmatpush.bf16.msra.mxu0 %v6533
    %10078 = vmatpush.bf16.msra.mxu0 %v6525
    %10079 = vmatpush.bf16.msra.mxu0 %v6517
    %10080 = vmatpush.bf16.msra.mxu0 %v6509
    %10081 = vmatpush.bf16.msra.mxu0 %v6501
    %10082 = vmatpush.bf16.msra.mxu0 %v6493
    %10083 = vmatpush.bf16.msra.mxu0 %v6485
    %10084 = vmatpush.bf16.msra.mxu0 %v6477
    %10085 = vmatmul.bf16.gmra.mxu0 %v295
    %v10086 = vpop.f32.mrf.mxu0
    %v10087 = vadd.f32 %v10074, %v10086
    %v10088 = vpop.f32.mrf.mxu0
    %10089 = vdwg.mxu0
    %10090 = vmatpush.bf16.msra.mxu0 %v6597
    %10091 = vmatpush.bf16.msra.mxu0 %v6589
    %10092 = vmatpush.bf16.msra.mxu0 %v6581
    %10093 = vmatpush.bf16.msra.mxu0 %v6573
    %10094 = vmatpush.bf16.msra.mxu0 %v6565
    %10095 = vmatpush.bf16.msra.mxu0 %v6557
    %10096 = vmatpush.bf16.msra.mxu0 %v6549
    %10097 = vmatpush.bf16.msra.mxu0 %v6541
    %10098 = vmatmul.bf16.gmra.mxu0 %v296
    %v10099 = vpop.f32.mrf.mxu0
    %v10100 = vadd.f32 %v10087, %v10099
    %v10101 = vpop.f32.mrf.mxu0
    %10102 = vdwg.mxu0
    %10103 = vmatpush.bf16.msra.mxu0 %v6661
    %10104 = vmatpush.bf16.msra.mxu0 %v6653
    %10105 = vmatpush.bf16.msra.mxu0 %v6645
    %10106 = vmatpush.bf16.msra.mxu0 %v6637
    %10107 = vmatpush.bf16.msra.mxu0 %v6629
    %10108 = vmatpush.bf16.msra.mxu0 %v6621
    %10109 = vmatpush.bf16.msra.mxu0 %v6613
    %10110 = vmatpush.bf16.msra.mxu0 %v6605
    %10111 = vmatmul.bf16.gmra.mxu0 %v297
    %v10112 = vpop.f32.mrf.mxu0
    %v10113 = vadd.f32 %v10100, %v10112
    %v10114 = vpop.f32.mrf.mxu0
    %10115 = vdwg.mxu0
    %10116 = vmatpush.bf16.msra.mxu0 %v6725
    %10117 = vmatpush.bf16.msra.mxu0 %v6717
    %10118 = vmatpush.bf16.msra.mxu0 %v6709
    %10119 = vmatpush.bf16.msra.mxu0 %v6701
    %10120 = vmatpush.bf16.msra.mxu0 %v6693
    %10121 = vmatpush.bf16.msra.mxu0 %v6685
    %10122 = vmatpush.bf16.msra.mxu0 %v6677
    %10123 = vmatpush.bf16.msra.mxu0 %v6669
    %10124 = vmatmul.bf16.gmra.mxu0 %v298
    %v10125 = vpop.f32.mrf.mxu0
    %v10126 = vadd.f32 %v10113, %v10125
    %v10127 = vpop.f32.mrf.mxu0
    %10128 = vdwg.mxu0
    %10129 = vmatpush.bf16.msra.mxu0 %v6789
    %10130 = vmatpush.bf16.msra.mxu0 %v6781
    %10131 = vmatpush.bf16.msra.mxu0 %v6773
    %10132 = vmatpush.bf16.msra.mxu0 %v6765
    %10133 = vmatpush.bf16.msra.mxu0 %v6757
    %10134 = vmatpush.bf16.msra.mxu0 %v6749
    %10135 = vmatpush.bf16.msra.mxu0 %v6741
    %10136 = vmatpush.bf16.msra.mxu0 %v6733
    %10137 = vmatmul.bf16.gmra.mxu0 %v299
    %v10138 = vpop.f32.mrf.mxu0
    %v10139 = vadd.f32 %v10126, %v10138
    %v10140 = vpop.f32.mrf.mxu0
    %10141 = vdwg.mxu0
    %10142 = vmatpush.bf16.msra.mxu0 %v6853
    %10143 = vmatpush.bf16.msra.mxu0 %v6845
    %10144 = vmatpush.bf16.msra.mxu0 %v6837
    %10145 = vmatpush.bf16.msra.mxu0 %v6829
    %10146 = vmatpush.bf16.msra.mxu0 %v6821
    %10147 = vmatpush.bf16.msra.mxu0 %v6813
    %10148 = vmatpush.bf16.msra.mxu0 %v6805
    %10149 = vmatpush.bf16.msra.mxu0 %v6797
    %10150 = vmatmul.bf16.gmra.mxu0 %v300
    %v10151 = vpop.f32.mrf.mxu0
    %v10152 = vadd.f32 %v10139, %v10151
    %v10153 = vpop.f32.mrf.mxu0
    %10154 = vdwg.mxu0
    %10155 = vmatpush.bf16.msra.mxu0 %v6917
    %10156 = vmatpush.bf16.msra.mxu0 %v6909
    %10157 = vmatpush.bf16.msra.mxu0 %v6901
    %10158 = vmatpush.bf16.msra.mxu0 %v6893
    %10159 = vmatpush.bf16.msra.mxu0 %v6885
    %10160 = vmatpush.bf16.msra.mxu0 %v6877
    %10161 = vmatpush.bf16.msra.mxu0 %v6869
    %10162 = vmatpush.bf16.msra.mxu0 %v6861
    %10163 = vmatmul.bf16.gmra.mxu0 %v301
    %v10164 = vpop.f32.mrf.mxu0
    %v10165 = vadd.f32 %v10152, %v10164
    %v10166 = vpop.f32.mrf.mxu0
    %10167 = vdwg.mxu0
    %10168 = vmatpush.bf16.msra.mxu0 %v6981
    %10169 = vmatpush.bf16.msra.mxu0 %v6973
    %10170 = vmatpush.bf16.msra.mxu0 %v6965
    %10171 = vmatpush.bf16.msra.mxu0 %v6957
    %10172 = vmatpush.bf16.msra.mxu0 %v6949
    %10173 = vmatpush.bf16.msra.mxu0 %v6941
    %10174 = vmatpush.bf16.msra.mxu0 %v6933
    %10175 = vmatpush.bf16.msra.mxu0 %v6925
    %10176 = vmatmul.bf16.gmra.mxu0 %v302
    %v10177 = vpop.f32.mrf.mxu0
    %v10178 = vadd.f32 %v10165, %v10177
    %v10179 = vpop.f32.mrf.mxu0
    %10180 = vdwg.mxu0
    %10181 = vmatpush.bf16.msra.mxu0 %v7045
    %10182 = vmatpush.bf16.msra.mxu0 %v7037
    %10183 = vmatpush.bf16.msra.mxu0 %v7029
    %10184 = vmatpush.bf16.msra.mxu0 %v7021
    %10185 = vmatpush.bf16.msra.mxu0 %v7013
    %10186 = vmatpush.bf16.msra.mxu0 %v7005
    %10187 = vmatpush.bf16.msra.mxu0 %v6997
    %10188 = vmatpush.bf16.msra.mxu0 %v6989
    %10189 = vmatmul.bf16.gmra.mxu0 %v303
    %v10190 = vpop.f32.mrf.mxu0
    %v10191 = vadd.f32 %v10178, %v10190
    %v10192 = vpop.f32.mrf.mxu0
    %10193 = vdwg.mxu0
    %10194 = vmatpush.bf16.msra.mxu0 %v7109
    %10195 = vmatpush.bf16.msra.mxu0 %v7101
    %10196 = vmatpush.bf16.msra.mxu0 %v7093
    %10197 = vmatpush.bf16.msra.mxu0 %v7085
    %10198 = vmatpush.bf16.msra.mxu0 %v7077
    %10199 = vmatpush.bf16.msra.mxu0 %v7069
    %10200 = vmatpush.bf16.msra.mxu0 %v7061
    %10201 = vmatpush.bf16.msra.mxu0 %v7053
    %10202 = vmatmul.bf16.gmra.mxu0 %v304
    %v10203 = vpop.f32.mrf.mxu0
    %v10204 = vadd.f32 %v10191, %v10203
    %v10205 = vpop.f32.mrf.mxu0
    %10206 = vdwg.mxu0
    %10207 = vmatpush.bf16.msra.mxu0 %v7173
    %10208 = vmatpush.bf16.msra.mxu0 %v7165
    %10209 = vmatpush.bf16.msra.mxu0 %v7157
    %10210 = vmatpush.bf16.msra.mxu0 %v7149
    %10211 = vmatpush.bf16.msra.mxu0 %v7141
    %10212 = vmatpush.bf16.msra.mxu0 %v7133
    %10213 = vmatpush.bf16.msra.mxu0 %v7125
    %10214 = vmatpush.bf16.msra.mxu0 %v7117
    %10215 = vmatmul.bf16.gmra.mxu0 %v305
    %v10216 = vpop.f32.mrf.mxu0
    %v10217 = vadd.f32 %v10204, %v10216
    %v10218 = vpop.f32.mrf.mxu0
    %10219 = vdwg.mxu0
    %10220 = vmatpush.bf16.msra.mxu0 %v7237
    %10221 = vmatpush.bf16.msra.mxu0 %v7229
    %10222 = vmatpush.bf16.msra.mxu0 %v7221
    %10223 = vmatpush.bf16.msra.mxu0 %v7213
    %10224 = vmatpush.bf16.msra.mxu0 %v7205
    %10225 = vmatpush.bf16.msra.mxu0 %v7197
    %10226 = vmatpush.bf16.msra.mxu0 %v7189
    %10227 = vmatpush.bf16.msra.mxu0 %v7181
    %10228 = vmatmul.bf16.gmra.mxu0 %v306
    %v10229 = vpop.f32.mrf.mxu0
    %v10230 = vadd.f32 %v10217, %v10229
    %v10231 = vpop.f32.mrf.mxu0
    %10232 = vdwg.mxu0
    %10233 = vmatpush.bf16.msra.mxu0 %v7301
    %10234 = vmatpush.bf16.msra.mxu0 %v7293
    %10235 = vmatpush.bf16.msra.mxu0 %v7285
    %10236 = vmatpush.bf16.msra.mxu0 %v7277
    %10237 = vmatpush.bf16.msra.mxu0 %v7269
    %10238 = vmatpush.bf16.msra.mxu0 %v7261
    %10239 = vmatpush.bf16.msra.mxu0 %v7253
    %10240 = vmatpush.bf16.msra.mxu0 %v7245
    %10241 = vmatmul.bf16.gmra.mxu0 %v307
    %v10242 = vpop.f32.mrf.mxu0
    %v10243 = vadd.f32 %v10230, %v10242
    %v10244 = vpop.f32.mrf.mxu0
    %10245 = vdwg.mxu0
    %10246 = vmatpush.bf16.msra.mxu0 %v7365
    %10247 = vmatpush.bf16.msra.mxu0 %v7357
    %10248 = vmatpush.bf16.msra.mxu0 %v7349
    %10249 = vmatpush.bf16.msra.mxu0 %v7341
    %10250 = vmatpush.bf16.msra.mxu0 %v7333
    %10251 = vmatpush.bf16.msra.mxu0 %v7325
    %10252 = vmatpush.bf16.msra.mxu0 %v7317
    %10253 = vmatpush.bf16.msra.mxu0 %v7309
    %10254 = vmatmul.bf16.gmra.mxu0 %v308
    %v10255 = vpop.f32.mrf.mxu0
    %v10256 = vadd.f32 %v10243, %v10255
    %v10257 = vpop.f32.mrf.mxu0
    %10258 = vdwg.mxu0
    %10259 = vmatpush.bf16.msra.mxu0 %v7429
    %10260 = vmatpush.bf16.msra.mxu0 %v7421
    %10261 = vmatpush.bf16.msra.mxu0 %v7413
    %10262 = vmatpush.bf16.msra.mxu0 %v7405
    %10263 = vmatpush.bf16.msra.mxu0 %v7397
    %10264 = vmatpush.bf16.msra.mxu0 %v7389
    %10265 = vmatpush.bf16.msra.mxu0 %v7381
    %10266 = vmatpush.bf16.msra.mxu0 %v7373
    %10267 = vmatmul.bf16.gmra.mxu0 %v309
    %v10268 = vpop.f32.mrf.mxu0
    %v10269 = vadd.f32 %v10256, %v10268
    %v10270 = vpop.f32.mrf.mxu0
    %10271 = vdwg.mxu0
    %10272 = vmatpush.bf16.msra.mxu0 %v6214
    %10273 = vmatpush.bf16.msra.mxu0 %v6206
    %10274 = vmatpush.bf16.msra.mxu0 %v6198
    %10275 = vmatpush.bf16.msra.mxu0 %v6190
    %10276 = vmatpush.bf16.msra.mxu0 %v6182
    %10277 = vmatpush.bf16.msra.mxu0 %v6174
    %10278 = vmatpush.bf16.msra.mxu0 %v6166
    %10279 = vmatpush.bf16.msra.mxu0 %v6158
    %10280 = vmatmul.bf16.gmra.mxu0 %v290
    %v10281 = vpop.f32.mrf.mxu0
    %v10282 = vadd.f32 0.0, %v10281
    %v10283 = vpop.f32.mrf.mxu0
    %10284 = vdwg.mxu0
    %10285 = vmatpush.bf16.msra.mxu0 %v6278
    %10286 = vmatpush.bf16.msra.mxu0 %v6270
    %10287 = vmatpush.bf16.msra.mxu0 %v6262
    %10288 = vmatpush.bf16.msra.mxu0 %v6254
    %10289 = vmatpush.bf16.msra.mxu0 %v6246
    %10290 = vmatpush.bf16.msra.mxu0 %v6238
    %10291 = vmatpush.bf16.msra.mxu0 %v6230
    %10292 = vmatpush.bf16.msra.mxu0 %v6222
    %10293 = vmatmul.bf16.gmra.mxu0 %v291
    %v10294 = vpop.f32.mrf.mxu0
    %v10295 = vadd.f32 %v10282, %v10294
    %v10296 = vpop.f32.mrf.mxu0
    %10297 = vdwg.mxu0
    %10298 = vmatpush.bf16.msra.mxu0 %v6342
    %10299 = vmatpush.bf16.msra.mxu0 %v6334
    %10300 = vmatpush.bf16.msra.mxu0 %v6326
    %10301 = vmatpush.bf16.msra.mxu0 %v6318
    %10302 = vmatpush.bf16.msra.mxu0 %v6310
    %10303 = vmatpush.bf16.msra.mxu0 %v6302
    %10304 = vmatpush.bf16.msra.mxu0 %v6294
    %10305 = vmatpush.bf16.msra.mxu0 %v6286
    %10306 = vmatmul.bf16.gmra.mxu0 %v292
    %v10307 = vpop.f32.mrf.mxu0
    %v10308 = vadd.f32 %v10295, %v10307
    %v10309 = vpop.f32.mrf.mxu0
    %10310 = vdwg.mxu0
    %10311 = vmatpush.bf16.msra.mxu0 %v6406
    %10312 = vmatpush.bf16.msra.mxu0 %v6398
    %10313 = vmatpush.bf16.msra.mxu0 %v6390
    %10314 = vmatpush.bf16.msra.mxu0 %v6382
    %10315 = vmatpush.bf16.msra.mxu0 %v6374
    %10316 = vmatpush.bf16.msra.mxu0 %v6366
    %10317 = vmatpush.bf16.msra.mxu0 %v6358
    %10318 = vmatpush.bf16.msra.mxu0 %v6350
    %10319 = vmatmul.bf16.gmra.mxu0 %v293
    %v10320 = vpop.f32.mrf.mxu0
    %v10321 = vadd.f32 %v10308, %v10320
    %v10322 = vpop.f32.mrf.mxu0
    %10323 = vdwg.mxu0
    %10324 = vmatpush.bf16.msra.mxu0 %v6470
    %10325 = vmatpush.bf16.msra.mxu0 %v6462
    %10326 = vmatpush.bf16.msra.mxu0 %v6454
    %10327 = vmatpush.bf16.msra.mxu0 %v6446
    %10328 = vmatpush.bf16.msra.mxu0 %v6438
    %10329 = vmatpush.bf16.msra.mxu0 %v6430
    %10330 = vmatpush.bf16.msra.mxu0 %v6422
    %10331 = vmatpush.bf16.msra.mxu0 %v6414
    %10332 = vmatmul.bf16.gmra.mxu0 %v294
    %v10333 = vpop.f32.mrf.mxu0
    %v10334 = vadd.f32 %v10321, %v10333
    %v10335 = vpop.f32.mrf.mxu0
    %10336 = vdwg.mxu0
    %10337 = vmatpush.bf16.msra.mxu0 %v6534
    %10338 = vmatpush.bf16.msra.mxu0 %v6526
    %10339 = vmatpush.bf16.msra.mxu0 %v6518
    %10340 = vmatpush.bf16.msra.mxu0 %v6510
    %10341 = vmatpush.bf16.msra.mxu0 %v6502
    %10342 = vmatpush.bf16.msra.mxu0 %v6494
    %10343 = vmatpush.bf16.msra.mxu0 %v6486
    %10344 = vmatpush.bf16.msra.mxu0 %v6478
    %10345 = vmatmul.bf16.gmra.mxu0 %v295
    %v10346 = vpop.f32.mrf.mxu0
    %v10347 = vadd.f32 %v10334, %v10346
    %v10348 = vpop.f32.mrf.mxu0
    %10349 = vdwg.mxu0
    %10350 = vmatpush.bf16.msra.mxu0 %v6598
    %10351 = vmatpush.bf16.msra.mxu0 %v6590
    %10352 = vmatpush.bf16.msra.mxu0 %v6582
    %10353 = vmatpush.bf16.msra.mxu0 %v6574
    %10354 = vmatpush.bf16.msra.mxu0 %v6566
    %10355 = vmatpush.bf16.msra.mxu0 %v6558
    %10356 = vmatpush.bf16.msra.mxu0 %v6550
    %10357 = vmatpush.bf16.msra.mxu0 %v6542
    %10358 = vmatmul.bf16.gmra.mxu0 %v296
    %v10359 = vpop.f32.mrf.mxu0
    %v10360 = vadd.f32 %v10347, %v10359
    %v10361 = vpop.f32.mrf.mxu0
    %10362 = vdwg.mxu0
    %10363 = vmatpush.bf16.msra.mxu0 %v6662
    %10364 = vmatpush.bf16.msra.mxu0 %v6654
    %10365 = vmatpush.bf16.msra.mxu0 %v6646
    %10366 = vmatpush.bf16.msra.mxu0 %v6638
    %10367 = vmatpush.bf16.msra.mxu0 %v6630
    %10368 = vmatpush.bf16.msra.mxu0 %v6622
    %10369 = vmatpush.bf16.msra.mxu0 %v6614
    %10370 = vmatpush.bf16.msra.mxu0 %v6606
    %10371 = vmatmul.bf16.gmra.mxu0 %v297
    %v10372 = vpop.f32.mrf.mxu0
    %v10373 = vadd.f32 %v10360, %v10372
    %v10374 = vpop.f32.mrf.mxu0
    %10375 = vdwg.mxu0
    %10376 = vmatpush.bf16.msra.mxu0 %v6726
    %10377 = vmatpush.bf16.msra.mxu0 %v6718
    %10378 = vmatpush.bf16.msra.mxu0 %v6710
    %10379 = vmatpush.bf16.msra.mxu0 %v6702
    %10380 = vmatpush.bf16.msra.mxu0 %v6694
    %10381 = vmatpush.bf16.msra.mxu0 %v6686
    %10382 = vmatpush.bf16.msra.mxu0 %v6678
    %10383 = vmatpush.bf16.msra.mxu0 %v6670
    %10384 = vmatmul.bf16.gmra.mxu0 %v298
    %v10385 = vpop.f32.mrf.mxu0
    %v10386 = vadd.f32 %v10373, %v10385
    %v10387 = vpop.f32.mrf.mxu0
    %10388 = vdwg.mxu0
    %10389 = vmatpush.bf16.msra.mxu0 %v6790
    %10390 = vmatpush.bf16.msra.mxu0 %v6782
    %10391 = vmatpush.bf16.msra.mxu0 %v6774
    %10392 = vmatpush.bf16.msra.mxu0 %v6766
    %10393 = vmatpush.bf16.msra.mxu0 %v6758
    %10394 = vmatpush.bf16.msra.mxu0 %v6750
    %10395 = vmatpush.bf16.msra.mxu0 %v6742
    %10396 = vmatpush.bf16.msra.mxu0 %v6734
    %10397 = vmatmul.bf16.gmra.mxu0 %v299
    %v10398 = vpop.f32.mrf.mxu0
    %v10399 = vadd.f32 %v10386, %v10398
    %v10400 = vpop.f32.mrf.mxu0
    %10401 = vdwg.mxu0
    %10402 = vmatpush.bf16.msra.mxu0 %v6854
    %10403 = vmatpush.bf16.msra.mxu0 %v6846
    %10404 = vmatpush.bf16.msra.mxu0 %v6838
    %10405 = vmatpush.bf16.msra.mxu0 %v6830
    %10406 = vmatpush.bf16.msra.mxu0 %v6822
    %10407 = vmatpush.bf16.msra.mxu0 %v6814
    %10408 = vmatpush.bf16.msra.mxu0 %v6806
    %10409 = vmatpush.bf16.msra.mxu0 %v6798
    %10410 = vmatmul.bf16.gmra.mxu0 %v300
    %v10411 = vpop.f32.mrf.mxu0
    %v10412 = vadd.f32 %v10399, %v10411
    %v10413 = vpop.f32.mrf.mxu0
    %10414 = vdwg.mxu0
    %10415 = vmatpush.bf16.msra.mxu0 %v6918
    %10416 = vmatpush.bf16.msra.mxu0 %v6910
    %10417 = vmatpush.bf16.msra.mxu0 %v6902
    %10418 = vmatpush.bf16.msra.mxu0 %v6894
    %10419 = vmatpush.bf16.msra.mxu0 %v6886
    %10420 = vmatpush.bf16.msra.mxu0 %v6878
    %10421 = vmatpush.bf16.msra.mxu0 %v6870
    %10422 = vmatpush.bf16.msra.mxu0 %v6862
    %10423 = vmatmul.bf16.gmra.mxu0 %v301
    %v10424 = vpop.f32.mrf.mxu0
    %v10425 = vadd.f32 %v10412, %v10424
    %v10426 = vpop.f32.mrf.mxu0
    %10427 = vdwg.mxu0
    %10428 = vmatpush.bf16.msra.mxu0 %v6982
    %10429 = vmatpush.bf16.msra.mxu0 %v6974
    %10430 = vmatpush.bf16.msra.mxu0 %v6966
    %10431 = vmatpush.bf16.msra.mxu0 %v6958
    %10432 = vmatpush.bf16.msra.mxu0 %v6950
    %10433 = vmatpush.bf16.msra.mxu0 %v6942
    %10434 = vmatpush.bf16.msra.mxu0 %v6934
    %10435 = vmatpush.bf16.msra.mxu0 %v6926
    %10436 = vmatmul.bf16.gmra.mxu0 %v302
    %v10437 = vpop.f32.mrf.mxu0
    %v10438 = vadd.f32 %v10425, %v10437
    %v10439 = vpop.f32.mrf.mxu0
    %10440 = vdwg.mxu0
    %10441 = vmatpush.bf16.msra.mxu0 %v7046
    %10442 = vmatpush.bf16.msra.mxu0 %v7038
    %10443 = vmatpush.bf16.msra.mxu0 %v7030
    %10444 = vmatpush.bf16.msra.mxu0 %v7022
    %10445 = vmatpush.bf16.msra.mxu0 %v7014
    %10446 = vmatpush.bf16.msra.mxu0 %v7006
    %10447 = vmatpush.bf16.msra.mxu0 %v6998
    %10448 = vmatpush.bf16.msra.mxu0 %v6990
    %10449 = vmatmul.bf16.gmra.mxu0 %v303
    %v10450 = vpop.f32.mrf.mxu0
    %v10451 = vadd.f32 %v10438, %v10450
    %v10452 = vpop.f32.mrf.mxu0
    %10453 = vdwg.mxu0
    %10454 = vmatpush.bf16.msra.mxu0 %v7110
    %10455 = vmatpush.bf16.msra.mxu0 %v7102
    %10456 = vmatpush.bf16.msra.mxu0 %v7094
    %10457 = vmatpush.bf16.msra.mxu0 %v7086
    %10458 = vmatpush.bf16.msra.mxu0 %v7078
    %10459 = vmatpush.bf16.msra.mxu0 %v7070
    %10460 = vmatpush.bf16.msra.mxu0 %v7062
    %10461 = vmatpush.bf16.msra.mxu0 %v7054
    %10462 = vmatmul.bf16.gmra.mxu0 %v304
    %v10463 = vpop.f32.mrf.mxu0
    %v10464 = vadd.f32 %v10451, %v10463
    %v10465 = vpop.f32.mrf.mxu0
    %10466 = vdwg.mxu0
    %10467 = vmatpush.bf16.msra.mxu0 %v7174
    %10468 = vmatpush.bf16.msra.mxu0 %v7166
    %10469 = vmatpush.bf16.msra.mxu0 %v7158
    %10470 = vmatpush.bf16.msra.mxu0 %v7150
    %10471 = vmatpush.bf16.msra.mxu0 %v7142
    %10472 = vmatpush.bf16.msra.mxu0 %v7134
    %10473 = vmatpush.bf16.msra.mxu0 %v7126
    %10474 = vmatpush.bf16.msra.mxu0 %v7118
    %10475 = vmatmul.bf16.gmra.mxu0 %v305
    %v10476 = vpop.f32.mrf.mxu0
    %v10477 = vadd.f32 %v10464, %v10476
    %v10478 = vpop.f32.mrf.mxu0
    %10479 = vdwg.mxu0
    %10480 = vmatpush.bf16.msra.mxu0 %v7238
    %10481 = vmatpush.bf16.msra.mxu0 %v7230
    %10482 = vmatpush.bf16.msra.mxu0 %v7222
    %10483 = vmatpush.bf16.msra.mxu0 %v7214
    %10484 = vmatpush.bf16.msra.mxu0 %v7206
    %10485 = vmatpush.bf16.msra.mxu0 %v7198
    %10486 = vmatpush.bf16.msra.mxu0 %v7190
    %10487 = vmatpush.bf16.msra.mxu0 %v7182
    %10488 = vmatmul.bf16.gmra.mxu0 %v306
    %v10489 = vpop.f32.mrf.mxu0
    %v10490 = vadd.f32 %v10477, %v10489
    %v10491 = vpop.f32.mrf.mxu0
    %10492 = vdwg.mxu0
    %10493 = vmatpush.bf16.msra.mxu0 %v7302
    %10494 = vmatpush.bf16.msra.mxu0 %v7294
    %10495 = vmatpush.bf16.msra.mxu0 %v7286
    %10496 = vmatpush.bf16.msra.mxu0 %v7278
    %10497 = vmatpush.bf16.msra.mxu0 %v7270
    %10498 = vmatpush.bf16.msra.mxu0 %v7262
    %10499 = vmatpush.bf16.msra.mxu0 %v7254
    %10500 = vmatpush.bf16.msra.mxu0 %v7246
    %10501 = vmatmul.bf16.gmra.mxu0 %v307
    %v10502 = vpop.f32.mrf.mxu0
    %v10503 = vadd.f32 %v10490, %v10502
    %v10504 = vpop.f32.mrf.mxu0
    %10505 = vdwg.mxu0
    %10506 = vmatpush.bf16.msra.mxu0 %v7366
    %10507 = vmatpush.bf16.msra.mxu0 %v7358
    %10508 = vmatpush.bf16.msra.mxu0 %v7350
    %10509 = vmatpush.bf16.msra.mxu0 %v7342
    %10510 = vmatpush.bf16.msra.mxu0 %v7334
    %10511 = vmatpush.bf16.msra.mxu0 %v7326
    %10512 = vmatpush.bf16.msra.mxu0 %v7318
    %10513 = vmatpush.bf16.msra.mxu0 %v7310
    %10514 = vmatmul.bf16.gmra.mxu0 %v308
    %v10515 = vpop.f32.mrf.mxu0
    %v10516 = vadd.f32 %v10503, %v10515
    %v10517 = vpop.f32.mrf.mxu0
    %10518 = vdwg.mxu0
    %10519 = vmatpush.bf16.msra.mxu0 %v7430
    %10520 = vmatpush.bf16.msra.mxu0 %v7422
    %10521 = vmatpush.bf16.msra.mxu0 %v7414
    %10522 = vmatpush.bf16.msra.mxu0 %v7406
    %10523 = vmatpush.bf16.msra.mxu0 %v7398
    %10524 = vmatpush.bf16.msra.mxu0 %v7390
    %10525 = vmatpush.bf16.msra.mxu0 %v7382
    %10526 = vmatpush.bf16.msra.mxu0 %v7374
    %10527 = vmatmul.bf16.gmra.mxu0 %v309
    %v10528 = vpop.f32.mrf.mxu0
    %v10529 = vadd.f32 %v10516, %v10528
    %v10530 = vpop.f32.mrf.mxu0
    %10531 = vdwg.mxu0
    %10532 = vmatpush.bf16.msra.mxu0 %v6215
    %10533 = vmatpush.bf16.msra.mxu0 %v6207
    %10534 = vmatpush.bf16.msra.mxu0 %v6199
    %10535 = vmatpush.bf16.msra.mxu0 %v6191
    %10536 = vmatpush.bf16.msra.mxu0 %v6183
    %10537 = vmatpush.bf16.msra.mxu0 %v6175
    %10538 = vmatpush.bf16.msra.mxu0 %v6167
    %10539 = vmatpush.bf16.msra.mxu0 %v6159
    %10540 = vmatmul.bf16.gmra.mxu0 %v290
    %v10541 = vpop.f32.mrf.mxu0
    %v10542 = vadd.f32 0.0, %v10541
    %v10543 = vpop.f32.mrf.mxu0
    %10544 = vdwg.mxu0
    %10545 = vmatpush.bf16.msra.mxu0 %v6279
    %10546 = vmatpush.bf16.msra.mxu0 %v6271
    %10547 = vmatpush.bf16.msra.mxu0 %v6263
    %10548 = vmatpush.bf16.msra.mxu0 %v6255
    %10549 = vmatpush.bf16.msra.mxu0 %v6247
    %10550 = vmatpush.bf16.msra.mxu0 %v6239
    %10551 = vmatpush.bf16.msra.mxu0 %v6231
    %10552 = vmatpush.bf16.msra.mxu0 %v6223
    %10553 = vmatmul.bf16.gmra.mxu0 %v291
    %v10554 = vpop.f32.mrf.mxu0
    %v10555 = vadd.f32 %v10542, %v10554
    %v10556 = vpop.f32.mrf.mxu0
    %10557 = vdwg.mxu0
    %10558 = vmatpush.bf16.msra.mxu0 %v6343
    %10559 = vmatpush.bf16.msra.mxu0 %v6335
    %10560 = vmatpush.bf16.msra.mxu0 %v6327
    %10561 = vmatpush.bf16.msra.mxu0 %v6319
    %10562 = vmatpush.bf16.msra.mxu0 %v6311
    %10563 = vmatpush.bf16.msra.mxu0 %v6303
    %10564 = vmatpush.bf16.msra.mxu0 %v6295
    %10565 = vmatpush.bf16.msra.mxu0 %v6287
    %10566 = vmatmul.bf16.gmra.mxu0 %v292
    %v10567 = vpop.f32.mrf.mxu0
    %v10568 = vadd.f32 %v10555, %v10567
    %v10569 = vpop.f32.mrf.mxu0
    %10570 = vdwg.mxu0
    %10571 = vmatpush.bf16.msra.mxu0 %v6407
    %10572 = vmatpush.bf16.msra.mxu0 %v6399
    %10573 = vmatpush.bf16.msra.mxu0 %v6391
    %10574 = vmatpush.bf16.msra.mxu0 %v6383
    %10575 = vmatpush.bf16.msra.mxu0 %v6375
    %10576 = vmatpush.bf16.msra.mxu0 %v6367
    %10577 = vmatpush.bf16.msra.mxu0 %v6359
    %10578 = vmatpush.bf16.msra.mxu0 %v6351
    %10579 = vmatmul.bf16.gmra.mxu0 %v293
    %v10580 = vpop.f32.mrf.mxu0
    %v10581 = vadd.f32 %v10568, %v10580
    %v10582 = vpop.f32.mrf.mxu0
    %10583 = vdwg.mxu0
    %10584 = vmatpush.bf16.msra.mxu0 %v6471
    %10585 = vmatpush.bf16.msra.mxu0 %v6463
    %10586 = vmatpush.bf16.msra.mxu0 %v6455
    %10587 = vmatpush.bf16.msra.mxu0 %v6447
    %10588 = vmatpush.bf16.msra.mxu0 %v6439
    %10589 = vmatpush.bf16.msra.mxu0 %v6431
    %10590 = vmatpush.bf16.msra.mxu0 %v6423
    %10591 = vmatpush.bf16.msra.mxu0 %v6415
    %10592 = vmatmul.bf16.gmra.mxu0 %v294
    %v10593 = vpop.f32.mrf.mxu0
    %v10594 = vadd.f32 %v10581, %v10593
    %v10595 = vpop.f32.mrf.mxu0
    %10596 = vdwg.mxu0
    %10597 = vmatpush.bf16.msra.mxu0 %v6535
    %10598 = vmatpush.bf16.msra.mxu0 %v6527
    %10599 = vmatpush.bf16.msra.mxu0 %v6519
    %10600 = vmatpush.bf16.msra.mxu0 %v6511
    %10601 = vmatpush.bf16.msra.mxu0 %v6503
    %10602 = vmatpush.bf16.msra.mxu0 %v6495
    %10603 = vmatpush.bf16.msra.mxu0 %v6487
    %10604 = vmatpush.bf16.msra.mxu0 %v6479
    %10605 = vmatmul.bf16.gmra.mxu0 %v295
    %v10606 = vpop.f32.mrf.mxu0
    %v10607 = vadd.f32 %v10594, %v10606
    %v10608 = vpop.f32.mrf.mxu0
    %10609 = vdwg.mxu0
    %10610 = vmatpush.bf16.msra.mxu0 %v6599
    %10611 = vmatpush.bf16.msra.mxu0 %v6591
    %10612 = vmatpush.bf16.msra.mxu0 %v6583
    %10613 = vmatpush.bf16.msra.mxu0 %v6575
    %10614 = vmatpush.bf16.msra.mxu0 %v6567
    %10615 = vmatpush.bf16.msra.mxu0 %v6559
    %10616 = vmatpush.bf16.msra.mxu0 %v6551
    %10617 = vmatpush.bf16.msra.mxu0 %v6543
    %10618 = vmatmul.bf16.gmra.mxu0 %v296
    %v10619 = vpop.f32.mrf.mxu0
    %v10620 = vadd.f32 %v10607, %v10619
    %v10621 = vpop.f32.mrf.mxu0
    %10622 = vdwg.mxu0
    %10623 = vmatpush.bf16.msra.mxu0 %v6663
    %10624 = vmatpush.bf16.msra.mxu0 %v6655
    %10625 = vmatpush.bf16.msra.mxu0 %v6647
    %10626 = vmatpush.bf16.msra.mxu0 %v6639
    %10627 = vmatpush.bf16.msra.mxu0 %v6631
    %10628 = vmatpush.bf16.msra.mxu0 %v6623
    %10629 = vmatpush.bf16.msra.mxu0 %v6615
    %10630 = vmatpush.bf16.msra.mxu0 %v6607
    %10631 = vmatmul.bf16.gmra.mxu0 %v297
    %v10632 = vpop.f32.mrf.mxu0
    %v10633 = vadd.f32 %v10620, %v10632
    %v10634 = vpop.f32.mrf.mxu0
    %10635 = vdwg.mxu0
    %10636 = vmatpush.bf16.msra.mxu0 %v6727
    %10637 = vmatpush.bf16.msra.mxu0 %v6719
    %10638 = vmatpush.bf16.msra.mxu0 %v6711
    %10639 = vmatpush.bf16.msra.mxu0 %v6703
    %10640 = vmatpush.bf16.msra.mxu0 %v6695
    %10641 = vmatpush.bf16.msra.mxu0 %v6687
    %10642 = vmatpush.bf16.msra.mxu0 %v6679
    %10643 = vmatpush.bf16.msra.mxu0 %v6671
    %10644 = vmatmul.bf16.gmra.mxu0 %v298
    %v10645 = vpop.f32.mrf.mxu0
    %v10646 = vadd.f32 %v10633, %v10645
    %v10647 = vpop.f32.mrf.mxu0
    %10648 = vdwg.mxu0
    %10649 = vmatpush.bf16.msra.mxu0 %v6791
    %10650 = vmatpush.bf16.msra.mxu0 %v6783
    %10651 = vmatpush.bf16.msra.mxu0 %v6775
    %10652 = vmatpush.bf16.msra.mxu0 %v6767
    %10653 = vmatpush.bf16.msra.mxu0 %v6759
    %10654 = vmatpush.bf16.msra.mxu0 %v6751
    %10655 = vmatpush.bf16.msra.mxu0 %v6743
    %10656 = vmatpush.bf16.msra.mxu0 %v6735
    %10657 = vmatmul.bf16.gmra.mxu0 %v299
    %v10658 = vpop.f32.mrf.mxu0
    %v10659 = vadd.f32 %v10646, %v10658
    %v10660 = vpop.f32.mrf.mxu0
    %10661 = vdwg.mxu0
    %10662 = vmatpush.bf16.msra.mxu0 %v6855
    %10663 = vmatpush.bf16.msra.mxu0 %v6847
    %10664 = vmatpush.bf16.msra.mxu0 %v6839
    %10665 = vmatpush.bf16.msra.mxu0 %v6831
    %10666 = vmatpush.bf16.msra.mxu0 %v6823
    %10667 = vmatpush.bf16.msra.mxu0 %v6815
    %10668 = vmatpush.bf16.msra.mxu0 %v6807
    %10669 = vmatpush.bf16.msra.mxu0 %v6799
    %10670 = vmatmul.bf16.gmra.mxu0 %v300
    %v10671 = vpop.f32.mrf.mxu0
    %v10672 = vadd.f32 %v10659, %v10671
    %v10673 = vpop.f32.mrf.mxu0
    %10674 = vdwg.mxu0
    %10675 = vmatpush.bf16.msra.mxu0 %v6919
    %10676 = vmatpush.bf16.msra.mxu0 %v6911
    %10677 = vmatpush.bf16.msra.mxu0 %v6903
    %10678 = vmatpush.bf16.msra.mxu0 %v6895
    %10679 = vmatpush.bf16.msra.mxu0 %v6887
    %10680 = vmatpush.bf16.msra.mxu0 %v6879
    %10681 = vmatpush.bf16.msra.mxu0 %v6871
    %10682 = vmatpush.bf16.msra.mxu0 %v6863
    %10683 = vmatmul.bf16.gmra.mxu0 %v301
    %v10684 = vpop.f32.mrf.mxu0
    %v10685 = vadd.f32 %v10672, %v10684
    %v10686 = vpop.f32.mrf.mxu0
    %10687 = vdwg.mxu0
    %10688 = vmatpush.bf16.msra.mxu0 %v6983
    %10689 = vmatpush.bf16.msra.mxu0 %v6975
    %10690 = vmatpush.bf16.msra.mxu0 %v6967
    %10691 = vmatpush.bf16.msra.mxu0 %v6959
    %10692 = vmatpush.bf16.msra.mxu0 %v6951
    %10693 = vmatpush.bf16.msra.mxu0 %v6943
    %10694 = vmatpush.bf16.msra.mxu0 %v6935
    %10695 = vmatpush.bf16.msra.mxu0 %v6927
    %10696 = vmatmul.bf16.gmra.mxu0 %v302
    %v10697 = vpop.f32.mrf.mxu0
    %v10698 = vadd.f32 %v10685, %v10697
    %v10699 = vpop.f32.mrf.mxu0
    %10700 = vdwg.mxu0
    %10701 = vmatpush.bf16.msra.mxu0 %v7047
    %10702 = vmatpush.bf16.msra.mxu0 %v7039
    %10703 = vmatpush.bf16.msra.mxu0 %v7031
    %10704 = vmatpush.bf16.msra.mxu0 %v7023
    %10705 = vmatpush.bf16.msra.mxu0 %v7015
    %10706 = vmatpush.bf16.msra.mxu0 %v7007
    %10707 = vmatpush.bf16.msra.mxu0 %v6999
    %10708 = vmatpush.bf16.msra.mxu0 %v6991
    %10709 = vmatmul.bf16.gmra.mxu0 %v303
    %v10710 = vpop.f32.mrf.mxu0
    %v10711 = vadd.f32 %v10698, %v10710
    %v10712 = vpop.f32.mrf.mxu0
    %10713 = vdwg.mxu0
    %10714 = vmatpush.bf16.msra.mxu0 %v7111
    %10715 = vmatpush.bf16.msra.mxu0 %v7103
    %10716 = vmatpush.bf16.msra.mxu0 %v7095
    %10717 = vmatpush.bf16.msra.mxu0 %v7087
    %10718 = vmatpush.bf16.msra.mxu0 %v7079
    %10719 = vmatpush.bf16.msra.mxu0 %v7071
    %10720 = vmatpush.bf16.msra.mxu0 %v7063
    %10721 = vmatpush.bf16.msra.mxu0 %v7055
    %10722 = vmatmul.bf16.gmra.mxu0 %v304
    %v10723 = vpop.f32.mrf.mxu0
    %v10724 = vadd.f32 %v10711, %v10723
    %v10725 = vpop.f32.mrf.mxu0
    %10726 = vdwg.mxu0
    %10727 = vmatpush.bf16.msra.mxu0 %v7175
    %10728 = vmatpush.bf16.msra.mxu0 %v7167
    %10729 = vmatpush.bf16.msra.mxu0 %v7159
    %10730 = vmatpush.bf16.msra.mxu0 %v7151
    %10731 = vmatpush.bf16.msra.mxu0 %v7143
    %10732 = vmatpush.bf16.msra.mxu0 %v7135
    %10733 = vmatpush.bf16.msra.mxu0 %v7127
    %10734 = vmatpush.bf16.msra.mxu0 %v7119
    %10735 = vmatmul.bf16.gmra.mxu0 %v305
    %v10736 = vpop.f32.mrf.mxu0
    %v10737 = vadd.f32 %v10724, %v10736
    %v10738 = vpop.f32.mrf.mxu0
    %10739 = vdwg.mxu0
    %10740 = vmatpush.bf16.msra.mxu0 %v7239
    %10741 = vmatpush.bf16.msra.mxu0 %v7231
    %10742 = vmatpush.bf16.msra.mxu0 %v7223
    %10743 = vmatpush.bf16.msra.mxu0 %v7215
    %10744 = vmatpush.bf16.msra.mxu0 %v7207
    %10745 = vmatpush.bf16.msra.mxu0 %v7199
    %10746 = vmatpush.bf16.msra.mxu0 %v7191
    %10747 = vmatpush.bf16.msra.mxu0 %v7183
    %10748 = vmatmul.bf16.gmra.mxu0 %v306
    %v10749 = vpop.f32.mrf.mxu0
    %v10750 = vadd.f32 %v10737, %v10749
    %v10751 = vpop.f32.mrf.mxu0
    %10752 = vdwg.mxu0
    %10753 = vmatpush.bf16.msra.mxu0 %v7303
    %10754 = vmatpush.bf16.msra.mxu0 %v7295
    %10755 = vmatpush.bf16.msra.mxu0 %v7287
    %10756 = vmatpush.bf16.msra.mxu0 %v7279
    %10757 = vmatpush.bf16.msra.mxu0 %v7271
    %10758 = vmatpush.bf16.msra.mxu0 %v7263
    %10759 = vmatpush.bf16.msra.mxu0 %v7255
    %10760 = vmatpush.bf16.msra.mxu0 %v7247
    %10761 = vmatmul.bf16.gmra.mxu0 %v307
    %v10762 = vpop.f32.mrf.mxu0
    %v10763 = vadd.f32 %v10750, %v10762
    %v10764 = vpop.f32.mrf.mxu0
    %10765 = vdwg.mxu0
    %10766 = vmatpush.bf16.msra.mxu0 %v7367
    %10767 = vmatpush.bf16.msra.mxu0 %v7359
    %10768 = vmatpush.bf16.msra.mxu0 %v7351
    %10769 = vmatpush.bf16.msra.mxu0 %v7343
    %10770 = vmatpush.bf16.msra.mxu0 %v7335
    %10771 = vmatpush.bf16.msra.mxu0 %v7327
    %10772 = vmatpush.bf16.msra.mxu0 %v7319
    %10773 = vmatpush.bf16.msra.mxu0 %v7311
    %10774 = vmatmul.bf16.gmra.mxu0 %v308
    %v10775 = vpop.f32.mrf.mxu0
    %v10776 = vadd.f32 %v10763, %v10775
    %v10777 = vpop.f32.mrf.mxu0
    %10778 = vdwg.mxu0
    %10779 = vmatpush.bf16.msra.mxu0 %v7431
    %10780 = vmatpush.bf16.msra.mxu0 %v7423
    %10781 = vmatpush.bf16.msra.mxu0 %v7415
    %10782 = vmatpush.bf16.msra.mxu0 %v7407
    %10783 = vmatpush.bf16.msra.mxu0 %v7399
    %10784 = vmatpush.bf16.msra.mxu0 %v7391
    %10785 = vmatpush.bf16.msra.mxu0 %v7383
    %10786 = vmatpush.bf16.msra.mxu0 %v7375
    %10787 = vmatmul.bf16.gmra.mxu0 %v309
    %v10788 = vpop.f32.mrf.mxu0
    %v10789 = vadd.f32 %v10776, %v10788
    %v10790 = vpop.f32.mrf.mxu0
    %10791 = vdwg.mxu0
    %v10856 = vunpack.c.l.b16 %v968
    %v10857 = vunpack.c.h.b16 %v968
    %v10858 = vunpack.c.l.b16 %v969
    %v10859 = vunpack.c.h.b16 %v969
    %v10860 = vunpack.c.l.b16 %v970
    %v10861 = vunpack.c.h.b16 %v970
    %v10862 = vunpack.c.l.b16 %v971
    %v10863 = vunpack.c.h.b16 %v971
    %v10864 = vunpack.c.l.b16 %v972
    %v10865 = vunpack.c.h.b16 %v972
    %v10866 = vunpack.c.l.b16 %v973
    %v10867 = vunpack.c.h.b16 %v973
    %v10868 = vunpack.c.l.b16 %v974
    %v10869 = vunpack.c.h.b16 %v974
    %v10870 = vunpack.c.l.b16 %v975
    %v10871 = vunpack.c.h.b16 %v975
    %v10872 = vunpack.c.l.b16 %v976
    %v10873 = vunpack.c.h.b16 %v976
    %v10874 = vunpack.c.l.b16 %v977
    %v10875 = vunpack.c.h.b16 %v977
    %v10876 = vunpack.c.l.b16 %v978
    %v10877 = vunpack.c.h.b16 %v978
    %v10878 = vunpack.c.l.b16 %v979
    %v10879 = vunpack.c.h.b16 %v979
    %v10880 = vunpack.c.l.b16 %v980
    %v10881 = vunpack.c.h.b16 %v980
    %v10882 = vunpack.c.l.b16 %v981
    %v10883 = vunpack.c.h.b16 %v981
    %v10884 = vunpack.c.l.b16 %v982
    %v10885 = vunpack.c.h.b16 %v982
    %v10886 = vunpack.c.l.b16 %v983
    %v10887 = vunpack.c.h.b16 %v983
    %v10888 = vunpack.c.l.b16 %v984
    %v10889 = vunpack.c.h.b16 %v984
    %v10890 = vunpack.c.l.b16 %v985
    %v10891 = vunpack.c.h.b16 %v985
    %v10892 = vunpack.c.l.b16 %v986
    %v10893 = vunpack.c.h.b16 %v986
    %v10894 = vunpack.c.l.b16 %v987
    %v10895 = vunpack.c.h.b16 %v987
    %v10896 = vunpack.c.l.b16 %v988
    %v10897 = vunpack.c.h.b16 %v988
    %v10898 = vunpack.c.l.b16 %v989
    %v10899 = vunpack.c.h.b16 %v989
    %v10900 = vunpack.c.l.b16 %v990
    %v10901 = vunpack.c.h.b16 %v990
    %v10902 = vunpack.c.l.b16 %v991
    %v10903 = vunpack.c.h.b16 %v991
    %v10904 = vunpack.c.l.b16 %v992
    %v10905 = vunpack.c.h.b16 %v992
    %v10906 = vunpack.c.l.b16 %v993
    %v10907 = vunpack.c.h.b16 %v993
    %v10908 = vunpack.c.l.b16 %v994
    %v10909 = vunpack.c.h.b16 %v994
    %v10910 = vunpack.c.l.b16 %v995
    %v10911 = vunpack.c.h.b16 %v995
    %v10912 = vunpack.c.l.b16 %v996
    %v10913 = vunpack.c.h.b16 %v996
    %v10914 = vunpack.c.l.b16 %v997
    %v10915 = vunpack.c.h.b16 %v997
    %v10916 = vunpack.c.l.b16 %v998
    %v10917 = vunpack.c.h.b16 %v998
    %v10918 = vunpack.c.l.b16 %v999
    %v10919 = vunpack.c.h.b16 %v999
    %v10920 = vunpack.c.l.b16 %v1000
    %v10921 = vunpack.c.h.b16 %v1000
    %v10922 = vunpack.c.l.b16 %v1001
    %v10923 = vunpack.c.h.b16 %v1001
    %v10924 = vunpack.c.l.b16 %v1002
    %v10925 = vunpack.c.h.b16 %v1002
    %v10926 = vunpack.c.l.b16 %v1003
    %v10927 = vunpack.c.h.b16 %v1003
    %v10928 = vunpack.c.l.b16 %v1004
    %v10929 = vunpack.c.h.b16 %v1004
    %v10930 = vunpack.c.l.b16 %v1005
    %v10931 = vunpack.c.h.b16 %v1005
    %v10932 = vunpack.c.l.b16 %v1006
    %v10933 = vunpack.c.h.b16 %v1006
    %v10934 = vunpack.c.l.b16 %v1007
    %v10935 = vunpack.c.h.b16 %v1007
    %v10936 = vunpack.c.l.b16 %v1008
    %v10937 = vunpack.c.h.b16 %v1008
    %v10938 = vunpack.c.l.b16 %v1009
    %v10939 = vunpack.c.h.b16 %v1009
    %v10940 = vunpack.c.l.b16 %v1010
    %v10941 = vunpack.c.h.b16 %v1010
    %v10942 = vunpack.c.l.b16 %v1011
    %v10943 = vunpack.c.h.b16 %v1011
    %v10944 = vunpack.c.l.b16 %v1012
    %v10945 = vunpack.c.h.b16 %v1012
    %v10946 = vunpack.c.l.b16 %v1013
    %v10947 = vunpack.c.h.b16 %v1013
    %v10948 = vunpack.c.l.b16 %v1014
    %v10949 = vunpack.c.h.b16 %v1014
    %v10950 = vunpack.c.l.b16 %v1015
    %v10951 = vunpack.c.h.b16 %v1015
    %v10952 = vunpack.c.l.b16 %v1016
    %v10953 = vunpack.c.h.b16 %v1016
    %v10954 = vunpack.c.l.b16 %v1017
    %v10955 = vunpack.c.h.b16 %v1017
    %v10956 = vunpack.c.l.b16 %v1018
    %v10957 = vunpack.c.h.b16 %v1018
    %v10958 = vunpack.c.l.b16 %v1019
    %v10959 = vunpack.c.h.b16 %v1019
    %v10960 = vunpack.c.l.b16 %v1020
    %v10961 = vunpack.c.h.b16 %v1020
    %v10962 = vunpack.c.l.b16 %v1021
    %v10963 = vunpack.c.h.b16 %v1021
    %v10964 = vunpack.c.l.b16 %v1022
    %v10965 = vunpack.c.h.b16 %v1022
    %v10966 = vunpack.c.l.b16 %v1023
    %v10967 = vunpack.c.h.b16 %v1023
    %v10968 = vunpack.c.l.b16 %v1024
    %v10969 = vunpack.c.h.b16 %v1024
    %v10970 = vunpack.c.l.b16 %v1025
    %v10971 = vunpack.c.h.b16 %v1025
    %v10972 = vunpack.c.l.b16 %v1026
    %v10973 = vunpack.c.h.b16 %v1026
    %v10974 = vunpack.c.l.b16 %v1027
    %v10975 = vunpack.c.h.b16 %v1027
    %v10976 = vunpack.c.l.b16 %v1028
    %v10977 = vunpack.c.h.b16 %v1028
    %v10978 = vunpack.c.l.b16 %v1029
    %v10979 = vunpack.c.h.b16 %v1029
    %v10980 = vunpack.c.l.b16 %v1030
    %v10981 = vunpack.c.h.b16 %v1030
    %v10982 = vunpack.c.l.b16 %v1031
    %v10983 = vunpack.c.h.b16 %v1031
    %v10984 = vpack.c.b16 %v10864, %v10856
    %v10985 = vpack.c.b16 %v10865, %v10857
    %v10986 = vpack.c.b16 %v10866, %v10858
    %v10987 = vpack.c.b16 %v10867, %v10859
    %v10988 = vpack.c.b16 %v10868, %v10860
    %v10989 = vpack.c.b16 %v10869, %v10861
    %v10990 = vpack.c.b16 %v10870, %v10862
    %v10991 = vpack.c.b16 %v10871, %v10863
    %v10992 = vpack.c.b16 %v10880, %v10872
    %v10993 = vpack.c.b16 %v10881, %v10873
    %v10994 = vpack.c.b16 %v10882, %v10874
    %v10995 = vpack.c.b16 %v10883, %v10875
    %v10996 = vpack.c.b16 %v10884, %v10876
    %v10997 = vpack.c.b16 %v10885, %v10877
    %v10998 = vpack.c.b16 %v10886, %v10878
    %v10999 = vpack.c.b16 %v10887, %v10879
    %v11000 = vpack.c.b16 %v10896, %v10888
    %v11001 = vpack.c.b16 %v10897, %v10889
    %v11002 = vpack.c.b16 %v10898, %v10890
    %v11003 = vpack.c.b16 %v10899, %v10891
    %v11004 = vpack.c.b16 %v10900, %v10892
    %v11005 = vpack.c.b16 %v10901, %v10893
    %v11006 = vpack.c.b16 %v10902, %v10894
    %v11007 = vpack.c.b16 %v10903, %v10895
    %v11008 = vpack.c.b16 %v10912, %v10904
    %v11009 = vpack.c.b16 %v10913, %v10905
    %v11010 = vpack.c.b16 %v10914, %v10906
    %v11011 = vpack.c.b16 %v10915, %v10907
    %v11012 = vpack.c.b16 %v10916, %v10908
    %v11013 = vpack.c.b16 %v10917, %v10909
    %v11014 = vpack.c.b16 %v10918, %v10910
    %v11015 = vpack.c.b16 %v10919, %v10911
    %v11016 = vpack.c.b16 %v10928, %v10920
    %v11017 = vpack.c.b16 %v10929, %v10921
    %v11018 = vpack.c.b16 %v10930, %v10922
    %v11019 = vpack.c.b16 %v10931, %v10923
    %v11020 = vpack.c.b16 %v10932, %v10924
    %v11021 = vpack.c.b16 %v10933, %v10925
    %v11022 = vpack.c.b16 %v10934, %v10926
    %v11023 = vpack.c.b16 %v10935, %v10927
    %v11024 = vpack.c.b16 %v10944, %v10936
    %v11025 = vpack.c.b16 %v10945, %v10937
    %v11026 = vpack.c.b16 %v10946, %v10938
    %v11027 = vpack.c.b16 %v10947, %v10939
    %v11028 = vpack.c.b16 %v10948, %v10940
    %v11029 = vpack.c.b16 %v10949, %v10941
    %v11030 = vpack.c.b16 %v10950, %v10942
    %v11031 = vpack.c.b16 %v10951, %v10943
    %v11032 = vpack.c.b16 %v10960, %v10952
    %v11033 = vpack.c.b16 %v10961, %v10953
    %v11034 = vpack.c.b16 %v10962, %v10954
    %v11035 = vpack.c.b16 %v10963, %v10955
    %v11036 = vpack.c.b16 %v10964, %v10956
    %v11037 = vpack.c.b16 %v10965, %v10957
    %v11038 = vpack.c.b16 %v10966, %v10958
    %v11039 = vpack.c.b16 %v10967, %v10959
    %v11040 = vpack.c.b16 %v10976, %v10968
    %v11041 = vpack.c.b16 %v10977, %v10969
    %v11042 = vpack.c.b16 %v10978, %v10970
    %v11043 = vpack.c.b16 %v10979, %v10971
    %v11044 = vpack.c.b16 %v10980, %v10972
    %v11045 = vpack.c.b16 %v10981, %v10973
    %v11046 = vpack.c.b16 %v10982, %v10974
    %v11047 = vpack.c.b16 %v10983, %v10975
    %11112 = vmatpush.bf16.msra.mxu0 %v11040
    %11113 = vmatpush.bf16.msra.mxu0 %v11032
    %11114 = vmatpush.bf16.msra.mxu0 %v11024
    %11115 = vmatpush.bf16.msra.mxu0 %v11016
    %11116 = vmatpush.bf16.msra.mxu0 %v11008
    %11117 = vmatpush.bf16.msra.mxu0 %v11000
    %11118 = vmatpush.bf16.msra.mxu0 %v10992
    %11119 = vmatpush.bf16.msra.mxu0 %v10984
    %11120 = vmatmul.bf16.gmra.mxu0 %v967
    %v11121 = vpop.f32.mrf.mxu0
    %v11122 = vadd.f32 %v8969, %v11121
    %v11123 = vpop.f32.mrf.mxu0
    %11124 = vdwg.mxu0
    %11125 = vmatpush.bf16.msra.mxu0 %v11041
    %11126 = vmatpush.bf16.msra.mxu0 %v11033
    %11127 = vmatpush.bf16.msra.mxu0 %v11025
    %11128 = vmatpush.bf16.msra.mxu0 %v11017
    %11129 = vmatpush.bf16.msra.mxu0 %v11009
    %11130 = vmatpush.bf16.msra.mxu0 %v11001
    %11131 = vmatpush.bf16.msra.mxu0 %v10993
    %11132 = vmatpush.bf16.msra.mxu0 %v10985
    %11133 = vmatmul.bf16.gmra.mxu0 %v967
    %v11134 = vpop.f32.mrf.mxu0
    %v11135 = vadd.f32 %v9229, %v11134
    %v11136 = vpop.f32.mrf.mxu0
    %11137 = vdwg.mxu0
    %11138 = vmatpush.bf16.msra.mxu0 %v11042
    %11139 = vmatpush.bf16.msra.mxu0 %v11034
    %11140 = vmatpush.bf16.msra.mxu0 %v11026
    %11141 = vmatpush.bf16.msra.mxu0 %v11018
    %11142 = vmatpush.bf16.msra.mxu0 %v11010
    %11143 = vmatpush.bf16.msra.mxu0 %v11002
    %11144 = vmatpush.bf16.msra.mxu0 %v10994
    %11145 = vmatpush.bf16.msra.mxu0 %v10986
    %11146 = vmatmul.bf16.gmra.mxu0 %v967
    %v11147 = vpop.f32.mrf.mxu0
    %v11148 = vadd.f32 %v9489, %v11147
    %v11149 = vpop.f32.mrf.mxu0
    %11150 = vdwg.mxu0
    %11151 = vmatpush.bf16.msra.mxu0 %v11043
    %11152 = vmatpush.bf16.msra.mxu0 %v11035
    %11153 = vmatpush.bf16.msra.mxu0 %v11027
    %11154 = vmatpush.bf16.msra.mxu0 %v11019
    %11155 = vmatpush.bf16.msra.mxu0 %v11011
    %11156 = vmatpush.bf16.msra.mxu0 %v11003
    %11157 = vmatpush.bf16.msra.mxu0 %v10995
    %11158 = vmatpush.bf16.msra.mxu0 %v10987
    %11159 = vmatmul.bf16.gmra.mxu0 %v967
    %v11160 = vpop.f32.mrf.mxu0
    %v11161 = vadd.f32 %v9749, %v11160
    %v11162 = vpop.f32.mrf.mxu0
    %11163 = vdwg.mxu0
    %11164 = vmatpush.bf16.msra.mxu0 %v11044
    %11165 = vmatpush.bf16.msra.mxu0 %v11036
    %11166 = vmatpush.bf16.msra.mxu0 %v11028
    %11167 = vmatpush.bf16.msra.mxu0 %v11020
    %11168 = vmatpush.bf16.msra.mxu0 %v11012
    %11169 = vmatpush.bf16.msra.mxu0 %v11004
    %11170 = vmatpush.bf16.msra.mxu0 %v10996
    %11171 = vmatpush.bf16.msra.mxu0 %v10988
    %11172 = vmatmul.bf16.gmra.mxu0 %v967
    %v11173 = vpop.f32.mrf.mxu0
    %v11174 = vadd.f32 %v10009, %v11173
    %v11175 = vpop.f32.mrf.mxu0
    %11176 = vdwg.mxu0
    %11177 = vmatpush.bf16.msra.mxu0 %v11045
    %11178 = vmatpush.bf16.msra.mxu0 %v11037
    %11179 = vmatpush.bf16.msra.mxu0 %v11029
    %11180 = vmatpush.bf16.msra.mxu0 %v11021
    %11181 = vmatpush.bf16.msra.mxu0 %v11013
    %11182 = vmatpush.bf16.msra.mxu0 %v11005
    %11183 = vmatpush.bf16.msra.mxu0 %v10997
    %11184 = vmatpush.bf16.msra.mxu0 %v10989
    %11185 = vmatmul.bf16.gmra.mxu0 %v967
    %v11186 = vpop.f32.mrf.mxu0
    %v11187 = vadd.f32 %v10269, %v11186
    %v11188 = vpop.f32.mrf.mxu0
    %11189 = vdwg.mxu0
    %11190 = vmatpush.bf16.msra.mxu0 %v11046
    %11191 = vmatpush.bf16.msra.mxu0 %v11038
    %11192 = vmatpush.bf16.msra.mxu0 %v11030
    %11193 = vmatpush.bf16.msra.mxu0 %v11022
    %11194 = vmatpush.bf16.msra.mxu0 %v11014
    %11195 = vmatpush.bf16.msra.mxu0 %v11006
    %11196 = vmatpush.bf16.msra.mxu0 %v10998
    %11197 = vmatpush.bf16.msra.mxu0 %v10990
    %11198 = vmatmul.bf16.gmra.mxu0 %v967
    %v11199 = vpop.f32.mrf.mxu0
    %v11200 = vadd.f32 %v10529, %v11199
    %v11201 = vpop.f32.mrf.mxu0
    %11202 = vdwg.mxu0
    %11203 = vmatpush.bf16.msra.mxu0 %v11047
    %11204 = vmatpush.bf16.msra.mxu0 %v11039
    %11205 = vmatpush.bf16.msra.mxu0 %v11031
    %11206 = vmatpush.bf16.msra.mxu0 %v11023
    %11207 = vmatpush.bf16.msra.mxu0 %v11015
    %11208 = vmatpush.bf16.msra.mxu0 %v11007
    %11209 = vmatpush.bf16.msra.mxu0 %v10999
    %11210 = vmatpush.bf16.msra.mxu0 %v10991
    %11211 = vmatmul.bf16.gmra.mxu0 %v967
    %v11212 = vpop.f32.mrf.mxu0
    %v11213 = vadd.f32 %v10789, %v11212
    %v11214 = vpop.f32.mrf.mxu0
    %11215 = vdwg.mxu0
    %v11216 = vld [vmem:[#allocation16] sm:$0xff]
    %v11218 = vperm.slane %v11216, 0
    %v11219 = vperm.slane %v11216, 1
    %v11220 = vperm.slane %v11216, 2
    %v11221 = vperm.slane %v11216, 3
    %v11222 = vperm.slane %v11216, 4
    %v11223 = vperm.slane %v11216, 5
    %v11224 = vperm.slane %v11216, 6
    %v11225 = vperm.slane %v11216, 7
    %v11234 = vadd.f32 %v11122, %v11218
    %v11235 = vadd.f32 %v11135, %v11219
    %v11236 = vadd.f32 %v11148, %v11220
    %v11237 = vadd.f32 %v11161, %v11221
    %v11238 = vadd.f32 %v11174, %v11222
    %v11239 = vadd.f32 %v11187, %v11223
    %v11240 = vadd.f32 %v11200, %v11224
    %v11241 = vadd.f32 %v11213, %v11225
    %v11242 = vmax.f32 %v11234, 0.0
    %v11243 = vmax.f32 %v11235, 0.0
    %v11244 = vmax.f32 %v11236, 0.0
    %v11245 = vmax.f32 %v11237, 0.0
    %v11246 = vmax.f32 %v11238, 0.0
    %v11247 = vmax.f32 %v11239, 0.0
    %v11248 = vmax.f32 %v11240, 0.0
    %v11249 = vmax.f32 %v11241, 0.0
    %v11250 = vpack.c.bf16 %v11242, %v11242
    %v11251 = vpack.c.bf16 %v11243, %v11243
    %v11252 = vpack.c.bf16 %v11244, %v11244
    %v11253 = vpack.c.bf16 %v11245, %v11245
    %v11254 = vpack.c.bf16 %v11246, %v11246
    %v11255 = vpack.c.bf16 %v11247, %v11247
    %v11256 = vpack.c.bf16 %v11248, %v11248
    %v11257 = vpack.c.bf16 %v11249, %v11249
    %v11258 = vld [vmem:[#allocation17] sm:$0xff]
    %v11259 = vld [vmem:[#allocation17 + $0x8] sm:$0xff]
    %v11260 = vld [vmem:[#allocation17 + $0x10] sm:$0xff]
    %v11261 = vld [vmem:[#allocation17 + $0x18] sm:$0xff]
    %v11262 = vld [vmem:[#allocation17 + $0x20] sm:$0xff]
    %v11263 = vld [vmem:[#allocation17 + $0x28] sm:$0xff]
    %v11264 = vld [vmem:[#allocation17 + $0x30] sm:$0xff]
    %v11265 = vld [vmem:[#allocation17 + $0x38] sm:$0xff]
    %v11266 = vld [vmem:[#allocation17 + $0x40] sm:$0xff]
    %v11267 = vld [vmem:[#allocation17 + $0x48] sm:$0xff]
    %v11268 = vld [vmem:[#allocation17 + $0x50] sm:$0xff]
    %v11269 = vld [vmem:[#allocation17 + $0x58] sm:$0xff]
    %v11270 = vld [vmem:[#allocation17 + $0x60] sm:$0xff]
    %v11271 = vld [vmem:[#allocation17 + $0x68] sm:$0xff]
    %v11272 = vld [vmem:[#allocation17 + $0x70] sm:$0xff]
    %v11273 = vld [vmem:[#allocation17 + $0x78] sm:$0xff]
    %v11274 = vld [vmem:[#allocation17 + $0x80] sm:$0xff]
    %v11275 = vld [vmem:[#allocation17 + $0x88] sm:$0xff]
    %v11276 = vld [vmem:[#allocation17 + $0x90] sm:$0xff]
    %v11277 = vld [vmem:[#allocation17 + $0x98] sm:$0xff]
    %v11278 = vld [vmem:[#allocation17 + $0xa0] sm:$0xff]
    %v11279 = vld [vmem:[#allocation17 + $0xa8] sm:$0xff]
    %v11280 = vld [vmem:[#allocation17 + $0xb0] sm:$0xff]
    %v11281 = vld [vmem:[#allocation17 + $0xb8] sm:$0xff]
    %v11282 = vld [vmem:[#allocation17 + $0xc0] sm:$0xff]
    %v11283 = vld [vmem:[#allocation17 + $0xc8] sm:$0xff]
    %v11284 = vld [vmem:[#allocation17 + $0xd0] sm:$0xff]
    %v11285 = vld [vmem:[#allocation17 + $0xd8] sm:$0xff]
    %v11286 = vld [vmem:[#allocation17 + $0xe0] sm:$0xff]
    %v11287 = vld [vmem:[#allocation17 + $0xe8] sm:$0xff]
    %v11288 = vld [vmem:[#allocation17 + $0xf0] sm:$0xff]
    %v11289 = vld [vmem:[#allocation17 + $0xf8] sm:$0xff]
    %v11290 = vld [vmem:[#allocation17 + $0x100] sm:$0xff]
    %v11291 = vld [vmem:[#allocation17 + $0x108] sm:$0xff]
    %v11292 = vld [vmem:[#allocation17 + $0x110] sm:$0xff]
    %v11293 = vld [vmem:[#allocation17 + $0x118] sm:$0xff]
    %v11294 = vld [vmem:[#allocation17 + $0x120] sm:$0xff]
    %v11295 = vld [vmem:[#allocation17 + $0x128] sm:$0xff]
    %v11296 = vld [vmem:[#allocation17 + $0x130] sm:$0xff]
    %v11297 = vld [vmem:[#allocation17 + $0x138] sm:$0xff]
    %v11298 = vld [vmem:[#allocation17 + $0x140] sm:$0xff]
    %v11299 = vld [vmem:[#allocation17 + $0x148] sm:$0xff]
    %v11300 = vld [vmem:[#allocation17 + $0x150] sm:$0xff]
    %v11301 = vld [vmem:[#allocation17 + $0x158] sm:$0xff]
    %v11302 = vld [vmem:[#allocation17 + $0x160] sm:$0xff]
    %v11303 = vld [vmem:[#allocation17 + $0x168] sm:$0xff]
    %v11304 = vld [vmem:[#allocation17 + $0x170] sm:$0xff]
    %v11305 = vld [vmem:[#allocation17 + $0x178] sm:$0xff]
    %v11306 = vld [vmem:[#allocation17 + $0x180] sm:$0xff]
    %v11307 = vld [vmem:[#allocation17 + $0x188] sm:$0xff]
    %v11308 = vld [vmem:[#allocation17 + $0x190] sm:$0xff]
    %v11309 = vld [vmem:[#allocation17 + $0x198] sm:$0xff]
    %v11310 = vld [vmem:[#allocation17 + $0x1a0] sm:$0xff]
    %v11311 = vld [vmem:[#allocation17 + $0x1a8] sm:$0xff]
    %v11312 = vld [vmem:[#allocation17 + $0x1b0] sm:$0xff]
    %v11313 = vld [vmem:[#allocation17 + $0x1b8] sm:$0xff]
    %v11314 = vld [vmem:[#allocation17 + $0x1c0] sm:$0xff]
    %v11315 = vld [vmem:[#allocation17 + $0x1c8] sm:$0xff]
    %v11316 = vld [vmem:[#allocation17 + $0x1d0] sm:$0xff]
    %v11317 = vld [vmem:[#allocation17 + $0x1d8] sm:$0xff]
    %v11318 = vld [vmem:[#allocation17 + $0x1e0] sm:$0xff]
    %v11319 = vld [vmem:[#allocation17 + $0x1e8] sm:$0xff]
    %v11320 = vld [vmem:[#allocation17 + $0x1f0] sm:$0xff]
    %v11321 = vld [vmem:[#allocation17 + $0x1f8] sm:$0xff]
    %v11322 = vld [vmem:[#allocation17 + $0x200] sm:$0xff]
    %v11323 = vld [vmem:[#allocation17 + $0x208] sm:$0xff]
    %v11324 = vld [vmem:[#allocation17 + $0x210] sm:$0xff]
    %v11325 = vld [vmem:[#allocation17 + $0x218] sm:$0xff]
    %v11326 = vld [vmem:[#allocation17 + $0x220] sm:$0xff]
    %v11327 = vld [vmem:[#allocation17 + $0x228] sm:$0xff]
    %v11328 = vld [vmem:[#allocation17 + $0x230] sm:$0xff]
    %v11329 = vld [vmem:[#allocation17 + $0x238] sm:$0xff]
    %v11330 = vld [vmem:[#allocation17 + $0x240] sm:$0xff]
    %v11331 = vld [vmem:[#allocation17 + $0x248] sm:$0xff]
    %v11332 = vld [vmem:[#allocation17 + $0x250] sm:$0xff]
    %v11333 = vld [vmem:[#allocation17 + $0x258] sm:$0xff]
    %v11334 = vld [vmem:[#allocation17 + $0x260] sm:$0xff]
    %v11335 = vld [vmem:[#allocation17 + $0x268] sm:$0xff]
    %v11336 = vld [vmem:[#allocation17 + $0x270] sm:$0xff]
    %v11337 = vld [vmem:[#allocation17 + $0x278] sm:$0xff]
    %v11338 = vld [vmem:[#allocation17 + $0x280] sm:$0xff]
    %v11339 = vld [vmem:[#allocation17 + $0x288] sm:$0xff]
    %v11340 = vld [vmem:[#allocation17 + $0x290] sm:$0xff]
    %v11341 = vld [vmem:[#allocation17 + $0x298] sm:$0xff]
    %v11342 = vld [vmem:[#allocation17 + $0x2a0] sm:$0xff]
    %v11343 = vld [vmem:[#allocation17 + $0x2a8] sm:$0xff]
    %v11344 = vld [vmem:[#allocation17 + $0x2b0] sm:$0xff]
    %v11345 = vld [vmem:[#allocation17 + $0x2b8] sm:$0xff]
    %v11346 = vld [vmem:[#allocation17 + $0x2c0] sm:$0xff]
    %v11347 = vld [vmem:[#allocation17 + $0x2c8] sm:$0xff]
    %v11348 = vld [vmem:[#allocation17 + $0x2d0] sm:$0xff]
    %v11349 = vld [vmem:[#allocation17 + $0x2d8] sm:$0xff]
    %v11350 = vld [vmem:[#allocation17 + $0x2e0] sm:$0xff]
    %v11351 = vld [vmem:[#allocation17 + $0x2e8] sm:$0xff]
    %v11352 = vld [vmem:[#allocation17 + $0x2f0] sm:$0xff]
    %v11353 = vld [vmem:[#allocation17 + $0x2f8] sm:$0xff]
    %v11354 = vld [vmem:[#allocation17 + $0x300] sm:$0xff]
    %v11355 = vld [vmem:[#allocation17 + $0x308] sm:$0xff]
    %v11356 = vld [vmem:[#allocation17 + $0x310] sm:$0xff]
    %v11357 = vld [vmem:[#allocation17 + $0x318] sm:$0xff]
    %v11358 = vld [vmem:[#allocation17 + $0x320] sm:$0xff]
    %v11359 = vld [vmem:[#allocation17 + $0x328] sm:$0xff]
    %v11360 = vld [vmem:[#allocation17 + $0x330] sm:$0xff]
    %v11361 = vld [vmem:[#allocation17 + $0x338] sm:$0xff]
    %v11362 = vld [vmem:[#allocation17 + $0x340] sm:$0xff]
    %v11363 = vld [vmem:[#allocation17 + $0x348] sm:$0xff]
    %v11364 = vld [vmem:[#allocation17 + $0x350] sm:$0xff]
    %v11365 = vld [vmem:[#allocation17 + $0x358] sm:$0xff]
    %v11366 = vld [vmem:[#allocation17 + $0x360] sm:$0xff]
    %v11367 = vld [vmem:[#allocation17 + $0x368] sm:$0xff]
    %v11368 = vld [vmem:[#allocation17 + $0x370] sm:$0xff]
    %v11369 = vld [vmem:[#allocation17 + $0x378] sm:$0xff]
    %v11370 = vld [vmem:[#allocation17 + $0x380] sm:$0xff]
    %v11371 = vld [vmem:[#allocation17 + $0x388] sm:$0xff]
    %v11372 = vld [vmem:[#allocation17 + $0x390] sm:$0xff]
    %v11373 = vld [vmem:[#allocation17 + $0x398] sm:$0xff]
    %v11374 = vld [vmem:[#allocation17 + $0x3a0] sm:$0xff]
    %v11375 = vld [vmem:[#allocation17 + $0x3a8] sm:$0xff]
    %v11376 = vld [vmem:[#allocation17 + $0x3b0] sm:$0xff]
    %v11377 = vld [vmem:[#allocation17 + $0x3b8] sm:$0xff]
    %v11378 = vld [vmem:[#allocation17 + $0x3c0] sm:$0xff]
    %v11379 = vld [vmem:[#allocation17 + $0x3c8] sm:$0xff]
    %v11380 = vld [vmem:[#allocation17 + $0x3d0] sm:$0xff]
    %v11381 = vld [vmem:[#allocation17 + $0x3d8] sm:$0xff]
    %v11382 = vld [vmem:[#allocation17 + $0x3e0] sm:$0xff]
    %v11383 = vld [vmem:[#allocation17 + $0x3e8] sm:$0xff]
    %v11384 = vld [vmem:[#allocation17 + $0x3f0] sm:$0xff]
    %v11385 = vld [vmem:[#allocation17 + $0x3f8] sm:$0xff]
    %v11386 = vld [vmem:[#allocation17 + $0x400] sm:$0xff]
    %v11387 = vld [vmem:[#allocation17 + $0x408] sm:$0xff]
    %v11388 = vld [vmem:[#allocation17 + $0x410] sm:$0xff]
    %v11389 = vld [vmem:[#allocation17 + $0x418] sm:$0xff]
    %v11390 = vld [vmem:[#allocation17 + $0x420] sm:$0xff]
    %v11391 = vld [vmem:[#allocation17 + $0x428] sm:$0xff]
    %v11392 = vld [vmem:[#allocation17 + $0x430] sm:$0xff]
    %v11393 = vld [vmem:[#allocation17 + $0x438] sm:$0xff]
    %v11394 = vld [vmem:[#allocation17 + $0x440] sm:$0xff]
    %v11395 = vld [vmem:[#allocation17 + $0x448] sm:$0xff]
    %v11396 = vld [vmem:[#allocation17 + $0x450] sm:$0xff]
    %v11397 = vld [vmem:[#allocation17 + $0x458] sm:$0xff]
    %v11398 = vld [vmem:[#allocation17 + $0x460] sm:$0xff]
    %v11399 = vld [vmem:[#allocation17 + $0x468] sm:$0xff]
    %v11400 = vld [vmem:[#allocation17 + $0x470] sm:$0xff]
    %v11401 = vld [vmem:[#allocation17 + $0x478] sm:$0xff]
    %v11402 = vld [vmem:[#allocation17 + $0x480] sm:$0xff]
    %v11403 = vld [vmem:[#allocation17 + $0x488] sm:$0xff]
    %v11404 = vld [vmem:[#allocation17 + $0x490] sm:$0xff]
    %v11405 = vld [vmem:[#allocation17 + $0x498] sm:$0xff]
    %v11406 = vld [vmem:[#allocation17 + $0x4a0] sm:$0xff]
    %v11407 = vld [vmem:[#allocation17 + $0x4a8] sm:$0xff]
    %v11408 = vld [vmem:[#allocation17 + $0x4b0] sm:$0xff]
    %v11409 = vld [vmem:[#allocation17 + $0x4b8] sm:$0xff]
    %v11410 = vld [vmem:[#allocation17 + $0x4c0] sm:$0xff]
    %v11411 = vld [vmem:[#allocation17 + $0x4c8] sm:$0xff]
    %v11412 = vld [vmem:[#allocation17 + $0x4d0] sm:$0xff]
    %v11413 = vld [vmem:[#allocation17 + $0x4d8] sm:$0xff]
    %v11414 = vld [vmem:[#allocation17 + $0x4e0] sm:$0xff]
    %v11415 = vld [vmem:[#allocation17 + $0x4e8] sm:$0xff]
    %v11416 = vld [vmem:[#allocation17 + $0x4f0] sm:$0xff]
    %v11417 = vld [vmem:[#allocation17 + $0x4f8] sm:$0xff]
    %v11418 = vld [vmem:[#allocation17 + $0x500] sm:$0xff]
    %v11419 = vld [vmem:[#allocation17 + $0x508] sm:$0xff]
    %v11420 = vld [vmem:[#allocation17 + $0x510] sm:$0xff]
    %v11421 = vld [vmem:[#allocation17 + $0x518] sm:$0xff]
    %v11422 = vld [vmem:[#allocation17 + $0x520] sm:$0xff]
    %v11423 = vld [vmem:[#allocation17 + $0x528] sm:$0xff]
    %v11424 = vld [vmem:[#allocation17 + $0x530] sm:$0xff]
    %v11425 = vld [vmem:[#allocation17 + $0x538] sm:$0xff]
    %v11426 = vld [vmem:[#allocation17 + $0x540] sm:$0xff]
    %v11427 = vld [vmem:[#allocation17 + $0x548] sm:$0xff]
    %v11428 = vld [vmem:[#allocation17 + $0x550] sm:$0xff]
    %v11429 = vld [vmem:[#allocation17 + $0x558] sm:$0xff]
    %v11430 = vld [vmem:[#allocation17 + $0x560] sm:$0xff]
    %v11431 = vld [vmem:[#allocation17 + $0x568] sm:$0xff]
    %v11432 = vld [vmem:[#allocation17 + $0x570] sm:$0xff]
    %v11433 = vld [vmem:[#allocation17 + $0x578] sm:$0xff]
    %v11434 = vld [vmem:[#allocation17 + $0x580] sm:$0xff]
    %v11435 = vld [vmem:[#allocation17 + $0x588] sm:$0xff]
    %v11436 = vld [vmem:[#allocation17 + $0x590] sm:$0xff]
    %v11437 = vld [vmem:[#allocation17 + $0x598] sm:$0xff]
    %v11438 = vld [vmem:[#allocation17 + $0x5a0] sm:$0xff]
    %v11439 = vld [vmem:[#allocation17 + $0x5a8] sm:$0xff]
    %v11440 = vld [vmem:[#allocation17 + $0x5b0] sm:$0xff]
    %v11441 = vld [vmem:[#allocation17 + $0x5b8] sm:$0xff]
    %v11442 = vld [vmem:[#allocation17 + $0x5c0] sm:$0xff]
    %v11443 = vld [vmem:[#allocation17 + $0x5c8] sm:$0xff]
    %v11444 = vld [vmem:[#allocation17 + $0x5d0] sm:$0xff]
    %v11445 = vld [vmem:[#allocation17 + $0x5d8] sm:$0xff]
    %v11446 = vld [vmem:[#allocation17 + $0x5e0] sm:$0xff]
    %v11447 = vld [vmem:[#allocation17 + $0x5e8] sm:$0xff]
    %v11448 = vld [vmem:[#allocation17 + $0x5f0] sm:$0xff]
    %v11449 = vld [vmem:[#allocation17 + $0x5f8] sm:$0xff]
    %v11450 = vld [vmem:[#allocation17 + $0x600] sm:$0xff]
    %v11451 = vld [vmem:[#allocation17 + $0x608] sm:$0xff]
    %v11452 = vld [vmem:[#allocation17 + $0x610] sm:$0xff]
    %v11453 = vld [vmem:[#allocation17 + $0x618] sm:$0xff]
    %v11454 = vld [vmem:[#allocation17 + $0x620] sm:$0xff]
    %v11455 = vld [vmem:[#allocation17 + $0x628] sm:$0xff]
    %v11456 = vld [vmem:[#allocation17 + $0x630] sm:$0xff]
    %v11457 = vld [vmem:[#allocation17 + $0x638] sm:$0xff]
    %v11458 = vld [vmem:[#allocation17 + $0x640] sm:$0xff]
    %v11459 = vld [vmem:[#allocation17 + $0x648] sm:$0xff]
    %v11460 = vld [vmem:[#allocation17 + $0x650] sm:$0xff]
    %v11461 = vld [vmem:[#allocation17 + $0x658] sm:$0xff]
    %v11462 = vld [vmem:[#allocation17 + $0x660] sm:$0xff]
    %v11463 = vld [vmem:[#allocation17 + $0x668] sm:$0xff]
    %v11464 = vld [vmem:[#allocation17 + $0x670] sm:$0xff]
    %v11465 = vld [vmem:[#allocation17 + $0x678] sm:$0xff]
    %v11466 = vld [vmem:[#allocation17 + $0x680] sm:$0xff]
    %v11467 = vld [vmem:[#allocation17 + $0x688] sm:$0xff]
    %v11468 = vld [vmem:[#allocation17 + $0x690] sm:$0xff]
    %v11469 = vld [vmem:[#allocation17 + $0x698] sm:$0xff]
    %v11470 = vld [vmem:[#allocation17 + $0x6a0] sm:$0xff]
    %v11471 = vld [vmem:[#allocation17 + $0x6a8] sm:$0xff]
    %v11472 = vld [vmem:[#allocation17 + $0x6b0] sm:$0xff]
    %v11473 = vld [vmem:[#allocation17 + $0x6b8] sm:$0xff]
    %v11474 = vld [vmem:[#allocation17 + $0x6c0] sm:$0xff]
    %v11475 = vld [vmem:[#allocation17 + $0x6c8] sm:$0xff]
    %v11476 = vld [vmem:[#allocation17 + $0x6d0] sm:$0xff]
    %v11477 = vld [vmem:[#allocation17 + $0x6d8] sm:$0xff]
    %v11478 = vld [vmem:[#allocation17 + $0x6e0] sm:$0xff]
    %v11479 = vld [vmem:[#allocation17 + $0x6e8] sm:$0xff]
    %v11480 = vld [vmem:[#allocation17 + $0x6f0] sm:$0xff]
    %v11481 = vld [vmem:[#allocation17 + $0x6f8] sm:$0xff]
    %v11482 = vld [vmem:[#allocation17 + $0x700] sm:$0xff]
    %v11483 = vld [vmem:[#allocation17 + $0x708] sm:$0xff]
    %v11484 = vld [vmem:[#allocation17 + $0x710] sm:$0xff]
    %v11485 = vld [vmem:[#allocation17 + $0x718] sm:$0xff]
    %v11486 = vld [vmem:[#allocation17 + $0x720] sm:$0xff]
    %v11487 = vld [vmem:[#allocation17 + $0x728] sm:$0xff]
    %v11488 = vld [vmem:[#allocation17 + $0x730] sm:$0xff]
    %v11489 = vld [vmem:[#allocation17 + $0x738] sm:$0xff]
    %v11490 = vld [vmem:[#allocation17 + $0x740] sm:$0xff]
    %v11491 = vld [vmem:[#allocation17 + $0x748] sm:$0xff]
    %v11492 = vld [vmem:[#allocation17 + $0x750] sm:$0xff]
    %v11493 = vld [vmem:[#allocation17 + $0x758] sm:$0xff]
    %v11494 = vld [vmem:[#allocation17 + $0x760] sm:$0xff]
    %v11495 = vld [vmem:[#allocation17 + $0x768] sm:$0xff]
    %v11496 = vld [vmem:[#allocation17 + $0x770] sm:$0xff]
    %v11497 = vld [vmem:[#allocation17 + $0x778] sm:$0xff]
    %v11498 = vld [vmem:[#allocation17 + $0x780] sm:$0xff]
    %v11499 = vld [vmem:[#allocation17 + $0x788] sm:$0xff]
    %v11500 = vld [vmem:[#allocation17 + $0x790] sm:$0xff]
    %v11501 = vld [vmem:[#allocation17 + $0x798] sm:$0xff]
    %v11502 = vld [vmem:[#allocation17 + $0x7a0] sm:$0xff]
    %v11503 = vld [vmem:[#allocation17 + $0x7a8] sm:$0xff]
    %v11504 = vld [vmem:[#allocation17 + $0x7b0] sm:$0xff]
    %v11505 = vld [vmem:[#allocation17 + $0x7b8] sm:$0xff]
    %v11506 = vld [vmem:[#allocation17 + $0x7c0] sm:$0xff]
    %v11507 = vld [vmem:[#allocation17 + $0x7c8] sm:$0xff]
    %v11508 = vld [vmem:[#allocation17 + $0x7d0] sm:$0xff]
    %v11509 = vld [vmem:[#allocation17 + $0x7d8] sm:$0xff]
    %v11510 = vld [vmem:[#allocation17 + $0x7e0] sm:$0xff]
    %v11511 = vld [vmem:[#allocation17 + $0x7e8] sm:$0xff]
    %v11512 = vld [vmem:[#allocation17 + $0x7f0] sm:$0xff]
    %v11513 = vld [vmem:[#allocation17 + $0x7f8] sm:$0xff]
    %v11514 = vld [vmem:[#allocation19] sm:$0xf]
    %v11516 = vperm.slane %v11514, 0
    %v11517 = vperm.slane %v11514, 1
    %v11518 = vperm.slane %v11514, 2
    %v11519 = vperm.slane %v11514, 3
    %v11780 = vunpack.c.l.b16 %v11258
    %v11781 = vunpack.c.h.b16 %v11258
    %v11782 = vunpack.c.l.b16 %v11259
    %v11783 = vunpack.c.h.b16 %v11259
    %v11784 = vunpack.c.l.b16 %v11260
    %v11785 = vunpack.c.h.b16 %v11260
    %v11786 = vunpack.c.l.b16 %v11261
    %v11787 = vunpack.c.h.b16 %v11261
    %v11788 = vunpack.c.l.b16 %v11262
    %v11789 = vunpack.c.h.b16 %v11262
    %v11790 = vunpack.c.l.b16 %v11263
    %v11791 = vunpack.c.h.b16 %v11263
    %v11792 = vunpack.c.l.b16 %v11264
    %v11793 = vunpack.c.h.b16 %v11264
    %v11794 = vunpack.c.l.b16 %v11265
    %v11795 = vunpack.c.h.b16 %v11265
    %v11796 = vunpack.c.l.b16 %v11266
    %v11797 = vunpack.c.h.b16 %v11266
    %v11798 = vunpack.c.l.b16 %v11267
    %v11799 = vunpack.c.h.b16 %v11267
    %v11800 = vunpack.c.l.b16 %v11268
    %v11801 = vunpack.c.h.b16 %v11268
    %v11802 = vunpack.c.l.b16 %v11269
    %v11803 = vunpack.c.h.b16 %v11269
    %v11804 = vunpack.c.l.b16 %v11270
    %v11805 = vunpack.c.h.b16 %v11270
    %v11806 = vunpack.c.l.b16 %v11271
    %v11807 = vunpack.c.h.b16 %v11271
    %v11808 = vunpack.c.l.b16 %v11272
    %v11809 = vunpack.c.h.b16 %v11272
    %v11810 = vunpack.c.l.b16 %v11273
    %v11811 = vunpack.c.h.b16 %v11273
    %v11812 = vunpack.c.l.b16 %v11274
    %v11813 = vunpack.c.h.b16 %v11274
    %v11814 = vunpack.c.l.b16 %v11275
    %v11815 = vunpack.c.h.b16 %v11275
    %v11816 = vunpack.c.l.b16 %v11276
    %v11817 = vunpack.c.h.b16 %v11276
    %v11818 = vunpack.c.l.b16 %v11277
    %v11819 = vunpack.c.h.b16 %v11277
    %v11820 = vunpack.c.l.b16 %v11278
    %v11821 = vunpack.c.h.b16 %v11278
    %v11822 = vunpack.c.l.b16 %v11279
    %v11823 = vunpack.c.h.b16 %v11279
    %v11824 = vunpack.c.l.b16 %v11280
    %v11825 = vunpack.c.h.b16 %v11280
    %v11826 = vunpack.c.l.b16 %v11281
    %v11827 = vunpack.c.h.b16 %v11281
    %v11828 = vunpack.c.l.b16 %v11282
    %v11829 = vunpack.c.h.b16 %v11282
    %v11830 = vunpack.c.l.b16 %v11283
    %v11831 = vunpack.c.h.b16 %v11283
    %v11832 = vunpack.c.l.b16 %v11284
    %v11833 = vunpack.c.h.b16 %v11284
    %v11834 = vunpack.c.l.b16 %v11285
    %v11835 = vunpack.c.h.b16 %v11285
    %v11836 = vunpack.c.l.b16 %v11286
    %v11837 = vunpack.c.h.b16 %v11286
    %v11838 = vunpack.c.l.b16 %v11287
    %v11839 = vunpack.c.h.b16 %v11287
    %v11840 = vunpack.c.l.b16 %v11288
    %v11841 = vunpack.c.h.b16 %v11288
    %v11842 = vunpack.c.l.b16 %v11289
    %v11843 = vunpack.c.h.b16 %v11289
    %v11844 = vunpack.c.l.b16 %v11290
    %v11845 = vunpack.c.h.b16 %v11290
    %v11846 = vunpack.c.l.b16 %v11291
    %v11847 = vunpack.c.h.b16 %v11291
    %v11848 = vunpack.c.l.b16 %v11292
    %v11849 = vunpack.c.h.b16 %v11292
    %v11850 = vunpack.c.l.b16 %v11293
    %v11851 = vunpack.c.h.b16 %v11293
    %v11852 = vunpack.c.l.b16 %v11294
    %v11853 = vunpack.c.h.b16 %v11294
    %v11854 = vunpack.c.l.b16 %v11295
    %v11855 = vunpack.c.h.b16 %v11295
    %v11856 = vunpack.c.l.b16 %v11296
    %v11857 = vunpack.c.h.b16 %v11296
    %v11858 = vunpack.c.l.b16 %v11297
    %v11859 = vunpack.c.h.b16 %v11297
    %v11860 = vunpack.c.l.b16 %v11298
    %v11861 = vunpack.c.h.b16 %v11298
    %v11862 = vunpack.c.l.b16 %v11299
    %v11863 = vunpack.c.h.b16 %v11299
    %v11864 = vunpack.c.l.b16 %v11300
    %v11865 = vunpack.c.h.b16 %v11300
    %v11866 = vunpack.c.l.b16 %v11301
    %v11867 = vunpack.c.h.b16 %v11301
    %v11868 = vunpack.c.l.b16 %v11302
    %v11869 = vunpack.c.h.b16 %v11302
    %v11870 = vunpack.c.l.b16 %v11303
    %v11871 = vunpack.c.h.b16 %v11303
    %v11872 = vunpack.c.l.b16 %v11304
    %v11873 = vunpack.c.h.b16 %v11304
    %v11874 = vunpack.c.l.b16 %v11305
    %v11875 = vunpack.c.h.b16 %v11305
    %v11876 = vunpack.c.l.b16 %v11306
    %v11877 = vunpack.c.h.b16 %v11306
    %v11878 = vunpack.c.l.b16 %v11307
    %v11879 = vunpack.c.h.b16 %v11307
    %v11880 = vunpack.c.l.b16 %v11308
    %v11881 = vunpack.c.h.b16 %v11308
    %v11882 = vunpack.c.l.b16 %v11309
    %v11883 = vunpack.c.h.b16 %v11309
    %v11884 = vunpack.c.l.b16 %v11310
    %v11885 = vunpack.c.h.b16 %v11310
    %v11886 = vunpack.c.l.b16 %v11311
    %v11887 = vunpack.c.h.b16 %v11311
    %v11888 = vunpack.c.l.b16 %v11312
    %v11889 = vunpack.c.h.b16 %v11312
    %v11890 = vunpack.c.l.b16 %v11313
    %v11891 = vunpack.c.h.b16 %v11313
    %v11892 = vunpack.c.l.b16 %v11314
    %v11893 = vunpack.c.h.b16 %v11314
    %v11894 = vunpack.c.l.b16 %v11315
    %v11895 = vunpack.c.h.b16 %v11315
    %v11896 = vunpack.c.l.b16 %v11316
    %v11897 = vunpack.c.h.b16 %v11316
    %v11898 = vunpack.c.l.b16 %v11317
    %v11899 = vunpack.c.h.b16 %v11317
    %v11900 = vunpack.c.l.b16 %v11318
    %v11901 = vunpack.c.h.b16 %v11318
    %v11902 = vunpack.c.l.b16 %v11319
    %v11903 = vunpack.c.h.b16 %v11319
    %v11904 = vunpack.c.l.b16 %v11320
    %v11905 = vunpack.c.h.b16 %v11320
    %v11906 = vunpack.c.l.b16 %v11321
    %v11907 = vunpack.c.h.b16 %v11321
    %v11908 = vunpack.c.l.b16 %v11322
    %v11909 = vunpack.c.h.b16 %v11322
    %v11910 = vunpack.c.l.b16 %v11323
    %v11911 = vunpack.c.h.b16 %v11323
    %v11912 = vunpack.c.l.b16 %v11324
    %v11913 = vunpack.c.h.b16 %v11324
    %v11914 = vunpack.c.l.b16 %v11325
    %v11915 = vunpack.c.h.b16 %v11325
    %v11916 = vunpack.c.l.b16 %v11326
    %v11917 = vunpack.c.h.b16 %v11326
    %v11918 = vunpack.c.l.b16 %v11327
    %v11919 = vunpack.c.h.b16 %v11327
    %v11920 = vunpack.c.l.b16 %v11328
    %v11921 = vunpack.c.h.b16 %v11328
    %v11922 = vunpack.c.l.b16 %v11329
    %v11923 = vunpack.c.h.b16 %v11329
    %v11924 = vunpack.c.l.b16 %v11330
    %v11925 = vunpack.c.h.b16 %v11330
    %v11926 = vunpack.c.l.b16 %v11331
    %v11927 = vunpack.c.h.b16 %v11331
    %v11928 = vunpack.c.l.b16 %v11332
    %v11929 = vunpack.c.h.b16 %v11332
    %v11930 = vunpack.c.l.b16 %v11333
    %v11931 = vunpack.c.h.b16 %v11333
    %v11932 = vunpack.c.l.b16 %v11334
    %v11933 = vunpack.c.h.b16 %v11334
    %v11934 = vunpack.c.l.b16 %v11335
    %v11935 = vunpack.c.h.b16 %v11335
    %v11936 = vunpack.c.l.b16 %v11336
    %v11937 = vunpack.c.h.b16 %v11336
    %v11938 = vunpack.c.l.b16 %v11337
    %v11939 = vunpack.c.h.b16 %v11337
    %v11940 = vunpack.c.l.b16 %v11338
    %v11941 = vunpack.c.h.b16 %v11338
    %v11942 = vunpack.c.l.b16 %v11339
    %v11943 = vunpack.c.h.b16 %v11339
    %v11944 = vunpack.c.l.b16 %v11340
    %v11945 = vunpack.c.h.b16 %v11340
    %v11946 = vunpack.c.l.b16 %v11341
    %v11947 = vunpack.c.h.b16 %v11341
    %v11948 = vunpack.c.l.b16 %v11342
    %v11949 = vunpack.c.h.b16 %v11342
    %v11950 = vunpack.c.l.b16 %v11343
    %v11951 = vunpack.c.h.b16 %v11343
    %v11952 = vunpack.c.l.b16 %v11344
    %v11953 = vunpack.c.h.b16 %v11344
    %v11954 = vunpack.c.l.b16 %v11345
    %v11955 = vunpack.c.h.b16 %v11345
    %v11956 = vunpack.c.l.b16 %v11346
    %v11957 = vunpack.c.h.b16 %v11346
    %v11958 = vunpack.c.l.b16 %v11347
    %v11959 = vunpack.c.h.b16 %v11347
    %v11960 = vunpack.c.l.b16 %v11348
    %v11961 = vunpack.c.h.b16 %v11348
    %v11962 = vunpack.c.l.b16 %v11349
    %v11963 = vunpack.c.h.b16 %v11349
    %v11964 = vunpack.c.l.b16 %v11350
    %v11965 = vunpack.c.h.b16 %v11350
    %v11966 = vunpack.c.l.b16 %v11351
    %v11967 = vunpack.c.h.b16 %v11351
    %v11968 = vunpack.c.l.b16 %v11352
    %v11969 = vunpack.c.h.b16 %v11352
    %v11970 = vunpack.c.l.b16 %v11353
    %v11971 = vunpack.c.h.b16 %v11353
    %v11972 = vunpack.c.l.b16 %v11354
    %v11973 = vunpack.c.h.b16 %v11354
    %v11974 = vunpack.c.l.b16 %v11355
    %v11975 = vunpack.c.h.b16 %v11355
    %v11976 = vunpack.c.l.b16 %v11356
    %v11977 = vunpack.c.h.b16 %v11356
    %v11978 = vunpack.c.l.b16 %v11357
    %v11979 = vunpack.c.h.b16 %v11357
    %v11980 = vunpack.c.l.b16 %v11358
    %v11981 = vunpack.c.h.b16 %v11358
    %v11982 = vunpack.c.l.b16 %v11359
    %v11983 = vunpack.c.h.b16 %v11359
    %v11984 = vunpack.c.l.b16 %v11360
    %v11985 = vunpack.c.h.b16 %v11360
    %v11986 = vunpack.c.l.b16 %v11361
    %v11987 = vunpack.c.h.b16 %v11361
    %v11988 = vunpack.c.l.b16 %v11362
    %v11989 = vunpack.c.h.b16 %v11362
    %v11990 = vunpack.c.l.b16 %v11363
    %v11991 = vunpack.c.h.b16 %v11363
    %v11992 = vunpack.c.l.b16 %v11364
    %v11993 = vunpack.c.h.b16 %v11364
    %v11994 = vunpack.c.l.b16 %v11365
    %v11995 = vunpack.c.h.b16 %v11365
    %v11996 = vunpack.c.l.b16 %v11366
    %v11997 = vunpack.c.h.b16 %v11366
    %v11998 = vunpack.c.l.b16 %v11367
    %v11999 = vunpack.c.h.b16 %v11367
    %v12000 = vunpack.c.l.b16 %v11368
    %v12001 = vunpack.c.h.b16 %v11368
    %v12002 = vunpack.c.l.b16 %v11369
    %v12003 = vunpack.c.h.b16 %v11369
    %v12004 = vunpack.c.l.b16 %v11370
    %v12005 = vunpack.c.h.b16 %v11370
    %v12006 = vunpack.c.l.b16 %v11371
    %v12007 = vunpack.c.h.b16 %v11371
    %v12008 = vunpack.c.l.b16 %v11372
    %v12009 = vunpack.c.h.b16 %v11372
    %v12010 = vunpack.c.l.b16 %v11373
    %v12011 = vunpack.c.h.b16 %v11373
    %v12012 = vunpack.c.l.b16 %v11374
    %v12013 = vunpack.c.h.b16 %v11374
    %v12014 = vunpack.c.l.b16 %v11375
    %v12015 = vunpack.c.h.b16 %v11375
    %v12016 = vunpack.c.l.b16 %v11376
    %v12017 = vunpack.c.h.b16 %v11376
    %v12018 = vunpack.c.l.b16 %v11377
    %v12019 = vunpack.c.h.b16 %v11377
    %v12020 = vunpack.c.l.b16 %v11378
    %v12021 = vunpack.c.h.b16 %v11378
    %v12022 = vunpack.c.l.b16 %v11379
    %v12023 = vunpack.c.h.b16 %v11379
    %v12024 = vunpack.c.l.b16 %v11380
    %v12025 = vunpack.c.h.b16 %v11380
    %v12026 = vunpack.c.l.b16 %v11381
    %v12027 = vunpack.c.h.b16 %v11381
    %v12028 = vunpack.c.l.b16 %v11382
    %v12029 = vunpack.c.h.b16 %v11382
    %v12030 = vunpack.c.l.b16 %v11383
    %v12031 = vunpack.c.h.b16 %v11383
    %v12032 = vunpack.c.l.b16 %v11384
    %v12033 = vunpack.c.h.b16 %v11384
    %v12034 = vunpack.c.l.b16 %v11385
    %v12035 = vunpack.c.h.b16 %v11385
    %v12036 = vunpack.c.l.b16 %v11386
    %v12037 = vunpack.c.h.b16 %v11386
    %v12038 = vunpack.c.l.b16 %v11387
    %v12039 = vunpack.c.h.b16 %v11387
    %v12040 = vunpack.c.l.b16 %v11388
    %v12041 = vunpack.c.h.b16 %v11388
    %v12042 = vunpack.c.l.b16 %v11389
    %v12043 = vunpack.c.h.b16 %v11389
    %v12044 = vunpack.c.l.b16 %v11390
    %v12045 = vunpack.c.h.b16 %v11390
    %v12046 = vunpack.c.l.b16 %v11391
    %v12047 = vunpack.c.h.b16 %v11391
    %v12048 = vunpack.c.l.b16 %v11392
    %v12049 = vunpack.c.h.b16 %v11392
    %v12050 = vunpack.c.l.b16 %v11393
    %v12051 = vunpack.c.h.b16 %v11393
    %v12052 = vunpack.c.l.b16 %v11394
    %v12053 = vunpack.c.h.b16 %v11394
    %v12054 = vunpack.c.l.b16 %v11395
    %v12055 = vunpack.c.h.b16 %v11395
    %v12056 = vunpack.c.l.b16 %v11396
    %v12057 = vunpack.c.h.b16 %v11396
    %v12058 = vunpack.c.l.b16 %v11397
    %v12059 = vunpack.c.h.b16 %v11397
    %v12060 = vunpack.c.l.b16 %v11398
    %v12061 = vunpack.c.h.b16 %v11398
    %v12062 = vunpack.c.l.b16 %v11399
    %v12063 = vunpack.c.h.b16 %v11399
    %v12064 = vunpack.c.l.b16 %v11400
    %v12065 = vunpack.c.h.b16 %v11400
    %v12066 = vunpack.c.l.b16 %v11401
    %v12067 = vunpack.c.h.b16 %v11401
    %v12068 = vunpack.c.l.b16 %v11402
    %v12069 = vunpack.c.h.b16 %v11402
    %v12070 = vunpack.c.l.b16 %v11403
    %v12071 = vunpack.c.h.b16 %v11403
    %v12072 = vunpack.c.l.b16 %v11404
    %v12073 = vunpack.c.h.b16 %v11404
    %v12074 = vunpack.c.l.b16 %v11405
    %v12075 = vunpack.c.h.b16 %v11405
    %v12076 = vunpack.c.l.b16 %v11406
    %v12077 = vunpack.c.h.b16 %v11406
    %v12078 = vunpack.c.l.b16 %v11407
    %v12079 = vunpack.c.h.b16 %v11407
    %v12080 = vunpack.c.l.b16 %v11408
    %v12081 = vunpack.c.h.b16 %v11408
    %v12082 = vunpack.c.l.b16 %v11409
    %v12083 = vunpack.c.h.b16 %v11409
    %v12084 = vunpack.c.l.b16 %v11410
    %v12085 = vunpack.c.h.b16 %v11410
    %v12086 = vunpack.c.l.b16 %v11411
    %v12087 = vunpack.c.h.b16 %v11411
    %v12088 = vunpack.c.l.b16 %v11412
    %v12089 = vunpack.c.h.b16 %v11412
    %v12090 = vunpack.c.l.b16 %v11413
    %v12091 = vunpack.c.h.b16 %v11413
    %v12092 = vunpack.c.l.b16 %v11414
    %v12093 = vunpack.c.h.b16 %v11414
    %v12094 = vunpack.c.l.b16 %v11415
    %v12095 = vunpack.c.h.b16 %v11415
    %v12096 = vunpack.c.l.b16 %v11416
    %v12097 = vunpack.c.h.b16 %v11416
    %v12098 = vunpack.c.l.b16 %v11417
    %v12099 = vunpack.c.h.b16 %v11417
    %v12100 = vunpack.c.l.b16 %v11418
    %v12101 = vunpack.c.h.b16 %v11418
    %v12102 = vunpack.c.l.b16 %v11419
    %v12103 = vunpack.c.h.b16 %v11419
    %v12104 = vunpack.c.l.b16 %v11420
    %v12105 = vunpack.c.h.b16 %v11420
    %v12106 = vunpack.c.l.b16 %v11421
    %v12107 = vunpack.c.h.b16 %v11421
    %v12108 = vunpack.c.l.b16 %v11422
    %v12109 = vunpack.c.h.b16 %v11422
    %v12110 = vunpack.c.l.b16 %v11423
    %v12111 = vunpack.c.h.b16 %v11423
    %v12112 = vunpack.c.l.b16 %v11424
    %v12113 = vunpack.c.h.b16 %v11424
    %v12114 = vunpack.c.l.b16 %v11425
    %v12115 = vunpack.c.h.b16 %v11425
    %v12116 = vunpack.c.l.b16 %v11426
    %v12117 = vunpack.c.h.b16 %v11426
    %v12118 = vunpack.c.l.b16 %v11427
    %v12119 = vunpack.c.h.b16 %v11427
    %v12120 = vunpack.c.l.b16 %v11428
    %v12121 = vunpack.c.h.b16 %v11428
    %v12122 = vunpack.c.l.b16 %v11429
    %v12123 = vunpack.c.h.b16 %v11429
    %v12124 = vunpack.c.l.b16 %v11430
    %v12125 = vunpack.c.h.b16 %v11430
    %v12126 = vunpack.c.l.b16 %v11431
    %v12127 = vunpack.c.h.b16 %v11431
    %v12128 = vunpack.c.l.b16 %v11432
    %v12129 = vunpack.c.h.b16 %v11432
    %v12130 = vunpack.c.l.b16 %v11433
    %v12131 = vunpack.c.h.b16 %v11433
    %v12132 = vunpack.c.l.b16 %v11434
    %v12133 = vunpack.c.h.b16 %v11434
    %v12134 = vunpack.c.l.b16 %v11435
    %v12135 = vunpack.c.h.b16 %v11435
    %v12136 = vunpack.c.l.b16 %v11436
    %v12137 = vunpack.c.h.b16 %v11436
    %v12138 = vunpack.c.l.b16 %v11437
    %v12139 = vunpack.c.h.b16 %v11437
    %v12140 = vunpack.c.l.b16 %v11438
    %v12141 = vunpack.c.h.b16 %v11438
    %v12142 = vunpack.c.l.b16 %v11439
    %v12143 = vunpack.c.h.b16 %v11439
    %v12144 = vunpack.c.l.b16 %v11440
    %v12145 = vunpack.c.h.b16 %v11440
    %v12146 = vunpack.c.l.b16 %v11441
    %v12147 = vunpack.c.h.b16 %v11441
    %v12148 = vunpack.c.l.b16 %v11442
    %v12149 = vunpack.c.h.b16 %v11442
    %v12150 = vunpack.c.l.b16 %v11443
    %v12151 = vunpack.c.h.b16 %v11443
    %v12152 = vunpack.c.l.b16 %v11444
    %v12153 = vunpack.c.h.b16 %v11444
    %v12154 = vunpack.c.l.b16 %v11445
    %v12155 = vunpack.c.h.b16 %v11445
    %v12156 = vunpack.c.l.b16 %v11446
    %v12157 = vunpack.c.h.b16 %v11446
    %v12158 = vunpack.c.l.b16 %v11447
    %v12159 = vunpack.c.h.b16 %v11447
    %v12160 = vunpack.c.l.b16 %v11448
    %v12161 = vunpack.c.h.b16 %v11448
    %v12162 = vunpack.c.l.b16 %v11449
    %v12163 = vunpack.c.h.b16 %v11449
    %v12164 = vunpack.c.l.b16 %v11450
    %v12165 = vunpack.c.h.b16 %v11450
    %v12166 = vunpack.c.l.b16 %v11451
    %v12167 = vunpack.c.h.b16 %v11451
    %v12168 = vunpack.c.l.b16 %v11452
    %v12169 = vunpack.c.h.b16 %v11452
    %v12170 = vunpack.c.l.b16 %v11453
    %v12171 = vunpack.c.h.b16 %v11453
    %v12172 = vunpack.c.l.b16 %v11454
    %v12173 = vunpack.c.h.b16 %v11454
    %v12174 = vunpack.c.l.b16 %v11455
    %v12175 = vunpack.c.h.b16 %v11455
    %v12176 = vunpack.c.l.b16 %v11456
    %v12177 = vunpack.c.h.b16 %v11456
    %v12178 = vunpack.c.l.b16 %v11457
    %v12179 = vunpack.c.h.b16 %v11457
    %v12180 = vunpack.c.l.b16 %v11458
    %v12181 = vunpack.c.h.b16 %v11458
    %v12182 = vunpack.c.l.b16 %v11459
    %v12183 = vunpack.c.h.b16 %v11459
    %v12184 = vunpack.c.l.b16 %v11460
    %v12185 = vunpack.c.h.b16 %v11460
    %v12186 = vunpack.c.l.b16 %v11461
    %v12187 = vunpack.c.h.b16 %v11461
    %v12188 = vunpack.c.l.b16 %v11462
    %v12189 = vunpack.c.h.b16 %v11462
    %v12190 = vunpack.c.l.b16 %v11463
    %v12191 = vunpack.c.h.b16 %v11463
    %v12192 = vunpack.c.l.b16 %v11464
    %v12193 = vunpack.c.h.b16 %v11464
    %v12194 = vunpack.c.l.b16 %v11465
    %v12195 = vunpack.c.h.b16 %v11465
    %v12196 = vunpack.c.l.b16 %v11466
    %v12197 = vunpack.c.h.b16 %v11466
    %v12198 = vunpack.c.l.b16 %v11467
    %v12199 = vunpack.c.h.b16 %v11467
    %v12200 = vunpack.c.l.b16 %v11468
    %v12201 = vunpack.c.h.b16 %v11468
    %v12202 = vunpack.c.l.b16 %v11469
    %v12203 = vunpack.c.h.b16 %v11469
    %v12204 = vunpack.c.l.b16 %v11470
    %v12205 = vunpack.c.h.b16 %v11470
    %v12206 = vunpack.c.l.b16 %v11471
    %v12207 = vunpack.c.h.b16 %v11471
    %v12208 = vunpack.c.l.b16 %v11472
    %v12209 = vunpack.c.h.b16 %v11472
    %v12210 = vunpack.c.l.b16 %v11473
    %v12211 = vunpack.c.h.b16 %v11473
    %v12212 = vunpack.c.l.b16 %v11474
    %v12213 = vunpack.c.h.b16 %v11474
    %v12214 = vunpack.c.l.b16 %v11475
    %v12215 = vunpack.c.h.b16 %v11475
    %v12216 = vunpack.c.l.b16 %v11476
    %v12217 = vunpack.c.h.b16 %v11476
    %v12218 = vunpack.c.l.b16 %v11477
    %v12219 = vunpack.c.h.b16 %v11477
    %v12220 = vunpack.c.l.b16 %v11478
    %v12221 = vunpack.c.h.b16 %v11478
    %v12222 = vunpack.c.l.b16 %v11479
    %v12223 = vunpack.c.h.b16 %v11479
    %v12224 = vunpack.c.l.b16 %v11480
    %v12225 = vunpack.c.h.b16 %v11480
    %v12226 = vunpack.c.l.b16 %v11481
    %v12227 = vunpack.c.h.b16 %v11481
    %v12228 = vunpack.c.l.b16 %v11482
    %v12229 = vunpack.c.h.b16 %v11482
    %v12230 = vunpack.c.l.b16 %v11483
    %v12231 = vunpack.c.h.b16 %v11483
    %v12232 = vunpack.c.l.b16 %v11484
    %v12233 = vunpack.c.h.b16 %v11484
    %v12234 = vunpack.c.l.b16 %v11485
    %v12235 = vunpack.c.h.b16 %v11485
    %v12236 = vunpack.c.l.b16 %v11486
    %v12237 = vunpack.c.h.b16 %v11486
    %v12238 = vunpack.c.l.b16 %v11487
    %v12239 = vunpack.c.h.b16 %v11487
    %v12240 = vunpack.c.l.b16 %v11488
    %v12241 = vunpack.c.h.b16 %v11488
    %v12242 = vunpack.c.l.b16 %v11489
    %v12243 = vunpack.c.h.b16 %v11489
    %v12244 = vunpack.c.l.b16 %v11490
    %v12245 = vunpack.c.h.b16 %v11490
    %v12246 = vunpack.c.l.b16 %v11491
    %v12247 = vunpack.c.h.b16 %v11491
    %v12248 = vunpack.c.l.b16 %v11492
    %v12249 = vunpack.c.h.b16 %v11492
    %v12250 = vunpack.c.l.b16 %v11493
    %v12251 = vunpack.c.h.b16 %v11493
    %v12252 = vunpack.c.l.b16 %v11494
    %v12253 = vunpack.c.h.b16 %v11494
    %v12254 = vunpack.c.l.b16 %v11495
    %v12255 = vunpack.c.h.b16 %v11495
    %v12256 = vunpack.c.l.b16 %v11496
    %v12257 = vunpack.c.h.b16 %v11496
    %v12258 = vunpack.c.l.b16 %v11497
    %v12259 = vunpack.c.h.b16 %v11497
    %v12260 = vunpack.c.l.b16 %v11498
    %v12261 = vunpack.c.h.b16 %v11498
    %v12262 = vunpack.c.l.b16 %v11499
    %v12263 = vunpack.c.h.b16 %v11499
    %v12264 = vunpack.c.l.b16 %v11500
    %v12265 = vunpack.c.h.b16 %v11500
    %v12266 = vunpack.c.l.b16 %v11501
    %v12267 = vunpack.c.h.b16 %v11501
    %v12268 = vunpack.c.l.b16 %v11502
    %v12269 = vunpack.c.h.b16 %v11502
    %v12270 = vunpack.c.l.b16 %v11503
    %v12271 = vunpack.c.h.b16 %v11503
    %v12272 = vunpack.c.l.b16 %v11504
    %v12273 = vunpack.c.h.b16 %v11504
    %v12274 = vunpack.c.l.b16 %v11505
    %v12275 = vunpack.c.h.b16 %v11505
    %v12276 = vunpack.c.l.b16 %v11506
    %v12277 = vunpack.c.h.b16 %v11506
    %v12278 = vunpack.c.l.b16 %v11507
    %v12279 = vunpack.c.h.b16 %v11507
    %v12280 = vunpack.c.l.b16 %v11508
    %v12281 = vunpack.c.h.b16 %v11508
    %v12282 = vunpack.c.l.b16 %v11509
    %v12283 = vunpack.c.h.b16 %v11509
    %v12284 = vunpack.c.l.b16 %v11510
    %v12285 = vunpack.c.h.b16 %v11510
    %v12286 = vunpack.c.l.b16 %v11511
    %v12287 = vunpack.c.h.b16 %v11511
    %v12288 = vunpack.c.l.b16 %v11512
    %v12289 = vunpack.c.h.b16 %v11512
    %v12290 = vunpack.c.l.b16 %v11513
    %v12291 = vunpack.c.h.b16 %v11513
    %v12292 = vpack.c.b16 %v11784, %v11780
    %v12293 = vpack.c.b16 %v11785, %v11781
    %v12294 = vpack.c.b16 %v11786, %v11782
    %v12295 = vpack.c.b16 %v11787, %v11783
    %v12296 = vpack.c.b16 %v11792, %v11788
    %v12297 = vpack.c.b16 %v11793, %v11789
    %v12298 = vpack.c.b16 %v11794, %v11790
    %v12299 = vpack.c.b16 %v11795, %v11791
    %v12300 = vpack.c.b16 %v11800, %v11796
    %v12301 = vpack.c.b16 %v11801, %v11797
    %v12302 = vpack.c.b16 %v11802, %v11798
    %v12303 = vpack.c.b16 %v11803, %v11799
    %v12304 = vpack.c.b16 %v11808, %v11804
    %v12305 = vpack.c.b16 %v11809, %v11805
    %v12306 = vpack.c.b16 %v11810, %v11806
    %v12307 = vpack.c.b16 %v11811, %v11807
    %v12308 = vpack.c.b16 %v11816, %v11812
    %v12309 = vpack.c.b16 %v11817, %v11813
    %v12310 = vpack.c.b16 %v11818, %v11814
    %v12311 = vpack.c.b16 %v11819, %v11815
    %v12312 = vpack.c.b16 %v11824, %v11820
    %v12313 = vpack.c.b16 %v11825, %v11821
    %v12314 = vpack.c.b16 %v11826, %v11822
    %v12315 = vpack.c.b16 %v11827, %v11823
    %v12316 = vpack.c.b16 %v11832, %v11828
    %v12317 = vpack.c.b16 %v11833, %v11829
    %v12318 = vpack.c.b16 %v11834, %v11830
    %v12319 = vpack.c.b16 %v11835, %v11831
    %v12320 = vpack.c.b16 %v11840, %v11836
    %v12321 = vpack.c.b16 %v11841, %v11837
    %v12322 = vpack.c.b16 %v11842, %v11838
    %v12323 = vpack.c.b16 %v11843, %v11839
    %v12324 = vpack.c.b16 %v11848, %v11844
    %v12325 = vpack.c.b16 %v11849, %v11845
    %v12326 = vpack.c.b16 %v11850, %v11846
    %v12327 = vpack.c.b16 %v11851, %v11847
    %v12328 = vpack.c.b16 %v11856, %v11852
    %v12329 = vpack.c.b16 %v11857, %v11853
    %v12330 = vpack.c.b16 %v11858, %v11854
    %v12331 = vpack.c.b16 %v11859, %v11855
    %v12332 = vpack.c.b16 %v11864, %v11860
    %v12333 = vpack.c.b16 %v11865, %v11861
    %v12334 = vpack.c.b16 %v11866, %v11862
    %v12335 = vpack.c.b16 %v11867, %v11863
    %v12336 = vpack.c.b16 %v11872, %v11868
    %v12337 = vpack.c.b16 %v11873, %v11869
    %v12338 = vpack.c.b16 %v11874, %v11870
    %v12339 = vpack.c.b16 %v11875, %v11871
    %v12340 = vpack.c.b16 %v11880, %v11876
    %v12341 = vpack.c.b16 %v11881, %v11877
    %v12342 = vpack.c.b16 %v11882, %v11878
    %v12343 = vpack.c.b16 %v11883, %v11879
    %v12344 = vpack.c.b16 %v11888, %v11884
    %v12345 = vpack.c.b16 %v11889, %v11885
    %v12346 = vpack.c.b16 %v11890, %v11886
    %v12347 = vpack.c.b16 %v11891, %v11887
    %v12348 = vpack.c.b16 %v11896, %v11892
    %v12349 = vpack.c.b16 %v11897, %v11893
    %v12350 = vpack.c.b16 %v11898, %v11894
    %v12351 = vpack.c.b16 %v11899, %v11895
    %v12352 = vpack.c.b16 %v11904, %v11900
    %v12353 = vpack.c.b16 %v11905, %v11901
    %v12354 = vpack.c.b16 %v11906, %v11902
    %v12355 = vpack.c.b16 %v11907, %v11903
    %v12356 = vpack.c.b16 %v11912, %v11908
    %v12357 = vpack.c.b16 %v11913, %v11909
    %v12358 = vpack.c.b16 %v11914, %v11910
    %v12359 = vpack.c.b16 %v11915, %v11911
    %v12360 = vpack.c.b16 %v11920, %v11916
    %v12361 = vpack.c.b16 %v11921, %v11917
    %v12362 = vpack.c.b16 %v11922, %v11918
    %v12363 = vpack.c.b16 %v11923, %v11919
    %v12364 = vpack.c.b16 %v11928, %v11924
    %v12365 = vpack.c.b16 %v11929, %v11925
    %v12366 = vpack.c.b16 %v11930, %v11926
    %v12367 = vpack.c.b16 %v11931, %v11927
    %v12368 = vpack.c.b16 %v11936, %v11932
    %v12369 = vpack.c.b16 %v11937, %v11933
    %v12370 = vpack.c.b16 %v11938, %v11934
    %v12371 = vpack.c.b16 %v11939, %v11935
    %v12372 = vpack.c.b16 %v11944, %v11940
    %v12373 = vpack.c.b16 %v11945, %v11941
    %v12374 = vpack.c.b16 %v11946, %v11942
    %v12375 = vpack.c.b16 %v11947, %v11943
    %v12376 = vpack.c.b16 %v11952, %v11948
    %v12377 = vpack.c.b16 %v11953, %v11949
    %v12378 = vpack.c.b16 %v11954, %v11950
    %v12379 = vpack.c.b16 %v11955, %v11951
    %v12380 = vpack.c.b16 %v11960, %v11956
    %v12381 = vpack.c.b16 %v11961, %v11957
    %v12382 = vpack.c.b16 %v11962, %v11958
    %v12383 = vpack.c.b16 %v11963, %v11959
    %v12384 = vpack.c.b16 %v11968, %v11964
    %v12385 = vpack.c.b16 %v11969, %v11965
    %v12386 = vpack.c.b16 %v11970, %v11966
    %v12387 = vpack.c.b16 %v11971, %v11967
    %v12388 = vpack.c.b16 %v11976, %v11972
    %v12389 = vpack.c.b16 %v11977, %v11973
    %v12390 = vpack.c.b16 %v11978, %v11974
    %v12391 = vpack.c.b16 %v11979, %v11975
    %v12392 = vpack.c.b16 %v11984, %v11980
    %v12393 = vpack.c.b16 %v11985, %v11981
    %v12394 = vpack.c.b16 %v11986, %v11982
    %v12395 = vpack.c.b16 %v11987, %v11983
    %v12396 = vpack.c.b16 %v11992, %v11988
    %v12397 = vpack.c.b16 %v11993, %v11989
    %v12398 = vpack.c.b16 %v11994, %v11990
    %v12399 = vpack.c.b16 %v11995, %v11991
    %v12400 = vpack.c.b16 %v12000, %v11996
    %v12401 = vpack.c.b16 %v12001, %v11997
    %v12402 = vpack.c.b16 %v12002, %v11998
    %v12403 = vpack.c.b16 %v12003, %v11999
    %v12404 = vpack.c.b16 %v12008, %v12004
    %v12405 = vpack.c.b16 %v12009, %v12005
    %v12406 = vpack.c.b16 %v12010, %v12006
    %v12407 = vpack.c.b16 %v12011, %v12007
    %v12408 = vpack.c.b16 %v12016, %v12012
    %v12409 = vpack.c.b16 %v12017, %v12013
    %v12410 = vpack.c.b16 %v12018, %v12014
    %v12411 = vpack.c.b16 %v12019, %v12015
    %v12412 = vpack.c.b16 %v12024, %v12020
    %v12413 = vpack.c.b16 %v12025, %v12021
    %v12414 = vpack.c.b16 %v12026, %v12022
    %v12415 = vpack.c.b16 %v12027, %v12023
    %v12416 = vpack.c.b16 %v12032, %v12028
    %v12417 = vpack.c.b16 %v12033, %v12029
    %v12418 = vpack.c.b16 %v12034, %v12030
    %v12419 = vpack.c.b16 %v12035, %v12031
    %v12420 = vpack.c.b16 %v12040, %v12036
    %v12421 = vpack.c.b16 %v12041, %v12037
    %v12422 = vpack.c.b16 %v12042, %v12038
    %v12423 = vpack.c.b16 %v12043, %v12039
    %v12424 = vpack.c.b16 %v12048, %v12044
    %v12425 = vpack.c.b16 %v12049, %v12045
    %v12426 = vpack.c.b16 %v12050, %v12046
    %v12427 = vpack.c.b16 %v12051, %v12047
    %v12428 = vpack.c.b16 %v12056, %v12052
    %v12429 = vpack.c.b16 %v12057, %v12053
    %v12430 = vpack.c.b16 %v12058, %v12054
    %v12431 = vpack.c.b16 %v12059, %v12055
    %v12432 = vpack.c.b16 %v12064, %v12060
    %v12433 = vpack.c.b16 %v12065, %v12061
    %v12434 = vpack.c.b16 %v12066, %v12062
    %v12435 = vpack.c.b16 %v12067, %v12063
    %v12436 = vpack.c.b16 %v12072, %v12068
    %v12437 = vpack.c.b16 %v12073, %v12069
    %v12438 = vpack.c.b16 %v12074, %v12070
    %v12439 = vpack.c.b16 %v12075, %v12071
    %v12440 = vpack.c.b16 %v12080, %v12076
    %v12441 = vpack.c.b16 %v12081, %v12077
    %v12442 = vpack.c.b16 %v12082, %v12078
    %v12443 = vpack.c.b16 %v12083, %v12079
    %v12444 = vpack.c.b16 %v12088, %v12084
    %v12445 = vpack.c.b16 %v12089, %v12085
    %v12446 = vpack.c.b16 %v12090, %v12086
    %v12447 = vpack.c.b16 %v12091, %v12087
    %v12448 = vpack.c.b16 %v12096, %v12092
    %v12449 = vpack.c.b16 %v12097, %v12093
    %v12450 = vpack.c.b16 %v12098, %v12094
    %v12451 = vpack.c.b16 %v12099, %v12095
    %v12452 = vpack.c.b16 %v12104, %v12100
    %v12453 = vpack.c.b16 %v12105, %v12101
    %v12454 = vpack.c.b16 %v12106, %v12102
    %v12455 = vpack.c.b16 %v12107, %v12103
    %v12456 = vpack.c.b16 %v12112, %v12108
    %v12457 = vpack.c.b16 %v12113, %v12109
    %v12458 = vpack.c.b16 %v12114, %v12110
    %v12459 = vpack.c.b16 %v12115, %v12111
    %v12460 = vpack.c.b16 %v12120, %v12116
    %v12461 = vpack.c.b16 %v12121, %v12117
    %v12462 = vpack.c.b16 %v12122, %v12118
    %v12463 = vpack.c.b16 %v12123, %v12119
    %v12464 = vpack.c.b16 %v12128, %v12124
    %v12465 = vpack.c.b16 %v12129, %v12125
    %v12466 = vpack.c.b16 %v12130, %v12126
    %v12467 = vpack.c.b16 %v12131, %v12127
    %v12468 = vpack.c.b16 %v12136, %v12132
    %v12469 = vpack.c.b16 %v12137, %v12133
    %v12470 = vpack.c.b16 %v12138, %v12134
    %v12471 = vpack.c.b16 %v12139, %v12135
    %v12472 = vpack.c.b16 %v12144, %v12140
    %v12473 = vpack.c.b16 %v12145, %v12141
    %v12474 = vpack.c.b16 %v12146, %v12142
    %v12475 = vpack.c.b16 %v12147, %v12143
    %v12476 = vpack.c.b16 %v12152, %v12148
    %v12477 = vpack.c.b16 %v12153, %v12149
    %v12478 = vpack.c.b16 %v12154, %v12150
    %v12479 = vpack.c.b16 %v12155, %v12151
    %v12480 = vpack.c.b16 %v12160, %v12156
    %v12481 = vpack.c.b16 %v12161, %v12157
    %v12482 = vpack.c.b16 %v12162, %v12158
    %v12483 = vpack.c.b16 %v12163, %v12159
    %v12484 = vpack.c.b16 %v12168, %v12164
    %v12485 = vpack.c.b16 %v12169, %v12165
    %v12486 = vpack.c.b16 %v12170, %v12166
    %v12487 = vpack.c.b16 %v12171, %v12167
    %v12488 = vpack.c.b16 %v12176, %v12172
    %v12489 = vpack.c.b16 %v12177, %v12173
    %v12490 = vpack.c.b16 %v12178, %v12174
    %v12491 = vpack.c.b16 %v12179, %v12175
    %v12492 = vpack.c.b16 %v12184, %v12180
    %v12493 = vpack.c.b16 %v12185, %v12181
    %v12494 = vpack.c.b16 %v12186, %v12182
    %v12495 = vpack.c.b16 %v12187, %v12183
    %v12496 = vpack.c.b16 %v12192, %v12188
    %v12497 = vpack.c.b16 %v12193, %v12189
    %v12498 = vpack.c.b16 %v12194, %v12190
    %v12499 = vpack.c.b16 %v12195, %v12191
    %v12500 = vpack.c.b16 %v12200, %v12196
    %v12501 = vpack.c.b16 %v12201, %v12197
    %v12502 = vpack.c.b16 %v12202, %v12198
    %v12503 = vpack.c.b16 %v12203, %v12199
    %v12504 = vpack.c.b16 %v12208, %v12204
    %v12505 = vpack.c.b16 %v12209, %v12205
    %v12506 = vpack.c.b16 %v12210, %v12206
    %v12507 = vpack.c.b16 %v12211, %v12207
    %v12508 = vpack.c.b16 %v12216, %v12212
    %v12509 = vpack.c.b16 %v12217, %v12213
    %v12510 = vpack.c.b16 %v12218, %v12214
    %v12511 = vpack.c.b16 %v12219, %v12215
    %v12512 = vpack.c.b16 %v12224, %v12220
    %v12513 = vpack.c.b16 %v12225, %v12221
    %v12514 = vpack.c.b16 %v12226, %v12222
    %v12515 = vpack.c.b16 %v12227, %v12223
    %v12516 = vpack.c.b16 %v12232, %v12228
    %v12517 = vpack.c.b16 %v12233, %v12229
    %v12518 = vpack.c.b16 %v12234, %v12230
    %v12519 = vpack.c.b16 %v12235, %v12231
    %v12520 = vpack.c.b16 %v12240, %v12236
    %v12521 = vpack.c.b16 %v12241, %v12237
    %v12522 = vpack.c.b16 %v12242, %v12238
    %v12523 = vpack.c.b16 %v12243, %v12239
    %v12524 = vpack.c.b16 %v12248, %v12244
    %v12525 = vpack.c.b16 %v12249, %v12245
    %v12526 = vpack.c.b16 %v12250, %v12246
    %v12527 = vpack.c.b16 %v12251, %v12247
    %v12528 = vpack.c.b16 %v12256, %v12252
    %v12529 = vpack.c.b16 %v12257, %v12253
    %v12530 = vpack.c.b16 %v12258, %v12254
    %v12531 = vpack.c.b16 %v12259, %v12255
    %v12532 = vpack.c.b16 %v12264, %v12260
    %v12533 = vpack.c.b16 %v12265, %v12261
    %v12534 = vpack.c.b16 %v12266, %v12262
    %v12535 = vpack.c.b16 %v12267, %v12263
    %v12536 = vpack.c.b16 %v12272, %v12268
    %v12537 = vpack.c.b16 %v12273, %v12269
    %v12538 = vpack.c.b16 %v12274, %v12270
    %v12539 = vpack.c.b16 %v12275, %v12271
    %v12540 = vpack.c.b16 %v12280, %v12276
    %v12541 = vpack.c.b16 %v12281, %v12277
    %v12542 = vpack.c.b16 %v12282, %v12278
    %v12543 = vpack.c.b16 %v12283, %v12279
    %v12544 = vpack.c.b16 %v12288, %v12284
    %v12545 = vpack.c.b16 %v12289, %v12285
    %v12546 = vpack.c.b16 %v12290, %v12286
    %v12547 = vpack.c.b16 %v12291, %v12287
    %12804 = vmatpush.bf16.msra.mxu0 %v12320
    %12805 = vmatpush.bf16.msra.mxu0 %v12316
    %12806 = vmatpush.bf16.msra.mxu0 %v12312
    %12807 = vmatpush.bf16.msra.mxu0 %v12308
    %12808 = vmatpush.bf16.msra.mxu0 %v12304
    %12809 = vmatpush.bf16.msra.mxu0 %v12300
    %12810 = vmatpush.bf16.msra.mxu0 %v12296
    %12811 = vmatpush.bf16.msra.mxu0 %v12292
    %12812 = vmatmul.bf16.gmra.mxu0 %v11250
    %v12813 = vpop.f32.mrf.mxu0
    %v12814 = vadd.f32 %v11516, %v12813
    %v12815 = vpop.f32.mrf.mxu0
    %12816 = vdwg.mxu0
    %12817 = vmatpush.bf16.msra.mxu0 %v12352
    %12818 = vmatpush.bf16.msra.mxu0 %v12348
    %12819 = vmatpush.bf16.msra.mxu0 %v12344
    %12820 = vmatpush.bf16.msra.mxu0 %v12340
    %12821 = vmatpush.bf16.msra.mxu0 %v12336
    %12822 = vmatpush.bf16.msra.mxu0 %v12332
    %12823 = vmatpush.bf16.msra.mxu0 %v12328
    %12824 = vmatpush.bf16.msra.mxu0 %v12324
    %12825 = vmatmul.bf16.gmra.mxu0 %v11251
    %v12826 = vpop.f32.mrf.mxu0
    %v12827 = vadd.f32 %v12814, %v12826
    %v12828 = vpop.f32.mrf.mxu0
    %12829 = vdwg.mxu0
    %12830 = vmatpush.bf16.msra.mxu0 %v12384
    %12831 = vmatpush.bf16.msra.mxu0 %v12380
    %12832 = vmatpush.bf16.msra.mxu0 %v12376
    %12833 = vmatpush.bf16.msra.mxu0 %v12372
    %12834 = vmatpush.bf16.msra.mxu0 %v12368
    %12835 = vmatpush.bf16.msra.mxu0 %v12364
    %12836 = vmatpush.bf16.msra.mxu0 %v12360
    %12837 = vmatpush.bf16.msra.mxu0 %v12356
    %12838 = vmatmul.bf16.gmra.mxu0 %v11252
    %v12839 = vpop.f32.mrf.mxu0
    %v12840 = vadd.f32 %v12827, %v12839
    %v12841 = vpop.f32.mrf.mxu0
    %12842 = vdwg.mxu0
    %12843 = vmatpush.bf16.msra.mxu0 %v12416
    %12844 = vmatpush.bf16.msra.mxu0 %v12412
    %12845 = vmatpush.bf16.msra.mxu0 %v12408
    %12846 = vmatpush.bf16.msra.mxu0 %v12404
    %12847 = vmatpush.bf16.msra.mxu0 %v12400
    %12848 = vmatpush.bf16.msra.mxu0 %v12396
    %12849 = vmatpush.bf16.msra.mxu0 %v12392
    %12850 = vmatpush.bf16.msra.mxu0 %v12388
    %12851 = vmatmul.bf16.gmra.mxu0 %v11253
    %v12852 = vpop.f32.mrf.mxu0
    %v12853 = vadd.f32 %v12840, %v12852
    %v12854 = vpop.f32.mrf.mxu0
    %12855 = vdwg.mxu0
    %12856 = vmatpush.bf16.msra.mxu0 %v12448
    %12857 = vmatpush.bf16.msra.mxu0 %v12444
    %12858 = vmatpush.bf16.msra.mxu0 %v12440
    %12859 = vmatpush.bf16.msra.mxu0 %v12436
    %12860 = vmatpush.bf16.msra.mxu0 %v12432
    %12861 = vmatpush.bf16.msra.mxu0 %v12428
    %12862 = vmatpush.bf16.msra.mxu0 %v12424
    %12863 = vmatpush.bf16.msra.mxu0 %v12420
    %12864 = vmatmul.bf16.gmra.mxu0 %v11254
    %v12865 = vpop.f32.mrf.mxu0
    %v12866 = vadd.f32 %v12853, %v12865
    %v12867 = vpop.f32.mrf.mxu0
    %12868 = vdwg.mxu0
    %12869 = vmatpush.bf16.msra.mxu0 %v12480
    %12870 = vmatpush.bf16.msra.mxu0 %v12476
    %12871 = vmatpush.bf16.msra.mxu0 %v12472
    %12872 = vmatpush.bf16.msra.mxu0 %v12468
    %12873 = vmatpush.bf16.msra.mxu0 %v12464
    %12874 = vmatpush.bf16.msra.mxu0 %v12460
    %12875 = vmatpush.bf16.msra.mxu0 %v12456
    %12876 = vmatpush.bf16.msra.mxu0 %v12452
    %12877 = vmatmul.bf16.gmra.mxu0 %v11255
    %v12878 = vpop.f32.mrf.mxu0
    %v12879 = vadd.f32 %v12866, %v12878
    %v12880 = vpop.f32.mrf.mxu0
    %12881 = vdwg.mxu0
    %12882 = vmatpush.bf16.msra.mxu0 %v12512
    %12883 = vmatpush.bf16.msra.mxu0 %v12508
    %12884 = vmatpush.bf16.msra.mxu0 %v12504
    %12885 = vmatpush.bf16.msra.mxu0 %v12500
    %12886 = vmatpush.bf16.msra.mxu0 %v12496
    %12887 = vmatpush.bf16.msra.mxu0 %v12492
    %12888 = vmatpush.bf16.msra.mxu0 %v12488
    %12889 = vmatpush.bf16.msra.mxu0 %v12484
    %12890 = vmatmul.bf16.gmra.mxu0 %v11256
    %v12891 = vpop.f32.mrf.mxu0
    %v12892 = vadd.f32 %v12879, %v12891
    %v12893 = vpop.f32.mrf.mxu0
    %12894 = vdwg.mxu0
    %12895 = vmatpush.bf16.msra.mxu0 %v12544
    %12896 = vmatpush.bf16.msra.mxu0 %v12540
    %12897 = vmatpush.bf16.msra.mxu0 %v12536
    %12898 = vmatpush.bf16.msra.mxu0 %v12532
    %12899 = vmatpush.bf16.msra.mxu0 %v12528
    %12900 = vmatpush.bf16.msra.mxu0 %v12524
    %12901 = vmatpush.bf16.msra.mxu0 %v12520
    %12902 = vmatpush.bf16.msra.mxu0 %v12516
    %12903 = vmatmul.bf16.gmra.mxu0 %v11257
    %v12904 = vpop.f32.mrf.mxu0
    %v12905 = vadd.f32 %v12892, %v12904
    %v12906 = vpop.f32.mrf.mxu0
    %12907 = vdwg.mxu0
    %12908 = vmatpush.bf16.msra.mxu0 %v12321
    %12909 = vmatpush.bf16.msra.mxu0 %v12317
    %12910 = vmatpush.bf16.msra.mxu0 %v12313
    %12911 = vmatpush.bf16.msra.mxu0 %v12309
    %12912 = vmatpush.bf16.msra.mxu0 %v12305
    %12913 = vmatpush.bf16.msra.mxu0 %v12301
    %12914 = vmatpush.bf16.msra.mxu0 %v12297
    %12915 = vmatpush.bf16.msra.mxu0 %v12293
    %12916 = vmatmul.bf16.gmra.mxu0 %v11250
    %v12917 = vpop.f32.mrf.mxu0
    %v12918 = vadd.f32 %v11517, %v12917
    %v12919 = vpop.f32.mrf.mxu0
    %12920 = vdwg.mxu0
    %12921 = vmatpush.bf16.msra.mxu0 %v12353
    %12922 = vmatpush.bf16.msra.mxu0 %v12349
    %12923 = vmatpush.bf16.msra.mxu0 %v12345
    %12924 = vmatpush.bf16.msra.mxu0 %v12341
    %12925 = vmatpush.bf16.msra.mxu0 %v12337
    %12926 = vmatpush.bf16.msra.mxu0 %v12333
    %12927 = vmatpush.bf16.msra.mxu0 %v12329
    %12928 = vmatpush.bf16.msra.mxu0 %v12325
    %12929 = vmatmul.bf16.gmra.mxu0 %v11251
    %v12930 = vpop.f32.mrf.mxu0
    %v12931 = vadd.f32 %v12918, %v12930
    %v12932 = vpop.f32.mrf.mxu0
    %12933 = vdwg.mxu0
    %12934 = vmatpush.bf16.msra.mxu0 %v12385
    %12935 = vmatpush.bf16.msra.mxu0 %v12381
    %12936 = vmatpush.bf16.msra.mxu0 %v12377
    %12937 = vmatpush.bf16.msra.mxu0 %v12373
    %12938 = vmatpush.bf16.msra.mxu0 %v12369
    %12939 = vmatpush.bf16.msra.mxu0 %v12365
    %12940 = vmatpush.bf16.msra.mxu0 %v12361
    %12941 = vmatpush.bf16.msra.mxu0 %v12357
    %12942 = vmatmul.bf16.gmra.mxu0 %v11252
    %v12943 = vpop.f32.mrf.mxu0
    %v12944 = vadd.f32 %v12931, %v12943
    %v12945 = vpop.f32.mrf.mxu0
    %12946 = vdwg.mxu0
    %12947 = vmatpush.bf16.msra.mxu0 %v12417
    %12948 = vmatpush.bf16.msra.mxu0 %v12413
    %12949 = vmatpush.bf16.msra.mxu0 %v12409
    %12950 = vmatpush.bf16.msra.mxu0 %v12405
    %12951 = vmatpush.bf16.msra.mxu0 %v12401
    %12952 = vmatpush.bf16.msra.mxu0 %v12397
    %12953 = vmatpush.bf16.msra.mxu0 %v12393
    %12954 = vmatpush.bf16.msra.mxu0 %v12389
    %12955 = vmatmul.bf16.gmra.mxu0 %v11253
    %v12956 = vpop.f32.mrf.mxu0
    %v12957 = vadd.f32 %v12944, %v12956
    %v12958 = vpop.f32.mrf.mxu0
    %12959 = vdwg.mxu0
    %12960 = vmatpush.bf16.msra.mxu0 %v12449
    %12961 = vmatpush.bf16.msra.mxu0 %v12445
    %12962 = vmatpush.bf16.msra.mxu0 %v12441
    %12963 = vmatpush.bf16.msra.mxu0 %v12437
    %12964 = vmatpush.bf16.msra.mxu0 %v12433
    %12965 = vmatpush.bf16.msra.mxu0 %v12429
    %12966 = vmatpush.bf16.msra.mxu0 %v12425
    %12967 = vmatpush.bf16.msra.mxu0 %v12421
    %12968 = vmatmul.bf16.gmra.mxu0 %v11254
    %v12969 = vpop.f32.mrf.mxu0
    %v12970 = vadd.f32 %v12957, %v12969
    %v12971 = vpop.f32.mrf.mxu0
    %12972 = vdwg.mxu0
    %12973 = vmatpush.bf16.msra.mxu0 %v12481
    %12974 = vmatpush.bf16.msra.mxu0 %v12477
    %12975 = vmatpush.bf16.msra.mxu0 %v12473
    %12976 = vmatpush.bf16.msra.mxu0 %v12469
    %12977 = vmatpush.bf16.msra.mxu0 %v12465
    %12978 = vmatpush.bf16.msra.mxu0 %v12461
    %12979 = vmatpush.bf16.msra.mxu0 %v12457
    %12980 = vmatpush.bf16.msra.mxu0 %v12453
    %12981 = vmatmul.bf16.gmra.mxu0 %v11255
    %v12982 = vpop.f32.mrf.mxu0
    %v12983 = vadd.f32 %v12970, %v12982
    %v12984 = vpop.f32.mrf.mxu0
    %12985 = vdwg.mxu0
    %12986 = vmatpush.bf16.msra.mxu0 %v12513
    %12987 = vmatpush.bf16.msra.mxu0 %v12509
    %12988 = vmatpush.bf16.msra.mxu0 %v12505
    %12989 = vmatpush.bf16.msra.mxu0 %v12501
    %12990 = vmatpush.bf16.msra.mxu0 %v12497
    %12991 = vmatpush.bf16.msra.mxu0 %v12493
    %12992 = vmatpush.bf16.msra.mxu0 %v12489
    %12993 = vmatpush.bf16.msra.mxu0 %v12485
    %12994 = vmatmul.bf16.gmra.mxu0 %v11256
    %v12995 = vpop.f32.mrf.mxu0
    %v12996 = vadd.f32 %v12983, %v12995
    %v12997 = vpop.f32.mrf.mxu0
    %12998 = vdwg.mxu0
    %12999 = vmatpush.bf16.msra.mxu0 %v12545
    %13000 = vmatpush.bf16.msra.mxu0 %v12541
    %13001 = vmatpush.bf16.msra.mxu0 %v12537
    %13002 = vmatpush.bf16.msra.mxu0 %v12533
    %13003 = vmatpush.bf16.msra.mxu0 %v12529
    %13004 = vmatpush.bf16.msra.mxu0 %v12525
    %13005 = vmatpush.bf16.msra.mxu0 %v12521
    %13006 = vmatpush.bf16.msra.mxu0 %v12517
    %13007 = vmatmul.bf16.gmra.mxu0 %v11257
    %v13008 = vpop.f32.mrf.mxu0
    %v13009 = vadd.f32 %v12996, %v13008
    %v13010 = vpop.f32.mrf.mxu0
    %13011 = vdwg.mxu0
    %13012 = vmatpush.bf16.msra.mxu0 %v12322
    %13013 = vmatpush.bf16.msra.mxu0 %v12318
    %13014 = vmatpush.bf16.msra.mxu0 %v12314
    %13015 = vmatpush.bf16.msra.mxu0 %v12310
    %13016 = vmatpush.bf16.msra.mxu0 %v12306
    %13017 = vmatpush.bf16.msra.mxu0 %v12302
    %13018 = vmatpush.bf16.msra.mxu0 %v12298
    %13019 = vmatpush.bf16.msra.mxu0 %v12294
    %13020 = vmatmul.bf16.gmra.mxu0 %v11250
    %v13021 = vpop.f32.mrf.mxu0
    %v13022 = vadd.f32 %v11518, %v13021
    %v13023 = vpop.f32.mrf.mxu0
    %13024 = vdwg.mxu0
    %13025 = vmatpush.bf16.msra.mxu0 %v12354
    %13026 = vmatpush.bf16.msra.mxu0 %v12350
    %13027 = vmatpush.bf16.msra.mxu0 %v12346
    %13028 = vmatpush.bf16.msra.mxu0 %v12342
    %13029 = vmatpush.bf16.msra.mxu0 %v12338
    %13030 = vmatpush.bf16.msra.mxu0 %v12334
    %13031 = vmatpush.bf16.msra.mxu0 %v12330
    %13032 = vmatpush.bf16.msra.mxu0 %v12326
    %13033 = vmatmul.bf16.gmra.mxu0 %v11251
    %v13034 = vpop.f32.mrf.mxu0
    %v13035 = vadd.f32 %v13022, %v13034
    %v13036 = vpop.f32.mrf.mxu0
    %13037 = vdwg.mxu0
    %13038 = vmatpush.bf16.msra.mxu0 %v12386
    %13039 = vmatpush.bf16.msra.mxu0 %v12382
    %13040 = vmatpush.bf16.msra.mxu0 %v12378
    %13041 = vmatpush.bf16.msra.mxu0 %v12374
    %13042 = vmatpush.bf16.msra.mxu0 %v12370
    %13043 = vmatpush.bf16.msra.mxu0 %v12366
    %13044 = vmatpush.bf16.msra.mxu0 %v12362
    %13045 = vmatpush.bf16.msra.mxu0 %v12358
    %13046 = vmatmul.bf16.gmra.mxu0 %v11252
    %v13047 = vpop.f32.mrf.mxu0
    %v13048 = vadd.f32 %v13035, %v13047
    %v13049 = vpop.f32.mrf.mxu0
    %13050 = vdwg.mxu0
    %13051 = vmatpush.bf16.msra.mxu0 %v12418
    %13052 = vmatpush.bf16.msra.mxu0 %v12414
    %13053 = vmatpush.bf16.msra.mxu0 %v12410
    %13054 = vmatpush.bf16.msra.mxu0 %v12406
    %13055 = vmatpush.bf16.msra.mxu0 %v12402
    %13056 = vmatpush.bf16.msra.mxu0 %v12398
    %13057 = vmatpush.bf16.msra.mxu0 %v12394
    %13058 = vmatpush.bf16.msra.mxu0 %v12390
    %13059 = vmatmul.bf16.gmra.mxu0 %v11253
    %v13060 = vpop.f32.mrf.mxu0
    %v13061 = vadd.f32 %v13048, %v13060
    %v13062 = vpop.f32.mrf.mxu0
    %13063 = vdwg.mxu0
    %13064 = vmatpush.bf16.msra.mxu0 %v12450
    %13065 = vmatpush.bf16.msra.mxu0 %v12446
    %13066 = vmatpush.bf16.msra.mxu0 %v12442
    %13067 = vmatpush.bf16.msra.mxu0 %v12438
    %13068 = vmatpush.bf16.msra.mxu0 %v12434
    %13069 = vmatpush.bf16.msra.mxu0 %v12430
    %13070 = vmatpush.bf16.msra.mxu0 %v12426
    %13071 = vmatpush.bf16.msra.mxu0 %v12422
    %13072 = vmatmul.bf16.gmra.mxu0 %v11254
    %v13073 = vpop.f32.mrf.mxu0
    %v13074 = vadd.f32 %v13061, %v13073
    %v13075 = vpop.f32.mrf.mxu0
    %13076 = vdwg.mxu0
    %13077 = vmatpush.bf16.msra.mxu0 %v12482
    %13078 = vmatpush.bf16.msra.mxu0 %v12478
    %13079 = vmatpush.bf16.msra.mxu0 %v12474
    %13080 = vmatpush.bf16.msra.mxu0 %v12470
    %13081 = vmatpush.bf16.msra.mxu0 %v12466
    %13082 = vmatpush.bf16.msra.mxu0 %v12462
    %13083 = vmatpush.bf16.msra.mxu0 %v12458
    %13084 = vmatpush.bf16.msra.mxu0 %v12454
    %13085 = vmatmul.bf16.gmra.mxu0 %v11255
    %v13086 = vpop.f32.mrf.mxu0
    %v13087 = vadd.f32 %v13074, %v13086
    %v13088 = vpop.f32.mrf.mxu0
    %13089 = vdwg.mxu0
    %13090 = vmatpush.bf16.msra.mxu0 %v12514
    %13091 = vmatpush.bf16.msra.mxu0 %v12510
    %13092 = vmatpush.bf16.msra.mxu0 %v12506
    %13093 = vmatpush.bf16.msra.mxu0 %v12502
    %13094 = vmatpush.bf16.msra.mxu0 %v12498
    %13095 = vmatpush.bf16.msra.mxu0 %v12494
    %13096 = vmatpush.bf16.msra.mxu0 %v12490
    %13097 = vmatpush.bf16.msra.mxu0 %v12486
    %13098 = vmatmul.bf16.gmra.mxu0 %v11256
    %v13099 = vpop.f32.mrf.mxu0
    %v13100 = vadd.f32 %v13087, %v13099
    %v13101 = vpop.f32.mrf.mxu0
    %13102 = vdwg.mxu0
    %13103 = vmatpush.bf16.msra.mxu0 %v12546
    %13104 = vmatpush.bf16.msra.mxu0 %v12542
    %13105 = vmatpush.bf16.msra.mxu0 %v12538
    %13106 = vmatpush.bf16.msra.mxu0 %v12534
    %13107 = vmatpush.bf16.msra.mxu0 %v12530
    %13108 = vmatpush.bf16.msra.mxu0 %v12526
    %13109 = vmatpush.bf16.msra.mxu0 %v12522
    %13110 = vmatpush.bf16.msra.mxu0 %v12518
    %13111 = vmatmul.bf16.gmra.mxu0 %v11257
    %v13112 = vpop.f32.mrf.mxu0
    %v13113 = vadd.f32 %v13100, %v13112
    %v13114 = vpop.f32.mrf.mxu0
    %13115 = vdwg.mxu0
    %13116 = vmatpush.bf16.msra.mxu0 %v12323
    %13117 = vmatpush.bf16.msra.mxu0 %v12319
    %13118 = vmatpush.bf16.msra.mxu0 %v12315
    %13119 = vmatpush.bf16.msra.mxu0 %v12311
    %13120 = vmatpush.bf16.msra.mxu0 %v12307
    %13121 = vmatpush.bf16.msra.mxu0 %v12303
    %13122 = vmatpush.bf16.msra.mxu0 %v12299
    %13123 = vmatpush.bf16.msra.mxu0 %v12295
    %13124 = vmatmul.bf16.gmra.mxu0 %v11250
    %v13125 = vpop.f32.mrf.mxu0
    %v13126 = vadd.f32 %v11519, %v13125
    %v13127 = vpop.f32.mrf.mxu0
    %13128 = vdwg.mxu0
    %13129 = vmatpush.bf16.msra.mxu0 %v12355
    %13130 = vmatpush.bf16.msra.mxu0 %v12351
    %13131 = vmatpush.bf16.msra.mxu0 %v12347
    %13132 = vmatpush.bf16.msra.mxu0 %v12343
    %13133 = vmatpush.bf16.msra.mxu0 %v12339
    %13134 = vmatpush.bf16.msra.mxu0 %v12335
    %13135 = vmatpush.bf16.msra.mxu0 %v12331
    %13136 = vmatpush.bf16.msra.mxu0 %v12327
    %13137 = vmatmul.bf16.gmra.mxu0 %v11251
    %v13138 = vpop.f32.mrf.mxu0
    %v13139 = vadd.f32 %v13126, %v13138
    %v13140 = vpop.f32.mrf.mxu0
    %13141 = vdwg.mxu0
    %13142 = vmatpush.bf16.msra.mxu0 %v12387
    %13143 = vmatpush.bf16.msra.mxu0 %v12383
    %13144 = vmatpush.bf16.msra.mxu0 %v12379
    %13145 = vmatpush.bf16.msra.mxu0 %v12375
    %13146 = vmatpush.bf16.msra.mxu0 %v12371
    %13147 = vmatpush.bf16.msra.mxu0 %v12367
    %13148 = vmatpush.bf16.msra.mxu0 %v12363
    %13149 = vmatpush.bf16.msra.mxu0 %v12359
    %13150 = vmatmul.bf16.gmra.mxu0 %v11252
    %v13151 = vpop.f32.mrf.mxu0
    %v13152 = vadd.f32 %v13139, %v13151
    %v13153 = vpop.f32.mrf.mxu0
    %13154 = vdwg.mxu0
    %13155 = vmatpush.bf16.msra.mxu0 %v12419
    %13156 = vmatpush.bf16.msra.mxu0 %v12415
    %13157 = vmatpush.bf16.msra.mxu0 %v12411
    %13158 = vmatpush.bf16.msra.mxu0 %v12407
    %13159 = vmatpush.bf16.msra.mxu0 %v12403
    %13160 = vmatpush.bf16.msra.mxu0 %v12399
    %13161 = vmatpush.bf16.msra.mxu0 %v12395
    %13162 = vmatpush.bf16.msra.mxu0 %v12391
    %13163 = vmatmul.bf16.gmra.mxu0 %v11253
    %v13164 = vpop.f32.mrf.mxu0
    %v13165 = vadd.f32 %v13152, %v13164
    %v13166 = vpop.f32.mrf.mxu0
    %13167 = vdwg.mxu0
    %13168 = vmatpush.bf16.msra.mxu0 %v12451
    %13169 = vmatpush.bf16.msra.mxu0 %v12447
    %13170 = vmatpush.bf16.msra.mxu0 %v12443
    %13171 = vmatpush.bf16.msra.mxu0 %v12439
    %13172 = vmatpush.bf16.msra.mxu0 %v12435
    %13173 = vmatpush.bf16.msra.mxu0 %v12431
    %13174 = vmatpush.bf16.msra.mxu0 %v12427
    %13175 = vmatpush.bf16.msra.mxu0 %v12423
    %13176 = vmatmul.bf16.gmra.mxu0 %v11254
    %v13177 = vpop.f32.mrf.mxu0
    %v13178 = vadd.f32 %v13165, %v13177
    %v13179 = vpop.f32.mrf.mxu0
    %13180 = vdwg.mxu0
    %13181 = vmatpush.bf16.msra.mxu0 %v12483
    %13182 = vmatpush.bf16.msra.mxu0 %v12479
    %13183 = vmatpush.bf16.msra.mxu0 %v12475
    %13184 = vmatpush.bf16.msra.mxu0 %v12471
    %13185 = vmatpush.bf16.msra.mxu0 %v12467
    %13186 = vmatpush.bf16.msra.mxu0 %v12463
    %13187 = vmatpush.bf16.msra.mxu0 %v12459
    %13188 = vmatpush.bf16.msra.mxu0 %v12455
    %13189 = vmatmul.bf16.gmra.mxu0 %v11255
    %v13190 = vpop.f32.mrf.mxu0
    %v13191 = vadd.f32 %v13178, %v13190
    %v13192 = vpop.f32.mrf.mxu0
    %13193 = vdwg.mxu0
    %13194 = vmatpush.bf16.msra.mxu0 %v12515
    %13195 = vmatpush.bf16.msra.mxu0 %v12511
    %13196 = vmatpush.bf16.msra.mxu0 %v12507
    %13197 = vmatpush.bf16.msra.mxu0 %v12503
    %13198 = vmatpush.bf16.msra.mxu0 %v12499
    %13199 = vmatpush.bf16.msra.mxu0 %v12495
    %13200 = vmatpush.bf16.msra.mxu0 %v12491
    %13201 = vmatpush.bf16.msra.mxu0 %v12487
    %13202 = vmatmul.bf16.gmra.mxu0 %v11256
    %v13203 = vpop.f32.mrf.mxu0
    %v13204 = vadd.f32 %v13191, %v13203
    %v13205 = vpop.f32.mrf.mxu0
    %13206 = vdwg.mxu0
    %13207 = vmatpush.bf16.msra.mxu0 %v12547
    %13208 = vmatpush.bf16.msra.mxu0 %v12543
    %13209 = vmatpush.bf16.msra.mxu0 %v12539
    %13210 = vmatpush.bf16.msra.mxu0 %v12535
    %13211 = vmatpush.bf16.msra.mxu0 %v12531
    %13212 = vmatpush.bf16.msra.mxu0 %v12527
    %13213 = vmatpush.bf16.msra.mxu0 %v12523
    %13214 = vmatpush.bf16.msra.mxu0 %v12519
    %13215 = vmatmul.bf16.gmra.mxu0 %v11257
    %v13216 = vpop.f32.mrf.mxu0
    %v13217 = vadd.f32 %v13204, %v13216
    %v13218 = vpop.f32.mrf.mxu0
    %13219 = vdwg.mxu0
    %v13220 = vmax.f32 %v12905, 0.0
    %v13221 = vmax.f32 %v13009, 0.0
    %v13222 = vmax.f32 %v13113, 0.0
    %v13223 = vmax.f32 %v13217, 0.0
    %v13224 = vld [vmem:[#allocation20] sm:$0xf]
    %v13226 = vperm.slane %v13224, 0
    %v13227 = vperm.slane %v13224, 1
    %v13228 = vperm.slane %v13224, 2
    %v13229 = vperm.slane %v13224, 3
    %v13234 = vmul.f32 %v13220, %v13226
    %v13235 = vmul.f32 %v13221, %v13227
    %v13236 = vmul.f32 %v13222, %v13228
    %v13237 = vmul.f32 %v13223, %v13229
    %vm13238 = vcmask 1041408
    %v13239 = vsel %vm13238, %v13234, 0.0
    %v13240 = vsel %vm13238, %v13235, 0.0
    %v13241 = vadd.f32 %v13239, %v13240
    %v13242 = vsel %vm13238, %v13236, 0.0
    %v13243 = vadd.f32 %v13241, %v13242
    %v13244 = vsel %vm13238, %v13237, 0.0
    %v13245 = vadd.f32 %v13243, %v13244
    %13246 = vadd.xlane.f32.xlu0 %v13245
    %v13247 = vpop.xlane.xlu0 %13246
    %v13248 = vld [vmem:[#allocation2] sm:$0x1]
    %v13250 = vperm.slane %v13248, 0
    %v13252 = vadd.f32 %v13247, %v13250
    %vm13253 = vcmask 1024
    %13254 = vst.msk [vmem:[%s13] sm:$0x3] %vm13253, %v13252
    // Predicated region
    $region102: #{_dti_forward_impl.1} parent=1 // pred_check
      _
    $region103: #{_dti_forward_impl.1} parent=1 // pred_check_branch
      %13256 = sbr.rel (0) target = $region105
    $region104: #{_dti_forward_impl.1} parent=1 // pred_region
      _
    $region105: #{_dti_forward_impl.1} parent=1 // pred_fallthru
      _
    // Predicated region
    $region106: #{_dti_forward_impl.1} parent=1 // pred_check
      _
    $region107: #{_dti_forward_impl.1} parent=1 // pred_check_branch
      %13258 = sbr.rel (0) target = $region109
    $region108: #{_dti_forward_impl.1} parent=1 // pred_region
      _
    $region109: #{_dti_forward_impl.1} parent=1 // pred_fallthru
      _
    %13259 = vsyncpa [#allocation4], 1
    %13260 = vsyncpa [#allocation6], 1
    %13261 = vsyncpa [#allocation9], 1
    %13262 = vsyncpa [#allocation12], 1
    %13263 = vsyncpa [#allocation15], 1
    %13264 = vsyncpa [#allocation18], 1
    %13265 = vsyncpa [#allocation21], 1

</llo_original>
